<compile_context>
chip_gen: v7x
topology: tpu7x:2x2x1
jax: 0.10.0
libtpu: 0.0.40
codegen_flags: <defaults>
</compile_context>

<pallas_src>
import jax
import jax.numpy as jnp
import numpy as np
from jax.experimental import pallas as pl
from jax.experimental.pallas import tpu as pltpu

LEAK = 0.2
EPS = 1e-5
K1 = 12                       # block1 kernel size -> length after block1
C1, C3, C4 = 256, 128, 64     # channel widths fixed by the module
L_OUT = 8 * K1                # 12 -> 24 -> 48 -> 96


# ----------------------------------------------------------------------------
# Host-side constant builders (one-time, in prepare_params)
# ----------------------------------------------------------------------------
def _scatter_mats(L, B, dtype=jnp.bfloat16):
    """(4, B*L, 2*B*L) 0/1 tap-scatter matrices for ConvTranspose1d(k=4,s=2,p=1),
    block-diagonal over the B lane-packed samples:
        S[k, b*L + m, b*2L + (2m + k - 1)] = 1   (taps outside [0, 2L) are dropped,
    which is exactly the padding=1 crop)."""
    s = np.zeros((4, B * L, 2 * B * L), np.float32)
    idx = np.arange(B * L)
    b, m = idx // L, idx % L
    for k in range(4):
        p = 2 * m + k - 1
        ok = (p >= 0) & (p < 2 * L)
        s[k, idx[ok], b[ok] * 2 * L + p[ok]] = 1.0
    return jnp.asarray(s, dtype)


def _segnorm_mat(C, L, B):
    """(B*L, B*L) matrix with 1/(C*L) inside a sample's lane segment, 0 elsewhere.
    Right-multiplying the per-lane channel sums by it yields each sample's mean
    (already divided by its element count C*L) broadcast to every lane of that sample."""
    seg = np.arange(B * L) // L
    p = (seg[:, None] == seg[None, :]).astype(np.float32) / float(C * L)
    return jnp.asarray(p, jnp.float32)


# ----------------------------------------------------------------------------
# In-kernel helpers (traced inside the fused kernel)
# ----------------------------------------------------------------------------
def _inorm_lrelu(y, p_ref):
    """InstanceNorm2d applied to a 3D (N,C,L) tensor == per-sample normalization over
    ALL channels & positions (no affine), then LeakyReLU(0.2), on lane-packed samples.
    One-pass stats: the two full-tile reductions are independent (dual-issue on the
    XLU); a single small MXU matmul broadcasts per-sample stats back to the lanes."""
    s1 = jnp.sum(y, axis=0, keepdims=True)           # (1, B*L)
    s2 = jnp.sum(y * y, axis=0, keepdims=True)       # (1, B*L)
    r = jnp.concatenate([s1, s2], axis=0)            # (2, B*L)
    stats = jnp.dot(r, p_ref[...], preferred_element_type=jnp.float32)  # (2, B*L)
    mean = stats[0:1, :]
    var = stats[1:2, :] - mean * mean                 # E[y^2] - mean^2
    z = (y - mean) * jax.lax.rsqrt(var + EPS)
    return jnp.where(z >= 0, z, LEAK * z)


def _convt_k4s2p1(h, w_ref, s_ref, b_ref):
    """ConvTranspose1d(k=4, s=2, p=1) on lane-packed activations.

    h:     (Cin, B*L)  f32 activations (samples packed along lanes)
    w_ref: (4, Cout, Cin) bf16, w[k, co, ci] = W_torch[ci, co, k]
    s_ref: (4, B*L, 2*B*L) bf16 precomputed 0/1 tap-scatter matrices
    b_ref: (Cout, 1) f32
    returns (Cout, 2*B*L) f32

    Each tap's projection q_k is consumed immediately by its scatter matmul, so the
    (4*Cout, B*L) intermediate never materializes; accumulation stays in f32."""
    hb = h.astype(jnp.bfloat16)
    y = None
    for k in range(4):
        q = jnp.dot(w_ref[k], hb, preferred_element_type=jnp.float32)      # (Cout, B*L)
        t = jnp.dot(q.astype(jnp.bfloat16), s_ref[k],
                    preferred_element_type=jnp.float32)                     # (Cout, 2*B*L)
        y = t if y is None else y + t
    return y + b_ref[...]


# ----------------------------------------------------------------------------
# Fused Generator kernel: one grid step == B samples' full forward pass
# ----------------------------------------------------------------------------
def _generator_kernel(xb_ref, w1_ref, b1_ref, p1_ref,
                      w3_ref, b3_ref, s3_ref, p3_ref,
                      w4_ref, b4_ref, s4_ref, p4_ref,
                      w5_ref, b5_ref, s5_ref, o_ref):
    cin1 = xb_ref.shape[1]

    # block1: ConvTranspose1d(cin1, 256, k=12, s=1, p=0) with L_in == 1.
    # Pure VPU broadcast-FMAs: xb already holds every sample's scalars broadcast over
    # its 12-lane segment, w1 is the matching lane-tiled weight (an M=1 MXU pass would
    # be ~99% padding).
    xv = xb_ref[0]                                            # (cin1, B*12) f32
    h = xv[0:1, :] * w1_ref[0]                                # (256, B*12)
    for ci in range(1, cin1):
        h = h + xv[ci:ci + 1, :] * w1_ref[ci]
    h = _inorm_lrelu(h + b1_ref[...], p1_ref)                 # (256, B*12)

    # block3 / block4: ConvT(k=4,s=2,p=1) + InstanceNorm + LeakyReLU
    h = _inorm_lrelu(_convt_k4s2p1(h, w3_ref, s3_ref, b3_ref), p3_ref)   # (128, B*24)
    h = _inorm_lrelu(_convt_k4s2p1(h, w4_ref, s4_ref, b4_ref), p4_ref)   # (64,  B*48)

    # block5: ConvT(k=4,s=2,p=1) + tanh, stored lane-dense as (out_ch, B*96)
    y = _convt_k4s2p1(h, w5_ref, s5_ref, b5_ref)                         # (out_ch, B*96)
    o_ref[0] = jnp.tanh(y).astype(o_ref.dtype)


# ----------------------------------------------------------------------------
# Wrapper: one-time weight/constant repack + single pallas_call
# ----------------------------------------------------------------------------
def prepare_params(params, block_b=8):
    """One-time repack of torch-layout weights + precomputed scatter / norm matrices
    for `block_b` lane-packed samples per grid step.
    block_b=8 keeps the constant working set < ~10 MiB; block_b=16 widens the MXU
    columns further (v5e/v6e full width) at the cost of O(B^2) scatter-matrix VMEM."""
    B = block_b
    W1, W3, W4, W5 = params["W1"], params["W3"], params["W4"], params["W5"]
    out_ch = W5.shape[1]

    def tap_major(W):  # torch (Cin, Cout, 4) -> (4, Cout, Cin), bf16 MXU operand
        return jnp.transpose(W, (2, 1, 0)).astype(jnp.bfloat16)

    return dict(
        # block1 weight lane-tiled B times so lane b*12+l uses W1[:, :, l]
        w1=jnp.tile(W1.astype(jnp.float32), (1, 1, B)),                   # (cin1,256,B*12)
        b1=params["b1"].reshape(C1, 1).astype(jnp.float32),
        p1=_segnorm_mat(C1, K1, B),
        w3=tap_major(W3),
        b3=params["b3"].reshape(C3, 1).astype(jnp.float32),
        s3=_scatter_mats(K1, B),
        p3=_segnorm_mat(C3, 2 * K1, B),
        w4=tap_major(W4),
        b4=params["b4"].reshape(C4, 1).astype(jnp.float32),
        s4=_scatter_mats(2 * K1, B),
        p4=_segnorm_mat(C4, 4 * K1, B),
        w5=tap_major(W5),
        b5=params["b5"].reshape(out_ch, 1).astype(jnp.float32),
        s5=_scatter_mats(4 * K1, B),
    )


def _const_spec(arr):
    zero = (0,) * arr.ndim
    return pl.BlockSpec(arr.shape, lambda n, _z=zero: _z)


def generator_forward(latent, code, prep):
    """latent: (N, in_ch, 1), code: (N, 1, 1) torch NCL.  Returns (N, out_ch, 96) NCL."""
    assert latent.shape[2] == 1 and code.shape[2] == 1      # ExGAN latent length 1
    N = latent.shape[0]
    cin1 = prep["w1"].shape[0]
    out_ch = prep["w5"].shape[1]
    B = prep["p1"].shape[0] // K1          # samples lane-packed per grid step
    G = pl.cdiv(N, B)                      # grid steps (>=2 keeps both v7x TCs busy)
    n_pad = G * B

    # (N, cin1) scalars -> (G, cin1, B*12): each scalar broadcast over its sample's
    # 12-lane segment (matches the lane-tiled w1); padded samples are sliced off below.
    x = jnp.concatenate([latent[:, :, 0], code[:, :, 0]], axis=1).astype(jnp.float32)
    x = jnp.pad(x, ((0, n_pad - N), (0, 0)))
    xb = jnp.repeat(x.reshape(G, B, cin1).transpose(0, 2, 1), K1, axis=2)

    consts = (prep["w1"], prep["b1"], prep["p1"],
              prep["w3"], prep["b3"], prep["s3"], prep["p3"],
              prep["w4"], prep["b4"], prep["s4"], prep["p4"],
              prep["w5"], prep["b5"], prep["s5"])

    out = pl.pallas_call(
        _generator_kernel,
        out_shape=jax.ShapeDtypeStruct((G, out_ch, B * L_OUT), jnp.float32),
        grid=(G,),
        in_specs=[pl.BlockSpec((1, cin1, B * K1), lambda n: (n, 0, 0))]
                 + [_const_spec(c) for c in consts],
        out_specs=pl.BlockSpec((1, out_ch, B * L_OUT), lambda n: (n, 0, 0)),
        compiler_params=pltpu.CompilerParams(
            dimension_semantics=("parallel",),
            vmem_limit_bytes=32 * 1024 * 1024),
    )(xb, *consts)

    # (G, out_ch, B*96) lane-packed -> (N, out_ch, 96)
    out = out.reshape(G, out_ch, B, L_OUT).transpose(0, 2, 1, 3)
    return out.reshape(n_pad, out_ch, L_OUT)[:N]


# ----------------------------------------------------------------------------
# Pure-JAX reference (for correctness check only)
# ----------------------------------------------------------------------------
def _ref_convT(x, W, b, stride, padding):
    K = W.shape[2]
    Wf = jnp.transpose(W, (1, 0, 2))[:, :, ::-1]          # OIH, flipped
    y = jax.lax.conv_general_dilated(
        x, Wf, window_strides=(1,),
        padding=[(K - 1 - padding, K - 1 - padding)],
        lhs_dilation=(stride,),
        dimension_numbers=("NCH", "OIH", "NCH"),
        precision=jax.lax.Precision.HIGHEST)
    return y + b.reshape(1, -1, 1)


def _ref_in_lrelu(y):
    # InstanceNorm2d on a 3D (N,C,L) tensor: per-sample stats over all channels
    # and positions, no affine (matches the PyTorch unbatched-(C,H,W) interpretation).
    mean = jnp.mean(y, axis=(1, 2), keepdims=True)
    var = jnp.mean((y - mean) ** 2, axis=(1, 2), keepdims=True)
    y = (y - mean) * jax.lax.rsqrt(var + EPS)
    return jnp.where(y >= 0, y, LEAK * y)


def ref_forward(latent, code, params):
    x = jnp.concatenate([latent, code], axis=1)
    h = _ref_in_lrelu(_ref_convT(x, params["W1"], params["b1"], 1, 0))
    h = _ref_in_lrelu(_ref_convT(h, params["W3"], params["b3"], 2, 1))
    h = _ref_in_lrelu(_ref_convT(h, params["W4"], params["b4"], 2, 1))
    return jnp.tanh(_ref_convT(h, params["W5"], params["b5"], 2, 1))


if __name__ == "__main__":
    key = jax.random.PRNGKey(0)
    N, in_channels, out_channels = 10, 4, 3        # N not a multiple of B: tests padding
    ks = jax.random.split(key, 10)
    latent = jax.random.normal(ks[0], (N, in_channels, 1), jnp.float32)
    code = jax.random.normal(ks[1], (N, 1, 1), jnp.float32)
    cin1 = in_channels + 1
    params = dict(
        W1=0.05 * jax.random.normal(ks[2], (cin1, 256, 12), jnp.float32),
        b1=0.05 * jax.random.normal(ks[3], (256,), jnp.float32),
        W3=0.05 * jax.random.normal(ks[4], (256, 128, 4), jnp.float32),
        b3=0.05 * jax.random.normal(ks[5], (128,), jnp.float32),
        W4=0.05 * jax.random.normal(ks[6], (128, 64, 4), jnp.float32),
        b4=0.05 * jax.random.normal(ks[7], (64,), jnp.float32),
        W5=0.05 * jax.random.normal(ks[8], (64, out_channels, 4), jnp.float32),
        b5=0.05 * jax.random.normal(ks[9], (out_channels,), jnp.float32),
    )

    prep = prepare_params(params, block_b=8)       # one-time repack; B=8 -> 2 grid steps
    fwd = jax.jit(generator_forward)
    out = jax.block_until_ready(fwd(latent, code, prep))
    assert out.shape == (N, out_channels, 96), out.shape

    ref = jax.block_until_ready(ref_forward(latent, code, params))
    # bf16 MXU operands with f32 accumulation + f32 norm/tanh epilogue: observed error
    # is ~1e-3; 2e-2 bounds it with margin while still catching structural bugs.
    np.testing.assert_allclose(np.asarray(out), np.asarray(ref), rtol=2e-2, atol=2e-2)
    print("KERNEL_OK")
</pallas_src>

<mosaic_0001>
module attributes {stable_mosaic.version = 11 : i64} {
  func.func @_generator_kernel(%arg0: i32, %arg1: memref<1x5x96xf32, #tpu.memory_space<vmem>>, %arg2: memref<5x256x96xf32, #tpu.memory_space<vmem>>, %arg3: memref<256x1xf32, #tpu.memory_space<vmem>>, %arg4: memref<96x96xf32, #tpu.memory_space<vmem>>, %arg5: memref<4x128x256xbf16, #tpu.memory_space<vmem>>, %arg6: memref<128x1xf32, #tpu.memory_space<vmem>>, %arg7: memref<4x96x192xbf16, #tpu.memory_space<vmem>>, %arg8: memref<192x192xf32, #tpu.memory_space<vmem>>, %arg9: memref<4x64x128xbf16, #tpu.memory_space<vmem>>, %arg10: memref<64x1xf32, #tpu.memory_space<vmem>>, %arg11: memref<4x192x384xbf16, #tpu.memory_space<vmem>>, %arg12: memref<384x384xf32, #tpu.memory_space<vmem>>, %arg13: memref<4x3x64xbf16, #tpu.memory_space<vmem>>, %arg14: memref<3x1xf32, #tpu.memory_space<vmem>>, %arg15: memref<4x384x768xbf16, #tpu.memory_space<vmem>>, %arg16: memref<1x3x768xf32, #tpu.memory_space<vmem>>) attributes {dimension_semantics = [#tpu.dimension_semantics<parallel>], iteration_bounds = array<i64: 2>, scalar_prefetch = 0 : i64, scratch_operands = 0 : i64, tpu.core_type = #tpu.core_type<tc>, window_params = [{transform_indices = @transform_0, window_bounds = array<i64: 1, 5, 96>}, {pipeline_mode = #tpu.pipeline_mode<synchronous>, transform_indices = @transform_1, window_bounds = array<i64: 5, 256, 96>}, {pipeline_mode = #tpu.pipeline_mode<synchronous>, transform_indices = @transform_2, window_bounds = array<i64: 256, 1>}, {pipeline_mode = #tpu.pipeline_mode<synchronous>, transform_indices = @transform_3, window_bounds = array<i64: 96, 96>}, {pipeline_mode = #tpu.pipeline_mode<synchronous>, transform_indices = @transform_4, window_bounds = array<i64: 4, 128, 256>}, {pipeline_mode = #tpu.pipeline_mode<synchronous>, transform_indices = @transform_5, window_bounds = array<i64: 128, 1>}, {pipeline_mode = #tpu.pipeline_mode<synchronous>, transform_indices = @transform_6, window_bounds = array<i64: 4, 96, 192>}, {pipeline_mode = #tpu.pipeline_mode<synchronous>, transform_indices = @transform_7, window_bounds = array<i64: 192, 192>}, {pipeline_mode = #tpu.pipeline_mode<synchronous>, transform_indices = @transform_8, window_bounds = array<i64: 4, 64, 128>}, {pipeline_mode = #tpu.pipeline_mode<synchronous>, transform_indices = @transform_9, window_bounds = array<i64: 64, 1>}, {pipeline_mode = #tpu.pipeline_mode<synchronous>, transform_indices = @transform_10, window_bounds = array<i64: 4, 192, 384>}, {pipeline_mode = #tpu.pipeline_mode<synchronous>, transform_indices = @transform_11, window_bounds = array<i64: 384, 384>}, {pipeline_mode = #tpu.pipeline_mode<synchronous>, transform_indices = @transform_12, window_bounds = array<i64: 4, 3, 64>}, {pipeline_mode = #tpu.pipeline_mode<synchronous>, transform_indices = @transform_13, window_bounds = array<i64: 3, 1>}, {pipeline_mode = #tpu.pipeline_mode<synchronous>, transform_indices = @transform_14, window_bounds = array<i64: 4, 384, 768>}, {transform_indices = @transform_15, window_bounds = array<i64: 1, 3, 768>}]} {
    %c0 = arith.constant 0 : index
    %c0_0 = arith.constant 0 : index
    %c0_1 = arith.constant 0 : index
    %0 = vector.load %arg1[%c0, %c0_0, %c0_1] : memref<1x5x96xf32, #tpu.memory_space<vmem>>, vector<1x5x96xf32>
    %1 = vector.shape_cast %0 : vector<1x5x96xf32> to vector<5x96xf32>
    %2 = vector.extract_strided_slice %1 {offsets = [0, 0], sizes = [1, 96], strides = [1, 1]} : vector<5x96xf32> to vector<1x96xf32>
    %c0_2 = arith.constant 0 : index
    %c0_3 = arith.constant 0 : index
    %c0_4 = arith.constant 0 : index
    %3 = vector.load %arg2[%c0_2, %c0_3, %c0_4] : memref<5x256x96xf32, #tpu.memory_space<vmem>>, vector<1x256x96xf32>
    %4 = vector.shape_cast %3 : vector<1x256x96xf32> to vector<256x96xf32>
    %5 = vector.broadcast %2 : vector<1x96xf32> to vector<256x96xf32>
    %6 = arith.mulf %5, %4 : vector<256x96xf32>
    %7 = vector.extract_strided_slice %1 {offsets = [1, 0], sizes = [1, 96], strides = [1, 1]} : vector<5x96xf32> to vector<1x96xf32>
    %c1 = arith.constant 1 : index
    %c0_5 = arith.constant 0 : index
    %c0_6 = arith.constant 0 : index
    %8 = vector.load %arg2[%c1, %c0_5, %c0_6] : memref<5x256x96xf32, #tpu.memory_space<vmem>>, vector<1x256x96xf32>
    %9 = vector.shape_cast %8 : vector<1x256x96xf32> to vector<256x96xf32>
    %10 = vector.broadcast %7 : vector<1x96xf32> to vector<256x96xf32>
    %11 = arith.mulf %10, %9 : vector<256x96xf32>
    %12 = arith.addf %6, %11 : vector<256x96xf32>
    %13 = vector.extract_strided_slice %1 {offsets = [2, 0], sizes = [1, 96], strides = [1, 1]} : vector<5x96xf32> to vector<1x96xf32>
    %c2 = arith.constant 2 : index
    %c0_7 = arith.constant 0 : index
    %c0_8 = arith.constant 0 : index
    %14 = vector.load %arg2[%c2, %c0_7, %c0_8] : memref<5x256x96xf32, #tpu.memory_space<vmem>>, vector<1x256x96xf32>
    %15 = vector.shape_cast %14 : vector<1x256x96xf32> to vector<256x96xf32>
    %16 = vector.broadcast %13 : vector<1x96xf32> to vector<256x96xf32>
    %17 = arith.mulf %16, %15 : vector<256x96xf32>
    %18 = arith.addf %12, %17 : vector<256x96xf32>
    %19 = vector.extract_strided_slice %1 {offsets = [3, 0], sizes = [1, 96], strides = [1, 1]} : vector<5x96xf32> to vector<1x96xf32>
    %c3 = arith.constant 3 : index
    %c0_9 = arith.constant 0 : index
    %c0_10 = arith.constant 0 : index
    %20 = vector.load %arg2[%c3, %c0_9, %c0_10] : memref<5x256x96xf32, #tpu.memory_space<vmem>>, vector<1x256x96xf32>
    %21 = vector.shape_cast %20 : vector<1x256x96xf32> to vector<256x96xf32>
    %22 = vector.broadcast %19 : vector<1x96xf32> to vector<256x96xf32>
    %23 = arith.mulf %22, %21 : vector<256x96xf32>
    %24 = arith.addf %18, %23 : vector<256x96xf32>
    %25 = vector.extract_strided_slice %1 {offsets = [4, 0], sizes = [1, 96], strides = [1, 1]} : vector<5x96xf32> to vector<1x96xf32>
    %c4 = arith.constant 4 : index
    %c0_11 = arith.constant 0 : index
    %c0_12 = arith.constant 0 : index
    %26 = vector.load %arg2[%c4, %c0_11, %c0_12] : memref<5x256x96xf32, #tpu.memory_space<vmem>>, vector<1x256x96xf32>
    %27 = vector.shape_cast %26 : vector<1x256x96xf32> to vector<256x96xf32>
    %28 = vector.broadcast %25 : vector<1x96xf32> to vector<256x96xf32>
    %29 = arith.mulf %28, %27 : vector<256x96xf32>
    %30 = arith.addf %24, %29 : vector<256x96xf32>
    %c0_13 = arith.constant 0 : index
    %c0_14 = arith.constant 0 : index
    %31 = vector.load %arg3[%c0_13, %c0_14] : memref<256x1xf32, #tpu.memory_space<vmem>>, vector<256x1xf32>
    %32 = vector.broadcast %31 : vector<256x1xf32> to vector<256x96xf32>
    %33 = arith.addf %30, %32 : vector<256x96xf32>
    %cst = arith.constant dense<0.000000e+00> : vector<96xf32>
    %34 = vector.multi_reduction <add>, %33, %cst [0] : vector<256x96xf32> to vector<96xf32>
    %35 = vector.shape_cast %34 : vector<96xf32> to vector<1x96xf32>
    %36 = arith.mulf %33, %33 : vector<256x96xf32>
    %cst_15 = arith.constant dense<0.000000e+00> : vector<96xf32>
    %37 = vector.multi_reduction <add>, %36, %cst_15 [0] : vector<256x96xf32> to vector<96xf32>
    %38 = vector.shape_cast %37 : vector<96xf32> to vector<1x96xf32>
    %39 = tpu.concatenate %35, %38 in 0 : vector<1x96xf32>, vector<1x96xf32> -> vector<2x96xf32>
    %c0_16 = arith.constant 0 : index
    %c0_17 = arith.constant 0 : index
    %40 = vector.load %arg4[%c0_16, %c0_17] : memref<96x96xf32, #tpu.memory_space<vmem>>, vector<96x96xf32>
    %cst_18 = arith.constant dense<0.000000e+00> : vector<2x96xf32>
    %41 = tpu.matmul %39, %40, %cst_18 {dimension_numbers = #tpu.dot_dimension_numbers<[1], [0], [0], [1], [0, 0, 1, 1], [], []>} : vector<2x96xf32>, vector<96x96xf32>, vector<2x96xf32> -> vector<2x96xf32>
    %42 = vector.extract_strided_slice %41 {offsets = [0, 0], sizes = [1, 96], strides = [1, 1]} : vector<2x96xf32> to vector<1x96xf32>
    %43 = vector.extract_strided_slice %41 {offsets = [1, 0], sizes = [1, 96], strides = [1, 1]} : vector<2x96xf32> to vector<1x96xf32>
    %44 = arith.mulf %42, %42 : vector<1x96xf32>
    %45 = arith.subf %43, %44 : vector<1x96xf32>
    %46 = vector.broadcast %42 : vector<1x96xf32> to vector<256x96xf32>
    %47 = arith.subf %33, %46 : vector<256x96xf32>
    %cst_19 = arith.constant 9.99999974E-6 : f32
    %48 = vector.broadcast %cst_19 : f32 to vector<1x96xf32>
    %49 = arith.addf %45, %48 : vector<1x96xf32>
    %50 = math.rsqrt %49 : vector<1x96xf32>
    %51 = vector.broadcast %50 : vector<1x96xf32> to vector<256x96xf32>
    %52 = arith.mulf %47, %51 : vector<256x96xf32>
    %cst_20 = arith.constant 0.000000e+00 : f32
    %53 = vector.broadcast %cst_20 : f32 to vector<256x96xf32>
    %54 = arith.cmpf oge, %52, %53 : vector<256x96xf32>
    %cst_21 = arith.constant 2.000000e-01 : f32
    %55 = vector.broadcast %cst_21 : f32 to vector<256x96xf32>
    %56 = arith.mulf %55, %52 : vector<256x96xf32>
    %57 = arith.select %54, %52, %56 : vector<256x96xi1>, vector<256x96xf32>
    %58 = arith.truncf %57 : vector<256x96xf32> to vector<256x96xbf16>
    %c0_22 = arith.constant 0 : index
    %c0_23 = arith.constant 0 : index
    %c0_24 = arith.constant 0 : index
    %59 = vector.load %arg5[%c0_22, %c0_23, %c0_24] : memref<4x128x256xbf16, #tpu.memory_space<vmem>>, vector<1x128x256xbf16>
    %60 = vector.shape_cast %59 : vector<1x128x256xbf16> to vector<128x256xbf16>
    %cst_25 = arith.constant dense<0.000000e+00> : vector<128x96xf32>
    %61 = tpu.matmul %60, %58, %cst_25 {dimension_numbers = #tpu.dot_dimension_numbers<[1], [0], [0], [1], [0, 0, 1, 1], [], []>} : vector<128x256xbf16>, vector<256x96xbf16>, vector<128x96xf32> -> vector<128x96xf32>
    %62 = arith.truncf %61 : vector<128x96xf32> to vector<128x96xbf16>
    %c0_26 = arith.constant 0 : index
    %c0_27 = arith.constant 0 : index
    %c0_28 = arith.constant 0 : index
    %63 = vector.load %arg7[%c0_26, %c0_27, %c0_28] : memref<4x96x192xbf16, #tpu.memory_space<vmem>>, vector<1x96x192xbf16>
    %64 = vector.shape_cast %63 : vector<1x96x192xbf16> to vector<96x192xbf16>
    %cst_29 = arith.constant dense<0.000000e+00> : vector<128x192xf32>
    %65 = tpu.matmul %62, %64, %cst_29 {dimension_numbers = #tpu.dot_dimension_numbers<[1], [0], [0], [1], [0, 0, 1, 1], [], []>} : vector<128x96xbf16>, vector<96x192xbf16>, vector<128x192xf32> -> vector<128x192xf32>
    %c1_30 = arith.constant 1 : index
    %c0_31 = arith.constant 0 : index
    %c0_32 = arith.constant 0 : index
    %66 = vector.load %arg5[%c1_30, %c0_31, %c0_32] : memref<4x128x256xbf16, #tpu.memory_space<vmem>>, vector<1x128x256xbf16>
    %67 = vector.shape_cast %66 : vector<1x128x256xbf16> to vector<128x256xbf16>
    %cst_33 = arith.constant dense<0.000000e+00> : vector<128x96xf32>
    %68 = tpu.matmul %67, %58, %cst_33 {dimension_numbers = #tpu.dot_dimension_numbers<[1], [0], [0], [1], [0, 0, 1, 1], [], []>} : vector<128x256xbf16>, vector<256x96xbf16>, vector<128x96xf32> -> vector<128x96xf32>
    %69 = arith.truncf %68 : vector<128x96xf32> to vector<128x96xbf16>
    %c1_34 = arith.constant 1 : index
    %c0_35 = arith.constant 0 : index
    %c0_36 = arith.constant 0 : index
    %70 = vector.load %arg7[%c1_34, %c0_35, %c0_36] : memref<4x96x192xbf16, #tpu.memory_space<vmem>>, vector<1x96x192xbf16>
    %71 = vector.shape_cast %70 : vector<1x96x192xbf16> to vector<96x192xbf16>
    %cst_37 = arith.constant dense<0.000000e+00> : vector<128x192xf32>
    %72 = tpu.matmul %69, %71, %cst_37 {dimension_numbers = #tpu.dot_dimension_numbers<[1], [0], [0], [1], [0, 0, 1, 1], [], []>} : vector<128x96xbf16>, vector<96x192xbf16>, vector<128x192xf32> -> vector<128x192xf32>
    %73 = arith.addf %65, %72 : vector<128x192xf32>
    %c2_38 = arith.constant 2 : index
    %c0_39 = arith.constant 0 : index
    %c0_40 = arith.constant 0 : index
    %74 = vector.load %arg5[%c2_38, %c0_39, %c0_40] : memref<4x128x256xbf16, #tpu.memory_space<vmem>>, vector<1x128x256xbf16>
    %75 = vector.shape_cast %74 : vector<1x128x256xbf16> to vector<128x256xbf16>
    %cst_41 = arith.constant dense<0.000000e+00> : vector<128x96xf32>
    %76 = tpu.matmul %75, %58, %cst_41 {dimension_numbers = #tpu.dot_dimension_numbers<[1], [0], [0], [1], [0, 0, 1, 1], [], []>} : vector<128x256xbf16>, vector<256x96xbf16>, vector<128x96xf32> -> vector<128x96xf32>
    %77 = arith.truncf %76 : vector<128x96xf32> to vector<128x96xbf16>
    %c2_42 = arith.constant 2 : index
    %c0_43 = arith.constant 0 : index
    %c0_44 = arith.constant 0 : index
    %78 = vector.load %arg7[%c2_42, %c0_43, %c0_44] : memref<4x96x192xbf16, #tpu.memory_space<vmem>>, vector<1x96x192xbf16>
    %79 = vector.shape_cast %78 : vector<1x96x192xbf16> to vector<96x192xbf16>
    %cst_45 = arith.constant dense<0.000000e+00> : vector<128x192xf32>
    %80 = tpu.matmul %77, %79, %cst_45 {dimension_numbers = #tpu.dot_dimension_numbers<[1], [0], [0], [1], [0, 0, 1, 1], [], []>} : vector<128x96xbf16>, vector<96x192xbf16>, vector<128x192xf32> -> vector<128x192xf32>
    %81 = arith.addf %73, %80 : vector<128x192xf32>
    %c3_46 = arith.constant 3 : index
    %c0_47 = arith.constant 0 : index
    %c0_48 = arith.constant 0 : index
    %82 = vector.load %arg5[%c3_46, %c0_47, %c0_48] : memref<4x128x256xbf16, #tpu.memory_space<vmem>>, vector<1x128x256xbf16>
    %83 = vector.shape_cast %82 : vector<1x128x256xbf16> to vector<128x256xbf16>
    %cst_49 = arith.constant dense<0.000000e+00> : vector<128x96xf32>
    %84 = tpu.matmul %83, %58, %cst_49 {dimension_numbers = #tpu.dot_dimension_numbers<[1], [0], [0], [1], [0, 0, 1, 1], [], []>} : vector<128x256xbf16>, vector<256x96xbf16>, vector<128x96xf32> -> vector<128x96xf32>
    %85 = arith.truncf %84 : vector<128x96xf32> to vector<128x96xbf16>
    %c3_50 = arith.constant 3 : index
    %c0_51 = arith.constant 0 : index
    %c0_52 = arith.constant 0 : index
    %86 = vector.load %arg7[%c3_50, %c0_51, %c0_52] : memref<4x96x192xbf16, #tpu.memory_space<vmem>>, vector<1x96x192xbf16>
    %87 = vector.shape_cast %86 : vector<1x96x192xbf16> to vector<96x192xbf16>
    %cst_53 = arith.constant dense<0.000000e+00> : vector<128x192xf32>
    %88 = tpu.matmul %85, %87, %cst_53 {dimension_numbers = #tpu.dot_dimension_numbers<[1], [0], [0], [1], [0, 0, 1, 1], [], []>} : vector<128x96xbf16>, vector<96x192xbf16>, vector<128x192xf32> -> vector<128x192xf32>
    %89 = arith.addf %81, %88 : vector<128x192xf32>
    %c0_54 = arith.constant 0 : index
    %c0_55 = arith.constant 0 : index
    %90 = vector.load %arg6[%c0_54, %c0_55] : memref<128x1xf32, #tpu.memory_space<vmem>>, vector<128x1xf32>
    %91 = vector.broadcast %90 : vector<128x1xf32> to vector<128x192xf32>
    %92 = arith.addf %89, %91 : vector<128x192xf32>
    %cst_56 = arith.constant dense<0.000000e+00> : vector<192xf32>
    %93 = vector.multi_reduction <add>, %92, %cst_56 [0] : vector<128x192xf32> to vector<192xf32>
    %94 = vector.shape_cast %93 : vector<192xf32> to vector<1x192xf32>
    %95 = arith.mulf %92, %92 : vector<128x192xf32>
    %cst_57 = arith.constant dense<0.000000e+00> : vector<192xf32>
    %96 = vector.multi_reduction <add>, %95, %cst_57 [0] : vector<128x192xf32> to vector<192xf32>
    %97 = vector.shape_cast %96 : vector<192xf32> to vector<1x192xf32>
    %98 = tpu.concatenate %94, %97 in 0 : vector<1x192xf32>, vector<1x192xf32> -> vector<2x192xf32>
    %c0_58 = arith.constant 0 : index
    %c0_59 = arith.constant 0 : index
    %99 = vector.load %arg8[%c0_58, %c0_59] : memref<192x192xf32, #tpu.memory_space<vmem>>, vector<192x192xf32>
    %cst_60 = arith.constant dense<0.000000e+00> : vector<2x192xf32>
    %100 = tpu.matmul %98, %99, %cst_60 {dimension_numbers = #tpu.dot_dimension_numbers<[1], [0], [0], [1], [0, 0, 1, 1], [], []>} : vector<2x192xf32>, vector<192x192xf32>, vector<2x192xf32> -> vector<2x192xf32>
    %101 = vector.extract_strided_slice %100 {offsets = [0, 0], sizes = [1, 192], strides = [1, 1]} : vector<2x192xf32> to vector<1x192xf32>
    %102 = vector.extract_strided_slice %100 {offsets = [1, 0], sizes = [1, 192], strides = [1, 1]} : vector<2x192xf32> to vector<1x192xf32>
    %103 = arith.mulf %101, %101 : vector<1x192xf32>
    %104 = arith.subf %102, %103 : vector<1x192xf32>
    %105 = vector.broadcast %101 : vector<1x192xf32> to vector<128x192xf32>
    %106 = arith.subf %92, %105 : vector<128x192xf32>
    %cst_61 = arith.constant 9.99999974E-6 : f32
    %107 = vector.broadcast %cst_61 : f32 to vector<1x192xf32>
    %108 = arith.addf %104, %107 : vector<1x192xf32>
    %109 = math.rsqrt %108 : vector<1x192xf32>
    %110 = vector.broadcast %109 : vector<1x192xf32> to vector<128x192xf32>
    %111 = arith.mulf %106, %110 : vector<128x192xf32>
    %cst_62 = arith.constant 0.000000e+00 : f32
    %112 = vector.broadcast %cst_62 : f32 to vector<128x192xf32>
    %113 = arith.cmpf oge, %111, %112 : vector<128x192xf32>
    %cst_63 = arith.constant 2.000000e-01 : f32
    %114 = vector.broadcast %cst_63 : f32 to vector<128x192xf32>
    %115 = arith.mulf %114, %111 : vector<128x192xf32>
    %116 = arith.select %113, %111, %115 : vector<128x192xi1>, vector<128x192xf32>
    %117 = arith.truncf %116 : vector<128x192xf32> to vector<128x192xbf16>
    %c0_64 = arith.constant 0 : index
    %c0_65 = arith.constant 0 : index
    %c0_66 = arith.constant 0 : index
    %118 = vector.load %arg9[%c0_64, %c0_65, %c0_66] : memref<4x64x128xbf16, #tpu.memory_space<vmem>>, vector<1x64x128xbf16>
    %119 = vector.shape_cast %118 : vector<1x64x128xbf16> to vector<64x128xbf16>
    %cst_67 = arith.constant dense<0.000000e+00> : vector<64x192xf32>
    %120 = tpu.matmul %119, %117, %cst_67 {dimension_numbers = #tpu.dot_dimension_numbers<[1], [0], [0], [1], [0, 0, 1, 1], [], []>} : vector<64x128xbf16>, vector<128x192xbf16>, vector<64x192xf32> -> vector<64x192xf32>
    %121 = arith.truncf %120 : vector<64x192xf32> to vector<64x192xbf16>
    %c0_68 = arith.constant 0 : index
    %c0_69 = arith.constant 0 : index
    %c0_70 = arith.constant 0 : index
    %122 = vector.load %arg11[%c0_68, %c0_69, %c0_70] : memref<4x192x384xbf16, #tpu.memory_space<vmem>>, vector<1x192x384xbf16>
    %123 = vector.shape_cast %122 : vector<1x192x384xbf16> to vector<192x384xbf16>
    %cst_71 = arith.constant dense<0.000000e+00> : vector<64x384xf32>
    %124 = tpu.matmul %121, %123, %cst_71 {dimension_numbers = #tpu.dot_dimension_numbers<[1], [0], [0], [1], [0, 0, 1, 1], [], []>} : vector<64x192xbf16>, vector<192x384xbf16>, vector<64x384xf32> -> vector<64x384xf32>
    %c1_72 = arith.constant 1 : index
    %c0_73 = arith.constant 0 : index
    %c0_74 = arith.constant 0 : index
    %125 = vector.load %arg9[%c1_72, %c0_73, %c0_74] : memref<4x64x128xbf16, #tpu.memory_space<vmem>>, vector<1x64x128xbf16>
    %126 = vector.shape_cast %125 : vector<1x64x128xbf16> to vector<64x128xbf16>
    %cst_75 = arith.constant dense<0.000000e+00> : vector<64x192xf32>
    %127 = tpu.matmul %126, %117, %cst_75 {dimension_numbers = #tpu.dot_dimension_numbers<[1], [0], [0], [1], [0, 0, 1, 1], [], []>} : vector<64x128xbf16>, vector<128x192xbf16>, vector<64x192xf32> -> vector<64x192xf32>
    %128 = arith.truncf %127 : vector<64x192xf32> to vector<64x192xbf16>
    %c1_76 = arith.constant 1 : index
    %c0_77 = arith.constant 0 : index
    %c0_78 = arith.constant 0 : index
    %129 = vector.load %arg11[%c1_76, %c0_77, %c0_78] : memref<4x192x384xbf16, #tpu.memory_space<vmem>>, vector<1x192x384xbf16>
    %130 = vector.shape_cast %129 : vector<1x192x384xbf16> to vector<192x384xbf16>
    %cst_79 = arith.constant dense<0.000000e+00> : vector<64x384xf32>
    %131 = tpu.matmul %128, %130, %cst_79 {dimension_numbers = #tpu.dot_dimension_numbers<[1], [0], [0], [1], [0, 0, 1, 1], [], []>} : vector<64x192xbf16>, vector<192x384xbf16>, vector<64x384xf32> -> vector<64x384xf32>
    %132 = arith.addf %124, %131 : vector<64x384xf32>
    %c2_80 = arith.constant 2 : index
    %c0_81 = arith.constant 0 : index
    %c0_82 = arith.constant 0 : index
    %133 = vector.load %arg9[%c2_80, %c0_81, %c0_82] : memref<4x64x128xbf16, #tpu.memory_space<vmem>>, vector<1x64x128xbf16>
    %134 = vector.shape_cast %133 : vector<1x64x128xbf16> to vector<64x128xbf16>
    %cst_83 = arith.constant dense<0.000000e+00> : vector<64x192xf32>
    %135 = tpu.matmul %134, %117, %cst_83 {dimension_numbers = #tpu.dot_dimension_numbers<[1], [0], [0], [1], [0, 0, 1, 1], [], []>} : vector<64x128xbf16>, vector<128x192xbf16>, vector<64x192xf32> -> vector<64x192xf32>
    %136 = arith.truncf %135 : vector<64x192xf32> to vector<64x192xbf16>
    %c2_84 = arith.constant 2 : index
    %c0_85 = arith.constant 0 : index
    %c0_86 = arith.constant 0 : index
    %137 = vector.load %arg11[%c2_84, %c0_85, %c0_86] : memref<4x192x384xbf16, #tpu.memory_space<vmem>>, vector<1x192x384xbf16>
    %138 = vector.shape_cast %137 : vector<1x192x384xbf16> to vector<192x384xbf16>
    %cst_87 = arith.constant dense<0.000000e+00> : vector<64x384xf32>
    %139 = tpu.matmul %136, %138, %cst_87 {dimension_numbers = #tpu.dot_dimension_numbers<[1], [0], [0], [1], [0, 0, 1, 1], [], []>} : vector<64x192xbf16>, vector<192x384xbf16>, vector<64x384xf32> -> vector<64x384xf32>
    %140 = arith.addf %132, %139 : vector<64x384xf32>
    %c3_88 = arith.constant 3 : index
    %c0_89 = arith.constant 0 : index
    %c0_90 = arith.constant 0 : index
    %141 = vector.load %arg9[%c3_88, %c0_89, %c0_90] : memref<4x64x128xbf16, #tpu.memory_space<vmem>>, vector<1x64x128xbf16>
    %142 = vector.shape_cast %141 : vector<1x64x128xbf16> to vector<64x128xbf16>
    %cst_91 = arith.constant dense<0.000000e+00> : vector<64x192xf32>
    %143 = tpu.matmul %142, %117, %cst_91 {dimension_numbers = #tpu.dot_dimension_numbers<[1], [0], [0], [1], [0, 0, 1, 1], [], []>} : vector<64x128xbf16>, vector<128x192xbf16>, vector<64x192xf32> -> vector<64x192xf32>
    %144 = arith.truncf %143 : vector<64x192xf32> to vector<64x192xbf16>
    %c3_92 = arith.constant 3 : index
    %c0_93 = arith.constant 0 : index
    %c0_94 = arith.constant 0 : index
    %145 = vector.load %arg11[%c3_92, %c0_93, %c0_94] : memref<4x192x384xbf16, #tpu.memory_space<vmem>>, vector<1x192x384xbf16>
    %146 = vector.shape_cast %145 : vector<1x192x384xbf16> to vector<192x384xbf16>
    %cst_95 = arith.constant dense<0.000000e+00> : vector<64x384xf32>
    %147 = tpu.matmul %144, %146, %cst_95 {dimension_numbers = #tpu.dot_dimension_numbers<[1], [0], [0], [1], [0, 0, 1, 1], [], []>} : vector<64x192xbf16>, vector<192x384xbf16>, vector<64x384xf32> -> vector<64x384xf32>
    %148 = arith.addf %140, %147 : vector<64x384xf32>
    %c0_96 = arith.constant 0 : index
    %c0_97 = arith.constant 0 : index
    %149 = vector.load %arg10[%c0_96, %c0_97] : memref<64x1xf32, #tpu.memory_space<vmem>>, vector<64x1xf32>
    %150 = vector.broadcast %149 : vector<64x1xf32> to vector<64x384xf32>
    %151 = arith.addf %148, %150 : vector<64x384xf32>
    %cst_98 = arith.constant dense<0.000000e+00> : vector<384xf32>
    %152 = vector.multi_reduction <add>, %151, %cst_98 [0] : vector<64x384xf32> to vector<384xf32>
    %153 = vector.shape_cast %152 : vector<384xf32> to vector<1x384xf32>
    %154 = arith.mulf %151, %151 : vector<64x384xf32>
    %cst_99 = arith.constant dense<0.000000e+00> : vector<384xf32>
    %155 = vector.multi_reduction <add>, %154, %cst_99 [0] : vector<64x384xf32> to vector<384xf32>
    %156 = vector.shape_cast %155 : vector<384xf32> to vector<1x384xf32>
    %157 = tpu.concatenate %153, %156 in 0 : vector<1x384xf32>, vector<1x384xf32> -> vector<2x384xf32>
    %c0_100 = arith.constant 0 : index
    %c0_101 = arith.constant 0 : index
    %158 = vector.load %arg12[%c0_100, %c0_101] : memref<384x384xf32, #tpu.memory_space<vmem>>, vector<384x384xf32>
    %cst_102 = arith.constant dense<0.000000e+00> : vector<2x384xf32>
    %159 = tpu.matmul %157, %158, %cst_102 {dimension_numbers = #tpu.dot_dimension_numbers<[1], [0], [0], [1], [0, 0, 1, 1], [], []>} : vector<2x384xf32>, vector<384x384xf32>, vector<2x384xf32> -> vector<2x384xf32>
    %160 = vector.extract_strided_slice %159 {offsets = [0, 0], sizes = [1, 384], strides = [1, 1]} : vector<2x384xf32> to vector<1x384xf32>
    %161 = vector.extract_strided_slice %159 {offsets = [1, 0], sizes = [1, 384], strides = [1, 1]} : vector<2x384xf32> to vector<1x384xf32>
    %162 = arith.mulf %160, %160 : vector<1x384xf32>
    %163 = arith.subf %161, %162 : vector<1x384xf32>
    %164 = vector.broadcast %160 : vector<1x384xf32> to vector<64x384xf32>
    %165 = arith.subf %151, %164 : vector<64x384xf32>
    %cst_103 = arith.constant 9.99999974E-6 : f32
    %166 = vector.broadcast %cst_103 : f32 to vector<1x384xf32>
    %167 = arith.addf %163, %166 : vector<1x384xf32>
    %168 = math.rsqrt %167 : vector<1x384xf32>
    %169 = vector.broadcast %168 : vector<1x384xf32> to vector<64x384xf32>
    %170 = arith.mulf %165, %169 : vector<64x384xf32>
    %cst_104 = arith.constant 0.000000e+00 : f32
    %171 = vector.broadcast %cst_104 : f32 to vector<64x384xf32>
    %172 = arith.cmpf oge, %170, %171 : vector<64x384xf32>
    %cst_105 = arith.constant 2.000000e-01 : f32
    %173 = vector.broadcast %cst_105 : f32 to vector<64x384xf32>
    %174 = arith.mulf %173, %170 : vector<64x384xf32>
    %175 = arith.select %172, %170, %174 : vector<64x384xi1>, vector<64x384xf32>
    %176 = arith.truncf %175 : vector<64x384xf32> to vector<64x384xbf16>
    %c0_106 = arith.constant 0 : index
    %c0_107 = arith.constant 0 : index
    %c0_108 = arith.constant 0 : index
    %177 = vector.load %arg13[%c0_106, %c0_107, %c0_108] : memref<4x3x64xbf16, #tpu.memory_space<vmem>>, vector<1x3x64xbf16>
    %178 = vector.shape_cast %177 : vector<1x3x64xbf16> to vector<3x64xbf16>
    %cst_109 = arith.constant dense<0.000000e+00> : vector<3x384xf32>
    %179 = tpu.matmul %178, %176, %cst_109 {dimension_numbers = #tpu.dot_dimension_numbers<[1], [0], [0], [1], [0, 0, 1, 1], [], []>} : vector<3x64xbf16>, vector<64x384xbf16>, vector<3x384xf32> -> vector<3x384xf32>
    %180 = arith.truncf %179 : vector<3x384xf32> to vector<3x384xbf16>
    %c0_110 = arith.constant 0 : index
    %c0_111 = arith.constant 0 : index
    %c0_112 = arith.constant 0 : index
    %181 = vector.load %arg15[%c0_110, %c0_111, %c0_112] : memref<4x384x768xbf16, #tpu.memory_space<vmem>>, vector<1x384x768xbf16>
    %182 = vector.shape_cast %181 : vector<1x384x768xbf16> to vector<384x768xbf16>
    %cst_113 = arith.constant dense<0.000000e+00> : vector<3x768xf32>
    %183 = tpu.matmul %180, %182, %cst_113 {dimension_numbers = #tpu.dot_dimension_numbers<[1], [0], [0], [1], [0, 0, 1, 1], [], []>} : vector<3x384xbf16>, vector<384x768xbf16>, vector<3x768xf32> -> vector<3x768xf32>
    %c1_114 = arith.constant 1 : index
    %c0_115 = arith.constant 0 : index
    %c0_116 = arith.constant 0 : index
    %184 = vector.load %arg13[%c1_114, %c0_115, %c0_116] : memref<4x3x64xbf16, #tpu.memory_space<vmem>>, vector<1x3x64xbf16>
    %185 = vector.shape_cast %184 : vector<1x3x64xbf16> to vector<3x64xbf16>
    %cst_117 = arith.constant dense<0.000000e+00> : vector<3x384xf32>
    %186 = tpu.matmul %185, %176, %cst_117 {dimension_numbers = #tpu.dot_dimension_numbers<[1], [0], [0], [1], [0, 0, 1, 1], [], []>} : vector<3x64xbf16>, vector<64x384xbf16>, vector<3x384xf32> -> vector<3x384xf32>
    %187 = arith.truncf %186 : vector<3x384xf32> to vector<3x384xbf16>
    %c1_118 = arith.constant 1 : index
    %c0_119 = arith.constant 0 : index
    %c0_120 = arith.constant 0 : index
    %188 = vector.load %arg15[%c1_118, %c0_119, %c0_120] : memref<4x384x768xbf16, #tpu.memory_space<vmem>>, vector<1x384x768xbf16>
    %189 = vector.shape_cast %188 : vector<1x384x768xbf16> to vector<384x768xbf16>
    %cst_121 = arith.constant dense<0.000000e+00> : vector<3x768xf32>
    %190 = tpu.matmul %187, %189, %cst_121 {dimension_numbers = #tpu.dot_dimension_numbers<[1], [0], [0], [1], [0, 0, 1, 1], [], []>} : vector<3x384xbf16>, vector<384x768xbf16>, vector<3x768xf32> -> vector<3x768xf32>
    %191 = arith.addf %183, %190 : vector<3x768xf32>
    %c2_122 = arith.constant 2 : index
    %c0_123 = arith.constant 0 : index
    %c0_124 = arith.constant 0 : index
    %192 = vector.load %arg13[%c2_122, %c0_123, %c0_124] : memref<4x3x64xbf16, #tpu.memory_space<vmem>>, vector<1x3x64xbf16>
    %193 = vector.shape_cast %192 : vector<1x3x64xbf16> to vector<3x64xbf16>
    %cst_125 = arith.constant dense<0.000000e+00> : vector<3x384xf32>
    %194 = tpu.matmul %193, %176, %cst_125 {dimension_numbers = #tpu.dot_dimension_numbers<[1], [0], [0], [1], [0, 0, 1, 1], [], []>} : vector<3x64xbf16>, vector<64x384xbf16>, vector<3x384xf32> -> vector<3x384xf32>
    %195 = arith.truncf %194 : vector<3x384xf32> to vector<3x384xbf16>
    %c2_126 = arith.constant 2 : index
    %c0_127 = arith.constant 0 : index
    %c0_128 = arith.constant 0 : index
    %196 = vector.load %arg15[%c2_126, %c0_127, %c0_128] : memref<4x384x768xbf16, #tpu.memory_space<vmem>>, vector<1x384x768xbf16>
    %197 = vector.shape_cast %196 : vector<1x384x768xbf16> to vector<384x768xbf16>
    %cst_129 = arith.constant dense<0.000000e+00> : vector<3x768xf32>
    %198 = tpu.matmul %195, %197, %cst_129 {dimension_numbers = #tpu.dot_dimension_numbers<[1], [0], [0], [1], [0, 0, 1, 1], [], []>} : vector<3x384xbf16>, vector<384x768xbf16>, vector<3x768xf32> -> vector<3x768xf32>
    %199 = arith.addf %191, %198 : vector<3x768xf32>
    %c3_130 = arith.constant 3 : index
    %c0_131 = arith.constant 0 : index
    %c0_132 = arith.constant 0 : index
    %200 = vector.load %arg13[%c3_130, %c0_131, %c0_132] : memref<4x3x64xbf16, #tpu.memory_space<vmem>>, vector<1x3x64xbf16>
    %201 = vector.shape_cast %200 : vector<1x3x64xbf16> to vector<3x64xbf16>
    %cst_133 = arith.constant dense<0.000000e+00> : vector<3x384xf32>
    %202 = tpu.matmul %201, %176, %cst_133 {dimension_numbers = #tpu.dot_dimension_numbers<[1], [0], [0], [1], [0, 0, 1, 1], [], []>} : vector<3x64xbf16>, vector<64x384xbf16>, vector<3x384xf32> -> vector<3x384xf32>
    %203 = arith.truncf %202 : vector<3x384xf32> to vector<3x384xbf16>
    %c3_134 = arith.constant 3 : index
    %c0_135 = arith.constant 0 : index
    %c0_136 = arith.constant 0 : index
    %204 = vector.load %arg15[%c3_134, %c0_135, %c0_136] : memref<4x384x768xbf16, #tpu.memory_space<vmem>>, vector<1x384x768xbf16>
    %205 = vector.shape_cast %204 : vector<1x384x768xbf16> to vector<384x768xbf16>
    %cst_137 = arith.constant dense<0.000000e+00> : vector<3x768xf32>
    %206 = tpu.matmul %203, %205, %cst_137 {dimension_numbers = #tpu.dot_dimension_numbers<[1], [0], [0], [1], [0, 0, 1, 1], [], []>} : vector<3x384xbf16>, vector<384x768xbf16>, vector<3x768xf32> -> vector<3x768xf32>
    %207 = arith.addf %199, %206 : vector<3x768xf32>
    %c0_138 = arith.constant 0 : index
    %c0_139 = arith.constant 0 : index
    %208 = vector.load %arg14[%c0_138, %c0_139] : memref<3x1xf32, #tpu.memory_space<vmem>>, vector<3x1xf32>
    %209 = vector.broadcast %208 : vector<3x1xf32> to vector<3x768xf32>
    %210 = arith.addf %207, %209 : vector<3x768xf32>
    %211 = math.tanh %210 : vector<3x768xf32>
    %c0_140 = arith.constant 0 : index
    %c0_141 = arith.constant 0 : index
    %c0_142 = arith.constant 0 : index
    %212 = vector.load %arg16[%c0_140, %c0_141, %c0_142] : memref<1x3x768xf32, #tpu.memory_space<vmem>>, vector<1x3x768xf32>
    %213 = vector.shape_cast %212 : vector<1x3x768xf32> to vector<3x768xf32>
    %214 = vector.shape_cast %211 : vector<3x768xf32> to vector<1x3x768xf32>
    tpu.vector_store %arg16[%c0_140, %c0_141, %c0_142], %214 {strides = array<i32>} : memref<1x3x768xf32, #tpu.memory_space<vmem>>, vector<1x3x768xf32>,
    return
  }
  func.func @transform_0(%arg0: i32) -> (i32, i32, i32) {
    %c0_i32 = arith.constant 0 : i32
    %c0_i32_0 = arith.constant 0 : i32
    %c0_i32_1 = arith.constant 0 : i32
    return %arg0, %c0_i32, %c0_i32_0 : i32, i32, i32
  }
  func.func @transform_1(%arg0: i32) -> (i32, i32, i32) {
    %c0_i32 = arith.constant 0 : i32
    %c0_i32_0 = arith.constant 0 : i32
    %c0_i32_1 = arith.constant 0 : i32
    %c0_i32_2 = arith.constant 0 : i32
    return %c0_i32, %c0_i32_0, %c0_i32_1 : i32, i32, i32
  }
  func.func @transform_2(%arg0: i32) -> (i32, i32) {
    %c0_i32 = arith.constant 0 : i32
    %c0_i32_0 = arith.constant 0 : i32
    %c0_i32_1 = arith.constant 0 : i32
    return %c0_i32, %c0_i32_0 : i32, i32
  }
  func.func @transform_3(%arg0: i32) -> (i32, i32) {
    %c0_i32 = arith.constant 0 : i32
    %c0_i32_0 = arith.constant 0 : i32
    %c0_i32_1 = arith.constant 0 : i32
    return %c0_i32, %c0_i32_0 : i32, i32
  }
  func.func @transform_4(%arg0: i32) -> (i32, i32, i32) {
    %c0_i32 = arith.constant 0 : i32
    %c0_i32_0 = arith.constant 0 : i32
    %c0_i32_1 = arith.constant 0 : i32
    %c0_i32_2 = arith.constant 0 : i32
    return %c0_i32, %c0_i32_0, %c0_i32_1 : i32, i32, i32
  }
  func.func @transform_5(%arg0: i32) -> (i32, i32) {
    %c0_i32 = arith.constant 0 : i32
    %c0_i32_0 = arith.constant 0 : i32
    %c0_i32_1 = arith.constant 0 : i32
    return %c0_i32, %c0_i32_0 : i32, i32
  }
  func.func @transform_6(%arg0: i32) -> (i32, i32, i32) {
    %c0_i32 = arith.constant 0 : i32
    %c0_i32_0 = arith.constant 0 : i32
    %c0_i32_1 = arith.constant 0 : i32
    %c0_i32_2 = arith.constant 0 : i32
    return %c0_i32, %c0_i32_0, %c0_i32_1 : i32, i32, i32
  }
  func.func @transform_7(%arg0: i32) -> (i32, i32) {
    %c0_i32 = arith.constant 0 : i32
    %c0_i32_0 = arith.constant 0 : i32
    %c0_i32_1 = arith.constant 0 : i32
    return %c0_i32, %c0_i32_0 : i32, i32
  }
  func.func @transform_8(%arg0: i32) -> (i32, i32, i32) {
    %c0_i32 = arith.constant 0 : i32
    %c0_i32_0 = arith.constant 0 : i32
    %c0_i32_1 = arith.constant 0 : i32
    %c0_i32_2 = arith.constant 0 : i32
    return %c0_i32, %c0_i32_0, %c0_i32_1 : i32, i32, i32
  }
  func.func @transform_9(%arg0: i32) -> (i32, i32) {
    %c0_i32 = arith.constant 0 : i32
    %c0_i32_0 = arith.constant 0 : i32
    %c0_i32_1 = arith.constant 0 : i32
    return %c0_i32, %c0_i32_0 : i32, i32
  }
  func.func @transform_10(%arg0: i32) -> (i32, i32, i32) {
    %c0_i32 = arith.constant 0 : i32
    %c0_i32_0 = arith.constant 0 : i32
    %c0_i32_1 = arith.constant 0 : i32
    %c0_i32_2 = arith.constant 0 : i32
    return %c0_i32, %c0_i32_0, %c0_i32_1 : i32, i32, i32
  }
  func.func @transform_11(%arg0: i32) -> (i32, i32) {
    %c0_i32 = arith.constant 0 : i32
    %c0_i32_0 = arith.constant 0 : i32
    %c0_i32_1 = arith.constant 0 : i32
    return %c0_i32, %c0_i32_0 : i32, i32
  }
  func.func @transform_12(%arg0: i32) -> (i32, i32, i32) {
    %c0_i32 = arith.constant 0 : i32
    %c0_i32_0 = arith.constant 0 : i32
    %c0_i32_1 = arith.constant 0 : i32
    %c0_i32_2 = arith.constant 0 : i32
    return %c0_i32, %c0_i32_0, %c0_i32_1 : i32, i32, i32
  }
  func.func @transform_13(%arg0: i32) -> (i32, i32) {
    %c0_i32 = arith.constant 0 : i32
    %c0_i32_0 = arith.constant 0 : i32
    %c0_i32_1 = arith.constant 0 : i32
    return %c0_i32, %c0_i32_0 : i32, i32
  }
  func.func @transform_14(%arg0: i32) -> (i32, i32, i32) {
    %c0_i32 = arith.constant 0 : i32
    %c0_i32_0 = arith.constant 0 : i32
    %c0_i32_1 = arith.constant 0 : i32
    %c0_i32_2 = arith.constant 0 : i32
    return %c0_i32, %c0_i32_0, %c0_i32_1 : i32, i32, i32
  }
  func.func @transform_15(%arg0: i32) -> (i32, i32, i32) {
    %c0_i32 = arith.constant 0 : i32
    %c0_i32_0 = arith.constant 0 : i32
    %c0_i32_1 = arith.constant 0 : i32
    return %arg0, %c0_i32, %c0_i32_0 : i32, i32, i32
  }
}

</mosaic_0001>

<llo_original>
// kernel: generator_forward.1
$region0: #{generator_forward.1}
  #allocation0 [shape = 'u32[]', space=smem, size = 0x4, offset = 0x4, fixed_abs, tag = 'smem constant byte address 0x4 - core index']
  #allocation1 [shape = 'u32[144,128]{1,0:T(1,128)}', space=vmem, size = 0x12000, scoped, tag = 'internal scratch']
  %s0 = inlined_call_operand.vmem [shape: f32[2,5,96], index: 0, kind: input, shape index: {}]
  %s1 = inlined_call_operand.vmem [shape: f32[5,256,96], index: 1, kind: input, shape index: {}]
  %s2 = inlined_call_operand.vmem [shape: f32[256,1], index: 2, kind: input, shape index: {}]
  %s3 = inlined_call_operand.hbm [shape: f32[96,96], index: 3, kind: input, shape index: {}]
  %s4 = inlined_call_operand.hbm [shape: bf16[4,128,256], index: 4, kind: input, shape index: {}]
  %s5 = inlined_call_operand.vmem [shape: f32[128,1], index: 5, kind: input, shape index: {}]
  %s6 = inlined_call_operand.hbm [shape: bf16[4,96,192], index: 6, kind: input, shape index: {}]
  %s7 = inlined_call_operand.hbm [shape: f32[192,192], index: 7, kind: input, shape index: {}]
  %s8 = inlined_call_operand.hbm [shape: bf16[4,64,128], index: 8, kind: input, shape index: {}]
  %s9 = inlined_call_operand.vmem [shape: f32[64,1], index: 9, kind: input, shape index: {}]
  %s10 = inlined_call_operand.hbm [shape: bf16[4,192,384], index: 10, kind: input, shape index: {}]
  %s11 = inlined_call_operand.hbm [shape: f32[384,384], index: 11, kind: input, shape index: {}]
  %s12 = inlined_call_operand.vmem [shape: bf16[4,3,64], index: 12, kind: input, shape index: {}]
  %s13 = inlined_call_operand.vmem [shape: f32[3,1], index: 13, kind: input, shape index: {}]
  %s14 = inlined_call_operand.hbm [shape: bf16[4,384,768], index: 14, kind: input, shape index: {}]
  %s15 = inlined_call_operand.vmem [shape: f32[2,3,768], index: 15, kind: output, shape index: {}]
  %s16 = sld [smem:[#allocation0]]
  $region125: #{generator_forward.1} parent=0
    _
  %s18 = ssub.s32 1, %s16
  %s19 = scalar_select 0, %s18, %s16
  $region1: #{generator_forward.1} parent=0
    #allocation2 [shape = 'u8[49152]{0}', space=vmem, size = 0xc000, scoped, tag = 'input window, operand 3, single buffered']
    #allocation3 [shape = 's32[2]{0}', space=sflag, size = 0x8, scoped, tag = 'scoped memory for generator_forward.1']
    #allocation4 [shape = 'u8[262144]{0}', space=vmem, size = 0x40000, scoped, tag = 'input window, operand 4, single buffered']
    #allocation5 [shape = 's32[1]{0}', space=sflag, size = 0x4, scoped, tag = 'scoped memory for generator_forward.1']
    #allocation6 [shape = 'u8[196608]{0}', space=vmem, size = 0x30000, scoped, tag = 'input window, operand 6, single buffered']
    #allocation7 [shape = 'u8[196608]{0}', space=vmem, size = 0x30000, scoped, tag = 'input window, operand 7, single buffered']
    #allocation8 [shape = 's32[1]{0}', space=sflag, size = 0x4, scoped, tag = 'scoped memory for generator_forward.1']
    #allocation9 [shape = 'u8[65536]{0}', space=vmem, size = 0x10000, scoped, tag = 'input window, operand 8, single buffered']
    #allocation10 [shape = 'u8[589824]{0}', space=vmem, size = 0x90000, scoped, tag = 'input window, operand 10, single buffered']
    #allocation11 [shape = 's32[1]{0}', space=sflag, size = 0x4, scoped, tag = 'scoped memory for generator_forward.1']
    #allocation12 [shape = 'u8[589824]{0}', space=vmem, size = 0x90000, scoped, tag = 'input window, operand 11, single buffered']
    #allocation13 [shape = 'u8[2359296]{0}', space=vmem, size = 0x240000, scoped, tag = 'input window, operand 14, single buffered']
    #allocation14 [shape = 's32[1]{0}', space=sflag, size = 0x4, scoped, tag = 'scoped memory for generator_forward.1']
    %20 = vsyncpa [#allocation3], 0
    %21 = vsyncpa [#allocation5], 0
    %22 = vsyncpa [#allocation8], 0
    %23 = vsyncpa [#allocation11], 0
    %24 = vsyncpa [#allocation14], 0
    loop: start=0, step=1, limit=4
    $region2: #{generator_forward.1} parent=1 // loop_pre_header
      _
    $region3: #{generator_forward.1} parent=1 // loop_header
      %s26 = sphi 0, %s30
      %p27 = scmp.ge.s32.totalorder %s26, 4
      %s36 = sphi 0, %s38
      %s39 = sphi 0, %s36
      %s40 = sphi 0, %s39
      %s56 = sphi 0, %s40
      %s60 = sphi 0, %s60
      %s62 = sphi 0, %s60
      %s63 = sphi 0, %s62
      %s77 = sphi 0, %s63
      %s81 = sphi 0, %s81
      %s83 = sphi 0, %s81
      %s84 = sphi 0, %s83
      %s98 = sphi 0, %s84
      %s102 = sphi 0, %s102
      %s104 = sphi 0, %s102
      %s105 = sphi 0, %s104
      %s119 = sphi 0, %s105
      %s123 = sphi 0, %s123
      %s125 = sphi 0, %s123
      %s126 = sphi 0, %s125
      %s140 = sphi 0, %s126
      %s144 = sphi 0, %s144
      %s146 = sphi 0, %s144
      %s147 = sphi 0, %s146
      %s161 = sphi 0, %s147
      %s165 = sphi 0, %s165
      %s167 = sphi 0, %s165
      %s168 = sphi 0, %s167
      %s182 = sphi 0, %s168
      %s186 = sphi 0, %s186
      %s188 = sphi 0, %s186
      %s189 = sphi 0, %s188
      %s203 = sphi 0, %s189
      %s207 = sphi 0, %s207
      %s209 = sphi 0, %s207
      %s210 = sphi 0, %s209
      %s224 = sphi 0, %s210
      %s228 = sphi 0, %s228
      %s230 = sphi 0, %s228
      %s231 = sphi 0, %s230
      %s245 = sphi 0, %s231
      %s249 = sphi 0, %s249
      %s251 = sphi 0, %s249
      %s252 = sphi 0, %s251
      %s266 = sphi 0, %s252
      %s270 = sphi 0, %s270
      %s272 = sphi 0, %s270
      %s273 = sphi 0, %s272
      %s287 = sphi 0, %s273
      %s291 = sphi 0, %s291
      %s293 = sphi 0, %s291
      %s294 = sphi 0, %s293
      %s308 = sphi 0, %s294
      %s312 = sphi 0, %s312
      %s314 = sphi 0, %s312
      %s315 = sphi 0, %s314
      %s329 = sphi 0, %s315
      %s333 = sphi 0, %s333
      %s335 = sphi 0, %s333
      %s336 = sphi 0, %s335
      %s350 = sphi 0, %s336
      %s356 = sphi 0, %s358
      %s359 = sphi 0, %s356
      %s360 = sphi 0, %s359
      %s376 = sphi 0, %s360
    $region4: #{generator_forward.1} parent=1 // loop_header_branch
      %29 = sbr.rel (%p27) target = $region8
    $region5: #{generator_forward.1} parent=1 // loop_body
      %s31 = ssub.s32 %s26, 1
      %s32 = ssub.s32 %s26, 2
      %s33 = sadd.s32 %s26, 1
      %s34 = ssub.s32 %s26, %s33
      %p35 = scmp.eq.s32.totalorder %s34, 0
      %s37 = sadd.s32 %s36, 1
      %s38 = scalar_select %p35, %s36, %s37
      %p41 = pneg %p35
      %p42 = scmp.eq.s32.totalorder %s26, 1
      %p43 = por %p41, %p42
      %p44 = scmp.ne.s32.totalorder %s36, %s39
      %p45 = scmp.eq.s32.totalorder %s26, 0
      %p46 = por %p44, %p45
      %p47 = scmp.ne.s32.totalorder %s36, %s39
      %p48 = scmp.eq.s32.totalorder %s31, 1
      %p49 = por %p47, %p48
      %p50 = scmp.ne.s32.totalorder %s39, %s40
      %p51 = scmp.eq.s32.totalorder %s31, 0
      %p52 = por %p50, %p51
      %p53 = scmp.ne.s32.totalorder %s39, %s40
      %p54 = scmp.eq.s32.totalorder %s32, 1
      %p55 = por %p53, %p54
      %p57 = scmp.ne.s32.totalorder %s40, %s56
      %p58 = scmp.eq.s32.totalorder %s32, 0
      %p59 = por %p57, %p58
      %s61 = sadd.s32 %s60, 1
      %p64 = scmp.eq.s32.totalorder %s26, 1
      %p65 = scmp.ne.s32.totalorder %s60, %s62
      %p66 = scmp.eq.s32.totalorder %s26, 0
      %p67 = por %p65, %p66
      %p68 = scmp.ne.s32.totalorder %s60, %s62
      %p69 = scmp.eq.s32.totalorder %s31, 1
      %p70 = por %p68, %p69
      %p71 = scmp.ne.s32.totalorder %s62, %s63
      %p72 = scmp.eq.s32.totalorder %s31, 0
      %p73 = por %p71, %p72
      %p74 = scmp.ne.s32.totalorder %s62, %s63
      %p75 = scmp.eq.s32.totalorder %s32, 1
      %p76 = por %p74, %p75
      %p78 = scmp.ne.s32.totalorder %s63, %s77
      %p79 = scmp.eq.s32.totalorder %s32, 0
      %p80 = por %p78, %p79
      %s82 = sadd.s32 %s81, 1
      %p85 = scmp.eq.s32.totalorder %s26, 1
      %p86 = scmp.ne.s32.totalorder %s81, %s83
      %p87 = scmp.eq.s32.totalorder %s26, 0
      %p88 = por %p86, %p87
      %p89 = scmp.ne.s32.totalorder %s81, %s83
      %p90 = scmp.eq.s32.totalorder %s31, 1
      %p91 = por %p89, %p90
      %p92 = scmp.ne.s32.totalorder %s83, %s84
      %p93 = scmp.eq.s32.totalorder %s31, 0
      %p94 = por %p92, %p93
      %p95 = scmp.ne.s32.totalorder %s83, %s84
      %p96 = scmp.eq.s32.totalorder %s32, 1
      %p97 = por %p95, %p96
      %p99 = scmp.ne.s32.totalorder %s84, %s98
      %p100 = scmp.eq.s32.totalorder %s32, 0
      %p101 = por %p99, %p100
      %s103 = sadd.s32 %s102, 1
      %p106 = scmp.eq.s32.totalorder %s26, 1
      %p107 = scmp.ne.s32.totalorder %s102, %s104
      %p108 = scmp.eq.s32.totalorder %s26, 0
      %p109 = por %p107, %p108
      %p110 = scmp.ne.s32.totalorder %s102, %s104
      %p111 = scmp.eq.s32.totalorder %s31, 1
      %p112 = por %p110, %p111
      %p113 = scmp.ne.s32.totalorder %s104, %s105
      %p114 = scmp.eq.s32.totalorder %s31, 0
      %p115 = por %p113, %p114
      %p116 = scmp.ne.s32.totalorder %s104, %s105
      %p117 = scmp.eq.s32.totalorder %s32, 1
      %p118 = por %p116, %p117
      %p120 = scmp.ne.s32.totalorder %s105, %s119
      %p121 = scmp.eq.s32.totalorder %s32, 0
      %p122 = por %p120, %p121
      %s124 = sadd.s32 %s123, 1
      %p127 = scmp.eq.s32.totalorder %s26, 1
      %p128 = scmp.ne.s32.totalorder %s123, %s125
      %p129 = scmp.eq.s32.totalorder %s26, 0
      %p130 = por %p128, %p129
      %p131 = scmp.ne.s32.totalorder %s123, %s125
      %p132 = scmp.eq.s32.totalorder %s31, 1
      %p133 = por %p131, %p132
      %p134 = scmp.ne.s32.totalorder %s125, %s126
      %p135 = scmp.eq.s32.totalorder %s31, 0
      %p136 = por %p134, %p135
      %p137 = scmp.ne.s32.totalorder %s125, %s126
      %p138 = scmp.eq.s32.totalorder %s32, 1
      %p139 = por %p137, %p138
      %p141 = scmp.ne.s32.totalorder %s126, %s140
      %p142 = scmp.eq.s32.totalorder %s32, 0
      %p143 = por %p141, %p142
      %s145 = sadd.s32 %s144, 1
      %p148 = scmp.eq.s32.totalorder %s26, 1
      %p149 = scmp.ne.s32.totalorder %s144, %s146
      %p150 = scmp.eq.s32.totalorder %s26, 0
      %p151 = por %p149, %p150
      %p152 = scmp.ne.s32.totalorder %s144, %s146
      %p153 = scmp.eq.s32.totalorder %s31, 1
      %p154 = por %p152, %p153
      %p155 = scmp.ne.s32.totalorder %s146, %s147
      %p156 = scmp.eq.s32.totalorder %s31, 0
      %p157 = por %p155, %p156
      %p158 = scmp.ne.s32.totalorder %s146, %s147
      %p159 = scmp.eq.s32.totalorder %s32, 1
      %p160 = por %p158, %p159
      %p162 = scmp.ne.s32.totalorder %s147, %s161
      %p163 = scmp.eq.s32.totalorder %s32, 0
      %p164 = por %p162, %p163
      %s166 = sadd.s32 %s165, 1
      %p169 = scmp.eq.s32.totalorder %s26, 1
      %p170 = scmp.ne.s32.totalorder %s165, %s167
      %p171 = scmp.eq.s32.totalorder %s26, 0
      %p172 = por %p170, %p171
      %p173 = scmp.ne.s32.totalorder %s165, %s167
      %p174 = scmp.eq.s32.totalorder %s31, 1
      %p175 = por %p173, %p174
      %p176 = scmp.ne.s32.totalorder %s167, %s168
      %p177 = scmp.eq.s32.totalorder %s31, 0
      %p178 = por %p176, %p177
      %p179 = scmp.ne.s32.totalorder %s167, %s168
      %p180 = scmp.eq.s32.totalorder %s32, 1
      %p181 = por %p179, %p180
      %p183 = scmp.ne.s32.totalorder %s168, %s182
      %p184 = scmp.eq.s32.totalorder %s32, 0
      %p185 = por %p183, %p184
      %s187 = sadd.s32 %s186, 1
      %p190 = scmp.eq.s32.totalorder %s26, 1
      %p191 = scmp.ne.s32.totalorder %s186, %s188
      %p192 = scmp.eq.s32.totalorder %s26, 0
      %p193 = por %p191, %p192
      %p194 = scmp.ne.s32.totalorder %s186, %s188
      %p195 = scmp.eq.s32.totalorder %s31, 1
      %p196 = por %p194, %p195
      %p197 = scmp.ne.s32.totalorder %s188, %s189
      %p198 = scmp.eq.s32.totalorder %s31, 0
      %p199 = por %p197, %p198
      %p200 = scmp.ne.s32.totalorder %s188, %s189
      %p201 = scmp.eq.s32.totalorder %s32, 1
      %p202 = por %p200, %p201
      %p204 = scmp.ne.s32.totalorder %s189, %s203
      %p205 = scmp.eq.s32.totalorder %s32, 0
      %p206 = por %p204, %p205
      %s208 = sadd.s32 %s207, 1
      %p211 = scmp.eq.s32.totalorder %s26, 1
      %p212 = scmp.ne.s32.totalorder %s207, %s209
      %p213 = scmp.eq.s32.totalorder %s26, 0
      %p214 = por %p212, %p213
      %p215 = scmp.ne.s32.totalorder %s207, %s209
      %p216 = scmp.eq.s32.totalorder %s31, 1
      %p217 = por %p215, %p216
      %p218 = scmp.ne.s32.totalorder %s209, %s210
      %p219 = scmp.eq.s32.totalorder %s31, 0
      %p220 = por %p218, %p219
      %p221 = scmp.ne.s32.totalorder %s209, %s210
      %p222 = scmp.eq.s32.totalorder %s32, 1
      %p223 = por %p221, %p222
      %p225 = scmp.ne.s32.totalorder %s210, %s224
      %p226 = scmp.eq.s32.totalorder %s32, 0
      %p227 = por %p225, %p226
      %s229 = sadd.s32 %s228, 1
      %p232 = scmp.eq.s32.totalorder %s26, 1
      %p233 = scmp.ne.s32.totalorder %s228, %s230
      %p234 = scmp.eq.s32.totalorder %s26, 0
      %p235 = por %p233, %p234
      %p236 = scmp.ne.s32.totalorder %s228, %s230
      %p237 = scmp.eq.s32.totalorder %s31, 1
      %p238 = por %p236, %p237
      %p239 = scmp.ne.s32.totalorder %s230, %s231
      %p240 = scmp.eq.s32.totalorder %s31, 0
      %p241 = por %p239, %p240
      %p242 = scmp.ne.s32.totalorder %s230, %s231
      %p243 = scmp.eq.s32.totalorder %s32, 1
      %p244 = por %p242, %p243
      %p246 = scmp.ne.s32.totalorder %s231, %s245
      %p247 = scmp.eq.s32.totalorder %s32, 0
      %p248 = por %p246, %p247
      %s250 = sadd.s32 %s249, 1
      %p253 = scmp.eq.s32.totalorder %s26, 1
      %p254 = scmp.ne.s32.totalorder %s249, %s251
      %p255 = scmp.eq.s32.totalorder %s26, 0
      %p256 = por %p254, %p255
      %p257 = scmp.ne.s32.totalorder %s249, %s251
      %p258 = scmp.eq.s32.totalorder %s31, 1
      %p259 = por %p257, %p258
      %p260 = scmp.ne.s32.totalorder %s251, %s252
      %p261 = scmp.eq.s32.totalorder %s31, 0
      %p262 = por %p260, %p261
      %p263 = scmp.ne.s32.totalorder %s251, %s252
      %p264 = scmp.eq.s32.totalorder %s32, 1
      %p265 = por %p263, %p264
      %p267 = scmp.ne.s32.totalorder %s252, %s266
      %p268 = scmp.eq.s32.totalorder %s32, 0
      %p269 = por %p267, %p268
      %s271 = sadd.s32 %s270, 1
      %p274 = scmp.eq.s32.totalorder %s26, 1
      %p275 = scmp.ne.s32.totalorder %s270, %s272
      %p276 = scmp.eq.s32.totalorder %s26, 0
      %p277 = por %p275, %p276
      %p278 = scmp.ne.s32.totalorder %s270, %s272
      %p279 = scmp.eq.s32.totalorder %s31, 1
      %p280 = por %p278, %p279
      %p281 = scmp.ne.s32.totalorder %s272, %s273
      %p282 = scmp.eq.s32.totalorder %s31, 0
      %p283 = por %p281, %p282
      %p284 = scmp.ne.s32.totalorder %s272, %s273
      %p285 = scmp.eq.s32.totalorder %s32, 1
      %p286 = por %p284, %p285
      %p288 = scmp.ne.s32.totalorder %s273, %s287
      %p289 = scmp.eq.s32.totalorder %s32, 0
      %p290 = por %p288, %p289
      %s292 = sadd.s32 %s291, 1
      %p295 = scmp.eq.s32.totalorder %s26, 1
      %p296 = scmp.ne.s32.totalorder %s291, %s293
      %p297 = scmp.eq.s32.totalorder %s26, 0
      %p298 = por %p296, %p297
      %p299 = scmp.ne.s32.totalorder %s291, %s293
      %p300 = scmp.eq.s32.totalorder %s31, 1
      %p301 = por %p299, %p300
      %p302 = scmp.ne.s32.totalorder %s293, %s294
      %p303 = scmp.eq.s32.totalorder %s31, 0
      %p304 = por %p302, %p303
      %p305 = scmp.ne.s32.totalorder %s293, %s294
      %p306 = scmp.eq.s32.totalorder %s32, 1
      %p307 = por %p305, %p306
      %p309 = scmp.ne.s32.totalorder %s294, %s308
      %p310 = scmp.eq.s32.totalorder %s32, 0
      %p311 = por %p309, %p310
      %s313 = sadd.s32 %s312, 1
      %p316 = scmp.eq.s32.totalorder %s26, 1
      %p317 = scmp.ne.s32.totalorder %s312, %s314
      %p318 = scmp.eq.s32.totalorder %s26, 0
      %p319 = por %p317, %p318
      %p320 = scmp.ne.s32.totalorder %s312, %s314
      %p321 = scmp.eq.s32.totalorder %s31, 1
      %p322 = por %p320, %p321
      %p323 = scmp.ne.s32.totalorder %s314, %s315
      %p324 = scmp.eq.s32.totalorder %s31, 0
      %p325 = por %p323, %p324
      %p326 = scmp.ne.s32.totalorder %s314, %s315
      %p327 = scmp.eq.s32.totalorder %s32, 1
      %p328 = por %p326, %p327
      %p330 = scmp.ne.s32.totalorder %s315, %s329
      %p331 = scmp.eq.s32.totalorder %s32, 0
      %p332 = por %p330, %p331
      %s334 = sadd.s32 %s333, 1
      %p337 = scmp.eq.s32.totalorder %s26, 1
      %p338 = scmp.ne.s32.totalorder %s333, %s335
      %p339 = scmp.eq.s32.totalorder %s26, 0
      %p340 = por %p338, %p339
      %p341 = scmp.ne.s32.totalorder %s333, %s335
      %p342 = scmp.eq.s32.totalorder %s31, 1
      %p343 = por %p341, %p342
      %p344 = scmp.ne.s32.totalorder %s335, %s336
      %p345 = scmp.eq.s32.totalorder %s31, 0
      %p346 = por %p344, %p345
      %p347 = scmp.ne.s32.totalorder %s335, %s336
      %p348 = scmp.eq.s32.totalorder %s32, 1
      %p349 = por %p347, %p348
      %p351 = scmp.ne.s32.totalorder %s336, %s350
      %p352 = scmp.eq.s32.totalorder %s32, 0
      %p353 = por %p351, %p352
      %s354 = ssub.s32 %s26, %s33
      %p355 = scmp.eq.s32.totalorder %s354, 0
      %s357 = sadd.s32 %s356, 1
      %s358 = scalar_select %p355, %s356, %s357
      %p361 = pneg %p355
      %p362 = scmp.eq.s32.totalorder %s26, 1
      %p363 = por %p361, %p362
      %p364 = scmp.ne.s32.totalorder %s356, %s359
      %p365 = scmp.eq.s32.totalorder %s26, 0
      %p366 = por %p364, %p365
      %p367 = scmp.ne.s32.totalorder %s356, %s359
      %p368 = scmp.eq.s32.totalorder %s31, 1
      %p369 = por %p367, %p368
      %p370 = scmp.ne.s32.totalorder %s359, %s360
      %p371 = scmp.eq.s32.totalorder %s31, 0
      %p372 = por %p370, %p371
      %p373 = scmp.ne.s32.totalorder %s359, %s360
      %p374 = scmp.eq.s32.totalorder %s32, 1
      %p375 = por %p373, %p374
      %p377 = scmp.ne.s32.totalorder %s360, %s376
      %p378 = scmp.eq.s32.totalorder %s32, 0
      %p379 = por %p377, %p378
      %p380 = scmp.le.s32.totalorder 1, %s26
      %p381 = scmp.lt.s32.totalorder %s26, 3
      %p382 = pnand %p380, %p381
      %p383 = pneg %p382
      // Predicated region
      $region9: #{generator_forward.1} parent=5 // pred_check
        _
      $region10: #{generator_forward.1} parent=5 // pred_check_branch
        %385 = sbr.rel (%p382) target = $region12
      $region11: #{generator_forward.1} parent=5 // pred_region
        %s386 = ssub.s32 %s26, 1
        // Predicated region
        $region13: #{generator_forward.1} parent=11 // pred_check
          %p387 = pneg %p73
        $region14: #{generator_forward.1} parent=11 // pred_check_branch
          %389 = sbr.rel (%p387) target = $region16
        $region15: #{generator_forward.1} parent=11 // pred_region
          _
        $region16: #{generator_forward.1} parent=11 // pred_fallthru
          _
        // Predicated region
        $region17: #{generator_forward.1} parent=11 // pred_check
          %p390 = pneg %p94
        $region18: #{generator_forward.1} parent=11 // pred_check_branch
          %392 = sbr.rel (%p390) target = $region20
        $region19: #{generator_forward.1} parent=11 // pred_region
          _
        $region20: #{generator_forward.1} parent=11 // pred_fallthru
          _
        // Predicated region
        $region21: #{generator_forward.1} parent=11 // pred_check
          %p393 = pneg %p115
        $region22: #{generator_forward.1} parent=11 // pred_check_branch
          %395 = sbr.rel (%p393) target = $region24
        $region23: #{generator_forward.1} parent=11 // pred_region
          %s397 = ssub.s32 1536, 1536
          %398 = vsyncadd [#allocation3], %s397
          %s399 = sshll.u32 [#allocation2], 4
          %s400 = int_to_ptr.vmem [resolvable:$true] %s399
          %405 = dma.hbm_to_vmem [thread:$0]  %s3, 1536, %s400, [#allocation3], 128, 128, 8
        $region24: #{generator_forward.1} parent=11 // pred_fallthru
          _
        // Predicated region
        $region25: #{generator_forward.1} parent=11 // pred_check
          %p406 = pneg %p136
        $region26: #{generator_forward.1} parent=11 // pred_check_branch
          %408 = sbr.rel (%p406) target = $region28
        $region27: #{generator_forward.1} parent=11 // pred_region
          %s410 = ssub.s32 8192, 8192
          %411 = vsyncadd [#allocation5], %s410
          %s412 = sshll.u32 [#allocation4], 4
          %s413 = int_to_ptr.vmem [resolvable:$true] %s412
          %418 = dma.hbm_to_vmem [thread:$0]  %s4, 8192, %s413, [#allocation5], 128, 128, 8
        $region28: #{generator_forward.1} parent=11 // pred_fallthru
          _
        // Predicated region
        $region29: #{generator_forward.1} parent=11 // pred_check
          %p419 = pneg %p157
        $region30: #{generator_forward.1} parent=11 // pred_check_branch
          %421 = sbr.rel (%p419) target = $region32
        $region31: #{generator_forward.1} parent=11 // pred_region
          _
        $region32: #{generator_forward.1} parent=11 // pred_fallthru
          _
        // Predicated region
        $region33: #{generator_forward.1} parent=11 // pred_check
          %p422 = pneg %p178
        $region34: #{generator_forward.1} parent=11 // pred_check_branch
          %424 = sbr.rel (%p422) target = $region36
        $region35: #{generator_forward.1} parent=11 // pred_region
          %s426 = ssub.s32 6144, 6144
          %427 = vsyncadd [#allocation5], %s426
          %s428 = sshll.u32 [#allocation6], 4
          %s429 = int_to_ptr.vmem [resolvable:$true] %s428
          %434 = dma.hbm_to_vmem [thread:$0]  %s6, 6144, %s429, [#allocation5], 128, 128, 8
        $region36: #{generator_forward.1} parent=11 // pred_fallthru
          _
        // Predicated region
        $region37: #{generator_forward.1} parent=11 // pred_check
          %p435 = pneg %p199
        $region38: #{generator_forward.1} parent=11 // pred_check_branch
          %437 = sbr.rel (%p435) target = $region40
        $region39: #{generator_forward.1} parent=11 // pred_region
          %s439 = ssub.s32 6144, 6144
          %440 = vsyncadd [#allocation8], %s439
          %s441 = sshll.u32 [#allocation7], 4
          %s442 = int_to_ptr.vmem [resolvable:$true] %s441
          %447 = dma.hbm_to_vmem [thread:$0]  %s7, 6144, %s442, [#allocation8], 256, 256, 16
        $region40: #{generator_forward.1} parent=11 // pred_fallthru
          _
        // Predicated region
        $region41: #{generator_forward.1} parent=11 // pred_check
          %p448 = pneg %p220
        $region42: #{generator_forward.1} parent=11 // pred_check_branch
          %450 = sbr.rel (%p448) target = $region44
        $region43: #{generator_forward.1} parent=11 // pred_region
          %s452 = ssub.s32 2048, 2048
          %453 = vsyncadd [#allocation8], %s452
          %s454 = sshll.u32 [#allocation9], 4
          %s455 = int_to_ptr.vmem [resolvable:$true] %s454
          %460 = dma.hbm_to_vmem [thread:$0]  %s8, 2048, %s455, [#allocation8], 64, 64, 4
        $region44: #{generator_forward.1} parent=11 // pred_fallthru
          _
        // Predicated region
        $region45: #{generator_forward.1} parent=11 // pred_check
          %p461 = pneg %p241
        $region46: #{generator_forward.1} parent=11 // pred_check_branch
          %463 = sbr.rel (%p461) target = $region48
        $region47: #{generator_forward.1} parent=11 // pred_region
          _
        $region48: #{generator_forward.1} parent=11 // pred_fallthru
          _
        // Predicated region
        $region49: #{generator_forward.1} parent=11 // pred_check
          %p464 = pneg %p262
        $region50: #{generator_forward.1} parent=11 // pred_check_branch
          %466 = sbr.rel (%p464) target = $region52
        $region51: #{generator_forward.1} parent=11 // pred_region
          %s468 = ssub.s32 18432, 18432
          %469 = vsyncadd [#allocation11], %s468
          %s470 = sshll.u32 [#allocation10], 4
          %s471 = int_to_ptr.vmem [resolvable:$true] %s470
          %476 = dma.hbm_to_vmem [thread:$0]  %s10, 18432, %s471, [#allocation11], 192, 192, 12
        $region52: #{generator_forward.1} parent=11 // pred_fallthru
          _
        // Predicated region
        $region53: #{generator_forward.1} parent=11 // pred_check
          %p477 = pneg %p283
        $region54: #{generator_forward.1} parent=11 // pred_check_branch
          %479 = sbr.rel (%p477) target = $region56
        $region55: #{generator_forward.1} parent=11 // pred_region
          %s481 = ssub.s32 18432, 18432
          %482 = vsyncadd [#allocation11], %s481
          %s483 = sshll.u32 [#allocation12], 4
          %s484 = int_to_ptr.vmem [resolvable:$true] %s483
          %489 = dma.hbm_to_vmem [thread:$0]  %s11, 18432, %s484, [#allocation11], 384, 384, 24
        $region56: #{generator_forward.1} parent=11 // pred_fallthru
          _
        // Predicated region
        $region57: #{generator_forward.1} parent=11 // pred_check
          %p490 = pneg %p304
        $region58: #{generator_forward.1} parent=11 // pred_check_branch
          %492 = sbr.rel (%p490) target = $region60
        $region59: #{generator_forward.1} parent=11 // pred_region
          _
        $region60: #{generator_forward.1} parent=11 // pred_fallthru
          _
        // Predicated region
        $region61: #{generator_forward.1} parent=11 // pred_check
          %p493 = pneg %p325
        $region62: #{generator_forward.1} parent=11 // pred_check_branch
          %495 = sbr.rel (%p493) target = $region64
        $region63: #{generator_forward.1} parent=11 // pred_region
          _
        $region64: #{generator_forward.1} parent=11 // pred_fallthru
          _
        // Predicated region
        $region65: #{generator_forward.1} parent=11 // pred_check
          %p496 = pneg %p346
        $region66: #{generator_forward.1} parent=11 // pred_check_branch
          %498 = sbr.rel (%p496) target = $region68
        $region67: #{generator_forward.1} parent=11 // pred_region
          %s500 = ssub.s32 73728, 73728
          %501 = vsyncadd [#allocation14], %s500
          %s502 = sshll.u32 [#allocation13], 4
          %s503 = int_to_ptr.vmem [resolvable:$true] %s502
          %508 = dma.hbm_to_vmem [thread:$0]  %s14, 73728, %s503, [#allocation14], 384, 384, 24
        $region68: #{generator_forward.1} parent=11 // pred_fallthru
          _
      $region12: #{generator_forward.1} parent=5 // pred_fallthru
        _
      %p509 = scmp.lt.s32.totalorder %s26, 2
      // Predicated region
      $region69: #{generator_forward.1} parent=5 // pred_check
        %p510 = pneg %p509
      $region70: #{generator_forward.1} parent=5 // pred_check_branch
        %512 = sbr.rel (%p510) target = $region72
      $region71: #{generator_forward.1} parent=5 // pred_region
        // Predicated region
        $region73: #{generator_forward.1} parent=71 // pred_check
          %p513 = pneg %p46
        $region74: #{generator_forward.1} parent=71 // pred_check_branch
          %515 = sbr.rel (%p513) target = $region76
        $region75: #{generator_forward.1} parent=71 // pred_region
          %p516 = scmp.lt.s32.totalorder %s26, 1
          %s517 = scalar_select %p516, %s26, 1
          %s518 = smul.addr %s517, 8
          %s519 = scalar_lea.vmem %s0, %s518
        $region76: #{generator_forward.1} parent=71 // pred_fallthru
          _
      $region72: #{generator_forward.1} parent=5 // pred_fallthru
        _
      %p520 = scmp.le.s32.totalorder 1, %s26
      %p521 = scmp.lt.s32.totalorder %s26, 3
      %p522 = pnand %p520, %p521
      %p523 = pneg %p522
      // Predicated region
      $region77: #{generator_forward.1} parent=5 // pred_check
        _
      $region78: #{generator_forward.1} parent=5 // pred_check_branch
        %525 = sbr.rel (%p522) target = $region80
      $region79: #{generator_forward.1} parent=5 // pred_region
        %s526 = ssub.s32 %s26, 1
        // Predicated region
        $region81: #{generator_forward.1} parent=79 // pred_check
          %p527 = pneg %p115
        $region82: #{generator_forward.1} parent=79 // pred_check_branch
          %529 = sbr.rel (%p527) target = $region84
        $region83: #{generator_forward.1} parent=79 // pred_region
          %530 = dma.done [#allocation3], 1536
        $region84: #{generator_forward.1} parent=79 // pred_fallthru
          _
        // Predicated region
        $region85: #{generator_forward.1} parent=79 // pred_check
          %p531 = pneg %p136
        $region86: #{generator_forward.1} parent=79 // pred_check_branch
          %533 = sbr.rel (%p531) target = $region88
        $region87: #{generator_forward.1} parent=79 // pred_region
          %534 = dma.done [#allocation5], 8192
        $region88: #{generator_forward.1} parent=79 // pred_fallthru
          _
        // Predicated region
        $region89: #{generator_forward.1} parent=79 // pred_check
          %p535 = pneg %p178
        $region90: #{generator_forward.1} parent=79 // pred_check_branch
          %537 = sbr.rel (%p535) target = $region92
        $region91: #{generator_forward.1} parent=79 // pred_region
          %538 = dma.done [#allocation5], 6144
        $region92: #{generator_forward.1} parent=79 // pred_fallthru
          _
        // Predicated region
        $region93: #{generator_forward.1} parent=79 // pred_check
          %p539 = pneg %p199
        $region94: #{generator_forward.1} parent=79 // pred_check_branch
          %541 = sbr.rel (%p539) target = $region96
        $region95: #{generator_forward.1} parent=79 // pred_region
          %542 = dma.done [#allocation8], 6144
        $region96: #{generator_forward.1} parent=79 // pred_fallthru
          _
        // Predicated region
        $region97: #{generator_forward.1} parent=79 // pred_check
          %p543 = pneg %p220
        $region98: #{generator_forward.1} parent=79 // pred_check_branch
          %545 = sbr.rel (%p543) target = $region100
        $region99: #{generator_forward.1} parent=79 // pred_region
          %546 = dma.done [#allocation8], 2048
        $region100: #{generator_forward.1} parent=79 // pred_fallthru
          _
        // Predicated region
        $region101: #{generator_forward.1} parent=79 // pred_check
          %p547 = pneg %p262
        $region102: #{generator_forward.1} parent=79 // pred_check_branch
          %549 = sbr.rel (%p547) target = $region104
        $region103: #{generator_forward.1} parent=79 // pred_region
          %550 = dma.done [#allocation11], 18432
        $region104: #{generator_forward.1} parent=79 // pred_fallthru
          _
        // Predicated region
        $region105: #{generator_forward.1} parent=79 // pred_check
          %p551 = pneg %p283
        $region106: #{generator_forward.1} parent=79 // pred_check_branch
          %553 = sbr.rel (%p551) target = $region108
        $region107: #{generator_forward.1} parent=79 // pred_region
          %554 = dma.done [#allocation11], 18432
        $region108: #{generator_forward.1} parent=79 // pred_fallthru
          _
        // Predicated region
        $region109: #{generator_forward.1} parent=79 // pred_check
          %p555 = pneg %p346
        $region110: #{generator_forward.1} parent=79 // pred_check_branch
          %557 = sbr.rel (%p555) target = $region112
        $region111: #{generator_forward.1} parent=79 // pred_region
          %558 = dma.done [#allocation14], 73728
        $region112: #{generator_forward.1} parent=79 // pred_fallthru
          _
        %p559 = scmp.lt.s32.totalorder %s31, 1
        %s560 = scalar_select %p559, %s31, 1
        %s561 = smul.addr %s560, 8
        %s562 = scalar_lea.vmem %s0, %s561
        %p563 = pneg %p52
        %p564 = pneg %p49
        %p565 = pneg %p73
        %p566 = pneg %p70
        %p567 = pneg %p94
        %p568 = pneg %p91
        %p569 = pneg %p115
        %p570 = pneg %p112
        %p571 = pneg %p136
        %p572 = pneg %p133
        %p573 = pneg %p157
        %p574 = pneg %p154
        %p575 = pneg %p178
        %p576 = pneg %p175
        %p577 = pneg %p199
        %p578 = pneg %p196
        %p579 = pneg %p220
        %p580 = pneg %p217
        %p581 = pneg %p241
        %p582 = pneg %p238
        %p583 = pneg %p262
        %p584 = pneg %p259
        %p585 = pneg %p283
        %p586 = pneg %p280
        %p587 = pneg %p304
        %p588 = pneg %p301
        %p589 = pneg %p325
        %p590 = pneg %p322
        %p591 = pneg %p346
        %p592 = pneg %p343
        %p593 = pneg %p372
        %p594 = pneg %p369
        %p595 = scmp.lt.s32.totalorder %s31, 1
        %s596 = scalar_select %p595, %s31, 1
        %s597 = smul.addr %s596, 6
        %s598 = smul.addr %s597, 4
        %s599 = scalar_lea.vmem %s15, %s598
        %p600 = scmp.lt.s32.totalorder %s31, 1
        %s601 = scalar_select %p600, %s31, 1
        %s602 = smul.addr %s601, 8
        %s603 = scalar_lea.vmem %s0, %s602
        %p604 = scmp.lt.s32.totalorder %s31, 1
        %s605 = scalar_select %p604, %s31, 1
        %s606 = smul.addr %s605, 6
        %s607 = smul.addr %s606, 4
        %s608 = scalar_lea.vmem %s15, %s607
        %v610 = vld [vmem:[%s603] sm:$0x1f]
        %v611 = vld [vmem:[%s1] sm:$0xff]
        %v612 = vld [vmem:[%s1 + $0x8] sm:$0xff]
        %v613 = vld [vmem:[%s1 + $0x10] sm:$0xff]
        %v614 = vld [vmem:[%s1 + $0x18] sm:$0xff]
        %v615 = vld [vmem:[%s1 + $0x20] sm:$0xff]
        %v616 = vld [vmem:[%s1 + $0x28] sm:$0xff]
        %v617 = vld [vmem:[%s1 + $0x30] sm:$0xff]
        %v618 = vld [vmem:[%s1 + $0x38] sm:$0xff]
        %v619 = vld [vmem:[%s1 + $0x40] sm:$0xff]
        %v620 = vld [vmem:[%s1 + $0x48] sm:$0xff]
        %v621 = vld [vmem:[%s1 + $0x50] sm:$0xff]
        %v622 = vld [vmem:[%s1 + $0x58] sm:$0xff]
        %v623 = vld [vmem:[%s1 + $0x60] sm:$0xff]
        %v624 = vld [vmem:[%s1 + $0x68] sm:$0xff]
        %v625 = vld [vmem:[%s1 + $0x70] sm:$0xff]
        %v626 = vld [vmem:[%s1 + $0x78] sm:$0xff]
        %v627 = vld [vmem:[%s1 + $0x80] sm:$0xff]
        %v628 = vld [vmem:[%s1 + $0x88] sm:$0xff]
        %v629 = vld [vmem:[%s1 + $0x90] sm:$0xff]
        %v630 = vld [vmem:[%s1 + $0x98] sm:$0xff]
        %v631 = vld [vmem:[%s1 + $0xa0] sm:$0xff]
        %v632 = vld [vmem:[%s1 + $0xa8] sm:$0xff]
        %v633 = vld [vmem:[%s1 + $0xb0] sm:$0xff]
        %v634 = vld [vmem:[%s1 + $0xb8] sm:$0xff]
        %v635 = vld [vmem:[%s1 + $0xc0] sm:$0xff]
        %v636 = vld [vmem:[%s1 + $0xc8] sm:$0xff]
        %v637 = vld [vmem:[%s1 + $0xd0] sm:$0xff]
        %v638 = vld [vmem:[%s1 + $0xd8] sm:$0xff]
        %v639 = vld [vmem:[%s1 + $0xe0] sm:$0xff]
        %v640 = vld [vmem:[%s1 + $0xe8] sm:$0xff]
        %v641 = vld [vmem:[%s1 + $0xf0] sm:$0xff]
        %v642 = vld [vmem:[%s1 + $0xf8] sm:$0xff]
        %v643 = vlaneseq
        %v644 = vshrl.u32 %v643, 7
        %v645 = vsub.s32 0, %v644
        %v646 = vrot.slane %v610, %v645
        %v647 = vmul.f32 %v646, %v611
        %v648 = vmul.f32 %v646, %v612
        %v649 = vmul.f32 %v646, %v613
        %v650 = vmul.f32 %v646, %v614
        %v651 = vmul.f32 %v646, %v615
        %v652 = vmul.f32 %v646, %v616
        %v653 = vmul.f32 %v646, %v617
        %v654 = vmul.f32 %v646, %v618
        %v655 = vmul.f32 %v646, %v619
        %v656 = vmul.f32 %v646, %v620
        %v657 = vmul.f32 %v646, %v621
        %v658 = vmul.f32 %v646, %v622
        %v659 = vmul.f32 %v646, %v623
        %v660 = vmul.f32 %v646, %v624
        %v661 = vmul.f32 %v646, %v625
        %v662 = vmul.f32 %v646, %v626
        %v663 = vmul.f32 %v646, %v627
        %v664 = vmul.f32 %v646, %v628
        %v665 = vmul.f32 %v646, %v629
        %v666 = vmul.f32 %v646, %v630
        %v667 = vmul.f32 %v646, %v631
        %v668 = vmul.f32 %v646, %v632
        %v669 = vmul.f32 %v646, %v633
        %v670 = vmul.f32 %v646, %v634
        %v671 = vmul.f32 %v646, %v635
        %v672 = vmul.f32 %v646, %v636
        %v673 = vmul.f32 %v646, %v637
        %v674 = vmul.f32 %v646, %v638
        %v675 = vmul.f32 %v646, %v639
        %v676 = vmul.f32 %v646, %v640
        %v677 = vmul.f32 %v646, %v641
        %v678 = vmul.f32 %v646, %v642
        %s679 = scalar_lea.vmem %s1, 256
        %v680 = vld [vmem:[%s679] sm:$0xff]
        %v681 = vld [vmem:[%s679 + $0x8] sm:$0xff]
        %v682 = vld [vmem:[%s679 + $0x10] sm:$0xff]
        %v683 = vld [vmem:[%s679 + $0x18] sm:$0xff]
        %v684 = vld [vmem:[%s679 + $0x20] sm:$0xff]
        %v685 = vld [vmem:[%s679 + $0x28] sm:$0xff]
        %v686 = vld [vmem:[%s679 + $0x30] sm:$0xff]
        %v687 = vld [vmem:[%s679 + $0x38] sm:$0xff]
        %v688 = vld [vmem:[%s679 + $0x40] sm:$0xff]
        %v689 = vld [vmem:[%s679 + $0x48] sm:$0xff]
        %v690 = vld [vmem:[%s679 + $0x50] sm:$0xff]
        %v691 = vld [vmem:[%s679 + $0x58] sm:$0xff]
        %v692 = vld [vmem:[%s679 + $0x60] sm:$0xff]
        %v693 = vld [vmem:[%s679 + $0x68] sm:$0xff]
        %v694 = vld [vmem:[%s679 + $0x70] sm:$0xff]
        %v695 = vld [vmem:[%s679 + $0x78] sm:$0xff]
        %v696 = vld [vmem:[%s679 + $0x80] sm:$0xff]
        %v697 = vld [vmem:[%s679 + $0x88] sm:$0xff]
        %v698 = vld [vmem:[%s679 + $0x90] sm:$0xff]
        %v699 = vld [vmem:[%s679 + $0x98] sm:$0xff]
        %v700 = vld [vmem:[%s679 + $0xa0] sm:$0xff]
        %v701 = vld [vmem:[%s679 + $0xa8] sm:$0xff]
        %v702 = vld [vmem:[%s679 + $0xb0] sm:$0xff]
        %v703 = vld [vmem:[%s679 + $0xb8] sm:$0xff]
        %v704 = vld [vmem:[%s679 + $0xc0] sm:$0xff]
        %v705 = vld [vmem:[%s679 + $0xc8] sm:$0xff]
        %v706 = vld [vmem:[%s679 + $0xd0] sm:$0xff]
        %v707 = vld [vmem:[%s679 + $0xd8] sm:$0xff]
        %v708 = vld [vmem:[%s679 + $0xe0] sm:$0xff]
        %v709 = vld [vmem:[%s679 + $0xe8] sm:$0xff]
        %v710 = vld [vmem:[%s679 + $0xf0] sm:$0xff]
        %v711 = vld [vmem:[%s679 + $0xf8] sm:$0xff]
        %v712 = vlaneseq
        %v713 = vshrl.u32 %v712, 7
        %v714 = vsub.s32 1, %v713
        %v715 = vrot.slane %v610, %v714
        %v716 = vmul.f32 %v715, %v680
        %v717 = vmul.f32 %v715, %v681
        %v718 = vmul.f32 %v715, %v682
        %v719 = vmul.f32 %v715, %v683
        %v720 = vmul.f32 %v715, %v684
        %v721 = vmul.f32 %v715, %v685
        %v722 = vmul.f32 %v715, %v686
        %v723 = vmul.f32 %v715, %v687
        %v724 = vmul.f32 %v715, %v688
        %v725 = vmul.f32 %v715, %v689
        %v726 = vmul.f32 %v715, %v690
        %v727 = vmul.f32 %v715, %v691
        %v728 = vmul.f32 %v715, %v692
        %v729 = vmul.f32 %v715, %v693
        %v730 = vmul.f32 %v715, %v694
        %v731 = vmul.f32 %v715, %v695
        %v732 = vmul.f32 %v715, %v696
        %v733 = vmul.f32 %v715, %v697
        %v734 = vmul.f32 %v715, %v698
        %v735 = vmul.f32 %v715, %v699
        %v736 = vmul.f32 %v715, %v700
        %v737 = vmul.f32 %v715, %v701
        %v738 = vmul.f32 %v715, %v702
        %v739 = vmul.f32 %v715, %v703
        %v740 = vmul.f32 %v715, %v704
        %v741 = vmul.f32 %v715, %v705
        %v742 = vmul.f32 %v715, %v706
        %v743 = vmul.f32 %v715, %v707
        %v744 = vmul.f32 %v715, %v708
        %v745 = vmul.f32 %v715, %v709
        %v746 = vmul.f32 %v715, %v710
        %v747 = vmul.f32 %v715, %v711
        %v748 = vadd.f32 %v647, %v716
        %v749 = vadd.f32 %v648, %v717
        %v750 = vadd.f32 %v649, %v718
        %v751 = vadd.f32 %v650, %v719
        %v752 = vadd.f32 %v651, %v720
        %v753 = vadd.f32 %v652, %v721
        %v754 = vadd.f32 %v653, %v722
        %v755 = vadd.f32 %v654, %v723
        %v756 = vadd.f32 %v655, %v724
        %v757 = vadd.f32 %v656, %v725
        %v758 = vadd.f32 %v657, %v726
        %v759 = vadd.f32 %v658, %v727
        %v760 = vadd.f32 %v659, %v728
        %v761 = vadd.f32 %v660, %v729
        %v762 = vadd.f32 %v661, %v730
        %v763 = vadd.f32 %v662, %v731
        %v764 = vadd.f32 %v663, %v732
        %v765 = vadd.f32 %v664, %v733
        %v766 = vadd.f32 %v665, %v734
        %v767 = vadd.f32 %v666, %v735
        %v768 = vadd.f32 %v667, %v736
        %v769 = vadd.f32 %v668, %v737
        %v770 = vadd.f32 %v669, %v738
        %v771 = vadd.f32 %v670, %v739
        %v772 = vadd.f32 %v671, %v740
        %v773 = vadd.f32 %v672, %v741
        %v774 = vadd.f32 %v673, %v742
        %v775 = vadd.f32 %v674, %v743
        %v776 = vadd.f32 %v675, %v744
        %v777 = vadd.f32 %v676, %v745
        %v778 = vadd.f32 %v677, %v746
        %v779 = vadd.f32 %v678, %v747
        %s780 = scalar_lea.vmem %s1, 512
        %v781 = vld [vmem:[%s780] sm:$0xff]
        %v782 = vld [vmem:[%s780 + $0x8] sm:$0xff]
        %v783 = vld [vmem:[%s780 + $0x10] sm:$0xff]
        %v784 = vld [vmem:[%s780 + $0x18] sm:$0xff]
        %v785 = vld [vmem:[%s780 + $0x20] sm:$0xff]
        %v786 = vld [vmem:[%s780 + $0x28] sm:$0xff]
        %v787 = vld [vmem:[%s780 + $0x30] sm:$0xff]
        %v788 = vld [vmem:[%s780 + $0x38] sm:$0xff]
        %v789 = vld [vmem:[%s780 + $0x40] sm:$0xff]
        %v790 = vld [vmem:[%s780 + $0x48] sm:$0xff]
        %v791 = vld [vmem:[%s780 + $0x50] sm:$0xff]
        %v792 = vld [vmem:[%s780 + $0x58] sm:$0xff]
        %v793 = vld [vmem:[%s780 + $0x60] sm:$0xff]
        %v794 = vld [vmem:[%s780 + $0x68] sm:$0xff]
        %v795 = vld [vmem:[%s780 + $0x70] sm:$0xff]
        %v796 = vld [vmem:[%s780 + $0x78] sm:$0xff]
        %v797 = vld [vmem:[%s780 + $0x80] sm:$0xff]
        %v798 = vld [vmem:[%s780 + $0x88] sm:$0xff]
        %v799 = vld [vmem:[%s780 + $0x90] sm:$0xff]
        %v800 = vld [vmem:[%s780 + $0x98] sm:$0xff]
        %v801 = vld [vmem:[%s780 + $0xa0] sm:$0xff]
        %v802 = vld [vmem:[%s780 + $0xa8] sm:$0xff]
        %v803 = vld [vmem:[%s780 + $0xb0] sm:$0xff]
        %v804 = vld [vmem:[%s780 + $0xb8] sm:$0xff]
        %v805 = vld [vmem:[%s780 + $0xc0] sm:$0xff]
        %v806 = vld [vmem:[%s780 + $0xc8] sm:$0xff]
        %v807 = vld [vmem:[%s780 + $0xd0] sm:$0xff]
        %v808 = vld [vmem:[%s780 + $0xd8] sm:$0xff]
        %v809 = vld [vmem:[%s780 + $0xe0] sm:$0xff]
        %v810 = vld [vmem:[%s780 + $0xe8] sm:$0xff]
        %v811 = vld [vmem:[%s780 + $0xf0] sm:$0xff]
        %v812 = vld [vmem:[%s780 + $0xf8] sm:$0xff]
        %v813 = vlaneseq
        %v814 = vshrl.u32 %v813, 7
        %v815 = vsub.s32 2, %v814
        %v816 = vrot.slane %v610, %v815
        %v817 = vmul.f32 %v816, %v781
        %v818 = vmul.f32 %v816, %v782
        %v819 = vmul.f32 %v816, %v783
        %v820 = vmul.f32 %v816, %v784
        %v821 = vmul.f32 %v816, %v785
        %v822 = vmul.f32 %v816, %v786
        %v823 = vmul.f32 %v816, %v787
        %v824 = vmul.f32 %v816, %v788
        %v825 = vmul.f32 %v816, %v789
        %v826 = vmul.f32 %v816, %v790
        %v827 = vmul.f32 %v816, %v791
        %v828 = vmul.f32 %v816, %v792
        %v829 = vmul.f32 %v816, %v793
        %v830 = vmul.f32 %v816, %v794
        %v831 = vmul.f32 %v816, %v795
        %v832 = vmul.f32 %v816, %v796
        %v833 = vmul.f32 %v816, %v797
        %v834 = vmul.f32 %v816, %v798
        %v835 = vmul.f32 %v816, %v799
        %v836 = vmul.f32 %v816, %v800
        %v837 = vmul.f32 %v816, %v801
        %v838 = vmul.f32 %v816, %v802
        %v839 = vmul.f32 %v816, %v803
        %v840 = vmul.f32 %v816, %v804
        %v841 = vmul.f32 %v816, %v805
        %v842 = vmul.f32 %v816, %v806
        %v843 = vmul.f32 %v816, %v807
        %v844 = vmul.f32 %v816, %v808
        %v845 = vmul.f32 %v816, %v809
        %v846 = vmul.f32 %v816, %v810
        %v847 = vmul.f32 %v816, %v811
        %v848 = vmul.f32 %v816, %v812
        %v849 = vadd.f32 %v748, %v817
        %v850 = vadd.f32 %v749, %v818
        %v851 = vadd.f32 %v750, %v819
        %v852 = vadd.f32 %v751, %v820
        %v853 = vadd.f32 %v752, %v821
        %v854 = vadd.f32 %v753, %v822
        %v855 = vadd.f32 %v754, %v823
        %v856 = vadd.f32 %v755, %v824
        %v857 = vadd.f32 %v756, %v825
        %v858 = vadd.f32 %v757, %v826
        %v859 = vadd.f32 %v758, %v827
        %v860 = vadd.f32 %v759, %v828
        %v861 = vadd.f32 %v760, %v829
        %v862 = vadd.f32 %v761, %v830
        %v863 = vadd.f32 %v762, %v831
        %v864 = vadd.f32 %v763, %v832
        %v865 = vadd.f32 %v764, %v833
        %v866 = vadd.f32 %v765, %v834
        %v867 = vadd.f32 %v766, %v835
        %v868 = vadd.f32 %v767, %v836
        %v869 = vadd.f32 %v768, %v837
        %v870 = vadd.f32 %v769, %v838
        %v871 = vadd.f32 %v770, %v839
        %v872 = vadd.f32 %v771, %v840
        %v873 = vadd.f32 %v772, %v841
        %v874 = vadd.f32 %v773, %v842
        %v875 = vadd.f32 %v774, %v843
        %v876 = vadd.f32 %v775, %v844
        %v877 = vadd.f32 %v776, %v845
        %v878 = vadd.f32 %v777, %v846
        %v879 = vadd.f32 %v778, %v847
        %v880 = vadd.f32 %v779, %v848
        %s881 = scalar_lea.vmem %s1, 768
        %v882 = vld [vmem:[%s881] sm:$0xff]
        %v883 = vld [vmem:[%s881 + $0x8] sm:$0xff]
        %v884 = vld [vmem:[%s881 + $0x10] sm:$0xff]
        %v885 = vld [vmem:[%s881 + $0x18] sm:$0xff]
        %v886 = vld [vmem:[%s881 + $0x20] sm:$0xff]
        %v887 = vld [vmem:[%s881 + $0x28] sm:$0xff]
        %v888 = vld [vmem:[%s881 + $0x30] sm:$0xff]
        %v889 = vld [vmem:[%s881 + $0x38] sm:$0xff]
        %v890 = vld [vmem:[%s881 + $0x40] sm:$0xff]
        %v891 = vld [vmem:[%s881 + $0x48] sm:$0xff]
        %v892 = vld [vmem:[%s881 + $0x50] sm:$0xff]
        %v893 = vld [vmem:[%s881 + $0x58] sm:$0xff]
        %v894 = vld [vmem:[%s881 + $0x60] sm:$0xff]
        %v895 = vld [vmem:[%s881 + $0x68] sm:$0xff]
        %v896 = vld [vmem:[%s881 + $0x70] sm:$0xff]
        %v897 = vld [vmem:[%s881 + $0x78] sm:$0xff]
        %v898 = vld [vmem:[%s881 + $0x80] sm:$0xff]
        %v899 = vld [vmem:[%s881 + $0x88] sm:$0xff]
        %v900 = vld [vmem:[%s881 + $0x90] sm:$0xff]
        %v901 = vld [vmem:[%s881 + $0x98] sm:$0xff]
        %v902 = vld [vmem:[%s881 + $0xa0] sm:$0xff]
        %v903 = vld [vmem:[%s881 + $0xa8] sm:$0xff]
        %v904 = vld [vmem:[%s881 + $0xb0] sm:$0xff]
        %v905 = vld [vmem:[%s881 + $0xb8] sm:$0xff]
        %v906 = vld [vmem:[%s881 + $0xc0] sm:$0xff]
        %v907 = vld [vmem:[%s881 + $0xc8] sm:$0xff]
        %v908 = vld [vmem:[%s881 + $0xd0] sm:$0xff]
        %v909 = vld [vmem:[%s881 + $0xd8] sm:$0xff]
        %v910 = vld [vmem:[%s881 + $0xe0] sm:$0xff]
        %v911 = vld [vmem:[%s881 + $0xe8] sm:$0xff]
        %v912 = vld [vmem:[%s881 + $0xf0] sm:$0xff]
        %v913 = vld [vmem:[%s881 + $0xf8] sm:$0xff]
        %v914 = vlaneseq
        %v915 = vshrl.u32 %v914, 7
        %v916 = vsub.s32 3, %v915
        %v917 = vrot.slane %v610, %v916
        %v918 = vmul.f32 %v917, %v882
        %v919 = vmul.f32 %v917, %v883
        %v920 = vmul.f32 %v917, %v884
        %v921 = vmul.f32 %v917, %v885
        %v922 = vmul.f32 %v917, %v886
        %v923 = vmul.f32 %v917, %v887
        %v924 = vmul.f32 %v917, %v888
        %v925 = vmul.f32 %v917, %v889
        %v926 = vmul.f32 %v917, %v890
        %v927 = vmul.f32 %v917, %v891
        %v928 = vmul.f32 %v917, %v892
        %v929 = vmul.f32 %v917, %v893
        %v930 = vmul.f32 %v917, %v894
        %v931 = vmul.f32 %v917, %v895
        %v932 = vmul.f32 %v917, %v896
        %v933 = vmul.f32 %v917, %v897
        %v934 = vmul.f32 %v917, %v898
        %v935 = vmul.f32 %v917, %v899
        %v936 = vmul.f32 %v917, %v900
        %v937 = vmul.f32 %v917, %v901
        %v938 = vmul.f32 %v917, %v902
        %v939 = vmul.f32 %v917, %v903
        %v940 = vmul.f32 %v917, %v904
        %v941 = vmul.f32 %v917, %v905
        %v942 = vmul.f32 %v917, %v906
        %v943 = vmul.f32 %v917, %v907
        %v944 = vmul.f32 %v917, %v908
        %v945 = vmul.f32 %v917, %v909
        %v946 = vmul.f32 %v917, %v910
        %v947 = vmul.f32 %v917, %v911
        %v948 = vmul.f32 %v917, %v912
        %v949 = vmul.f32 %v917, %v913
        %v950 = vadd.f32 %v849, %v918
        %v951 = vadd.f32 %v850, %v919
        %v952 = vadd.f32 %v851, %v920
        %v953 = vadd.f32 %v852, %v921
        %v954 = vadd.f32 %v853, %v922
        %v955 = vadd.f32 %v854, %v923
        %v956 = vadd.f32 %v855, %v924
        %v957 = vadd.f32 %v856, %v925
        %v958 = vadd.f32 %v857, %v926
        %v959 = vadd.f32 %v858, %v927
        %v960 = vadd.f32 %v859, %v928
        %v961 = vadd.f32 %v860, %v929
        %v962 = vadd.f32 %v861, %v930
        %v963 = vadd.f32 %v862, %v931
        %v964 = vadd.f32 %v863, %v932
        %v965 = vadd.f32 %v864, %v933
        %v966 = vadd.f32 %v865, %v934
        %v967 = vadd.f32 %v866, %v935
        %v968 = vadd.f32 %v867, %v936
        %v969 = vadd.f32 %v868, %v937
        %v970 = vadd.f32 %v869, %v938
        %v971 = vadd.f32 %v870, %v939
        %v972 = vadd.f32 %v871, %v940
        %v973 = vadd.f32 %v872, %v941
        %v974 = vadd.f32 %v873, %v942
        %v975 = vadd.f32 %v874, %v943
        %v976 = vadd.f32 %v875, %v944
        %v977 = vadd.f32 %v876, %v945
        %v978 = vadd.f32 %v877, %v946
        %v979 = vadd.f32 %v878, %v947
        %v980 = vadd.f32 %v879, %v948
        %v981 = vadd.f32 %v880, %v949
        %s982 = scalar_lea.vmem %s1, 1024
        %v983 = vld [vmem:[%s982] sm:$0xff]
        %v984 = vld [vmem:[%s982 + $0x8] sm:$0xff]
        %v985 = vld [vmem:[%s982 + $0x10] sm:$0xff]
        %v986 = vld [vmem:[%s982 + $0x18] sm:$0xff]
        %v987 = vld [vmem:[%s982 + $0x20] sm:$0xff]
        %v988 = vld [vmem:[%s982 + $0x28] sm:$0xff]
        %v989 = vld [vmem:[%s982 + $0x30] sm:$0xff]
        %v990 = vld [vmem:[%s982 + $0x38] sm:$0xff]
        %v991 = vld [vmem:[%s982 + $0x40] sm:$0xff]
        %v992 = vld [vmem:[%s982 + $0x48] sm:$0xff]
        %v993 = vld [vmem:[%s982 + $0x50] sm:$0xff]
        %v994 = vld [vmem:[%s982 + $0x58] sm:$0xff]
        %v995 = vld [vmem:[%s982 + $0x60] sm:$0xff]
        %v996 = vld [vmem:[%s982 + $0x68] sm:$0xff]
        %v997 = vld [vmem:[%s982 + $0x70] sm:$0xff]
        %v998 = vld [vmem:[%s982 + $0x78] sm:$0xff]
        %v999 = vld [vmem:[%s982 + $0x80] sm:$0xff]
        %v1000 = vld [vmem:[%s982 + $0x88] sm:$0xff]
        %v1001 = vld [vmem:[%s982 + $0x90] sm:$0xff]
        %v1002 = vld [vmem:[%s982 + $0x98] sm:$0xff]
        %v1003 = vld [vmem:[%s982 + $0xa0] sm:$0xff]
        %v1004 = vld [vmem:[%s982 + $0xa8] sm:$0xff]
        %v1005 = vld [vmem:[%s982 + $0xb0] sm:$0xff]
        %v1006 = vld [vmem:[%s982 + $0xb8] sm:$0xff]
        %v1007 = vld [vmem:[%s982 + $0xc0] sm:$0xff]
        %v1008 = vld [vmem:[%s982 + $0xc8] sm:$0xff]
        %v1009 = vld [vmem:[%s982 + $0xd0] sm:$0xff]
        %v1010 = vld [vmem:[%s982 + $0xd8] sm:$0xff]
        %v1011 = vld [vmem:[%s982 + $0xe0] sm:$0xff]
        %v1012 = vld [vmem:[%s982 + $0xe8] sm:$0xff]
        %v1013 = vld [vmem:[%s982 + $0xf0] sm:$0xff]
        %v1014 = vld [vmem:[%s982 + $0xf8] sm:$0xff]
        %v1015 = vlaneseq
        %v1016 = vshrl.u32 %v1015, 7
        %v1017 = vsub.s32 4, %v1016
        %v1018 = vrot.slane %v610, %v1017
        %v1019 = vmul.f32 %v1018, %v983
        %v1020 = vmul.f32 %v1018, %v984
        %v1021 = vmul.f32 %v1018, %v985
        %v1022 = vmul.f32 %v1018, %v986
        %v1023 = vmul.f32 %v1018, %v987
        %v1024 = vmul.f32 %v1018, %v988
        %v1025 = vmul.f32 %v1018, %v989
        %v1026 = vmul.f32 %v1018, %v990
        %v1027 = vmul.f32 %v1018, %v991
        %v1028 = vmul.f32 %v1018, %v992
        %v1029 = vmul.f32 %v1018, %v993
        %v1030 = vmul.f32 %v1018, %v994
        %v1031 = vmul.f32 %v1018, %v995
        %v1032 = vmul.f32 %v1018, %v996
        %v1033 = vmul.f32 %v1018, %v997
        %v1034 = vmul.f32 %v1018, %v998
        %v1035 = vmul.f32 %v1018, %v999
        %v1036 = vmul.f32 %v1018, %v1000
        %v1037 = vmul.f32 %v1018, %v1001
        %v1038 = vmul.f32 %v1018, %v1002
        %v1039 = vmul.f32 %v1018, %v1003
        %v1040 = vmul.f32 %v1018, %v1004
        %v1041 = vmul.f32 %v1018, %v1005
        %v1042 = vmul.f32 %v1018, %v1006
        %v1043 = vmul.f32 %v1018, %v1007
        %v1044 = vmul.f32 %v1018, %v1008
        %v1045 = vmul.f32 %v1018, %v1009
        %v1046 = vmul.f32 %v1018, %v1010
        %v1047 = vmul.f32 %v1018, %v1011
        %v1048 = vmul.f32 %v1018, %v1012
        %v1049 = vmul.f32 %v1018, %v1013
        %v1050 = vmul.f32 %v1018, %v1014
        %v1051 = vadd.f32 %v950, %v1019
        %v1052 = vadd.f32 %v951, %v1020
        %v1053 = vadd.f32 %v952, %v1021
        %v1054 = vadd.f32 %v953, %v1022
        %v1055 = vadd.f32 %v954, %v1023
        %v1056 = vadd.f32 %v955, %v1024
        %v1057 = vadd.f32 %v956, %v1025
        %v1058 = vadd.f32 %v957, %v1026
        %v1059 = vadd.f32 %v958, %v1027
        %v1060 = vadd.f32 %v959, %v1028
        %v1061 = vadd.f32 %v960, %v1029
        %v1062 = vadd.f32 %v961, %v1030
        %v1063 = vadd.f32 %v962, %v1031
        %v1064 = vadd.f32 %v963, %v1032
        %v1065 = vadd.f32 %v964, %v1033
        %v1066 = vadd.f32 %v965, %v1034
        %v1067 = vadd.f32 %v966, %v1035
        %v1068 = vadd.f32 %v967, %v1036
        %v1069 = vadd.f32 %v968, %v1037
        %v1070 = vadd.f32 %v969, %v1038
        %v1071 = vadd.f32 %v970, %v1039
        %v1072 = vadd.f32 %v971, %v1040
        %v1073 = vadd.f32 %v972, %v1041
        %v1074 = vadd.f32 %v973, %v1042
        %v1075 = vadd.f32 %v974, %v1043
        %v1076 = vadd.f32 %v975, %v1044
        %v1077 = vadd.f32 %v976, %v1045
        %v1078 = vadd.f32 %v977, %v1046
        %v1079 = vadd.f32 %v978, %v1047
        %v1080 = vadd.f32 %v979, %v1048
        %v1081 = vadd.f32 %v980, %v1049
        %v1082 = vadd.f32 %v981, %v1050
        %v1083 = vld [vmem:[%s2] sm:$0xff]
        %v1084 = vld [vmem:[%s2 + $0x8] sm:$0xff]
        %v1085 = vld [vmem:[%s2 + $0x10] sm:$0xff]
        %v1086 = vld [vmem:[%s2 + $0x18] sm:$0xff]
        %v1087 = vld [vmem:[%s2 + $0x20] sm:$0xff]
        %v1088 = vld [vmem:[%s2 + $0x28] sm:$0xff]
        %v1089 = vld [vmem:[%s2 + $0x30] sm:$0xff]
        %v1090 = vld [vmem:[%s2 + $0x38] sm:$0xff]
        %v1091 = vld [vmem:[%s2 + $0x40] sm:$0xff]
        %v1092 = vld [vmem:[%s2 + $0x48] sm:$0xff]
        %v1093 = vld [vmem:[%s2 + $0x50] sm:$0xff]
        %v1094 = vld [vmem:[%s2 + $0x58] sm:$0xff]
        %v1095 = vld [vmem:[%s2 + $0x60] sm:$0xff]
        %v1096 = vld [vmem:[%s2 + $0x68] sm:$0xff]
        %v1097 = vld [vmem:[%s2 + $0x70] sm:$0xff]
        %v1098 = vld [vmem:[%s2 + $0x78] sm:$0xff]
        %v1099 = vld [vmem:[%s2 + $0x80] sm:$0xff]
        %v1100 = vld [vmem:[%s2 + $0x88] sm:$0xff]
        %v1101 = vld [vmem:[%s2 + $0x90] sm:$0xff]
        %v1102 = vld [vmem:[%s2 + $0x98] sm:$0xff]
        %v1103 = vld [vmem:[%s2 + $0xa0] sm:$0xff]
        %v1104 = vld [vmem:[%s2 + $0xa8] sm:$0xff]
        %v1105 = vld [vmem:[%s2 + $0xb0] sm:$0xff]
        %v1106 = vld [vmem:[%s2 + $0xb8] sm:$0xff]
        %v1107 = vld [vmem:[%s2 + $0xc0] sm:$0xff]
        %v1108 = vld [vmem:[%s2 + $0xc8] sm:$0xff]
        %v1109 = vld [vmem:[%s2 + $0xd0] sm:$0xff]
        %v1110 = vld [vmem:[%s2 + $0xd8] sm:$0xff]
        %v1111 = vld [vmem:[%s2 + $0xe0] sm:$0xff]
        %v1112 = vld [vmem:[%s2 + $0xe8] sm:$0xff]
        %v1113 = vld [vmem:[%s2 + $0xf0] sm:$0xff]
        %v1114 = vld [vmem:[%s2 + $0xf8] sm:$0xff]
        %1116 = vset.pattern.permute.xlu0 0
        %1117 = vperm.xlu0 %1116, %v1083
        %v1118 = vpop.permute.xlu0 %1117
        %1121 = vset.pattern.permute.xlu0 0
        %1122 = vperm.xlu0 %1121, %v1084
        %v1123 = vpop.permute.xlu0 %1122
        %1126 = vset.pattern.permute.xlu0 0
        %1127 = vperm.xlu0 %1126, %v1085
        %v1128 = vpop.permute.xlu0 %1127
        %1131 = vset.pattern.permute.xlu0 0
        %1132 = vperm.xlu0 %1131, %v1086
        %v1133 = vpop.permute.xlu0 %1132
        %1136 = vset.pattern.permute.xlu0 0
        %1137 = vperm.xlu0 %1136, %v1087
        %v1138 = vpop.permute.xlu0 %1137
        %1141 = vset.pattern.permute.xlu0 0
        %1142 = vperm.xlu0 %1141, %v1088
        %v1143 = vpop.permute.xlu0 %1142
        %1146 = vset.pattern.permute.xlu0 0
        %1147 = vperm.xlu0 %1146, %v1089
        %v1148 = vpop.permute.xlu0 %1147
        %1151 = vset.pattern.permute.xlu0 0
        %1152 = vperm.xlu0 %1151, %v1090
        %v1153 = vpop.permute.xlu0 %1152
        %1156 = vset.pattern.permute.xlu0 0
        %1157 = vperm.xlu0 %1156, %v1091
        %v1158 = vpop.permute.xlu0 %1157
        %1161 = vset.pattern.permute.xlu0 0
        %1162 = vperm.xlu0 %1161, %v1092
        %v1163 = vpop.permute.xlu0 %1162
        %1166 = vset.pattern.permute.xlu0 0
        %1167 = vperm.xlu0 %1166, %v1093
        %v1168 = vpop.permute.xlu0 %1167
        %1171 = vset.pattern.permute.xlu0 0
        %1172 = vperm.xlu0 %1171, %v1094
        %v1173 = vpop.permute.xlu0 %1172
        %1176 = vset.pattern.permute.xlu0 0
        %1177 = vperm.xlu0 %1176, %v1095
        %v1178 = vpop.permute.xlu0 %1177
        %1181 = vset.pattern.permute.xlu0 0
        %1182 = vperm.xlu0 %1181, %v1096
        %v1183 = vpop.permute.xlu0 %1182
        %1186 = vset.pattern.permute.xlu0 0
        %1187 = vperm.xlu0 %1186, %v1097
        %v1188 = vpop.permute.xlu0 %1187
        %1191 = vset.pattern.permute.xlu0 0
        %1192 = vperm.xlu0 %1191, %v1098
        %v1193 = vpop.permute.xlu0 %1192
        %1196 = vset.pattern.permute.xlu0 0
        %1197 = vperm.xlu0 %1196, %v1099
        %v1198 = vpop.permute.xlu0 %1197
        %1201 = vset.pattern.permute.xlu0 0
        %1202 = vperm.xlu0 %1201, %v1100
        %v1203 = vpop.permute.xlu0 %1202
        %1206 = vset.pattern.permute.xlu0 0
        %1207 = vperm.xlu0 %1206, %v1101
        %v1208 = vpop.permute.xlu0 %1207
        %1211 = vset.pattern.permute.xlu0 0
        %1212 = vperm.xlu0 %1211, %v1102
        %v1213 = vpop.permute.xlu0 %1212
        %1216 = vset.pattern.permute.xlu0 0
        %1217 = vperm.xlu0 %1216, %v1103
        %v1218 = vpop.permute.xlu0 %1217
        %1221 = vset.pattern.permute.xlu0 0
        %1222 = vperm.xlu0 %1221, %v1104
        %v1223 = vpop.permute.xlu0 %1222
        %1226 = vset.pattern.permute.xlu0 0
        %1227 = vperm.xlu0 %1226, %v1105
        %v1228 = vpop.permute.xlu0 %1227
        %1231 = vset.pattern.permute.xlu0 0
        %1232 = vperm.xlu0 %1231, %v1106
        %v1233 = vpop.permute.xlu0 %1232
        %1236 = vset.pattern.permute.xlu0 0
        %1237 = vperm.xlu0 %1236, %v1107
        %v1238 = vpop.permute.xlu0 %1237
        %1241 = vset.pattern.permute.xlu0 0
        %1242 = vperm.xlu0 %1241, %v1108
        %v1243 = vpop.permute.xlu0 %1242
        %1246 = vset.pattern.permute.xlu0 0
        %1247 = vperm.xlu0 %1246, %v1109
        %v1248 = vpop.permute.xlu0 %1247
        %1251 = vset.pattern.permute.xlu0 0
        %1252 = vperm.xlu0 %1251, %v1110
        %v1253 = vpop.permute.xlu0 %1252
        %1256 = vset.pattern.permute.xlu0 0
        %1257 = vperm.xlu0 %1256, %v1111
        %v1258 = vpop.permute.xlu0 %1257
        %1261 = vset.pattern.permute.xlu0 0
        %1262 = vperm.xlu0 %1261, %v1112
        %v1263 = vpop.permute.xlu0 %1262
        %1266 = vset.pattern.permute.xlu0 0
        %1267 = vperm.xlu0 %1266, %v1113
        %v1268 = vpop.permute.xlu0 %1267
        %1271 = vset.pattern.permute.xlu0 0
        %1272 = vperm.xlu0 %1271, %v1114
        %v1273 = vpop.permute.xlu0 %1272
        %v1275 = vadd.f32 %v1051, %v1118
        %v1276 = vadd.f32 %v1052, %v1123
        %v1277 = vadd.f32 %v1053, %v1128
        %v1278 = vadd.f32 %v1054, %v1133
        %v1279 = vadd.f32 %v1055, %v1138
        %v1280 = vadd.f32 %v1056, %v1143
        %v1281 = vadd.f32 %v1057, %v1148
        %v1282 = vadd.f32 %v1058, %v1153
        %v1283 = vadd.f32 %v1059, %v1158
        %v1284 = vadd.f32 %v1060, %v1163
        %v1285 = vadd.f32 %v1061, %v1168
        %v1286 = vadd.f32 %v1062, %v1173
        %v1287 = vadd.f32 %v1063, %v1178
        %v1288 = vadd.f32 %v1064, %v1183
        %v1289 = vadd.f32 %v1065, %v1188
        %v1290 = vadd.f32 %v1066, %v1193
        %v1291 = vadd.f32 %v1067, %v1198
        %v1292 = vadd.f32 %v1068, %v1203
        %v1293 = vadd.f32 %v1069, %v1208
        %v1294 = vadd.f32 %v1070, %v1213
        %v1295 = vadd.f32 %v1071, %v1218
        %v1296 = vadd.f32 %v1072, %v1223
        %v1297 = vadd.f32 %v1073, %v1228
        %v1298 = vadd.f32 %v1074, %v1233
        %v1299 = vadd.f32 %v1075, %v1238
        %v1300 = vadd.f32 %v1076, %v1243
        %v1301 = vadd.f32 %v1077, %v1248
        %v1302 = vadd.f32 %v1078, %v1253
        %v1303 = vadd.f32 %v1079, %v1258
        %v1304 = vadd.f32 %v1080, %v1263
        %v1305 = vadd.f32 %v1081, %v1268
        %v1306 = vadd.f32 %v1082, %v1273
        %vm1307 = vcmask 785408
        %v1308 = vsel %vm1307, %v1275, 0.0
        %v1309 = vsel %vm1307, %v1276, 0.0
        %v1310 = vadd.f32 %v1308, %v1309
        %v1311 = vsel %vm1307, %v1277, 0.0
        %v1312 = vadd.f32 %v1310, %v1311
        %v1313 = vsel %vm1307, %v1278, 0.0
        %v1314 = vadd.f32 %v1312, %v1313
        %v1315 = vsel %vm1307, %v1279, 0.0
        %v1316 = vadd.f32 %v1314, %v1315
        %v1317 = vsel %vm1307, %v1280, 0.0
        %v1318 = vadd.f32 %v1316, %v1317
        %v1319 = vsel %vm1307, %v1281, 0.0
        %v1320 = vadd.f32 %v1318, %v1319
        %v1321 = vsel %vm1307, %v1282, 0.0
        %v1322 = vadd.f32 %v1320, %v1321
        %v1323 = vsel %vm1307, %v1283, 0.0
        %v1324 = vadd.f32 %v1322, %v1323
        %v1325 = vsel %vm1307, %v1284, 0.0
        %v1326 = vadd.f32 %v1324, %v1325
        %v1327 = vsel %vm1307, %v1285, 0.0
        %v1328 = vadd.f32 %v1326, %v1327
        %v1329 = vsel %vm1307, %v1286, 0.0
        %v1330 = vadd.f32 %v1328, %v1329
        %v1331 = vsel %vm1307, %v1287, 0.0
        %v1332 = vadd.f32 %v1330, %v1331
        %v1333 = vsel %vm1307, %v1288, 0.0
        %v1334 = vadd.f32 %v1332, %v1333
        %v1335 = vsel %vm1307, %v1289, 0.0
        %v1336 = vadd.f32 %v1334, %v1335
        %v1337 = vsel %vm1307, %v1290, 0.0
        %v1338 = vadd.f32 %v1336, %v1337
        %v1339 = vsel %vm1307, %v1291, 0.0
        %v1340 = vadd.f32 %v1338, %v1339
        %v1341 = vsel %vm1307, %v1292, 0.0
        %v1342 = vadd.f32 %v1340, %v1341
        %v1343 = vsel %vm1307, %v1293, 0.0
        %v1344 = vadd.f32 %v1342, %v1343
        %v1345 = vsel %vm1307, %v1294, 0.0
        %v1346 = vadd.f32 %v1344, %v1345
        %v1347 = vsel %vm1307, %v1295, 0.0
        %v1348 = vadd.f32 %v1346, %v1347
        %v1349 = vsel %vm1307, %v1296, 0.0
        %v1350 = vadd.f32 %v1348, %v1349
        %v1351 = vsel %vm1307, %v1297, 0.0
        %v1352 = vadd.f32 %v1350, %v1351
        %v1353 = vsel %vm1307, %v1298, 0.0
        %v1354 = vadd.f32 %v1352, %v1353
        %v1355 = vsel %vm1307, %v1299, 0.0
        %v1356 = vadd.f32 %v1354, %v1355
        %v1357 = vsel %vm1307, %v1300, 0.0
        %v1358 = vadd.f32 %v1356, %v1357
        %v1359 = vsel %vm1307, %v1301, 0.0
        %v1360 = vadd.f32 %v1358, %v1359
        %v1361 = vsel %vm1307, %v1302, 0.0
        %v1362 = vadd.f32 %v1360, %v1361
        %v1363 = vsel %vm1307, %v1303, 0.0
        %v1364 = vadd.f32 %v1362, %v1363
        %v1365 = vsel %vm1307, %v1304, 0.0
        %v1366 = vadd.f32 %v1364, %v1365
        %v1367 = vsel %vm1307, %v1305, 0.0
        %v1368 = vadd.f32 %v1366, %v1367
        %v1369 = vsel %vm1307, %v1306, 0.0
        %v1370 = vadd.f32 %v1368, %v1369
        %v1371 = vrot.slane %v1370, 4
        %v1372 = vadd.f32 %v1370, %v1371
        %v1373 = vrot.slane %v1372, 2
        %v1374 = vadd.f32 %v1372, %v1373
        %v1375 = vrot.slane %v1374, 1
        %v1376 = vadd.f32 %v1374, %v1375
        %v1377 = vmul.f32 %v1275, %v1275
        %v1378 = vmul.f32 %v1276, %v1276
        %v1379 = vmul.f32 %v1277, %v1277
        %v1380 = vmul.f32 %v1278, %v1278
        %v1381 = vmul.f32 %v1279, %v1279
        %v1382 = vmul.f32 %v1280, %v1280
        %v1383 = vmul.f32 %v1281, %v1281
        %v1384 = vmul.f32 %v1282, %v1282
        %v1385 = vmul.f32 %v1283, %v1283
        %v1386 = vmul.f32 %v1284, %v1284
        %v1387 = vmul.f32 %v1285, %v1285
        %v1388 = vmul.f32 %v1286, %v1286
        %v1389 = vmul.f32 %v1287, %v1287
        %v1390 = vmul.f32 %v1288, %v1288
        %v1391 = vmul.f32 %v1289, %v1289
        %v1392 = vmul.f32 %v1290, %v1290
        %v1393 = vmul.f32 %v1291, %v1291
        %v1394 = vmul.f32 %v1292, %v1292
        %v1395 = vmul.f32 %v1293, %v1293
        %v1396 = vmul.f32 %v1294, %v1294
        %v1397 = vmul.f32 %v1295, %v1295
        %v1398 = vmul.f32 %v1296, %v1296
        %v1399 = vmul.f32 %v1297, %v1297
        %v1400 = vmul.f32 %v1298, %v1298
        %v1401 = vmul.f32 %v1299, %v1299
        %v1402 = vmul.f32 %v1300, %v1300
        %v1403 = vmul.f32 %v1301, %v1301
        %v1404 = vmul.f32 %v1302, %v1302
        %v1405 = vmul.f32 %v1303, %v1303
        %v1406 = vmul.f32 %v1304, %v1304
        %v1407 = vmul.f32 %v1305, %v1305
        %v1408 = vmul.f32 %v1306, %v1306
        %v1409 = vsel %vm1307, %v1377, 0.0
        %v1410 = vsel %vm1307, %v1378, 0.0
        %v1411 = vadd.f32 %v1409, %v1410
        %v1412 = vsel %vm1307, %v1379, 0.0
        %v1413 = vadd.f32 %v1411, %v1412
        %v1414 = vsel %vm1307, %v1380, 0.0
        %v1415 = vadd.f32 %v1413, %v1414
        %v1416 = vsel %vm1307, %v1381, 0.0
        %v1417 = vadd.f32 %v1415, %v1416
        %v1418 = vsel %vm1307, %v1382, 0.0
        %v1419 = vadd.f32 %v1417, %v1418
        %v1420 = vsel %vm1307, %v1383, 0.0
        %v1421 = vadd.f32 %v1419, %v1420
        %v1422 = vsel %vm1307, %v1384, 0.0
        %v1423 = vadd.f32 %v1421, %v1422
        %v1424 = vsel %vm1307, %v1385, 0.0
        %v1425 = vadd.f32 %v1423, %v1424
        %v1426 = vsel %vm1307, %v1386, 0.0
        %v1427 = vadd.f32 %v1425, %v1426
        %v1428 = vsel %vm1307, %v1387, 0.0
        %v1429 = vadd.f32 %v1427, %v1428
        %v1430 = vsel %vm1307, %v1388, 0.0
        %v1431 = vadd.f32 %v1429, %v1430
        %v1432 = vsel %vm1307, %v1389, 0.0
        %v1433 = vadd.f32 %v1431, %v1432
        %v1434 = vsel %vm1307, %v1390, 0.0
        %v1435 = vadd.f32 %v1433, %v1434
        %v1436 = vsel %vm1307, %v1391, 0.0
        %v1437 = vadd.f32 %v1435, %v1436
        %v1438 = vsel %vm1307, %v1392, 0.0
        %v1439 = vadd.f32 %v1437, %v1438
        %v1440 = vsel %vm1307, %v1393, 0.0
        %v1441 = vadd.f32 %v1439, %v1440
        %v1442 = vsel %vm1307, %v1394, 0.0
        %v1443 = vadd.f32 %v1441, %v1442
        %v1444 = vsel %vm1307, %v1395, 0.0
        %v1445 = vadd.f32 %v1443, %v1444
        %v1446 = vsel %vm1307, %v1396, 0.0
        %v1447 = vadd.f32 %v1445, %v1446
        %v1448 = vsel %vm1307, %v1397, 0.0
        %v1449 = vadd.f32 %v1447, %v1448
        %v1450 = vsel %vm1307, %v1398, 0.0
        %v1451 = vadd.f32 %v1449, %v1450
        %v1452 = vsel %vm1307, %v1399, 0.0
        %v1453 = vadd.f32 %v1451, %v1452
        %v1454 = vsel %vm1307, %v1400, 0.0
        %v1455 = vadd.f32 %v1453, %v1454
        %v1456 = vsel %vm1307, %v1401, 0.0
        %v1457 = vadd.f32 %v1455, %v1456
        %v1458 = vsel %vm1307, %v1402, 0.0
        %v1459 = vadd.f32 %v1457, %v1458
        %v1460 = vsel %vm1307, %v1403, 0.0
        %v1461 = vadd.f32 %v1459, %v1460
        %v1462 = vsel %vm1307, %v1404, 0.0
        %v1463 = vadd.f32 %v1461, %v1462
        %v1464 = vsel %vm1307, %v1405, 0.0
        %v1465 = vadd.f32 %v1463, %v1464
        %v1466 = vsel %vm1307, %v1406, 0.0
        %v1467 = vadd.f32 %v1465, %v1466
        %v1468 = vsel %vm1307, %v1407, 0.0
        %v1469 = vadd.f32 %v1467, %v1468
        %v1470 = vsel %vm1307, %v1408, 0.0
        %v1471 = vadd.f32 %v1469, %v1470
        %v1472 = vrot.slane %v1471, 4
        %v1473 = vadd.f32 %v1471, %v1472
        %v1474 = vrot.slane %v1473, 2
        %v1475 = vadd.f32 %v1473, %v1474
        %v1476 = vrot.slane %v1475, 1
        %v1477 = vadd.f32 %v1475, %v1476
        %vm1478 = vcmask 1040384
        %v1479 = vsel %vm1478, %v1376, %v1477
        %v1480 = vld [vmem:[#allocation2] sm:$0xff]
        %v1481 = vld [vmem:[#allocation2 + $0x8] sm:$0xff]
        %v1482 = vld [vmem:[#allocation2 + $0x10] sm:$0xff]
        %v1483 = vld [vmem:[#allocation2 + $0x18] sm:$0xff]
        %v1484 = vld [vmem:[#allocation2 + $0x20] sm:$0xff]
        %v1485 = vld [vmem:[#allocation2 + $0x28] sm:$0xff]
        %v1486 = vld [vmem:[#allocation2 + $0x30] sm:$0xff]
        %v1487 = vld [vmem:[#allocation2 + $0x38] sm:$0xff]
        %v1488 = vld [vmem:[#allocation2 + $0x40] sm:$0xff]
        %v1489 = vld [vmem:[#allocation2 + $0x48] sm:$0xff]
        %v1490 = vld [vmem:[#allocation2 + $0x50] sm:$0xff]
        %v1491 = vld [vmem:[#allocation2 + $0x58] sm:$0xff]
        %v1493 = vsel %vm1307, %v1479, 0
        %1495 = vmatprep.subr.mxu0 0.0
        %1496 = vmatpush1.msra.mxu0 %v1480
        %1497 = vmatprep.subr.mxu0 0.0
        %1498 = vmatpush1.msra.mxu0 %v1481
        %1499 = vmatprep.subr.mxu0 0.0
        %1500 = vmatpush1.msra.mxu0 %v1482
        %1501 = vmatprep.subr.mxu0 0.0
        %1502 = vmatpush1.msra.mxu0 %v1483
        %1503 = vmatprep.subr.mxu0 0.0
        %1504 = vmatpush1.msra.mxu0 %v1484
        %1505 = vmatprep.subr.mxu0 0.0
        %1506 = vmatpush1.msra.mxu0 %v1485
        %1507 = vmatprep.subr.mxu0 0.0
        %1508 = vmatpush1.msra.mxu0 %v1486
        %1509 = vmatprep.subr.mxu0 0.0
        %1510 = vmatpush1.msra.mxu0 %v1487
        %1511 = vmatprep.subr.mxu0 0.0
        %1512 = vmatpush1.msra.mxu0 %v1488
        %1513 = vmatprep.subr.mxu0 0.0
        %1514 = vmatpush1.msra.mxu0 %v1489
        %1515 = vmatprep.subr.mxu0 0.0
        %1516 = vmatpush1.msra.mxu0 %v1490
        %1517 = vmatprep.subr.mxu0 0.0
        %1518 = vmatpush1.msra.mxu0 %v1491
        %1519 = vmatprep.subr.mxu0 0.0
        %1520 = vmatpush1.msra.mxu0 0.0
        %1521 = vmatprep.subr.mxu0 0.0
        %1522 = vmatpush1.msra.mxu0 0.0
        %1523 = vmatprep.subr.mxu0 0.0
        %1524 = vmatpush1.msra.mxu0 0.0
        %1525 = vmatprep.subr.mxu0 0.0
        %1526 = vmatpush1.msra.mxu0 0.0
        %1527 = vmatprep.subr.mxu0 0.0
        %1528 = vmatpush1.msra.mxu0 0.0
        %1529 = vmatprep.subr.mxu0 0.0
        %1530 = vmatpush1.msra.mxu0 0.0
        %1531 = vmatprep.subr.mxu0 0.0
        %1532 = vmatpush1.msra.mxu0 0.0
        %1533 = vmatprep.subr.mxu0 0.0
        %1534 = vmatpush1.msra.mxu0 0.0
        %1535 = vmatprep.subr.mxu0 0.0
        %1536 = vmatpush1.msra.mxu0 0.0
        %1537 = vmatprep.subr.mxu0 0.0
        %1538 = vmatpush1.msra.mxu0 0.0
        %1539 = vmatprep.subr.mxu0 0.0
        %1540 = vmatpush1.msra.mxu0 0.0
        %1541 = vmatprep.subr.mxu0 0.0
        %1542 = vmatpush1.msra.mxu0 0.0
        %1543 = vmatprep.subr.mxu0 0.0
        %1544 = vmatpush1.msra.mxu0 0.0
        %1545 = vmatprep.subr.mxu0 0.0
        %1546 = vmatpush1.msra.mxu0 0.0
        %1547 = vmatprep.subr.mxu0 0.0
        %1548 = vmatpush1.msra.mxu0 0.0
        %1549 = vmatprep.subr.mxu0 0.0
        %1550 = vmatpush1.msra.mxu0 0.0
        %1551 = vmatprep.subr.mxu0 0.0
        %1552 = vmatpush1.msra.mxu0 0.0
        %1553 = vmatprep.subr.mxu0 0.0
        %1554 = vmatpush1.msra.mxu0 0.0
        %1555 = vmatprep.subr.mxu0 0.0
        %1556 = vmatpush1.msra.mxu0 0.0
        %1557 = vmatprep.subr.mxu0 0.0
        %1558 = vmatpush1.msra.mxu0 0.0
        %1559 = vmatprep.mubr.f32.mxu0 0.0
        %1560 = vmatmul.mubr.f32.gmra.mrb[0].mxu0 %v1493
        %v1561 = vpop.f32.mrb[0].mxu0
        %v1562 = vadd.f32 0.0, %v1561
        %v1563 = vpop.f32.mrb[0].mxu0
        %1564 = vdwg.mxu0
        %v1565 = vmul.f32 %v1562, %v1562
        %v1567 = vrot.slane %v1565, 7
        %v1569 = vsub.f32 %v1562, %v1567
        %v1570 = vlaneseq
        %v1571 = vshrl.u32 %v1570, 7
        %v1572 = vsub.s32 0, %v1571
        %v1573 = vrot.slane %v1562, %v1572
        %v1574 = vsub.f32 %v1275, %v1573
        %v1575 = vsub.f32 %v1276, %v1573
        %v1576 = vsub.f32 %v1277, %v1573
        %v1577 = vsub.f32 %v1278, %v1573
        %v1578 = vsub.f32 %v1279, %v1573
        %v1579 = vsub.f32 %v1280, %v1573
        %v1580 = vsub.f32 %v1281, %v1573
        %v1581 = vsub.f32 %v1282, %v1573
        %v1582 = vsub.f32 %v1283, %v1573
        %v1583 = vsub.f32 %v1284, %v1573
        %v1584 = vsub.f32 %v1285, %v1573
        %v1585 = vsub.f32 %v1286, %v1573
        %v1586 = vsub.f32 %v1287, %v1573
        %v1587 = vsub.f32 %v1288, %v1573
        %v1588 = vsub.f32 %v1289, %v1573
        %v1589 = vsub.f32 %v1290, %v1573
        %v1590 = vsub.f32 %v1291, %v1573
        %v1591 = vsub.f32 %v1292, %v1573
        %v1592 = vsub.f32 %v1293, %v1573
        %v1593 = vsub.f32 %v1294, %v1573
        %v1594 = vsub.f32 %v1295, %v1573
        %v1595 = vsub.f32 %v1296, %v1573
        %v1596 = vsub.f32 %v1297, %v1573
        %v1597 = vsub.f32 %v1298, %v1573
        %v1598 = vsub.f32 %v1299, %v1573
        %v1599 = vsub.f32 %v1300, %v1573
        %v1600 = vsub.f32 %v1301, %v1573
        %v1601 = vsub.f32 %v1302, %v1573
        %v1602 = vsub.f32 %v1303, %v1573
        %v1603 = vsub.f32 %v1304, %v1573
        %v1604 = vsub.f32 %v1305, %v1573
        %v1605 = vsub.f32 %v1306, %v1573
        %v1606 = vadd.f32 %v1569, 1e-05
        %v1607 = vrsqrt.pop %v1606
        %v1608 = vlaneseq
        %v1609 = vshrl.u32 %v1608, 7
        %v1610 = vsub.s32 1, %v1609
        %v1611 = vrot.slane %v1607, %v1610
        %v1612 = vmul.f32 %v1574, %v1611
        %v1613 = vmul.f32 %v1575, %v1611
        %v1614 = vmul.f32 %v1576, %v1611
        %v1615 = vmul.f32 %v1577, %v1611
        %v1616 = vmul.f32 %v1578, %v1611
        %v1617 = vmul.f32 %v1579, %v1611
        %v1618 = vmul.f32 %v1580, %v1611
        %v1619 = vmul.f32 %v1581, %v1611
        %v1620 = vmul.f32 %v1582, %v1611
        %v1621 = vmul.f32 %v1583, %v1611
        %v1622 = vmul.f32 %v1584, %v1611
        %v1623 = vmul.f32 %v1585, %v1611
        %v1624 = vmul.f32 %v1586, %v1611
        %v1625 = vmul.f32 %v1587, %v1611
        %v1626 = vmul.f32 %v1588, %v1611
        %v1627 = vmul.f32 %v1589, %v1611
        %v1628 = vmul.f32 %v1590, %v1611
        %v1629 = vmul.f32 %v1591, %v1611
        %v1630 = vmul.f32 %v1592, %v1611
        %v1631 = vmul.f32 %v1593, %v1611
        %v1632 = vmul.f32 %v1594, %v1611
        %v1633 = vmul.f32 %v1595, %v1611
        %v1634 = vmul.f32 %v1596, %v1611
        %v1635 = vmul.f32 %v1597, %v1611
        %v1636 = vmul.f32 %v1598, %v1611
        %v1637 = vmul.f32 %v1599, %v1611
        %v1638 = vmul.f32 %v1600, %v1611
        %v1639 = vmul.f32 %v1601, %v1611
        %v1640 = vmul.f32 %v1602, %v1611
        %v1641 = vmul.f32 %v1603, %v1611
        %v1642 = vmul.f32 %v1604, %v1611
        %v1643 = vmul.f32 %v1605, %v1611
        %vm1644 = vcmp.ge.f32.partialorder %v1612, 0.0
        %vm1645 = vcmp.ge.f32.partialorder %v1613, 0.0
        %vm1646 = vcmp.ge.f32.partialorder %v1614, 0.0
        %vm1647 = vcmp.ge.f32.partialorder %v1615, 0.0
        %vm1648 = vcmp.ge.f32.partialorder %v1616, 0.0
        %vm1649 = vcmp.ge.f32.partialorder %v1617, 0.0
        %vm1650 = vcmp.ge.f32.partialorder %v1618, 0.0
        %vm1651 = vcmp.ge.f32.partialorder %v1619, 0.0
        %vm1652 = vcmp.ge.f32.partialorder %v1620, 0.0
        %vm1653 = vcmp.ge.f32.partialorder %v1621, 0.0
        %vm1654 = vcmp.ge.f32.partialorder %v1622, 0.0
        %vm1655 = vcmp.ge.f32.partialorder %v1623, 0.0
        %vm1656 = vcmp.ge.f32.partialorder %v1624, 0.0
        %vm1657 = vcmp.ge.f32.partialorder %v1625, 0.0
        %vm1658 = vcmp.ge.f32.partialorder %v1626, 0.0
        %vm1659 = vcmp.ge.f32.partialorder %v1627, 0.0
        %vm1660 = vcmp.ge.f32.partialorder %v1628, 0.0
        %vm1661 = vcmp.ge.f32.partialorder %v1629, 0.0
        %vm1662 = vcmp.ge.f32.partialorder %v1630, 0.0
        %vm1663 = vcmp.ge.f32.partialorder %v1631, 0.0
        %vm1664 = vcmp.ge.f32.partialorder %v1632, 0.0
        %vm1665 = vcmp.ge.f32.partialorder %v1633, 0.0
        %vm1666 = vcmp.ge.f32.partialorder %v1634, 0.0
        %vm1667 = vcmp.ge.f32.partialorder %v1635, 0.0
        %vm1668 = vcmp.ge.f32.partialorder %v1636, 0.0
        %vm1669 = vcmp.ge.f32.partialorder %v1637, 0.0
        %vm1670 = vcmp.ge.f32.partialorder %v1638, 0.0
        %vm1671 = vcmp.ge.f32.partialorder %v1639, 0.0
        %vm1672 = vcmp.ge.f32.partialorder %v1640, 0.0
        %vm1673 = vcmp.ge.f32.partialorder %v1641, 0.0
        %vm1674 = vcmp.ge.f32.partialorder %v1642, 0.0
        %vm1675 = vcmp.ge.f32.partialorder %v1643, 0.0
        %v1676 = vmul.f32 %v1612, 0.2
        %v1677 = vmul.f32 %v1613, 0.2
        %v1678 = vmul.f32 %v1614, 0.2
        %v1679 = vmul.f32 %v1615, 0.2
        %v1680 = vmul.f32 %v1616, 0.2
        %v1681 = vmul.f32 %v1617, 0.2
        %v1682 = vmul.f32 %v1618, 0.2
        %v1683 = vmul.f32 %v1619, 0.2
        %v1684 = vmul.f32 %v1620, 0.2
        %v1685 = vmul.f32 %v1621, 0.2
        %v1686 = vmul.f32 %v1622, 0.2
        %v1687 = vmul.f32 %v1623, 0.2
        %v1688 = vmul.f32 %v1624, 0.2
        %v1689 = vmul.f32 %v1625, 0.2
        %v1690 = vmul.f32 %v1626, 0.2
        %v1691 = vmul.f32 %v1627, 0.2
        %v1692 = vmul.f32 %v1628, 0.2
        %v1693 = vmul.f32 %v1629, 0.2
        %v1694 = vmul.f32 %v1630, 0.2
        %v1695 = vmul.f32 %v1631, 0.2
        %v1696 = vmul.f32 %v1632, 0.2
        %v1697 = vmul.f32 %v1633, 0.2
        %v1698 = vmul.f32 %v1634, 0.2
        %v1699 = vmul.f32 %v1635, 0.2
        %v1700 = vmul.f32 %v1636, 0.2
        %v1701 = vmul.f32 %v1637, 0.2
        %v1702 = vmul.f32 %v1638, 0.2
        %v1703 = vmul.f32 %v1639, 0.2
        %v1704 = vmul.f32 %v1640, 0.2
        %v1705 = vmul.f32 %v1641, 0.2
        %v1706 = vmul.f32 %v1642, 0.2
        %v1707 = vmul.f32 %v1643, 0.2
        %v1708 = vsel %vm1644, %v1612, %v1676
        %v1709 = vsel %vm1645, %v1613, %v1677
        %v1710 = vsel %vm1646, %v1614, %v1678
        %v1711 = vsel %vm1647, %v1615, %v1679
        %v1712 = vsel %vm1648, %v1616, %v1680
        %v1713 = vsel %vm1649, %v1617, %v1681
        %v1714 = vsel %vm1650, %v1618, %v1682
        %v1715 = vsel %vm1651, %v1619, %v1683
        %v1716 = vsel %vm1652, %v1620, %v1684
        %v1717 = vsel %vm1653, %v1621, %v1685
        %v1718 = vsel %vm1654, %v1622, %v1686
        %v1719 = vsel %vm1655, %v1623, %v1687
        %v1720 = vsel %vm1656, %v1624, %v1688
        %v1721 = vsel %vm1657, %v1625, %v1689
        %v1722 = vsel %vm1658, %v1626, %v1690
        %v1723 = vsel %vm1659, %v1627, %v1691
        %v1724 = vsel %vm1660, %v1628, %v1692
        %v1725 = vsel %vm1661, %v1629, %v1693
        %v1726 = vsel %vm1662, %v1630, %v1694
        %v1727 = vsel %vm1663, %v1631, %v1695
        %v1728 = vsel %vm1664, %v1632, %v1696
        %v1729 = vsel %vm1665, %v1633, %v1697
        %v1730 = vsel %vm1666, %v1634, %v1698
        %v1731 = vsel %vm1667, %v1635, %v1699
        %v1732 = vsel %vm1668, %v1636, %v1700
        %v1733 = vsel %vm1669, %v1637, %v1701
        %v1734 = vsel %vm1670, %v1638, %v1702
        %v1735 = vsel %vm1671, %v1639, %v1703
        %v1736 = vsel %vm1672, %v1640, %v1704
        %v1737 = vsel %vm1673, %v1641, %v1705
        %v1738 = vsel %vm1674, %v1642, %v1706
        %v1739 = vsel %vm1675, %v1643, %v1707
        %v1740 = vpack.c.bf16 %v1709, %v1708
        %v1741 = vpack.c.bf16 %v1711, %v1710
        %v1742 = vpack.c.bf16 %v1713, %v1712
        %v1743 = vpack.c.bf16 %v1715, %v1714
        %v1744 = vpack.c.bf16 %v1717, %v1716
        %v1745 = vpack.c.bf16 %v1719, %v1718
        %v1746 = vpack.c.bf16 %v1721, %v1720
        %v1747 = vpack.c.bf16 %v1723, %v1722
        %v1748 = vpack.c.bf16 %v1725, %v1724
        %v1749 = vpack.c.bf16 %v1727, %v1726
        %v1750 = vpack.c.bf16 %v1729, %v1728
        %v1751 = vpack.c.bf16 %v1731, %v1730
        %v1752 = vpack.c.bf16 %v1733, %v1732
        %v1753 = vpack.c.bf16 %v1735, %v1734
        %v1754 = vpack.c.bf16 %v1737, %v1736
        %v1755 = vpack.c.bf16 %v1739, %v1738
        %v1756 = vld [vmem:[#allocation4] sm:$0xff]
        %v1757 = vld [vmem:[#allocation4 + $0x8] sm:$0xff]
        %v1758 = vld [vmem:[#allocation4 + $0x10] sm:$0xff]
        %v1759 = vld [vmem:[#allocation4 + $0x18] sm:$0xff]
        %v1760 = vld [vmem:[#allocation4 + $0x20] sm:$0xff]
        %v1761 = vld [vmem:[#allocation4 + $0x28] sm:$0xff]
        %v1762 = vld [vmem:[#allocation4 + $0x30] sm:$0xff]
        %v1763 = vld [vmem:[#allocation4 + $0x38] sm:$0xff]
        %v1764 = vld [vmem:[#allocation4 + $0x40] sm:$0xff]
        %v1765 = vld [vmem:[#allocation4 + $0x48] sm:$0xff]
        %v1766 = vld [vmem:[#allocation4 + $0x50] sm:$0xff]
        %v1767 = vld [vmem:[#allocation4 + $0x58] sm:$0xff]
        %v1768 = vld [vmem:[#allocation4 + $0x60] sm:$0xff]
        %v1769 = vld [vmem:[#allocation4 + $0x68] sm:$0xff]
        %v1770 = vld [vmem:[#allocation4 + $0x70] sm:$0xff]
        %v1771 = vld [vmem:[#allocation4 + $0x78] sm:$0xff]
        %v1788 = vunpack.c.l.b16 %v1756
        %v1789 = vunpack.c.h.b16 %v1756
        %v1790 = vunpack.c.l.b16 %v1757
        %v1791 = vunpack.c.h.b16 %v1757
        %v1792 = vunpack.c.l.b16 %v1758
        %v1793 = vunpack.c.h.b16 %v1758
        %v1794 = vunpack.c.l.b16 %v1759
        %v1795 = vunpack.c.h.b16 %v1759
        %v1796 = vunpack.c.l.b16 %v1760
        %v1797 = vunpack.c.h.b16 %v1760
        %v1798 = vunpack.c.l.b16 %v1761
        %v1799 = vunpack.c.h.b16 %v1761
        %v1800 = vunpack.c.l.b16 %v1762
        %v1801 = vunpack.c.h.b16 %v1762
        %v1802 = vunpack.c.l.b16 %v1763
        %v1803 = vunpack.c.h.b16 %v1763
        %v1804 = vunpack.c.l.b16 %v1764
        %v1805 = vunpack.c.h.b16 %v1764
        %v1806 = vunpack.c.l.b16 %v1765
        %v1807 = vunpack.c.h.b16 %v1765
        %v1808 = vunpack.c.l.b16 %v1766
        %v1809 = vunpack.c.h.b16 %v1766
        %v1810 = vunpack.c.l.b16 %v1767
        %v1811 = vunpack.c.h.b16 %v1767
        %v1812 = vunpack.c.l.b16 %v1768
        %v1813 = vunpack.c.h.b16 %v1768
        %v1814 = vunpack.c.l.b16 %v1769
        %v1815 = vunpack.c.h.b16 %v1769
        %v1816 = vunpack.c.l.b16 %v1770
        %v1817 = vunpack.c.h.b16 %v1770
        %v1818 = vunpack.c.l.b16 %v1771
        %v1819 = vunpack.c.h.b16 %v1771
        %v1820 = vpack.c.b16 %v1790, %v1788
        %v1821 = vpack.c.b16 %v1791, %v1789
        %v1822 = vpack.c.b16 %v1794, %v1792
        %v1823 = vpack.c.b16 %v1795, %v1793
        %v1824 = vpack.c.b16 %v1798, %v1796
        %v1825 = vpack.c.b16 %v1799, %v1797
        %v1826 = vpack.c.b16 %v1802, %v1800
        %v1827 = vpack.c.b16 %v1803, %v1801
        %v1828 = vpack.c.b16 %v1806, %v1804
        %v1829 = vpack.c.b16 %v1807, %v1805
        %v1830 = vpack.c.b16 %v1810, %v1808
        %v1831 = vpack.c.b16 %v1811, %v1809
        %v1832 = vpack.c.b16 %v1814, %v1812
        %v1833 = vpack.c.b16 %v1815, %v1813
        %v1834 = vpack.c.b16 %v1818, %v1816
        %v1835 = vpack.c.b16 %v1819, %v1817
        %1852 = vmatprep.subr.bf16.mxu0 0
        %1853 = vmatpush1.bf16.msra.mxu0 %v1740
        %1854 = vmatprep.subr.bf16.mxu0 0
        %1855 = vmatpush1.bf16.msra.mxu0 %v1741
        %1856 = vmatprep.subr.bf16.mxu0 0
        %1857 = vmatpush1.bf16.msra.mxu0 %v1742
        %1858 = vmatprep.subr.bf16.mxu0 0
        %1859 = vmatpush1.bf16.msra.mxu0 %v1743
        %1860 = vmatprep.subr.bf16.mxu0 0
        %1861 = vmatpush1.bf16.msra.mxu0 %v1744
        %1862 = vmatprep.subr.bf16.mxu0 0
        %1863 = vmatpush1.bf16.msra.mxu0 %v1745
        %1864 = vmatprep.subr.bf16.mxu0 0
        %1865 = vmatpush1.bf16.msra.mxu0 %v1746
        %1866 = vmatprep.subr.bf16.mxu0 0
        %1867 = vmatpush1.bf16.msra.mxu0 %v1747
        %1868 = vmatprep.subr.bf16.mxu0 0
        %1869 = vmatpush1.bf16.msra.mxu0 %v1748
        %1870 = vmatprep.subr.bf16.mxu0 0
        %1871 = vmatpush1.bf16.msra.mxu0 %v1749
        %1872 = vmatprep.subr.bf16.mxu0 0
        %1873 = vmatpush1.bf16.msra.mxu0 %v1750
        %1874 = vmatprep.subr.bf16.mxu0 0
        %1875 = vmatpush1.bf16.msra.mxu0 %v1751
        %1876 = vmatprep.subr.bf16.mxu0 0
        %1877 = vmatpush1.bf16.msra.mxu0 %v1752
        %1878 = vmatprep.subr.bf16.mxu0 0
        %1879 = vmatpush1.bf16.msra.mxu0 %v1753
        %1880 = vmatprep.subr.bf16.mxu0 0
        %1881 = vmatpush1.bf16.msra.mxu0 %v1754
        %1882 = vmatprep.subr.bf16.mxu0 0
        %1883 = vmatpush1.bf16.msra.mxu0 %v1755
        %1884 = vmatprep.mubr.bf16.mxu0 %v1821
        %1885 = vmatmul.mubr.bf16.gmra.mrb[0].mxu0 %v1820
        %v1886 = vpop.f32.mrb[0].mxu0
        %v1887 = vadd.f32 0.0, %v1886
        %v1888 = vpop.f32.mrb[0].mxu0
        %v1889 = vpop.f32.mrb[0].mxu0
        %v1890 = vadd.f32 0.0, %v1889
        %v1891 = vpop.f32.mrb[0].mxu0
        %1892 = vmatprep.mubr.bf16.mxu0 %v1823
        %1893 = vmatmul.mubr.bf16.gmra.mrb[0].mxu0 %v1822
        %v1894 = vpop.f32.mrb[0].mxu0
        %v1895 = vadd.f32 0.0, %v1894
        %v1896 = vpop.f32.mrb[0].mxu0
        %v1897 = vpop.f32.mrb[0].mxu0
        %v1898 = vadd.f32 0.0, %v1897
        %v1899 = vpop.f32.mrb[0].mxu0
        %1900 = vmatprep.mubr.bf16.mxu0 %v1825
        %1901 = vmatmul.mubr.bf16.gmra.mrb[0].mxu0 %v1824
        %v1902 = vpop.f32.mrb[0].mxu0
        %v1903 = vadd.f32 0.0, %v1902
        %v1904 = vpop.f32.mrb[0].mxu0
        %v1905 = vpop.f32.mrb[0].mxu0
        %v1906 = vadd.f32 0.0, %v1905
        %v1907 = vpop.f32.mrb[0].mxu0
        %1908 = vmatprep.mubr.bf16.mxu0 %v1827
        %1909 = vmatmul.mubr.bf16.gmra.mrb[0].mxu0 %v1826
        %v1910 = vpop.f32.mrb[0].mxu0
        %v1911 = vadd.f32 0.0, %v1910
        %v1912 = vpop.f32.mrb[0].mxu0
        %v1913 = vpop.f32.mrb[0].mxu0
        %v1914 = vadd.f32 0.0, %v1913
        %v1915 = vpop.f32.mrb[0].mxu0
        %1916 = vmatprep.mubr.bf16.mxu0 %v1829
        %1917 = vmatmul.mubr.bf16.gmra.mrb[0].mxu0 %v1828
        %v1918 = vpop.f32.mrb[0].mxu0
        %v1919 = vadd.f32 0.0, %v1918
        %v1920 = vpop.f32.mrb[0].mxu0
        %v1921 = vpop.f32.mrb[0].mxu0
        %v1922 = vadd.f32 0.0, %v1921
        %v1923 = vpop.f32.mrb[0].mxu0
        %1924 = vmatprep.mubr.bf16.mxu0 %v1831
        %1925 = vmatmul.mubr.bf16.gmra.mrb[0].mxu0 %v1830
        %v1926 = vpop.f32.mrb[0].mxu0
        %v1927 = vadd.f32 0.0, %v1926
        %v1928 = vpop.f32.mrb[0].mxu0
        %v1929 = vpop.f32.mrb[0].mxu0
        %v1930 = vadd.f32 0.0, %v1929
        %v1931 = vpop.f32.mrb[0].mxu0
        %1932 = vmatprep.mubr.bf16.mxu0 %v1833
        %1933 = vmatmul.mubr.bf16.gmra.mrb[0].mxu0 %v1832
        %v1934 = vpop.f32.mrb[0].mxu0
        %v1935 = vadd.f32 0.0, %v1934
        %v1936 = vpop.f32.mrb[0].mxu0
        %v1937 = vpop.f32.mrb[0].mxu0
        %v1938 = vadd.f32 0.0, %v1937
        %v1939 = vpop.f32.mrb[0].mxu0
        %1940 = vmatprep.mubr.bf16.mxu0 %v1835
        %1941 = vmatmul.mubr.bf16.gmra.mrb[0].mxu0 %v1834
        %v1942 = vpop.f32.mrb[0].mxu0
        %v1943 = vadd.f32 0.0, %v1942
        %v1944 = vpop.f32.mrb[0].mxu0
        %v1945 = vpop.f32.mrb[0].mxu0
        %v1946 = vadd.f32 0.0, %v1945
        %v1947 = vpop.f32.mrb[0].mxu0
        %1948 = vdwg.mxu0
        %v1949 = vpack.c.bf16 %v1890, %v1887
        %v1950 = vpack.c.bf16 %v1898, %v1895
        %v1951 = vpack.c.bf16 %v1906, %v1903
        %v1952 = vpack.c.bf16 %v1914, %v1911
        %v1953 = vpack.c.bf16 %v1922, %v1919
        %v1954 = vpack.c.bf16 %v1930, %v1927
        %v1955 = vpack.c.bf16 %v1938, %v1935
        %v1956 = vpack.c.bf16 %v1946, %v1943
        %v1957 = vld [vmem:[#allocation6] sm:$0xff]
        %v1958 = vld [vmem:[#allocation6 + $0x8] sm:$0xff]
        %v1959 = vld [vmem:[#allocation6 + $0x10] sm:$0xff]
        %v1960 = vld [vmem:[#allocation6 + $0x18] sm:$0xff]
        %v1961 = vld [vmem:[#allocation6 + $0x20] sm:$0xff]
        %v1962 = vld [vmem:[#allocation6 + $0x28] sm:$0xff]
        %v1963 = vld [vmem:[#allocation6 + $0x30] sm:$0xff]
        %v1964 = vld [vmem:[#allocation6 + $0x38] sm:$0xff]
        %v1965 = vld [vmem:[#allocation6 + $0x40] sm:$0xff]
        %v1966 = vld [vmem:[#allocation6 + $0x48] sm:$0xff]
        %v1967 = vld [vmem:[#allocation6 + $0x50] sm:$0xff]
        %v1968 = vld [vmem:[#allocation6 + $0x58] sm:$0xff]
        %s1969 = scalar_lea.vmem [#allocation4], 128
        %v1970 = vld [vmem:[%s1969] sm:$0xff]
        %v1971 = vld [vmem:[%s1969 + $0x8] sm:$0xff]
        %v1972 = vld [vmem:[%s1969 + $0x10] sm:$0xff]
        %v1973 = vld [vmem:[%s1969 + $0x18] sm:$0xff]
        %v1974 = vld [vmem:[%s1969 + $0x20] sm:$0xff]
        %v1975 = vld [vmem:[%s1969 + $0x28] sm:$0xff]
        %v1976 = vld [vmem:[%s1969 + $0x30] sm:$0xff]
        %v1977 = vld [vmem:[%s1969 + $0x38] sm:$0xff]
        %v1978 = vld [vmem:[%s1969 + $0x40] sm:$0xff]
        %v1979 = vld [vmem:[%s1969 + $0x48] sm:$0xff]
        %v1980 = vld [vmem:[%s1969 + $0x50] sm:$0xff]
        %v1981 = vld [vmem:[%s1969 + $0x58] sm:$0xff]
        %v1982 = vld [vmem:[%s1969 + $0x60] sm:$0xff]
        %v1983 = vld [vmem:[%s1969 + $0x68] sm:$0xff]
        %v1984 = vld [vmem:[%s1969 + $0x70] sm:$0xff]
        %v1985 = vld [vmem:[%s1969 + $0x78] sm:$0xff]
        %v2002 = vunpack.c.l.b16 %v1970
        %v2003 = vunpack.c.h.b16 %v1970
        %v2004 = vunpack.c.l.b16 %v1971
        %v2005 = vunpack.c.h.b16 %v1971
        %v2006 = vunpack.c.l.b16 %v1972
        %v2007 = vunpack.c.h.b16 %v1972
        %v2008 = vunpack.c.l.b16 %v1973
        %v2009 = vunpack.c.h.b16 %v1973
        %v2010 = vunpack.c.l.b16 %v1974
        %v2011 = vunpack.c.h.b16 %v1974
        %v2012 = vunpack.c.l.b16 %v1975
        %v2013 = vunpack.c.h.b16 %v1975
        %v2014 = vunpack.c.l.b16 %v1976
        %v2015 = vunpack.c.h.b16 %v1976
        %v2016 = vunpack.c.l.b16 %v1977
        %v2017 = vunpack.c.h.b16 %v1977
        %v2018 = vunpack.c.l.b16 %v1978
        %v2019 = vunpack.c.h.b16 %v1978
        %v2020 = vunpack.c.l.b16 %v1979
        %v2021 = vunpack.c.h.b16 %v1979
        %v2022 = vunpack.c.l.b16 %v1980
        %v2023 = vunpack.c.h.b16 %v1980
        %v2024 = vunpack.c.l.b16 %v1981
        %v2025 = vunpack.c.h.b16 %v1981
        %v2026 = vunpack.c.l.b16 %v1982
        %v2027 = vunpack.c.h.b16 %v1982
        %v2028 = vunpack.c.l.b16 %v1983
        %v2029 = vunpack.c.h.b16 %v1983
        %v2030 = vunpack.c.l.b16 %v1984
        %v2031 = vunpack.c.h.b16 %v1984
        %v2032 = vunpack.c.l.b16 %v1985
        %v2033 = vunpack.c.h.b16 %v1985
        %v2034 = vpack.c.b16 %v2004, %v2002
        %v2035 = vpack.c.b16 %v2005, %v2003
        %v2036 = vpack.c.b16 %v2008, %v2006
        %v2037 = vpack.c.b16 %v2009, %v2007
        %v2038 = vpack.c.b16 %v2012, %v2010
        %v2039 = vpack.c.b16 %v2013, %v2011
        %v2040 = vpack.c.b16 %v2016, %v2014
        %v2041 = vpack.c.b16 %v2017, %v2015
        %v2042 = vpack.c.b16 %v2020, %v2018
        %v2043 = vpack.c.b16 %v2021, %v2019
        %v2044 = vpack.c.b16 %v2024, %v2022
        %v2045 = vpack.c.b16 %v2025, %v2023
        %v2046 = vpack.c.b16 %v2028, %v2026
        %v2047 = vpack.c.b16 %v2029, %v2027
        %v2048 = vpack.c.b16 %v2032, %v2030
        %v2049 = vpack.c.b16 %v2033, %v2031
        %2066 = vmatprep.subr.bf16.mxu0 0
        %2067 = vmatpush1.bf16.msra.mxu0 %v1740
        %2068 = vmatprep.subr.bf16.mxu0 0
        %2069 = vmatpush1.bf16.msra.mxu0 %v1741
        %2070 = vmatprep.subr.bf16.mxu0 0
        %2071 = vmatpush1.bf16.msra.mxu0 %v1742
        %2072 = vmatprep.subr.bf16.mxu0 0
        %2073 = vmatpush1.bf16.msra.mxu0 %v1743
        %2074 = vmatprep.subr.bf16.mxu0 0
        %2075 = vmatpush1.bf16.msra.mxu0 %v1744
        %2076 = vmatprep.subr.bf16.mxu0 0
        %2077 = vmatpush1.bf16.msra.mxu0 %v1745
        %2078 = vmatprep.subr.bf16.mxu0 0
        %2079 = vmatpush1.bf16.msra.mxu0 %v1746
        %2080 = vmatprep.subr.bf16.mxu0 0
        %2081 = vmatpush1.bf16.msra.mxu0 %v1747
        %2082 = vmatprep.subr.bf16.mxu0 0
        %2083 = vmatpush1.bf16.msra.mxu0 %v1748
        %2084 = vmatprep.subr.bf16.mxu0 0
        %2085 = vmatpush1.bf16.msra.mxu0 %v1749
        %2086 = vmatprep.subr.bf16.mxu0 0
        %2087 = vmatpush1.bf16.msra.mxu0 %v1750
        %2088 = vmatprep.subr.bf16.mxu0 0
        %2089 = vmatpush1.bf16.msra.mxu0 %v1751
        %2090 = vmatprep.subr.bf16.mxu0 0
        %2091 = vmatpush1.bf16.msra.mxu0 %v1752
        %2092 = vmatprep.subr.bf16.mxu0 0
        %2093 = vmatpush1.bf16.msra.mxu0 %v1753
        %2094 = vmatprep.subr.bf16.mxu0 0
        %2095 = vmatpush1.bf16.msra.mxu0 %v1754
        %2096 = vmatprep.subr.bf16.mxu0 0
        %2097 = vmatpush1.bf16.msra.mxu0 %v1755
        %2098 = vmatprep.mubr.bf16.mxu0 %v2035
        %2099 = vmatmul.mubr.bf16.gmra.mrb[0].mxu0 %v2034
        %v2100 = vpop.f32.mrb[0].mxu0
        %v2101 = vadd.f32 0.0, %v2100
        %v2102 = vpop.f32.mrb[0].mxu0
        %v2103 = vpop.f32.mrb[0].mxu0
        %v2104 = vadd.f32 0.0, %v2103
        %v2105 = vpop.f32.mrb[0].mxu0
        %2106 = vmatprep.mubr.bf16.mxu0 %v2037
        %2107 = vmatmul.mubr.bf16.gmra.mrb[0].mxu0 %v2036
        %v2108 = vpop.f32.mrb[0].mxu0
        %v2109 = vadd.f32 0.0, %v2108
        %v2110 = vpop.f32.mrb[0].mxu0
        %v2111 = vpop.f32.mrb[0].mxu0
        %v2112 = vadd.f32 0.0, %v2111
        %v2113 = vpop.f32.mrb[0].mxu0
        %2114 = vmatprep.mubr.bf16.mxu0 %v2039
        %2115 = vmatmul.mubr.bf16.gmra.mrb[0].mxu0 %v2038
        %v2116 = vpop.f32.mrb[0].mxu0
        %v2117 = vadd.f32 0.0, %v2116
        %v2118 = vpop.f32.mrb[0].mxu0
        %v2119 = vpop.f32.mrb[0].mxu0
        %v2120 = vadd.f32 0.0, %v2119
        %v2121 = vpop.f32.mrb[0].mxu0
        %2122 = vmatprep.mubr.bf16.mxu0 %v2041
        %2123 = vmatmul.mubr.bf16.gmra.mrb[0].mxu0 %v2040
        %v2124 = vpop.f32.mrb[0].mxu0
        %v2125 = vadd.f32 0.0, %v2124
        %v2126 = vpop.f32.mrb[0].mxu0
        %v2127 = vpop.f32.mrb[0].mxu0
        %v2128 = vadd.f32 0.0, %v2127
        %v2129 = vpop.f32.mrb[0].mxu0
        %2130 = vmatprep.mubr.bf16.mxu0 %v2043
        %2131 = vmatmul.mubr.bf16.gmra.mrb[0].mxu0 %v2042
        %v2132 = vpop.f32.mrb[0].mxu0
        %v2133 = vadd.f32 0.0, %v2132
        %v2134 = vpop.f32.mrb[0].mxu0
        %v2135 = vpop.f32.mrb[0].mxu0
        %v2136 = vadd.f32 0.0, %v2135
        %v2137 = vpop.f32.mrb[0].mxu0
        %2138 = vmatprep.mubr.bf16.mxu0 %v2045
        %2139 = vmatmul.mubr.bf16.gmra.mrb[0].mxu0 %v2044
        %v2140 = vpop.f32.mrb[0].mxu0
        %v2141 = vadd.f32 0.0, %v2140
        %v2142 = vpop.f32.mrb[0].mxu0
        %v2143 = vpop.f32.mrb[0].mxu0
        %v2144 = vadd.f32 0.0, %v2143
        %v2145 = vpop.f32.mrb[0].mxu0
        %2146 = vmatprep.mubr.bf16.mxu0 %v2047
        %2147 = vmatmul.mubr.bf16.gmra.mrb[0].mxu0 %v2046
        %v2148 = vpop.f32.mrb[0].mxu0
        %v2149 = vadd.f32 0.0, %v2148
        %v2150 = vpop.f32.mrb[0].mxu0
        %v2151 = vpop.f32.mrb[0].mxu0
        %v2152 = vadd.f32 0.0, %v2151
        %v2153 = vpop.f32.mrb[0].mxu0
        %2154 = vmatprep.mubr.bf16.mxu0 %v2049
        %2155 = vmatmul.mubr.bf16.gmra.mrb[0].mxu0 %v2048
        %v2156 = vpop.f32.mrb[0].mxu0
        %v2157 = vadd.f32 0.0, %v2156
        %v2158 = vpop.f32.mrb[0].mxu0
        %v2159 = vpop.f32.mrb[0].mxu0
        %v2160 = vadd.f32 0.0, %v2159
        %v2161 = vpop.f32.mrb[0].mxu0
        %2162 = vdwg.mxu0
        %v2163 = vpack.c.bf16 %v2104, %v2101
        %v2164 = vpack.c.bf16 %v2112, %v2109
        %v2165 = vpack.c.bf16 %v2120, %v2117
        %v2166 = vpack.c.bf16 %v2128, %v2125
        %v2167 = vpack.c.bf16 %v2136, %v2133
        %v2168 = vpack.c.bf16 %v2144, %v2141
        %v2169 = vpack.c.bf16 %v2152, %v2149
        %v2170 = vpack.c.bf16 %v2160, %v2157
        %s2171 = scalar_lea.vmem [#allocation6], 96
        %v2172 = vld [vmem:[%s2171] sm:$0xff]
        %v2173 = vld [vmem:[%s2171 + $0x8] sm:$0xff]
        %v2174 = vld [vmem:[%s2171 + $0x10] sm:$0xff]
        %v2175 = vld [vmem:[%s2171 + $0x18] sm:$0xff]
        %v2176 = vld [vmem:[%s2171 + $0x20] sm:$0xff]
        %v2177 = vld [vmem:[%s2171 + $0x28] sm:$0xff]
        %v2178 = vld [vmem:[%s2171 + $0x30] sm:$0xff]
        %v2179 = vld [vmem:[%s2171 + $0x38] sm:$0xff]
        %v2180 = vld [vmem:[%s2171 + $0x40] sm:$0xff]
        %v2181 = vld [vmem:[%s2171 + $0x48] sm:$0xff]
        %v2182 = vld [vmem:[%s2171 + $0x50] sm:$0xff]
        %v2183 = vld [vmem:[%s2171 + $0x58] sm:$0xff]
        %v2196 = vunpack.c.l.b16 %v2172
        %v2197 = vunpack.c.h.b16 %v2172
        %v2198 = vunpack.c.l.b16 %v2173
        %v2199 = vunpack.c.h.b16 %v2173
        %v2200 = vunpack.c.l.b16 %v2174
        %v2201 = vunpack.c.h.b16 %v2174
        %v2202 = vunpack.c.l.b16 %v2175
        %v2203 = vunpack.c.h.b16 %v2175
        %v2204 = vunpack.c.l.b16 %v2176
        %v2205 = vunpack.c.h.b16 %v2176
        %v2206 = vunpack.c.l.b16 %v2177
        %v2207 = vunpack.c.h.b16 %v2177
        %v2208 = vunpack.c.l.b16 %v2178
        %v2209 = vunpack.c.h.b16 %v2178
        %v2210 = vunpack.c.l.b16 %v2179
        %v2211 = vunpack.c.h.b16 %v2179
        %v2212 = vunpack.c.l.b16 %v2180
        %v2213 = vunpack.c.h.b16 %v2180
        %v2214 = vunpack.c.l.b16 %v2181
        %v2215 = vunpack.c.h.b16 %v2181
        %v2216 = vunpack.c.l.b16 %v2182
        %v2217 = vunpack.c.h.b16 %v2182
        %v2218 = vunpack.c.l.b16 %v2183
        %v2219 = vunpack.c.h.b16 %v2183
        %v2220 = vpack.c.b16 %v2198, %v2196
        %v2221 = vpack.c.b16 %v2199, %v2197
        %v2222 = vpack.c.b16 %v2202, %v2200
        %v2223 = vpack.c.b16 %v2203, %v2201
        %v2224 = vpack.c.b16 %v2206, %v2204
        %v2225 = vpack.c.b16 %v2207, %v2205
        %v2226 = vpack.c.b16 %v2210, %v2208
        %v2227 = vpack.c.b16 %v2211, %v2209
        %v2228 = vpack.c.b16 %v2214, %v2212
        %v2229 = vpack.c.b16 %v2215, %v2213
        %v2230 = vpack.c.b16 %v2218, %v2216
        %v2231 = vpack.c.b16 %v2219, %v2217
        %v2245 = vsel %vm1307, %v2163, 0
        %v2248 = vsel %vm1307, %v2164, 0
        %v2251 = vsel %vm1307, %v2165, 0
        %v2254 = vsel %vm1307, %v2166, 0
        %v2257 = vsel %vm1307, %v2167, 0
        %v2260 = vsel %vm1307, %v2168, 0
        %v2263 = vsel %vm1307, %v2169, 0
        %v2266 = vsel %vm1307, %v2170, 0
        %2268 = vmatprep.subr.bf16.mxu0 %v2221
        %2269 = vmatpush1.bf16.msra.mxu0 %v2220
        %2270 = vmatprep.subr.bf16.mxu0 %v2223
        %2271 = vmatpush1.bf16.msra.mxu0 %v2222
        %2272 = vmatprep.subr.bf16.mxu0 %v2225
        %2273 = vmatpush1.bf16.msra.mxu0 %v2224
        %2274 = vmatprep.subr.bf16.mxu0 %v2227
        %2275 = vmatpush1.bf16.msra.mxu0 %v2226
        %2276 = vmatprep.subr.bf16.mxu0 %v2229
        %2277 = vmatpush1.bf16.msra.mxu0 %v2228
        %2278 = vmatprep.subr.bf16.mxu0 %v2231
        %2279 = vmatpush1.bf16.msra.mxu0 %v2230
        %2280 = vmatprep.subr.bf16.mxu0 0
        %2281 = vmatpush1.bf16.msra.mxu0 0
        %2282 = vmatprep.subr.bf16.mxu0 0
        %2283 = vmatpush1.bf16.msra.mxu0 0
        %2284 = vmatprep.subr.bf16.mxu0 0
        %2285 = vmatpush1.bf16.msra.mxu0 0
        %2286 = vmatprep.subr.bf16.mxu0 0
        %2287 = vmatpush1.bf16.msra.mxu0 0
        %2288 = vmatprep.subr.bf16.mxu0 0
        %2289 = vmatpush1.bf16.msra.mxu0 0
        %2290 = vmatprep.subr.bf16.mxu0 0
        %2291 = vmatpush1.bf16.msra.mxu0 0
        %2292 = vmatprep.subr.bf16.mxu0 0
        %2293 = vmatpush1.bf16.msra.mxu0 0
        %2294 = vmatprep.subr.bf16.mxu0 0
        %2295 = vmatpush1.bf16.msra.mxu0 0
        %2296 = vmatprep.subr.bf16.mxu0 0
        %2297 = vmatpush1.bf16.msra.mxu0 0
        %2298 = vmatprep.subr.bf16.mxu0 0
        %2299 = vmatpush1.bf16.msra.mxu0 0
        %2300 = vmatprep.mubr.bf16.mxu0 0
        %2301 = vmatmul.mubr.bf16.gmra.mrb[0].mxu0 %v2245
        %v2302 = vpop.f32.mrb[0].mxu0
        %v2303 = vadd.f32 0.0, %v2302
        %v2304 = vpop.f32.mrb[0].mxu0
        %v2305 = vadd.f32 0.0, %v2304
        %v2306 = vpop.f32.mrb[0].mxu0
        %v2307 = vadd.f32 0.0, %v2306
        %v2308 = vpop.f32.mrb[0].mxu0
        %v2309 = vadd.f32 0.0, %v2308
        %2310 = vmatprep.mubr.bf16.mxu0 0
        %2311 = vmatmul.mubr.bf16.gmra.mrb[0].mxu0 %v2248
        %v2312 = vpop.f32.mrb[0].mxu0
        %v2313 = vadd.f32 0.0, %v2312
        %v2314 = vpop.f32.mrb[0].mxu0
        %v2315 = vadd.f32 0.0, %v2314
        %v2316 = vpop.f32.mrb[0].mxu0
        %v2317 = vadd.f32 0.0, %v2316
        %v2318 = vpop.f32.mrb[0].mxu0
        %v2319 = vadd.f32 0.0, %v2318
        %2320 = vmatprep.mubr.bf16.mxu0 0
        %2321 = vmatmul.mubr.bf16.gmra.mrb[0].mxu0 %v2251
        %v2322 = vpop.f32.mrb[0].mxu0
        %v2323 = vadd.f32 0.0, %v2322
        %v2324 = vpop.f32.mrb[0].mxu0
        %v2325 = vadd.f32 0.0, %v2324
        %v2326 = vpop.f32.mrb[0].mxu0
        %v2327 = vadd.f32 0.0, %v2326
        %v2328 = vpop.f32.mrb[0].mxu0
        %v2329 = vadd.f32 0.0, %v2328
        %2330 = vmatprep.mubr.bf16.mxu0 0
        %2331 = vmatmul.mubr.bf16.gmra.mrb[0].mxu0 %v2254
        %v2332 = vpop.f32.mrb[0].mxu0
        %v2333 = vadd.f32 0.0, %v2332
        %v2334 = vpop.f32.mrb[0].mxu0
        %v2335 = vadd.f32 0.0, %v2334
        %v2336 = vpop.f32.mrb[0].mxu0
        %v2337 = vadd.f32 0.0, %v2336
        %v2338 = vpop.f32.mrb[0].mxu0
        %v2339 = vadd.f32 0.0, %v2338
        %2340 = vmatprep.mubr.bf16.mxu0 0
        %2341 = vmatmul.mubr.bf16.gmra.mrb[0].mxu0 %v2257
        %v2342 = vpop.f32.mrb[0].mxu0
        %v2343 = vadd.f32 0.0, %v2342
        %v2344 = vpop.f32.mrb[0].mxu0
        %v2345 = vadd.f32 0.0, %v2344
        %v2346 = vpop.f32.mrb[0].mxu0
        %v2347 = vadd.f32 0.0, %v2346
        %v2348 = vpop.f32.mrb[0].mxu0
        %v2349 = vadd.f32 0.0, %v2348
        %2350 = vmatprep.mubr.bf16.mxu0 0
        %2351 = vmatmul.mubr.bf16.gmra.mrb[0].mxu0 %v2260
        %v2352 = vpop.f32.mrb[0].mxu0
        %v2353 = vadd.f32 0.0, %v2352
        %v2354 = vpop.f32.mrb[0].mxu0
        %v2355 = vadd.f32 0.0, %v2354
        %v2356 = vpop.f32.mrb[0].mxu0
        %v2357 = vadd.f32 0.0, %v2356
        %v2358 = vpop.f32.mrb[0].mxu0
        %v2359 = vadd.f32 0.0, %v2358
        %2360 = vmatprep.mubr.bf16.mxu0 0
        %2361 = vmatmul.mubr.bf16.gmra.mrb[0].mxu0 %v2263
        %v2362 = vpop.f32.mrb[0].mxu0
        %v2363 = vadd.f32 0.0, %v2362
        %v2364 = vpop.f32.mrb[0].mxu0
        %v2365 = vadd.f32 0.0, %v2364
        %v2366 = vpop.f32.mrb[0].mxu0
        %v2367 = vadd.f32 0.0, %v2366
        %v2368 = vpop.f32.mrb[0].mxu0
        %v2369 = vadd.f32 0.0, %v2368
        %2370 = vmatprep.mubr.bf16.mxu0 0
        %2371 = vmatmul.mubr.bf16.gmra.mrb[0].mxu0 %v2266
        %v2372 = vpop.f32.mrb[0].mxu0
        %v2373 = vadd.f32 0.0, %v2372
        %v2374 = vpop.f32.mrb[0].mxu0
        %v2375 = vadd.f32 0.0, %v2374
        %v2376 = vpop.f32.mrb[0].mxu0
        %v2377 = vadd.f32 0.0, %v2376
        %v2378 = vpop.f32.mrb[0].mxu0
        %v2379 = vadd.f32 0.0, %v2378
        %2380 = vdwg.mxu0
        %v2393 = vunpack.c.l.b16 %v1957
        %v2394 = vunpack.c.h.b16 %v1957
        %v2395 = vunpack.c.l.b16 %v1958
        %v2396 = vunpack.c.h.b16 %v1958
        %v2397 = vunpack.c.l.b16 %v1959
        %v2398 = vunpack.c.h.b16 %v1959
        %v2399 = vunpack.c.l.b16 %v1960
        %v2400 = vunpack.c.h.b16 %v1960
        %v2401 = vunpack.c.l.b16 %v1961
        %v2402 = vunpack.c.h.b16 %v1961
        %v2403 = vunpack.c.l.b16 %v1962
        %v2404 = vunpack.c.h.b16 %v1962
        %v2405 = vunpack.c.l.b16 %v1963
        %v2406 = vunpack.c.h.b16 %v1963
        %v2407 = vunpack.c.l.b16 %v1964
        %v2408 = vunpack.c.h.b16 %v1964
        %v2409 = vunpack.c.l.b16 %v1965
        %v2410 = vunpack.c.h.b16 %v1965
        %v2411 = vunpack.c.l.b16 %v1966
        %v2412 = vunpack.c.h.b16 %v1966
        %v2413 = vunpack.c.l.b16 %v1967
        %v2414 = vunpack.c.h.b16 %v1967
        %v2415 = vunpack.c.l.b16 %v1968
        %v2416 = vunpack.c.h.b16 %v1968
        %v2417 = vpack.c.b16 %v2395, %v2393
        %v2418 = vpack.c.b16 %v2396, %v2394
        %v2419 = vpack.c.b16 %v2399, %v2397
        %v2420 = vpack.c.b16 %v2400, %v2398
        %v2421 = vpack.c.b16 %v2403, %v2401
        %v2422 = vpack.c.b16 %v2404, %v2402
        %v2423 = vpack.c.b16 %v2407, %v2405
        %v2424 = vpack.c.b16 %v2408, %v2406
        %v2425 = vpack.c.b16 %v2411, %v2409
        %v2426 = vpack.c.b16 %v2412, %v2410
        %v2427 = vpack.c.b16 %v2415, %v2413
        %v2428 = vpack.c.b16 %v2416, %v2414
        %v2442 = vsel %vm1307, %v1949, 0
        %v2445 = vsel %vm1307, %v1950, 0
        %v2448 = vsel %vm1307, %v1951, 0
        %v2451 = vsel %vm1307, %v1952, 0
        %v2454 = vsel %vm1307, %v1953, 0
        %v2457 = vsel %vm1307, %v1954, 0
        %v2460 = vsel %vm1307, %v1955, 0
        %v2463 = vsel %vm1307, %v1956, 0
        %2465 = vmatprep.subr.bf16.mxu0 %v2418
        %2466 = vmatpush1.bf16.msra.mxu0 %v2417
        %2467 = vmatprep.subr.bf16.mxu0 %v2420
        %2468 = vmatpush1.bf16.msra.mxu0 %v2419
        %2469 = vmatprep.subr.bf16.mxu0 %v2422
        %2470 = vmatpush1.bf16.msra.mxu0 %v2421
        %2471 = vmatprep.subr.bf16.mxu0 %v2424
        %2472 = vmatpush1.bf16.msra.mxu0 %v2423
        %2473 = vmatprep.subr.bf16.mxu0 %v2426
        %2474 = vmatpush1.bf16.msra.mxu0 %v2425
        %2475 = vmatprep.subr.bf16.mxu0 %v2428
        %2476 = vmatpush1.bf16.msra.mxu0 %v2427
        %2477 = vmatprep.subr.bf16.mxu0 0
        %2478 = vmatpush1.bf16.msra.mxu0 0
        %2479 = vmatprep.subr.bf16.mxu0 0
        %2480 = vmatpush1.bf16.msra.mxu0 0
        %2481 = vmatprep.subr.bf16.mxu0 0
        %2482 = vmatpush1.bf16.msra.mxu0 0
        %2483 = vmatprep.subr.bf16.mxu0 0
        %2484 = vmatpush1.bf16.msra.mxu0 0
        %2485 = vmatprep.subr.bf16.mxu0 0
        %2486 = vmatpush1.bf16.msra.mxu0 0
        %2487 = vmatprep.subr.bf16.mxu0 0
        %2488 = vmatpush1.bf16.msra.mxu0 0
        %2489 = vmatprep.subr.bf16.mxu0 0
        %2490 = vmatpush1.bf16.msra.mxu0 0
        %2491 = vmatprep.subr.bf16.mxu0 0
        %2492 = vmatpush1.bf16.msra.mxu0 0
        %2493 = vmatprep.subr.bf16.mxu0 0
        %2494 = vmatpush1.bf16.msra.mxu0 0
        %2495 = vmatprep.subr.bf16.mxu0 0
        %2496 = vmatpush1.bf16.msra.mxu0 0
        %2497 = vmatprep.mubr.bf16.mxu0 0
        %2498 = vmatmul.mubr.bf16.gmra.mrb[0].mxu0 %v2442
        %v2499 = vpop.f32.mrb[0].mxu0
        %v2500 = vadd.f32 %v2303, %v2499
        %v2501 = vpop.f32.mrb[0].mxu0
        %v2502 = vadd.f32 %v2305, %v2501
        %v2503 = vpop.f32.mrb[0].mxu0
        %v2504 = vadd.f32 %v2307, %v2503
        %v2505 = vpop.f32.mrb[0].mxu0
        %v2506 = vadd.f32 %v2309, %v2505
        %2507 = vmatprep.mubr.bf16.mxu0 0
        %2508 = vmatmul.mubr.bf16.gmra.mrb[0].mxu0 %v2445
        %v2509 = vpop.f32.mrb[0].mxu0
        %v2510 = vadd.f32 %v2313, %v2509
        %v2511 = vpop.f32.mrb[0].mxu0
        %v2512 = vadd.f32 %v2315, %v2511
        %v2513 = vpop.f32.mrb[0].mxu0
        %v2514 = vadd.f32 %v2317, %v2513
        %v2515 = vpop.f32.mrb[0].mxu0
        %v2516 = vadd.f32 %v2319, %v2515
        %2517 = vmatprep.mubr.bf16.mxu0 0
        %2518 = vmatmul.mubr.bf16.gmra.mrb[0].mxu0 %v2448
        %v2519 = vpop.f32.mrb[0].mxu0
        %v2520 = vadd.f32 %v2323, %v2519
        %v2521 = vpop.f32.mrb[0].mxu0
        %v2522 = vadd.f32 %v2325, %v2521
        %v2523 = vpop.f32.mrb[0].mxu0
        %v2524 = vadd.f32 %v2327, %v2523
        %v2525 = vpop.f32.mrb[0].mxu0
        %v2526 = vadd.f32 %v2329, %v2525
        %2527 = vmatprep.mubr.bf16.mxu0 0
        %2528 = vmatmul.mubr.bf16.gmra.mrb[0].mxu0 %v2451
        %v2529 = vpop.f32.mrb[0].mxu0
        %v2530 = vadd.f32 %v2333, %v2529
        %v2531 = vpop.f32.mrb[0].mxu0
        %v2532 = vadd.f32 %v2335, %v2531
        %v2533 = vpop.f32.mrb[0].mxu0
        %v2534 = vadd.f32 %v2337, %v2533
        %v2535 = vpop.f32.mrb[0].mxu0
        %v2536 = vadd.f32 %v2339, %v2535
        %2537 = vmatprep.mubr.bf16.mxu0 0
        %2538 = vmatmul.mubr.bf16.gmra.mrb[0].mxu0 %v2454
        %v2539 = vpop.f32.mrb[0].mxu0
        %v2540 = vadd.f32 %v2343, %v2539
        %v2541 = vpop.f32.mrb[0].mxu0
        %v2542 = vadd.f32 %v2345, %v2541
        %v2543 = vpop.f32.mrb[0].mxu0
        %v2544 = vadd.f32 %v2347, %v2543
        %v2545 = vpop.f32.mrb[0].mxu0
        %v2546 = vadd.f32 %v2349, %v2545
        %2547 = vmatprep.mubr.bf16.mxu0 0
        %2548 = vmatmul.mubr.bf16.gmra.mrb[0].mxu0 %v2457
        %v2549 = vpop.f32.mrb[0].mxu0
        %v2550 = vadd.f32 %v2353, %v2549
        %v2551 = vpop.f32.mrb[0].mxu0
        %v2552 = vadd.f32 %v2355, %v2551
        %v2553 = vpop.f32.mrb[0].mxu0
        %v2554 = vadd.f32 %v2357, %v2553
        %v2555 = vpop.f32.mrb[0].mxu0
        %v2556 = vadd.f32 %v2359, %v2555
        %2557 = vmatprep.mubr.bf16.mxu0 0
        %2558 = vmatmul.mubr.bf16.gmra.mrb[0].mxu0 %v2460
        %v2559 = vpop.f32.mrb[0].mxu0
        %v2560 = vadd.f32 %v2363, %v2559
        %v2561 = vpop.f32.mrb[0].mxu0
        %v2562 = vadd.f32 %v2365, %v2561
        %v2563 = vpop.f32.mrb[0].mxu0
        %v2564 = vadd.f32 %v2367, %v2563
        %v2565 = vpop.f32.mrb[0].mxu0
        %v2566 = vadd.f32 %v2369, %v2565
        %2567 = vmatprep.mubr.bf16.mxu0 0
        %2568 = vmatmul.mubr.bf16.gmra.mrb[0].mxu0 %v2463
        %v2569 = vpop.f32.mrb[0].mxu0
        %v2570 = vadd.f32 %v2373, %v2569
        %v2571 = vpop.f32.mrb[0].mxu0
        %v2572 = vadd.f32 %v2375, %v2571
        %v2573 = vpop.f32.mrb[0].mxu0
        %v2574 = vadd.f32 %v2377, %v2573
        %v2575 = vpop.f32.mrb[0].mxu0
        %v2576 = vadd.f32 %v2379, %v2575
        %2577 = vdwg.mxu0
        %s2578 = scalar_lea.vmem [#allocation4], 256
        %v2579 = vld [vmem:[%s2578] sm:$0xff]
        %v2580 = vld [vmem:[%s2578 + $0x8] sm:$0xff]
        %v2581 = vld [vmem:[%s2578 + $0x10] sm:$0xff]
        %v2582 = vld [vmem:[%s2578 + $0x18] sm:$0xff]
        %v2583 = vld [vmem:[%s2578 + $0x20] sm:$0xff]
        %v2584 = vld [vmem:[%s2578 + $0x28] sm:$0xff]
        %v2585 = vld [vmem:[%s2578 + $0x30] sm:$0xff]
        %v2586 = vld [vmem:[%s2578 + $0x38] sm:$0xff]
        %v2587 = vld [vmem:[%s2578 + $0x40] sm:$0xff]
        %v2588 = vld [vmem:[%s2578 + $0x48] sm:$0xff]
        %v2589 = vld [vmem:[%s2578 + $0x50] sm:$0xff]
        %v2590 = vld [vmem:[%s2578 + $0x58] sm:$0xff]
        %v2591 = vld [vmem:[%s2578 + $0x60] sm:$0xff]
        %v2592 = vld [vmem:[%s2578 + $0x68] sm:$0xff]
        %v2593 = vld [vmem:[%s2578 + $0x70] sm:$0xff]
        %v2594 = vld [vmem:[%s2578 + $0x78] sm:$0xff]
        %v2611 = vunpack.c.l.b16 %v2579
        %v2612 = vunpack.c.h.b16 %v2579
        %v2613 = vunpack.c.l.b16 %v2580
        %v2614 = vunpack.c.h.b16 %v2580
        %v2615 = vunpack.c.l.b16 %v2581
        %v2616 = vunpack.c.h.b16 %v2581
        %v2617 = vunpack.c.l.b16 %v2582
        %v2618 = vunpack.c.h.b16 %v2582
        %v2619 = vunpack.c.l.b16 %v2583
        %v2620 = vunpack.c.h.b16 %v2583
        %v2621 = vunpack.c.l.b16 %v2584
        %v2622 = vunpack.c.h.b16 %v2584
        %v2623 = vunpack.c.l.b16 %v2585
        %v2624 = vunpack.c.h.b16 %v2585
        %v2625 = vunpack.c.l.b16 %v2586
        %v2626 = vunpack.c.h.b16 %v2586
        %v2627 = vunpack.c.l.b16 %v2587
        %v2628 = vunpack.c.h.b16 %v2587
        %v2629 = vunpack.c.l.b16 %v2588
        %v2630 = vunpack.c.h.b16 %v2588
        %v2631 = vunpack.c.l.b16 %v2589
        %v2632 = vunpack.c.h.b16 %v2589
        %v2633 = vunpack.c.l.b16 %v2590
        %v2634 = vunpack.c.h.b16 %v2590
        %v2635 = vunpack.c.l.b16 %v2591
        %v2636 = vunpack.c.h.b16 %v2591
        %v2637 = vunpack.c.l.b16 %v2592
        %v2638 = vunpack.c.h.b16 %v2592
        %v2639 = vunpack.c.l.b16 %v2593
        %v2640 = vunpack.c.h.b16 %v2593
        %v2641 = vunpack.c.l.b16 %v2594
        %v2642 = vunpack.c.h.b16 %v2594
        %v2643 = vpack.c.b16 %v2613, %v2611
        %v2644 = vpack.c.b16 %v2614, %v2612
        %v2645 = vpack.c.b16 %v2617, %v2615
        %v2646 = vpack.c.b16 %v2618, %v2616
        %v2647 = vpack.c.b16 %v2621, %v2619
        %v2648 = vpack.c.b16 %v2622, %v2620
        %v2649 = vpack.c.b16 %v2625, %v2623
        %v2650 = vpack.c.b16 %v2626, %v2624
        %v2651 = vpack.c.b16 %v2629, %v2627
        %v2652 = vpack.c.b16 %v2630, %v2628
        %v2653 = vpack.c.b16 %v2633, %v2631
        %v2654 = vpack.c.b16 %v2634, %v2632
        %v2655 = vpack.c.b16 %v2637, %v2635
        %v2656 = vpack.c.b16 %v2638, %v2636
        %v2657 = vpack.c.b16 %v2641, %v2639
        %v2658 = vpack.c.b16 %v2642, %v2640
        %2675 = vmatprep.subr.bf16.mxu0 0
        %2676 = vmatpush1.bf16.msra.mxu0 %v1740
        %2677 = vmatprep.subr.bf16.mxu0 0
        %2678 = vmatpush1.bf16.msra.mxu0 %v1741
        %2679 = vmatprep.subr.bf16.mxu0 0
        %2680 = vmatpush1.bf16.msra.mxu0 %v1742
        %2681 = vmatprep.subr.bf16.mxu0 0
        %2682 = vmatpush1.bf16.msra.mxu0 %v1743
        %2683 = vmatprep.subr.bf16.mxu0 0
        %2684 = vmatpush1.bf16.msra.mxu0 %v1744
        %2685 = vmatprep.subr.bf16.mxu0 0
        %2686 = vmatpush1.bf16.msra.mxu0 %v1745
        %2687 = vmatprep.subr.bf16.mxu0 0
        %2688 = vmatpush1.bf16.msra.mxu0 %v1746
        %2689 = vmatprep.subr.bf16.mxu0 0
        %2690 = vmatpush1.bf16.msra.mxu0 %v1747
        %2691 = vmatprep.subr.bf16.mxu0 0
        %2692 = vmatpush1.bf16.msra.mxu0 %v1748
        %2693 = vmatprep.subr.bf16.mxu0 0
        %2694 = vmatpush1.bf16.msra.mxu0 %v1749
        %2695 = vmatprep.subr.bf16.mxu0 0
        %2696 = vmatpush1.bf16.msra.mxu0 %v1750
        %2697 = vmatprep.subr.bf16.mxu0 0
        %2698 = vmatpush1.bf16.msra.mxu0 %v1751
        %2699 = vmatprep.subr.bf16.mxu0 0
        %2700 = vmatpush1.bf16.msra.mxu0 %v1752
        %2701 = vmatprep.subr.bf16.mxu0 0
        %2702 = vmatpush1.bf16.msra.mxu0 %v1753
        %2703 = vmatprep.subr.bf16.mxu0 0
        %2704 = vmatpush1.bf16.msra.mxu0 %v1754
        %2705 = vmatprep.subr.bf16.mxu0 0
        %2706 = vmatpush1.bf16.msra.mxu0 %v1755
        %2707 = vmatprep.mubr.bf16.mxu0 %v2644
        %2708 = vmatmul.mubr.bf16.gmra.mrb[0].mxu0 %v2643
        %v2709 = vpop.f32.mrb[0].mxu0
        %v2710 = vadd.f32 0.0, %v2709
        %v2711 = vpop.f32.mrb[0].mxu0
        %v2712 = vpop.f32.mrb[0].mxu0
        %v2713 = vadd.f32 0.0, %v2712
        %v2714 = vpop.f32.mrb[0].mxu0
        %2715 = vmatprep.mubr.bf16.mxu0 %v2646
        %2716 = vmatmul.mubr.bf16.gmra.mrb[0].mxu0 %v2645
        %v2717 = vpop.f32.mrb[0].mxu0
        %v2718 = vadd.f32 0.0, %v2717
        %v2719 = vpop.f32.mrb[0].mxu0
        %v2720 = vpop.f32.mrb[0].mxu0
        %v2721 = vadd.f32 0.0, %v2720
        %v2722 = vpop.f32.mrb[0].mxu0
        %2723 = vmatprep.mubr.bf16.mxu0 %v2648
        %2724 = vmatmul.mubr.bf16.gmra.mrb[0].mxu0 %v2647
        %v2725 = vpop.f32.mrb[0].mxu0
        %v2726 = vadd.f32 0.0, %v2725
        %v2727 = vpop.f32.mrb[0].mxu0
        %v2728 = vpop.f32.mrb[0].mxu0
        %v2729 = vadd.f32 0.0, %v2728
        %v2730 = vpop.f32.mrb[0].mxu0
        %2731 = vmatprep.mubr.bf16.mxu0 %v2650
        %2732 = vmatmul.mubr.bf16.gmra.mrb[0].mxu0 %v2649
        %v2733 = vpop.f32.mrb[0].mxu0
        %v2734 = vadd.f32 0.0, %v2733
        %v2735 = vpop.f32.mrb[0].mxu0
        %v2736 = vpop.f32.mrb[0].mxu0
        %v2737 = vadd.f32 0.0, %v2736
        %v2738 = vpop.f32.mrb[0].mxu0
        %2739 = vmatprep.mubr.bf16.mxu0 %v2652
        %2740 = vmatmul.mubr.bf16.gmra.mrb[0].mxu0 %v2651
        %v2741 = vpop.f32.mrb[0].mxu0
        %v2742 = vadd.f32 0.0, %v2741
        %v2743 = vpop.f32.mrb[0].mxu0
        %v2744 = vpop.f32.mrb[0].mxu0
        %v2745 = vadd.f32 0.0, %v2744
        %v2746 = vpop.f32.mrb[0].mxu0
        %2747 = vmatprep.mubr.bf16.mxu0 %v2654
        %2748 = vmatmul.mubr.bf16.gmra.mrb[0].mxu0 %v2653
        %v2749 = vpop.f32.mrb[0].mxu0
        %v2750 = vadd.f32 0.0, %v2749
        %v2751 = vpop.f32.mrb[0].mxu0
        %v2752 = vpop.f32.mrb[0].mxu0
        %v2753 = vadd.f32 0.0, %v2752
        %v2754 = vpop.f32.mrb[0].mxu0
        %2755 = vmatprep.mubr.bf16.mxu0 %v2656
        %2756 = vmatmul.mubr.bf16.gmra.mrb[0].mxu0 %v2655
        %v2757 = vpop.f32.mrb[0].mxu0
        %v2758 = vadd.f32 0.0, %v2757
        %v2759 = vpop.f32.mrb[0].mxu0
        %v2760 = vpop.f32.mrb[0].mxu0
        %v2761 = vadd.f32 0.0, %v2760
        %v2762 = vpop.f32.mrb[0].mxu0
        %2763 = vmatprep.mubr.bf16.mxu0 %v2658
        %2764 = vmatmul.mubr.bf16.gmra.mrb[0].mxu0 %v2657
        %v2765 = vpop.f32.mrb[0].mxu0
        %v2766 = vadd.f32 0.0, %v2765
        %v2767 = vpop.f32.mrb[0].mxu0
        %v2768 = vpop.f32.mrb[0].mxu0
        %v2769 = vadd.f32 0.0, %v2768
        %v2770 = vpop.f32.mrb[0].mxu0
        %2771 = vdwg.mxu0
        %v2772 = vpack.c.bf16 %v2713, %v2710
        %v2773 = vpack.c.bf16 %v2721, %v2718
        %v2774 = vpack.c.bf16 %v2729, %v2726
        %v2775 = vpack.c.bf16 %v2737, %v2734
        %v2776 = vpack.c.bf16 %v2745, %v2742
        %v2777 = vpack.c.bf16 %v2753, %v2750
        %v2778 = vpack.c.bf16 %v2761, %v2758
        %v2779 = vpack.c.bf16 %v2769, %v2766
        %s2780 = scalar_lea.vmem [#allocation6], 192
        %v2781 = vld [vmem:[%s2780] sm:$0xff]
        %v2782 = vld [vmem:[%s2780 + $0x8] sm:$0xff]
        %v2783 = vld [vmem:[%s2780 + $0x10] sm:$0xff]
        %v2784 = vld [vmem:[%s2780 + $0x18] sm:$0xff]
        %v2785 = vld [vmem:[%s2780 + $0x20] sm:$0xff]
        %v2786 = vld [vmem:[%s2780 + $0x28] sm:$0xff]
        %v2787 = vld [vmem:[%s2780 + $0x30] sm:$0xff]
        %v2788 = vld [vmem:[%s2780 + $0x38] sm:$0xff]
        %v2789 = vld [vmem:[%s2780 + $0x40] sm:$0xff]
        %v2790 = vld [vmem:[%s2780 + $0x48] sm:$0xff]
        %v2791 = vld [vmem:[%s2780 + $0x50] sm:$0xff]
        %v2792 = vld [vmem:[%s2780 + $0x58] sm:$0xff]
        %v2805 = vunpack.c.l.b16 %v2781
        %v2806 = vunpack.c.h.b16 %v2781
        %v2807 = vunpack.c.l.b16 %v2782
        %v2808 = vunpack.c.h.b16 %v2782
        %v2809 = vunpack.c.l.b16 %v2783
        %v2810 = vunpack.c.h.b16 %v2783
        %v2811 = vunpack.c.l.b16 %v2784
        %v2812 = vunpack.c.h.b16 %v2784
        %v2813 = vunpack.c.l.b16 %v2785
        %v2814 = vunpack.c.h.b16 %v2785
        %v2815 = vunpack.c.l.b16 %v2786
        %v2816 = vunpack.c.h.b16 %v2786
        %v2817 = vunpack.c.l.b16 %v2787
        %v2818 = vunpack.c.h.b16 %v2787
        %v2819 = vunpack.c.l.b16 %v2788
        %v2820 = vunpack.c.h.b16 %v2788
        %v2821 = vunpack.c.l.b16 %v2789
        %v2822 = vunpack.c.h.b16 %v2789
        %v2823 = vunpack.c.l.b16 %v2790
        %v2824 = vunpack.c.h.b16 %v2790
        %v2825 = vunpack.c.l.b16 %v2791
        %v2826 = vunpack.c.h.b16 %v2791
        %v2827 = vunpack.c.l.b16 %v2792
        %v2828 = vunpack.c.h.b16 %v2792
        %v2829 = vpack.c.b16 %v2807, %v2805
        %v2830 = vpack.c.b16 %v2808, %v2806
        %v2831 = vpack.c.b16 %v2811, %v2809
        %v2832 = vpack.c.b16 %v2812, %v2810
        %v2833 = vpack.c.b16 %v2815, %v2813
        %v2834 = vpack.c.b16 %v2816, %v2814
        %v2835 = vpack.c.b16 %v2819, %v2817
        %v2836 = vpack.c.b16 %v2820, %v2818
        %v2837 = vpack.c.b16 %v2823, %v2821
        %v2838 = vpack.c.b16 %v2824, %v2822
        %v2839 = vpack.c.b16 %v2827, %v2825
        %v2840 = vpack.c.b16 %v2828, %v2826
        %v2854 = vsel %vm1307, %v2772, 0
        %v2857 = vsel %vm1307, %v2773, 0
        %v2860 = vsel %vm1307, %v2774, 0
        %v2863 = vsel %vm1307, %v2775, 0
        %v2866 = vsel %vm1307, %v2776, 0
        %v2869 = vsel %vm1307, %v2777, 0
        %v2872 = vsel %vm1307, %v2778, 0
        %v2875 = vsel %vm1307, %v2779, 0
        %2877 = vmatprep.subr.bf16.mxu0 %v2830
        %2878 = vmatpush1.bf16.msra.mxu0 %v2829
        %2879 = vmatprep.subr.bf16.mxu0 %v2832
        %2880 = vmatpush1.bf16.msra.mxu0 %v2831
        %2881 = vmatprep.subr.bf16.mxu0 %v2834
        %2882 = vmatpush1.bf16.msra.mxu0 %v2833
        %2883 = vmatprep.subr.bf16.mxu0 %v2836
        %2884 = vmatpush1.bf16.msra.mxu0 %v2835
        %2885 = vmatprep.subr.bf16.mxu0 %v2838
        %2886 = vmatpush1.bf16.msra.mxu0 %v2837
        %2887 = vmatprep.subr.bf16.mxu0 %v2840
        %2888 = vmatpush1.bf16.msra.mxu0 %v2839
        %2889 = vmatprep.subr.bf16.mxu0 0
        %2890 = vmatpush1.bf16.msra.mxu0 0
        %2891 = vmatprep.subr.bf16.mxu0 0
        %2892 = vmatpush1.bf16.msra.mxu0 0
        %2893 = vmatprep.subr.bf16.mxu0 0
        %2894 = vmatpush1.bf16.msra.mxu0 0
        %2895 = vmatprep.subr.bf16.mxu0 0
        %2896 = vmatpush1.bf16.msra.mxu0 0
        %2897 = vmatprep.subr.bf16.mxu0 0
        %2898 = vmatpush1.bf16.msra.mxu0 0
        %2899 = vmatprep.subr.bf16.mxu0 0
        %2900 = vmatpush1.bf16.msra.mxu0 0
        %2901 = vmatprep.subr.bf16.mxu0 0
        %2902 = vmatpush1.bf16.msra.mxu0 0
        %2903 = vmatprep.subr.bf16.mxu0 0
        %2904 = vmatpush1.bf16.msra.mxu0 0
        %2905 = vmatprep.subr.bf16.mxu0 0
        %2906 = vmatpush1.bf16.msra.mxu0 0
        %2907 = vmatprep.subr.bf16.mxu0 0
        %2908 = vmatpush1.bf16.msra.mxu0 0
        %2909 = vmatprep.mubr.bf16.mxu0 0
        %2910 = vmatmul.mubr.bf16.gmra.mrb[0].mxu0 %v2854
        %v2911 = vpop.f32.mrb[0].mxu0
        %v2912 = vadd.f32 0.0, %v2911
        %v2913 = vpop.f32.mrb[0].mxu0
        %v2914 = vadd.f32 0.0, %v2913
        %v2915 = vpop.f32.mrb[0].mxu0
        %v2916 = vadd.f32 0.0, %v2915
        %v2917 = vpop.f32.mrb[0].mxu0
        %v2918 = vadd.f32 0.0, %v2917
        %2919 = vmatprep.mubr.bf16.mxu0 0
        %2920 = vmatmul.mubr.bf16.gmra.mrb[0].mxu0 %v2857
        %v2921 = vpop.f32.mrb[0].mxu0
        %v2922 = vadd.f32 0.0, %v2921
        %v2923 = vpop.f32.mrb[0].mxu0
        %v2924 = vadd.f32 0.0, %v2923
        %v2925 = vpop.f32.mrb[0].mxu0
        %v2926 = vadd.f32 0.0, %v2925
        %v2927 = vpop.f32.mrb[0].mxu0
        %v2928 = vadd.f32 0.0, %v2927
        %2929 = vmatprep.mubr.bf16.mxu0 0
        %2930 = vmatmul.mubr.bf16.gmra.mrb[0].mxu0 %v2860
        %v2931 = vpop.f32.mrb[0].mxu0
        %v2932 = vadd.f32 0.0, %v2931
        %v2933 = vpop.f32.mrb[0].mxu0
        %v2934 = vadd.f32 0.0, %v2933
        %v2935 = vpop.f32.mrb[0].mxu0
        %v2936 = vadd.f32 0.0, %v2935
        %v2937 = vpop.f32.mrb[0].mxu0
        %v2938 = vadd.f32 0.0, %v2937
        %2939 = vmatprep.mubr.bf16.mxu0 0
        %2940 = vmatmul.mubr.bf16.gmra.mrb[0].mxu0 %v2863
        %v2941 = vpop.f32.mrb[0].mxu0
        %v2942 = vadd.f32 0.0, %v2941
        %v2943 = vpop.f32.mrb[0].mxu0
        %v2944 = vadd.f32 0.0, %v2943
        %v2945 = vpop.f32.mrb[0].mxu0
        %v2946 = vadd.f32 0.0, %v2945
        %v2947 = vpop.f32.mrb[0].mxu0
        %v2948 = vadd.f32 0.0, %v2947
        %2949 = vmatprep.mubr.bf16.mxu0 0
        %2950 = vmatmul.mubr.bf16.gmra.mrb[0].mxu0 %v2866
        %v2951 = vpop.f32.mrb[0].mxu0
        %v2952 = vadd.f32 0.0, %v2951
        %v2953 = vpop.f32.mrb[0].mxu0
        %v2954 = vadd.f32 0.0, %v2953
        %v2955 = vpop.f32.mrb[0].mxu0
        %v2956 = vadd.f32 0.0, %v2955
        %v2957 = vpop.f32.mrb[0].mxu0
        %v2958 = vadd.f32 0.0, %v2957
        %2959 = vmatprep.mubr.bf16.mxu0 0
        %2960 = vmatmul.mubr.bf16.gmra.mrb[0].mxu0 %v2869
        %v2961 = vpop.f32.mrb[0].mxu0
        %v2962 = vadd.f32 0.0, %v2961
        %v2963 = vpop.f32.mrb[0].mxu0
        %v2964 = vadd.f32 0.0, %v2963
        %v2965 = vpop.f32.mrb[0].mxu0
        %v2966 = vadd.f32 0.0, %v2965
        %v2967 = vpop.f32.mrb[0].mxu0
        %v2968 = vadd.f32 0.0, %v2967
        %2969 = vmatprep.mubr.bf16.mxu0 0
        %2970 = vmatmul.mubr.bf16.gmra.mrb[0].mxu0 %v2872
        %v2971 = vpop.f32.mrb[0].mxu0
        %v2972 = vadd.f32 0.0, %v2971
        %v2973 = vpop.f32.mrb[0].mxu0
        %v2974 = vadd.f32 0.0, %v2973
        %v2975 = vpop.f32.mrb[0].mxu0
        %v2976 = vadd.f32 0.0, %v2975
        %v2977 = vpop.f32.mrb[0].mxu0
        %v2978 = vadd.f32 0.0, %v2977
        %2979 = vmatprep.mubr.bf16.mxu0 0
        %2980 = vmatmul.mubr.bf16.gmra.mrb[0].mxu0 %v2875
        %v2981 = vpop.f32.mrb[0].mxu0
        %v2982 = vadd.f32 0.0, %v2981
        %v2983 = vpop.f32.mrb[0].mxu0
        %v2984 = vadd.f32 0.0, %v2983
        %v2985 = vpop.f32.mrb[0].mxu0
        %v2986 = vadd.f32 0.0, %v2985
        %v2987 = vpop.f32.mrb[0].mxu0
        %v2988 = vadd.f32 0.0, %v2987
        %2989 = vdwg.mxu0
        %v2990 = vadd.f32 %v2500, %v2912
        %v2991 = vadd.f32 %v2502, %v2914
        %v2992 = vadd.f32 %v2504, %v2916
        %v2993 = vadd.f32 %v2506, %v2918
        %v2994 = vadd.f32 %v2510, %v2922
        %v2995 = vadd.f32 %v2512, %v2924
        %v2996 = vadd.f32 %v2514, %v2926
        %v2997 = vadd.f32 %v2516, %v2928
        %v2998 = vadd.f32 %v2520, %v2932
        %v2999 = vadd.f32 %v2522, %v2934
        %v3000 = vadd.f32 %v2524, %v2936
        %v3001 = vadd.f32 %v2526, %v2938
        %v3002 = vadd.f32 %v2530, %v2942
        %v3003 = vadd.f32 %v2532, %v2944
        %v3004 = vadd.f32 %v2534, %v2946
        %v3005 = vadd.f32 %v2536, %v2948
        %v3006 = vadd.f32 %v2540, %v2952
        %v3007 = vadd.f32 %v2542, %v2954
        %v3008 = vadd.f32 %v2544, %v2956
        %v3009 = vadd.f32 %v2546, %v2958
        %v3010 = vadd.f32 %v2550, %v2962
        %v3011 = vadd.f32 %v2552, %v2964
        %v3012 = vadd.f32 %v2554, %v2966
        %v3013 = vadd.f32 %v2556, %v2968
        %v3014 = vadd.f32 %v2560, %v2972
        %v3015 = vadd.f32 %v2562, %v2974
        %v3016 = vadd.f32 %v2564, %v2976
        %v3017 = vadd.f32 %v2566, %v2978
        %v3018 = vadd.f32 %v2570, %v2982
        %v3019 = vadd.f32 %v2572, %v2984
        %v3020 = vadd.f32 %v2574, %v2986
        %v3021 = vadd.f32 %v2576, %v2988
        %s3022 = scalar_lea.vmem [#allocation4], 384
        %v3023 = vld [vmem:[%s3022] sm:$0xff]
        %v3024 = vld [vmem:[%s3022 + $0x8] sm:$0xff]
        %v3025 = vld [vmem:[%s3022 + $0x10] sm:$0xff]
        %v3026 = vld [vmem:[%s3022 + $0x18] sm:$0xff]
        %v3027 = vld [vmem:[%s3022 + $0x20] sm:$0xff]
        %v3028 = vld [vmem:[%s3022 + $0x28] sm:$0xff]
        %v3029 = vld [vmem:[%s3022 + $0x30] sm:$0xff]
        %v3030 = vld [vmem:[%s3022 + $0x38] sm:$0xff]
        %v3031 = vld [vmem:[%s3022 + $0x40] sm:$0xff]
        %v3032 = vld [vmem:[%s3022 + $0x48] sm:$0xff]
        %v3033 = vld [vmem:[%s3022 + $0x50] sm:$0xff]
        %v3034 = vld [vmem:[%s3022 + $0x58] sm:$0xff]
        %v3035 = vld [vmem:[%s3022 + $0x60] sm:$0xff]
        %v3036 = vld [vmem:[%s3022 + $0x68] sm:$0xff]
        %v3037 = vld [vmem:[%s3022 + $0x70] sm:$0xff]
        %v3038 = vld [vmem:[%s3022 + $0x78] sm:$0xff]
        %v3055 = vunpack.c.l.b16 %v3023
        %v3056 = vunpack.c.h.b16 %v3023
        %v3057 = vunpack.c.l.b16 %v3024
        %v3058 = vunpack.c.h.b16 %v3024
        %v3059 = vunpack.c.l.b16 %v3025
        %v3060 = vunpack.c.h.b16 %v3025
        %v3061 = vunpack.c.l.b16 %v3026
        %v3062 = vunpack.c.h.b16 %v3026
        %v3063 = vunpack.c.l.b16 %v3027
        %v3064 = vunpack.c.h.b16 %v3027
        %v3065 = vunpack.c.l.b16 %v3028
        %v3066 = vunpack.c.h.b16 %v3028
        %v3067 = vunpack.c.l.b16 %v3029
        %v3068 = vunpack.c.h.b16 %v3029
        %v3069 = vunpack.c.l.b16 %v3030
        %v3070 = vunpack.c.h.b16 %v3030
        %v3071 = vunpack.c.l.b16 %v3031
        %v3072 = vunpack.c.h.b16 %v3031
        %v3073 = vunpack.c.l.b16 %v3032
        %v3074 = vunpack.c.h.b16 %v3032
        %v3075 = vunpack.c.l.b16 %v3033
        %v3076 = vunpack.c.h.b16 %v3033
        %v3077 = vunpack.c.l.b16 %v3034
        %v3078 = vunpack.c.h.b16 %v3034
        %v3079 = vunpack.c.l.b16 %v3035
        %v3080 = vunpack.c.h.b16 %v3035
        %v3081 = vunpack.c.l.b16 %v3036
        %v3082 = vunpack.c.h.b16 %v3036
        %v3083 = vunpack.c.l.b16 %v3037
        %v3084 = vunpack.c.h.b16 %v3037
        %v3085 = vunpack.c.l.b16 %v3038
        %v3086 = vunpack.c.h.b16 %v3038
        %v3087 = vpack.c.b16 %v3057, %v3055
        %v3088 = vpack.c.b16 %v3058, %v3056
        %v3089 = vpack.c.b16 %v3061, %v3059
        %v3090 = vpack.c.b16 %v3062, %v3060
        %v3091 = vpack.c.b16 %v3065, %v3063
        %v3092 = vpack.c.b16 %v3066, %v3064
        %v3093 = vpack.c.b16 %v3069, %v3067
        %v3094 = vpack.c.b16 %v3070, %v3068
        %v3095 = vpack.c.b16 %v3073, %v3071
        %v3096 = vpack.c.b16 %v3074, %v3072
        %v3097 = vpack.c.b16 %v3077, %v3075
        %v3098 = vpack.c.b16 %v3078, %v3076
        %v3099 = vpack.c.b16 %v3081, %v3079
        %v3100 = vpack.c.b16 %v3082, %v3080
        %v3101 = vpack.c.b16 %v3085, %v3083
        %v3102 = vpack.c.b16 %v3086, %v3084
        %3119 = vmatprep.subr.bf16.mxu0 0
        %3120 = vmatpush1.bf16.msra.mxu0 %v1740
        %3121 = vmatprep.subr.bf16.mxu0 0
        %3122 = vmatpush1.bf16.msra.mxu0 %v1741
        %3123 = vmatprep.subr.bf16.mxu0 0
        %3124 = vmatpush1.bf16.msra.mxu0 %v1742
        %3125 = vmatprep.subr.bf16.mxu0 0
        %3126 = vmatpush1.bf16.msra.mxu0 %v1743
        %3127 = vmatprep.subr.bf16.mxu0 0
        %3128 = vmatpush1.bf16.msra.mxu0 %v1744
        %3129 = vmatprep.subr.bf16.mxu0 0
        %3130 = vmatpush1.bf16.msra.mxu0 %v1745
        %3131 = vmatprep.subr.bf16.mxu0 0
        %3132 = vmatpush1.bf16.msra.mxu0 %v1746
        %3133 = vmatprep.subr.bf16.mxu0 0
        %3134 = vmatpush1.bf16.msra.mxu0 %v1747
        %3135 = vmatprep.subr.bf16.mxu0 0
        %3136 = vmatpush1.bf16.msra.mxu0 %v1748
        %3137 = vmatprep.subr.bf16.mxu0 0
        %3138 = vmatpush1.bf16.msra.mxu0 %v1749
        %3139 = vmatprep.subr.bf16.mxu0 0
        %3140 = vmatpush1.bf16.msra.mxu0 %v1750
        %3141 = vmatprep.subr.bf16.mxu0 0
        %3142 = vmatpush1.bf16.msra.mxu0 %v1751
        %3143 = vmatprep.subr.bf16.mxu0 0
        %3144 = vmatpush1.bf16.msra.mxu0 %v1752
        %3145 = vmatprep.subr.bf16.mxu0 0
        %3146 = vmatpush1.bf16.msra.mxu0 %v1753
        %3147 = vmatprep.subr.bf16.mxu0 0
        %3148 = vmatpush1.bf16.msra.mxu0 %v1754
        %3149 = vmatprep.subr.bf16.mxu0 0
        %3150 = vmatpush1.bf16.msra.mxu0 %v1755
        %3151 = vmatprep.mubr.bf16.mxu0 %v3088
        %3152 = vmatmul.mubr.bf16.gmra.mrb[0].mxu0 %v3087
        %v3153 = vpop.f32.mrb[0].mxu0
        %v3154 = vadd.f32 0.0, %v3153
        %v3155 = vpop.f32.mrb[0].mxu0
        %v3156 = vpop.f32.mrb[0].mxu0
        %v3157 = vadd.f32 0.0, %v3156
        %v3158 = vpop.f32.mrb[0].mxu0
        %3159 = vmatprep.mubr.bf16.mxu0 %v3090
        %3160 = vmatmul.mubr.bf16.gmra.mrb[0].mxu0 %v3089
        %v3161 = vpop.f32.mrb[0].mxu0
        %v3162 = vadd.f32 0.0, %v3161
        %v3163 = vpop.f32.mrb[0].mxu0
        %v3164 = vpop.f32.mrb[0].mxu0
        %v3165 = vadd.f32 0.0, %v3164
        %v3166 = vpop.f32.mrb[0].mxu0
        %3167 = vmatprep.mubr.bf16.mxu0 %v3092
        %3168 = vmatmul.mubr.bf16.gmra.mrb[0].mxu0 %v3091
        %v3169 = vpop.f32.mrb[0].mxu0
        %v3170 = vadd.f32 0.0, %v3169
        %v3171 = vpop.f32.mrb[0].mxu0
        %v3172 = vpop.f32.mrb[0].mxu0
        %v3173 = vadd.f32 0.0, %v3172
        %v3174 = vpop.f32.mrb[0].mxu0
        %3175 = vmatprep.mubr.bf16.mxu0 %v3094
        %3176 = vmatmul.mubr.bf16.gmra.mrb[0].mxu0 %v3093
        %v3177 = vpop.f32.mrb[0].mxu0
        %v3178 = vadd.f32 0.0, %v3177
        %v3179 = vpop.f32.mrb[0].mxu0
        %v3180 = vpop.f32.mrb[0].mxu0
        %v3181 = vadd.f32 0.0, %v3180
        %v3182 = vpop.f32.mrb[0].mxu0
        %3183 = vmatprep.mubr.bf16.mxu0 %v3096
        %3184 = vmatmul.mubr.bf16.gmra.mrb[0].mxu0 %v3095
        %v3185 = vpop.f32.mrb[0].mxu0
        %v3186 = vadd.f32 0.0, %v3185
        %v3187 = vpop.f32.mrb[0].mxu0
        %v3188 = vpop.f32.mrb[0].mxu0
        %v3189 = vadd.f32 0.0, %v3188
        %v3190 = vpop.f32.mrb[0].mxu0
        %3191 = vmatprep.mubr.bf16.mxu0 %v3098
        %3192 = vmatmul.mubr.bf16.gmra.mrb[0].mxu0 %v3097
        %v3193 = vpop.f32.mrb[0].mxu0
        %v3194 = vadd.f32 0.0, %v3193
        %v3195 = vpop.f32.mrb[0].mxu0
        %v3196 = vpop.f32.mrb[0].mxu0
        %v3197 = vadd.f32 0.0, %v3196
        %v3198 = vpop.f32.mrb[0].mxu0
        %3199 = vmatprep.mubr.bf16.mxu0 %v3100
        %3200 = vmatmul.mubr.bf16.gmra.mrb[0].mxu0 %v3099
        %v3201 = vpop.f32.mrb[0].mxu0
        %v3202 = vadd.f32 0.0, %v3201
        %v3203 = vpop.f32.mrb[0].mxu0
        %v3204 = vpop.f32.mrb[0].mxu0
        %v3205 = vadd.f32 0.0, %v3204
        %v3206 = vpop.f32.mrb[0].mxu0
        %3207 = vmatprep.mubr.bf16.mxu0 %v3102
        %3208 = vmatmul.mubr.bf16.gmra.mrb[0].mxu0 %v3101
        %v3209 = vpop.f32.mrb[0].mxu0
        %v3210 = vadd.f32 0.0, %v3209
        %v3211 = vpop.f32.mrb[0].mxu0
        %v3212 = vpop.f32.mrb[0].mxu0
        %v3213 = vadd.f32 0.0, %v3212
        %v3214 = vpop.f32.mrb[0].mxu0
        %3215 = vdwg.mxu0
        %v3216 = vpack.c.bf16 %v3157, %v3154
        %v3217 = vpack.c.bf16 %v3165, %v3162
        %v3218 = vpack.c.bf16 %v3173, %v3170
        %v3219 = vpack.c.bf16 %v3181, %v3178
        %v3220 = vpack.c.bf16 %v3189, %v3186
        %v3221 = vpack.c.bf16 %v3197, %v3194
        %v3222 = vpack.c.bf16 %v3205, %v3202
        %v3223 = vpack.c.bf16 %v3213, %v3210
        %s3224 = scalar_lea.vmem [#allocation6], 288
        %v3225 = vld [vmem:[%s3224] sm:$0xff]
        %v3226 = vld [vmem:[%s3224 + $0x8] sm:$0xff]
        %v3227 = vld [vmem:[%s3224 + $0x10] sm:$0xff]
        %v3228 = vld [vmem:[%s3224 + $0x18] sm:$0xff]
        %v3229 = vld [vmem:[%s3224 + $0x20] sm:$0xff]
        %v3230 = vld [vmem:[%s3224 + $0x28] sm:$0xff]
        %v3231 = vld [vmem:[%s3224 + $0x30] sm:$0xff]
        %v3232 = vld [vmem:[%s3224 + $0x38] sm:$0xff]
        %v3233 = vld [vmem:[%s3224 + $0x40] sm:$0xff]
        %v3234 = vld [vmem:[%s3224 + $0x48] sm:$0xff]
        %v3235 = vld [vmem:[%s3224 + $0x50] sm:$0xff]
        %v3236 = vld [vmem:[%s3224 + $0x58] sm:$0xff]
        %v3249 = vunpack.c.l.b16 %v3225
        %v3250 = vunpack.c.h.b16 %v3225
        %v3251 = vunpack.c.l.b16 %v3226
        %v3252 = vunpack.c.h.b16 %v3226
        %v3253 = vunpack.c.l.b16 %v3227
        %v3254 = vunpack.c.h.b16 %v3227
        %v3255 = vunpack.c.l.b16 %v3228
        %v3256 = vunpack.c.h.b16 %v3228
        %v3257 = vunpack.c.l.b16 %v3229
        %v3258 = vunpack.c.h.b16 %v3229
        %v3259 = vunpack.c.l.b16 %v3230
        %v3260 = vunpack.c.h.b16 %v3230
        %v3261 = vunpack.c.l.b16 %v3231
        %v3262 = vunpack.c.h.b16 %v3231
        %v3263 = vunpack.c.l.b16 %v3232
        %v3264 = vunpack.c.h.b16 %v3232
        %v3265 = vunpack.c.l.b16 %v3233
        %v3266 = vunpack.c.h.b16 %v3233
        %v3267 = vunpack.c.l.b16 %v3234
        %v3268 = vunpack.c.h.b16 %v3234
        %v3269 = vunpack.c.l.b16 %v3235
        %v3270 = vunpack.c.h.b16 %v3235
        %v3271 = vunpack.c.l.b16 %v3236
        %v3272 = vunpack.c.h.b16 %v3236
        %v3273 = vpack.c.b16 %v3251, %v3249
        %v3274 = vpack.c.b16 %v3252, %v3250
        %v3275 = vpack.c.b16 %v3255, %v3253
        %v3276 = vpack.c.b16 %v3256, %v3254
        %v3277 = vpack.c.b16 %v3259, %v3257
        %v3278 = vpack.c.b16 %v3260, %v3258
        %v3279 = vpack.c.b16 %v3263, %v3261
        %v3280 = vpack.c.b16 %v3264, %v3262
        %v3281 = vpack.c.b16 %v3267, %v3265
        %v3282 = vpack.c.b16 %v3268, %v3266
        %v3283 = vpack.c.b16 %v3271, %v3269
        %v3284 = vpack.c.b16 %v3272, %v3270
        %v3298 = vsel %vm1307, %v3216, 0
        %v3301 = vsel %vm1307, %v3217, 0
        %v3304 = vsel %vm1307, %v3218, 0
        %v3307 = vsel %vm1307, %v3219, 0
        %v3310 = vsel %vm1307, %v3220, 0
        %v3313 = vsel %vm1307, %v3221, 0
        %v3316 = vsel %vm1307, %v3222, 0
        %v3319 = vsel %vm1307, %v3223, 0
        %3321 = vmatprep.subr.bf16.mxu0 %v3274
        %3322 = vmatpush1.bf16.msra.mxu0 %v3273
        %3323 = vmatprep.subr.bf16.mxu0 %v3276
        %3324 = vmatpush1.bf16.msra.mxu0 %v3275
        %3325 = vmatprep.subr.bf16.mxu0 %v3278
        %3326 = vmatpush1.bf16.msra.mxu0 %v3277
        %3327 = vmatprep.subr.bf16.mxu0 %v3280
        %3328 = vmatpush1.bf16.msra.mxu0 %v3279
        %3329 = vmatprep.subr.bf16.mxu0 %v3282
        %3330 = vmatpush1.bf16.msra.mxu0 %v3281
        %3331 = vmatprep.subr.bf16.mxu0 %v3284
        %3332 = vmatpush1.bf16.msra.mxu0 %v3283
        %3333 = vmatprep.subr.bf16.mxu0 0
        %3334 = vmatpush1.bf16.msra.mxu0 0
        %3335 = vmatprep.subr.bf16.mxu0 0
        %3336 = vmatpush1.bf16.msra.mxu0 0
        %3337 = vmatprep.subr.bf16.mxu0 0
        %3338 = vmatpush1.bf16.msra.mxu0 0
        %3339 = vmatprep.subr.bf16.mxu0 0
        %3340 = vmatpush1.bf16.msra.mxu0 0
        %3341 = vmatprep.subr.bf16.mxu0 0
        %3342 = vmatpush1.bf16.msra.mxu0 0
        %3343 = vmatprep.subr.bf16.mxu0 0
        %3344 = vmatpush1.bf16.msra.mxu0 0
        %3345 = vmatprep.subr.bf16.mxu0 0
        %3346 = vmatpush1.bf16.msra.mxu0 0
        %3347 = vmatprep.subr.bf16.mxu0 0
        %3348 = vmatpush1.bf16.msra.mxu0 0
        %3349 = vmatprep.subr.bf16.mxu0 0
        %3350 = vmatpush1.bf16.msra.mxu0 0
        %3351 = vmatprep.subr.bf16.mxu0 0
        %3352 = vmatpush1.bf16.msra.mxu0 0
        %3353 = vmatprep.mubr.bf16.mxu0 0
        %3354 = vmatmul.mubr.bf16.gmra.mrb[0].mxu0 %v3298
        %v3355 = vpop.f32.mrb[0].mxu0
        %v3356 = vadd.f32 0.0, %v3355
        %v3357 = vpop.f32.mrb[0].mxu0
        %v3358 = vadd.f32 0.0, %v3357
        %v3359 = vpop.f32.mrb[0].mxu0
        %v3360 = vadd.f32 0.0, %v3359
        %v3361 = vpop.f32.mrb[0].mxu0
        %v3362 = vadd.f32 0.0, %v3361
        %3363 = vmatprep.mubr.bf16.mxu0 0
        %3364 = vmatmul.mubr.bf16.gmra.mrb[0].mxu0 %v3301
        %v3365 = vpop.f32.mrb[0].mxu0
        %v3366 = vadd.f32 0.0, %v3365
        %v3367 = vpop.f32.mrb[0].mxu0
        %v3368 = vadd.f32 0.0, %v3367
        %v3369 = vpop.f32.mrb[0].mxu0
        %v3370 = vadd.f32 0.0, %v3369
        %v3371 = vpop.f32.mrb[0].mxu0
        %v3372 = vadd.f32 0.0, %v3371
        %3373 = vmatprep.mubr.bf16.mxu0 0
        %3374 = vmatmul.mubr.bf16.gmra.mrb[0].mxu0 %v3304
        %v3375 = vpop.f32.mrb[0].mxu0
        %v3376 = vadd.f32 0.0, %v3375
        %v3377 = vpop.f32.mrb[0].mxu0
        %v3378 = vadd.f32 0.0, %v3377
        %v3379 = vpop.f32.mrb[0].mxu0
        %v3380 = vadd.f32 0.0, %v3379
        %v3381 = vpop.f32.mrb[0].mxu0
        %v3382 = vadd.f32 0.0, %v3381
        %3383 = vmatprep.mubr.bf16.mxu0 0
        %3384 = vmatmul.mubr.bf16.gmra.mrb[0].mxu0 %v3307
        %v3385 = vpop.f32.mrb[0].mxu0
        %v3386 = vadd.f32 0.0, %v3385
        %v3387 = vpop.f32.mrb[0].mxu0
        %v3388 = vadd.f32 0.0, %v3387
        %v3389 = vpop.f32.mrb[0].mxu0
        %v3390 = vadd.f32 0.0, %v3389
        %v3391 = vpop.f32.mrb[0].mxu0
        %v3392 = vadd.f32 0.0, %v3391
        %3393 = vmatprep.mubr.bf16.mxu0 0
        %3394 = vmatmul.mubr.bf16.gmra.mrb[0].mxu0 %v3310
        %v3395 = vpop.f32.mrb[0].mxu0
        %v3396 = vadd.f32 0.0, %v3395
        %v3397 = vpop.f32.mrb[0].mxu0
        %v3398 = vadd.f32 0.0, %v3397
        %v3399 = vpop.f32.mrb[0].mxu0
        %v3400 = vadd.f32 0.0, %v3399
        %v3401 = vpop.f32.mrb[0].mxu0
        %v3402 = vadd.f32 0.0, %v3401
        %3403 = vmatprep.mubr.bf16.mxu0 0
        %3404 = vmatmul.mubr.bf16.gmra.mrb[0].mxu0 %v3313
        %v3405 = vpop.f32.mrb[0].mxu0
        %v3406 = vadd.f32 0.0, %v3405
        %v3407 = vpop.f32.mrb[0].mxu0
        %v3408 = vadd.f32 0.0, %v3407
        %v3409 = vpop.f32.mrb[0].mxu0
        %v3410 = vadd.f32 0.0, %v3409
        %v3411 = vpop.f32.mrb[0].mxu0
        %v3412 = vadd.f32 0.0, %v3411
        %3413 = vmatprep.mubr.bf16.mxu0 0
        %3414 = vmatmul.mubr.bf16.gmra.mrb[0].mxu0 %v3316
        %v3415 = vpop.f32.mrb[0].mxu0
        %v3416 = vadd.f32 0.0, %v3415
        %v3417 = vpop.f32.mrb[0].mxu0
        %v3418 = vadd.f32 0.0, %v3417
        %v3419 = vpop.f32.mrb[0].mxu0
        %v3420 = vadd.f32 0.0, %v3419
        %v3421 = vpop.f32.mrb[0].mxu0
        %v3422 = vadd.f32 0.0, %v3421
        %3423 = vmatprep.mubr.bf16.mxu0 0
        %3424 = vmatmul.mubr.bf16.gmra.mrb[0].mxu0 %v3319
        %v3425 = vpop.f32.mrb[0].mxu0
        %v3426 = vadd.f32 0.0, %v3425
        %v3427 = vpop.f32.mrb[0].mxu0
        %v3428 = vadd.f32 0.0, %v3427
        %v3429 = vpop.f32.mrb[0].mxu0
        %v3430 = vadd.f32 0.0, %v3429
        %v3431 = vpop.f32.mrb[0].mxu0
        %v3432 = vadd.f32 0.0, %v3431
        %3433 = vdwg.mxu0
        %v3434 = vadd.f32 %v2990, %v3356
        %v3435 = vadd.f32 %v2991, %v3358
        %v3436 = vadd.f32 %v2992, %v3360
        %v3437 = vadd.f32 %v2993, %v3362
        %v3438 = vadd.f32 %v2994, %v3366
        %v3439 = vadd.f32 %v2995, %v3368
        %v3440 = vadd.f32 %v2996, %v3370
        %v3441 = vadd.f32 %v2997, %v3372
        %v3442 = vadd.f32 %v2998, %v3376
        %v3443 = vadd.f32 %v2999, %v3378
        %v3444 = vadd.f32 %v3000, %v3380
        %v3445 = vadd.f32 %v3001, %v3382
        %v3446 = vadd.f32 %v3002, %v3386
        %v3447 = vadd.f32 %v3003, %v3388
        %v3448 = vadd.f32 %v3004, %v3390
        %v3449 = vadd.f32 %v3005, %v3392
        %v3450 = vadd.f32 %v3006, %v3396
        %v3451 = vadd.f32 %v3007, %v3398
        %v3452 = vadd.f32 %v3008, %v3400
        %v3453 = vadd.f32 %v3009, %v3402
        %v3454 = vadd.f32 %v3010, %v3406
        %v3455 = vadd.f32 %v3011, %v3408
        %v3456 = vadd.f32 %v3012, %v3410
        %v3457 = vadd.f32 %v3013, %v3412
        %v3458 = vadd.f32 %v3014, %v3416
        %v3459 = vadd.f32 %v3015, %v3418
        %v3460 = vadd.f32 %v3016, %v3420
        %v3461 = vadd.f32 %v3017, %v3422
        %v3462 = vadd.f32 %v3018, %v3426
        %v3463 = vadd.f32 %v3019, %v3428
        %v3464 = vadd.f32 %v3020, %v3430
        %v3465 = vadd.f32 %v3021, %v3432
        %v3466 = vld [vmem:[%s5] sm:$0xff]
        %v3467 = vld [vmem:[%s5 + $0x8] sm:$0xff]
        %v3468 = vld [vmem:[%s5 + $0x10] sm:$0xff]
        %v3469 = vld [vmem:[%s5 + $0x18] sm:$0xff]
        %v3470 = vld [vmem:[%s5 + $0x20] sm:$0xff]
        %v3471 = vld [vmem:[%s5 + $0x28] sm:$0xff]
        %v3472 = vld [vmem:[%s5 + $0x30] sm:$0xff]
        %v3473 = vld [vmem:[%s5 + $0x38] sm:$0xff]
        %v3474 = vld [vmem:[%s5 + $0x40] sm:$0xff]
        %v3475 = vld [vmem:[%s5 + $0x48] sm:$0xff]
        %v3476 = vld [vmem:[%s5 + $0x50] sm:$0xff]
        %v3477 = vld [vmem:[%s5 + $0x58] sm:$0xff]
        %v3478 = vld [vmem:[%s5 + $0x60] sm:$0xff]
        %v3479 = vld [vmem:[%s5 + $0x68] sm:$0xff]
        %v3480 = vld [vmem:[%s5 + $0x70] sm:$0xff]
        %v3481 = vld [vmem:[%s5 + $0x78] sm:$0xff]
        %3483 = vset.pattern.permute.xlu0 0
        %3484 = vperm.xlu0 %3483, %v3466
        %v3485 = vpop.permute.xlu0 %3484
        %3488 = vset.pattern.permute.xlu0 0
        %3489 = vperm.xlu0 %3488, %v3467
        %v3490 = vpop.permute.xlu0 %3489
        %3493 = vset.pattern.permute.xlu0 0
        %3494 = vperm.xlu0 %3493, %v3468
        %v3495 = vpop.permute.xlu0 %3494
        %3498 = vset.pattern.permute.xlu0 0
        %3499 = vperm.xlu0 %3498, %v3469
        %v3500 = vpop.permute.xlu0 %3499
        %3503 = vset.pattern.permute.xlu0 0
        %3504 = vperm.xlu0 %3503, %v3470
        %v3505 = vpop.permute.xlu0 %3504
        %3508 = vset.pattern.permute.xlu0 0
        %3509 = vperm.xlu0 %3508, %v3471
        %v3510 = vpop.permute.xlu0 %3509
        %3513 = vset.pattern.permute.xlu0 0
        %3514 = vperm.xlu0 %3513, %v3472
        %v3515 = vpop.permute.xlu0 %3514
        %3518 = vset.pattern.permute.xlu0 0
        %3519 = vperm.xlu0 %3518, %v3473
        %v3520 = vpop.permute.xlu0 %3519
        %3523 = vset.pattern.permute.xlu0 0
        %3524 = vperm.xlu0 %3523, %v3474
        %v3525 = vpop.permute.xlu0 %3524
        %3528 = vset.pattern.permute.xlu0 0
        %3529 = vperm.xlu0 %3528, %v3475
        %v3530 = vpop.permute.xlu0 %3529
        %3533 = vset.pattern.permute.xlu0 0
        %3534 = vperm.xlu0 %3533, %v3476
        %v3535 = vpop.permute.xlu0 %3534
        %3538 = vset.pattern.permute.xlu0 0
        %3539 = vperm.xlu0 %3538, %v3477
        %v3540 = vpop.permute.xlu0 %3539
        %3543 = vset.pattern.permute.xlu0 0
        %3544 = vperm.xlu0 %3543, %v3478
        %v3545 = vpop.permute.xlu0 %3544
        %3548 = vset.pattern.permute.xlu0 0
        %3549 = vperm.xlu0 %3548, %v3479
        %v3550 = vpop.permute.xlu0 %3549
        %3553 = vset.pattern.permute.xlu0 0
        %3554 = vperm.xlu0 %3553, %v3480
        %v3555 = vpop.permute.xlu0 %3554
        %3558 = vset.pattern.permute.xlu0 0
        %3559 = vperm.xlu0 %3558, %v3481
        %v3560 = vpop.permute.xlu0 %3559
        %v3562 = vadd.f32 %v3434, %v3485
        %v3563 = vadd.f32 %v3435, %v3485
        %v3564 = vadd.f32 %v3436, %v3490
        %v3565 = vadd.f32 %v3437, %v3490
        %v3566 = vadd.f32 %v3438, %v3495
        %v3567 = vadd.f32 %v3439, %v3495
        %v3568 = vadd.f32 %v3440, %v3500
        %v3569 = vadd.f32 %v3441, %v3500
        %v3570 = vadd.f32 %v3442, %v3505
        %v3571 = vadd.f32 %v3443, %v3505
        %v3572 = vadd.f32 %v3444, %v3510
        %v3573 = vadd.f32 %v3445, %v3510
        %v3574 = vadd.f32 %v3446, %v3515
        %v3575 = vadd.f32 %v3447, %v3515
        %v3576 = vadd.f32 %v3448, %v3520
        %v3577 = vadd.f32 %v3449, %v3520
        %v3578 = vadd.f32 %v3450, %v3525
        %v3579 = vadd.f32 %v3451, %v3525
        %v3580 = vadd.f32 %v3452, %v3530
        %v3581 = vadd.f32 %v3453, %v3530
        %v3582 = vadd.f32 %v3454, %v3535
        %v3583 = vadd.f32 %v3455, %v3535
        %v3584 = vadd.f32 %v3456, %v3540
        %v3585 = vadd.f32 %v3457, %v3540
        %v3586 = vadd.f32 %v3458, %v3545
        %v3587 = vadd.f32 %v3459, %v3545
        %v3588 = vadd.f32 %v3460, %v3550
        %v3589 = vadd.f32 %v3461, %v3550
        %v3590 = vadd.f32 %v3462, %v3555
        %v3591 = vadd.f32 %v3463, %v3555
        %v3592 = vadd.f32 %v3464, %v3560
        %v3593 = vadd.f32 %v3465, %v3560
        %v3594 = vadd.f32 %v3562, %v3564
        %v3595 = vadd.f32 %v3594, %v3566
        %v3596 = vadd.f32 %v3595, %v3568
        %v3597 = vadd.f32 %v3596, %v3570
        %v3598 = vadd.f32 %v3597, %v3572
        %v3599 = vadd.f32 %v3598, %v3574
        %v3600 = vadd.f32 %v3599, %v3576
        %v3601 = vadd.f32 %v3600, %v3578
        %v3602 = vadd.f32 %v3601, %v3580
        %v3603 = vadd.f32 %v3602, %v3582
        %v3604 = vadd.f32 %v3603, %v3584
        %v3605 = vadd.f32 %v3604, %v3586
        %v3606 = vadd.f32 %v3605, %v3588
        %v3607 = vadd.f32 %v3606, %v3590
        %v3608 = vadd.f32 %v3607, %v3592
        %v3609 = vrot.slane %v3608, 4
        %v3610 = vadd.f32 %v3608, %v3609
        %v3611 = vrot.slane %v3610, 2
        %v3612 = vadd.f32 %v3610, %v3611
        %v3613 = vrot.slane %v3612, 1
        %v3614 = vadd.f32 %v3612, %v3613
        %vm3615 = vcmask 523264
        %v3616 = vsel %vm3615, %v3563, 0.0
        %v3617 = vsel %vm3615, %v3565, 0.0
        %v3618 = vadd.f32 %v3616, %v3617
        %v3619 = vsel %vm3615, %v3567, 0.0
        %v3620 = vadd.f32 %v3618, %v3619
        %v3621 = vsel %vm3615, %v3569, 0.0
        %v3622 = vadd.f32 %v3620, %v3621
        %v3623 = vsel %vm3615, %v3571, 0.0
        %v3624 = vadd.f32 %v3622, %v3623
        %v3625 = vsel %vm3615, %v3573, 0.0
        %v3626 = vadd.f32 %v3624, %v3625
        %v3627 = vsel %vm3615, %v3575, 0.0
        %v3628 = vadd.f32 %v3626, %v3627
        %v3629 = vsel %vm3615, %v3577, 0.0
        %v3630 = vadd.f32 %v3628, %v3629
        %v3631 = vsel %vm3615, %v3579, 0.0
        %v3632 = vadd.f32 %v3630, %v3631
        %v3633 = vsel %vm3615, %v3581, 0.0
        %v3634 = vadd.f32 %v3632, %v3633
        %v3635 = vsel %vm3615, %v3583, 0.0
        %v3636 = vadd.f32 %v3634, %v3635
        %v3637 = vsel %vm3615, %v3585, 0.0
        %v3638 = vadd.f32 %v3636, %v3637
        %v3639 = vsel %vm3615, %v3587, 0.0
        %v3640 = vadd.f32 %v3638, %v3639
        %v3641 = vsel %vm3615, %v3589, 0.0
        %v3642 = vadd.f32 %v3640, %v3641
        %v3643 = vsel %vm3615, %v3591, 0.0
        %v3644 = vadd.f32 %v3642, %v3643
        %v3645 = vsel %vm3615, %v3593, 0.0
        %v3646 = vadd.f32 %v3644, %v3645
        %v3647 = vrot.slane %v3646, 4
        %v3648 = vadd.f32 %v3646, %v3647
        %v3649 = vrot.slane %v3648, 2
        %v3650 = vadd.f32 %v3648, %v3649
        %v3651 = vrot.slane %v3650, 1
        %v3652 = vadd.f32 %v3650, %v3651
        %v3653 = vmul.f32 %v3562, %v3562
        %v3654 = vmul.f32 %v3563, %v3563
        %v3655 = vmul.f32 %v3564, %v3564
        %v3656 = vmul.f32 %v3565, %v3565
        %v3657 = vmul.f32 %v3566, %v3566
        %v3658 = vmul.f32 %v3567, %v3567
        %v3659 = vmul.f32 %v3568, %v3568
        %v3660 = vmul.f32 %v3569, %v3569
        %v3661 = vmul.f32 %v3570, %v3570
        %v3662 = vmul.f32 %v3571, %v3571
        %v3663 = vmul.f32 %v3572, %v3572
        %v3664 = vmul.f32 %v3573, %v3573
        %v3665 = vmul.f32 %v3574, %v3574
        %v3666 = vmul.f32 %v3575, %v3575
        %v3667 = vmul.f32 %v3576, %v3576
        %v3668 = vmul.f32 %v3577, %v3577
        %v3669 = vmul.f32 %v3578, %v3578
        %v3670 = vmul.f32 %v3579, %v3579
        %v3671 = vmul.f32 %v3580, %v3580
        %v3672 = vmul.f32 %v3581, %v3581
        %v3673 = vmul.f32 %v3582, %v3582
        %v3674 = vmul.f32 %v3583, %v3583
        %v3675 = vmul.f32 %v3584, %v3584
        %v3676 = vmul.f32 %v3585, %v3585
        %v3677 = vmul.f32 %v3586, %v3586
        %v3678 = vmul.f32 %v3587, %v3587
        %v3679 = vmul.f32 %v3588, %v3588
        %v3680 = vmul.f32 %v3589, %v3589
        %v3681 = vmul.f32 %v3590, %v3590
        %v3682 = vmul.f32 %v3591, %v3591
        %v3683 = vmul.f32 %v3592, %v3592
        %v3684 = vmul.f32 %v3593, %v3593
        %v3685 = vadd.f32 %v3653, %v3655
        %v3686 = vadd.f32 %v3685, %v3657
        %v3687 = vadd.f32 %v3686, %v3659
        %v3688 = vadd.f32 %v3687, %v3661
        %v3689 = vadd.f32 %v3688, %v3663
        %v3690 = vadd.f32 %v3689, %v3665
        %v3691 = vadd.f32 %v3690, %v3667
        %v3692 = vadd.f32 %v3691, %v3669
        %v3693 = vadd.f32 %v3692, %v3671
        %v3694 = vadd.f32 %v3693, %v3673
        %v3695 = vadd.f32 %v3694, %v3675
        %v3696 = vadd.f32 %v3695, %v3677
        %v3697 = vadd.f32 %v3696, %v3679
        %v3698 = vadd.f32 %v3697, %v3681
        %v3699 = vadd.f32 %v3698, %v3683
        %v3700 = vrot.slane %v3699, 4
        %v3701 = vadd.f32 %v3699, %v3700
        %v3702 = vrot.slane %v3701, 2
        %v3703 = vadd.f32 %v3701, %v3702
        %v3704 = vrot.slane %v3703, 1
        %v3705 = vadd.f32 %v3703, %v3704
        %v3706 = vsel %vm3615, %v3654, 0.0
        %v3707 = vsel %vm3615, %v3656, 0.0
        %v3708 = vadd.f32 %v3706, %v3707
        %v3709 = vsel %vm3615, %v3658, 0.0
        %v3710 = vadd.f32 %v3708, %v3709
        %v3711 = vsel %vm3615, %v3660, 0.0
        %v3712 = vadd.f32 %v3710, %v3711
        %v3713 = vsel %vm3615, %v3662, 0.0
        %v3714 = vadd.f32 %v3712, %v3713
        %v3715 = vsel %vm3615, %v3664, 0.0
        %v3716 = vadd.f32 %v3714, %v3715
        %v3717 = vsel %vm3615, %v3666, 0.0
        %v3718 = vadd.f32 %v3716, %v3717
        %v3719 = vsel %vm3615, %v3668, 0.0
        %v3720 = vadd.f32 %v3718, %v3719
        %v3721 = vsel %vm3615, %v3670, 0.0
        %v3722 = vadd.f32 %v3720, %v3721
        %v3723 = vsel %vm3615, %v3672, 0.0
        %v3724 = vadd.f32 %v3722, %v3723
        %v3725 = vsel %vm3615, %v3674, 0.0
        %v3726 = vadd.f32 %v3724, %v3725
        %v3727 = vsel %vm3615, %v3676, 0.0
        %v3728 = vadd.f32 %v3726, %v3727
        %v3729 = vsel %vm3615, %v3678, 0.0
        %v3730 = vadd.f32 %v3728, %v3729
        %v3731 = vsel %vm3615, %v3680, 0.0
        %v3732 = vadd.f32 %v3730, %v3731
        %v3733 = vsel %vm3615, %v3682, 0.0
        %v3734 = vadd.f32 %v3732, %v3733
        %v3735 = vsel %vm3615, %v3684, 0.0
        %v3736 = vadd.f32 %v3734, %v3735
        %v3737 = vrot.slane %v3736, 4
        %v3738 = vadd.f32 %v3736, %v3737
        %v3739 = vrot.slane %v3738, 2
        %v3740 = vadd.f32 %v3738, %v3739
        %v3741 = vrot.slane %v3740, 1
        %v3742 = vadd.f32 %v3740, %v3741
        %v3743 = vsel %vm1478, %v3614, %v3705
        %v3744 = vsel %vm1478, %v3652, %v3742
        %v3745 = vld [vmem:[#allocation7] sm:$0xff]
        %v3746 = vld [vmem:[#allocation7 + $0x8] sm:$0xff]
        %v3747 = vld [vmem:[#allocation7 + $0x10] sm:$0xff]
        %v3748 = vld [vmem:[#allocation7 + $0x18] sm:$0xff]
        %v3749 = vld [vmem:[#allocation7 + $0x20] sm:$0xff]
        %v3750 = vld [vmem:[#allocation7 + $0x28] sm:$0xff]
        %v3751 = vld [vmem:[#allocation7 + $0x30] sm:$0xff]
        %v3752 = vld [vmem:[#allocation7 + $0x38] sm:$0xff]
        %v3753 = vld [vmem:[#allocation7 + $0x40] sm:$0xff]
        %v3754 = vld [vmem:[#allocation7 + $0x48] sm:$0xff]
        %v3755 = vld [vmem:[#allocation7 + $0x50] sm:$0xff]
        %v3756 = vld [vmem:[#allocation7 + $0x58] sm:$0xff]
        %v3757 = vld [vmem:[#allocation7 + $0x60] sm:$0xff]
        %v3758 = vld [vmem:[#allocation7 + $0x68] sm:$0xff]
        %v3759 = vld [vmem:[#allocation7 + $0x70] sm:$0xff]
        %v3760 = vld [vmem:[#allocation7 + $0x78] sm:$0xff]
        %v3761 = vld [vmem:[#allocation7 + $0x80] sm:$0xff]
        %v3762 = vld [vmem:[#allocation7 + $0x88] sm:$0xff]
        %v3763 = vld [vmem:[#allocation7 + $0x90] sm:$0xff]
        %v3764 = vld [vmem:[#allocation7 + $0x98] sm:$0xff]
        %v3765 = vld [vmem:[#allocation7 + $0xa0] sm:$0xff]
        %v3766 = vld [vmem:[#allocation7 + $0xa8] sm:$0xff]
        %v3767 = vld [vmem:[#allocation7 + $0xb0] sm:$0xff]
        %v3768 = vld [vmem:[#allocation7 + $0xb8] sm:$0xff]
        %v3769 = vld [vmem:[#allocation7 + $0xc0] sm:$0xff]
        %v3770 = vld [vmem:[#allocation7 + $0xc8] sm:$0xff]
        %v3771 = vld [vmem:[#allocation7 + $0xd0] sm:$0xff]
        %v3772 = vld [vmem:[#allocation7 + $0xd8] sm:$0xff]
        %v3773 = vld [vmem:[#allocation7 + $0xe0] sm:$0xff]
        %v3774 = vld [vmem:[#allocation7 + $0xe8] sm:$0xff]
        %v3775 = vld [vmem:[#allocation7 + $0xf0] sm:$0xff]
        %v3776 = vld [vmem:[#allocation7 + $0xf8] sm:$0xff]
        %v3777 = vld [vmem:[#allocation7 + $0x100] sm:$0xff]
        %v3778 = vld [vmem:[#allocation7 + $0x108] sm:$0xff]
        %v3779 = vld [vmem:[#allocation7 + $0x110] sm:$0xff]
        %v3780 = vld [vmem:[#allocation7 + $0x118] sm:$0xff]
        %v3781 = vld [vmem:[#allocation7 + $0x120] sm:$0xff]
        %v3782 = vld [vmem:[#allocation7 + $0x128] sm:$0xff]
        %v3783 = vld [vmem:[#allocation7 + $0x130] sm:$0xff]
        %v3784 = vld [vmem:[#allocation7 + $0x138] sm:$0xff]
        %v3785 = vld [vmem:[#allocation7 + $0x140] sm:$0xff]
        %v3786 = vld [vmem:[#allocation7 + $0x148] sm:$0xff]
        %v3787 = vld [vmem:[#allocation7 + $0x150] sm:$0xff]
        %v3788 = vld [vmem:[#allocation7 + $0x158] sm:$0xff]
        %v3789 = vld [vmem:[#allocation7 + $0x160] sm:$0xff]
        %v3790 = vld [vmem:[#allocation7 + $0x168] sm:$0xff]
        %v3791 = vld [vmem:[#allocation7 + $0x170] sm:$0xff]
        %v3792 = vld [vmem:[#allocation7 + $0x178] sm:$0xff]
        %v3794 = vsel %vm3615, %v3744, 0
        %3796 = vmatprep.subr.mxu0 %v3746
        %3797 = vmatpush1.msra.mxu0 %v3745
        %3798 = vmatprep.subr.mxu0 %v3748
        %3799 = vmatpush1.msra.mxu0 %v3747
        %3800 = vmatprep.subr.mxu0 %v3750
        %3801 = vmatpush1.msra.mxu0 %v3749
        %3802 = vmatprep.subr.mxu0 %v3752
        %3803 = vmatpush1.msra.mxu0 %v3751
        %3804 = vmatprep.subr.mxu0 %v3754
        %3805 = vmatpush1.msra.mxu0 %v3753
        %3806 = vmatprep.subr.mxu0 %v3756
        %3807 = vmatpush1.msra.mxu0 %v3755
        %3808 = vmatprep.subr.mxu0 %v3758
        %3809 = vmatpush1.msra.mxu0 %v3757
        %3810 = vmatprep.subr.mxu0 %v3760
        %3811 = vmatpush1.msra.mxu0 %v3759
        %3812 = vmatprep.subr.mxu0 %v3762
        %3813 = vmatpush1.msra.mxu0 %v3761
        %3814 = vmatprep.subr.mxu0 %v3764
        %3815 = vmatpush1.msra.mxu0 %v3763
        %3816 = vmatprep.subr.mxu0 %v3766
        %3817 = vmatpush1.msra.mxu0 %v3765
        %3818 = vmatprep.subr.mxu0 %v3768
        %3819 = vmatpush1.msra.mxu0 %v3767
        %3820 = vmatprep.subr.mxu0 %v3770
        %3821 = vmatpush1.msra.mxu0 %v3769
        %3822 = vmatprep.subr.mxu0 %v3772
        %3823 = vmatpush1.msra.mxu0 %v3771
        %3824 = vmatprep.subr.mxu0 %v3774
        %3825 = vmatpush1.msra.mxu0 %v3773
        %3826 = vmatprep.subr.mxu0 %v3776
        %3827 = vmatpush1.msra.mxu0 %v3775
        %3828 = vmatprep.subr.mxu0 %v3778
        %3829 = vmatpush1.msra.mxu0 %v3777
        %3830 = vmatprep.subr.mxu0 %v3780
        %3831 = vmatpush1.msra.mxu0 %v3779
        %3832 = vmatprep.subr.mxu0 %v3782
        %3833 = vmatpush1.msra.mxu0 %v3781
        %3834 = vmatprep.subr.mxu0 %v3784
        %3835 = vmatpush1.msra.mxu0 %v3783
        %3836 = vmatprep.subr.mxu0 %v3786
        %3837 = vmatpush1.msra.mxu0 %v3785
        %3838 = vmatprep.subr.mxu0 %v3788
        %3839 = vmatpush1.msra.mxu0 %v3787
        %3840 = vmatprep.subr.mxu0 %v3790
        %3841 = vmatpush1.msra.mxu0 %v3789
        %3842 = vmatprep.subr.mxu0 %v3792
        %3843 = vmatpush1.msra.mxu0 %v3791
        %3844 = vmatprep.subr.mxu0 0.0
        %3845 = vmatpush1.msra.mxu0 0.0
        %3846 = vmatprep.subr.mxu0 0.0
        %3847 = vmatpush1.msra.mxu0 0.0
        %3848 = vmatprep.subr.mxu0 0.0
        %3849 = vmatpush1.msra.mxu0 0.0
        %3850 = vmatprep.subr.mxu0 0.0
        %3851 = vmatpush1.msra.mxu0 0.0
        %3852 = vmatprep.subr.mxu0 0.0
        %3853 = vmatpush1.msra.mxu0 0.0
        %3854 = vmatprep.subr.mxu0 0.0
        %3855 = vmatpush1.msra.mxu0 0.0
        %3856 = vmatprep.subr.mxu0 0.0
        %3857 = vmatpush1.msra.mxu0 0.0
        %3858 = vmatprep.subr.mxu0 0.0
        %3859 = vmatpush1.msra.mxu0 0.0
        %3860 = vmatprep.mubr.f32.mxu0 %v3794
        %3861 = vmatmul.mubr.f32.gmra.mrb[0].mxu0 %v3743
        %v3862 = vpop.f32.mrb[0].mxu0
        %v3863 = vadd.f32 0.0, %v3862
        %v3864 = vpop.f32.mrb[0].mxu0
        %v3865 = vadd.f32 0.0, %v3864
        %3866 = vdwg.mxu0
        %v3867 = vmul.f32 %v3863, %v3863
        %v3868 = vmul.f32 %v3865, %v3865
        %v3871 = vrot.slane %v3867, 7
        %v3872 = vrot.slane %v3868, 7
        %v3875 = vsub.f32 %v3863, %v3871
        %v3876 = vsub.f32 %v3865, %v3872
        %v3877 = vlaneseq
        %v3878 = vshrl.u32 %v3877, 7
        %v3879 = vsub.s32 0, %v3878
        %v3880 = vrot.slane %v3863, %v3879
        %v3881 = vlaneseq
        %v3882 = vshrl.u32 %v3881, 7
        %v3883 = vsub.s32 0, %v3882
        %v3884 = vrot.slane %v3865, %v3883
        %v3885 = vsub.f32 %v3562, %v3880
        %v3886 = vsub.f32 %v3563, %v3884
        %v3887 = vsub.f32 %v3564, %v3880
        %v3888 = vsub.f32 %v3565, %v3884
        %v3889 = vsub.f32 %v3566, %v3880
        %v3890 = vsub.f32 %v3567, %v3884
        %v3891 = vsub.f32 %v3568, %v3880
        %v3892 = vsub.f32 %v3569, %v3884
        %v3893 = vsub.f32 %v3570, %v3880
        %v3894 = vsub.f32 %v3571, %v3884
        %v3895 = vsub.f32 %v3572, %v3880
        %v3896 = vsub.f32 %v3573, %v3884
        %v3897 = vsub.f32 %v3574, %v3880
        %v3898 = vsub.f32 %v3575, %v3884
        %v3899 = vsub.f32 %v3576, %v3880
        %v3900 = vsub.f32 %v3577, %v3884
        %v3901 = vsub.f32 %v3578, %v3880
        %v3902 = vsub.f32 %v3579, %v3884
        %v3903 = vsub.f32 %v3580, %v3880
        %v3904 = vsub.f32 %v3581, %v3884
        %v3905 = vsub.f32 %v3582, %v3880
        %v3906 = vsub.f32 %v3583, %v3884
        %v3907 = vsub.f32 %v3584, %v3880
        %v3908 = vsub.f32 %v3585, %v3884
        %v3909 = vsub.f32 %v3586, %v3880
        %v3910 = vsub.f32 %v3587, %v3884
        %v3911 = vsub.f32 %v3588, %v3880
        %v3912 = vsub.f32 %v3589, %v3884
        %v3913 = vsub.f32 %v3590, %v3880
        %v3914 = vsub.f32 %v3591, %v3884
        %v3915 = vsub.f32 %v3592, %v3880
        %v3916 = vsub.f32 %v3593, %v3884
        %v3917 = vadd.f32 %v3875, 1e-05
        %v3918 = vadd.f32 %v3876, 1e-05
        %v3919 = vrsqrt.pop %v3917
        %v3920 = vrsqrt.pop %v3918
        %v3921 = vlaneseq
        %v3922 = vshrl.u32 %v3921, 7
        %v3923 = vsub.s32 1, %v3922
        %v3924 = vrot.slane %v3919, %v3923
        %v3925 = vlaneseq
        %v3926 = vshrl.u32 %v3925, 7
        %v3927 = vsub.s32 1, %v3926
        %v3928 = vrot.slane %v3920, %v3927
        %v3929 = vmul.f32 %v3885, %v3924
        %v3930 = vmul.f32 %v3886, %v3928
        %v3931 = vmul.f32 %v3887, %v3924
        %v3932 = vmul.f32 %v3888, %v3928
        %v3933 = vmul.f32 %v3889, %v3924
        %v3934 = vmul.f32 %v3890, %v3928
        %v3935 = vmul.f32 %v3891, %v3924
        %v3936 = vmul.f32 %v3892, %v3928
        %v3937 = vmul.f32 %v3893, %v3924
        %v3938 = vmul.f32 %v3894, %v3928
        %v3939 = vmul.f32 %v3895, %v3924
        %v3940 = vmul.f32 %v3896, %v3928
        %v3941 = vmul.f32 %v3897, %v3924
        %v3942 = vmul.f32 %v3898, %v3928
        %v3943 = vmul.f32 %v3899, %v3924
        %v3944 = vmul.f32 %v3900, %v3928
        %v3945 = vmul.f32 %v3901, %v3924
        %v3946 = vmul.f32 %v3902, %v3928
        %v3947 = vmul.f32 %v3903, %v3924
        %v3948 = vmul.f32 %v3904, %v3928
        %v3949 = vmul.f32 %v3905, %v3924
        %v3950 = vmul.f32 %v3906, %v3928
        %v3951 = vmul.f32 %v3907, %v3924
        %v3952 = vmul.f32 %v3908, %v3928
        %v3953 = vmul.f32 %v3909, %v3924
        %v3954 = vmul.f32 %v3910, %v3928
        %v3955 = vmul.f32 %v3911, %v3924
        %v3956 = vmul.f32 %v3912, %v3928
        %v3957 = vmul.f32 %v3913, %v3924
        %v3958 = vmul.f32 %v3914, %v3928
        %v3959 = vmul.f32 %v3915, %v3924
        %v3960 = vmul.f32 %v3916, %v3928
        %vm3961 = vcmp.ge.f32.partialorder %v3929, 0.0
        %vm3962 = vcmp.ge.f32.partialorder %v3930, 0.0
        %vm3963 = vcmp.ge.f32.partialorder %v3931, 0.0
        %vm3964 = vcmp.ge.f32.partialorder %v3932, 0.0
        %vm3965 = vcmp.ge.f32.partialorder %v3933, 0.0
        %vm3966 = vcmp.ge.f32.partialorder %v3934, 0.0
        %vm3967 = vcmp.ge.f32.partialorder %v3935, 0.0
        %vm3968 = vcmp.ge.f32.partialorder %v3936, 0.0
        %vm3969 = vcmp.ge.f32.partialorder %v3937, 0.0
        %vm3970 = vcmp.ge.f32.partialorder %v3938, 0.0
        %vm3971 = vcmp.ge.f32.partialorder %v3939, 0.0
        %vm3972 = vcmp.ge.f32.partialorder %v3940, 0.0
        %vm3973 = vcmp.ge.f32.partialorder %v3941, 0.0
        %vm3974 = vcmp.ge.f32.partialorder %v3942, 0.0
        %vm3975 = vcmp.ge.f32.partialorder %v3943, 0.0
        %vm3976 = vcmp.ge.f32.partialorder %v3944, 0.0
        %vm3977 = vcmp.ge.f32.partialorder %v3945, 0.0
        %vm3978 = vcmp.ge.f32.partialorder %v3946, 0.0
        %vm3979 = vcmp.ge.f32.partialorder %v3947, 0.0
        %vm3980 = vcmp.ge.f32.partialorder %v3948, 0.0
        %vm3981 = vcmp.ge.f32.partialorder %v3949, 0.0
        %vm3982 = vcmp.ge.f32.partialorder %v3950, 0.0
        %vm3983 = vcmp.ge.f32.partialorder %v3951, 0.0
        %vm3984 = vcmp.ge.f32.partialorder %v3952, 0.0
        %vm3985 = vcmp.ge.f32.partialorder %v3953, 0.0
        %vm3986 = vcmp.ge.f32.partialorder %v3954, 0.0
        %vm3987 = vcmp.ge.f32.partialorder %v3955, 0.0
        %vm3988 = vcmp.ge.f32.partialorder %v3956, 0.0
        %vm3989 = vcmp.ge.f32.partialorder %v3957, 0.0
        %vm3990 = vcmp.ge.f32.partialorder %v3958, 0.0
        %vm3991 = vcmp.ge.f32.partialorder %v3959, 0.0
        %vm3992 = vcmp.ge.f32.partialorder %v3960, 0.0
        %v3993 = vmul.f32 %v3929, 0.2
        %v3994 = vmul.f32 %v3930, 0.2
        %v3995 = vmul.f32 %v3931, 0.2
        %v3996 = vmul.f32 %v3932, 0.2
        %v3997 = vmul.f32 %v3933, 0.2
        %v3998 = vmul.f32 %v3934, 0.2
        %v3999 = vmul.f32 %v3935, 0.2
        %v4000 = vmul.f32 %v3936, 0.2
        %v4001 = vmul.f32 %v3937, 0.2
        %v4002 = vmul.f32 %v3938, 0.2
        %v4003 = vmul.f32 %v3939, 0.2
        %v4004 = vmul.f32 %v3940, 0.2
        %v4005 = vmul.f32 %v3941, 0.2
        %v4006 = vmul.f32 %v3942, 0.2
        %v4007 = vmul.f32 %v3943, 0.2
        %v4008 = vmul.f32 %v3944, 0.2
        %v4009 = vmul.f32 %v3945, 0.2
        %v4010 = vmul.f32 %v3946, 0.2
        %v4011 = vmul.f32 %v3947, 0.2
        %v4012 = vmul.f32 %v3948, 0.2
        %v4013 = vmul.f32 %v3949, 0.2
        %v4014 = vmul.f32 %v3950, 0.2
        %v4015 = vmul.f32 %v3951, 0.2
        %v4016 = vmul.f32 %v3952, 0.2
        %v4017 = vmul.f32 %v3953, 0.2
        %v4018 = vmul.f32 %v3954, 0.2
        %v4019 = vmul.f32 %v3955, 0.2
        %v4020 = vmul.f32 %v3956, 0.2
        %v4021 = vmul.f32 %v3957, 0.2
        %v4022 = vmul.f32 %v3958, 0.2
        %v4023 = vmul.f32 %v3959, 0.2
        %v4024 = vmul.f32 %v3960, 0.2
        %v4025 = vsel %vm3961, %v3929, %v3993
        %v4026 = vsel %vm3962, %v3930, %v3994
        %v4027 = vsel %vm3963, %v3931, %v3995
        %v4028 = vsel %vm3964, %v3932, %v3996
        %v4029 = vsel %vm3965, %v3933, %v3997
        %v4030 = vsel %vm3966, %v3934, %v3998
        %v4031 = vsel %vm3967, %v3935, %v3999
        %v4032 = vsel %vm3968, %v3936, %v4000
        %v4033 = vsel %vm3969, %v3937, %v4001
        %v4034 = vsel %vm3970, %v3938, %v4002
        %v4035 = vsel %vm3971, %v3939, %v4003
        %v4036 = vsel %vm3972, %v3940, %v4004
        %v4037 = vsel %vm3973, %v3941, %v4005
        %v4038 = vsel %vm3974, %v3942, %v4006
        %v4039 = vsel %vm3975, %v3943, %v4007
        %v4040 = vsel %vm3976, %v3944, %v4008
        %v4041 = vsel %vm3977, %v3945, %v4009
        %v4042 = vsel %vm3978, %v3946, %v4010
        %v4043 = vsel %vm3979, %v3947, %v4011
        %v4044 = vsel %vm3980, %v3948, %v4012
        %v4045 = vsel %vm3981, %v3949, %v4013
        %v4046 = vsel %vm3982, %v3950, %v4014
        %v4047 = vsel %vm3983, %v3951, %v4015
        %v4048 = vsel %vm3984, %v3952, %v4016
        %v4049 = vsel %vm3985, %v3953, %v4017
        %v4050 = vsel %vm3986, %v3954, %v4018
        %v4051 = vsel %vm3987, %v3955, %v4019
        %v4052 = vsel %vm3988, %v3956, %v4020
        %v4053 = vsel %vm3989, %v3957, %v4021
        %v4054 = vsel %vm3990, %v3958, %v4022
        %v4055 = vsel %vm3991, %v3959, %v4023
        %v4056 = vsel %vm3992, %v3960, %v4024
        %v4057 = vpack.c.bf16 %v4027, %v4025
        %v4058 = vpack.c.bf16 %v4028, %v4026
        %v4059 = vpack.c.bf16 %v4031, %v4029
        %v4060 = vpack.c.bf16 %v4032, %v4030
        %v4061 = vpack.c.bf16 %v4035, %v4033
        %v4062 = vpack.c.bf16 %v4036, %v4034
        %v4063 = vpack.c.bf16 %v4039, %v4037
        %v4064 = vpack.c.bf16 %v4040, %v4038
        %v4065 = vpack.c.bf16 %v4043, %v4041
        %v4066 = vpack.c.bf16 %v4044, %v4042
        %v4067 = vpack.c.bf16 %v4047, %v4045
        %v4068 = vpack.c.bf16 %v4048, %v4046
        %v4069 = vpack.c.bf16 %v4051, %v4049
        %v4070 = vpack.c.bf16 %v4052, %v4050
        %v4071 = vpack.c.bf16 %v4055, %v4053
        %v4072 = vpack.c.bf16 %v4056, %v4054
        %v4073 = vld [vmem:[#allocation9] sm:$0xf]
        %v4074 = vld [vmem:[#allocation9 + $0x4] sm:$0xf]
        %v4075 = vld [vmem:[#allocation9 + $0x8] sm:$0xf]
        %v4076 = vld [vmem:[#allocation9 + $0xc] sm:$0xf]
        %v4077 = vld [vmem:[#allocation9 + $0x10] sm:$0xf]
        %v4078 = vld [vmem:[#allocation9 + $0x14] sm:$0xf]
        %v4079 = vld [vmem:[#allocation9 + $0x18] sm:$0xf]
        %v4080 = vld [vmem:[#allocation9 + $0x1c] sm:$0xf]
        %v4089 = vunpack.c.l.b16 %v4073
        %v4090 = vunpack.c.l.b16 %v4074
        %v4091 = vunpack.c.l.b16 %v4075
        %v4092 = vunpack.c.l.b16 %v4076
        %v4093 = vunpack.c.l.b16 %v4077
        %v4094 = vunpack.c.l.b16 %v4078
        %v4095 = vunpack.c.l.b16 %v4079
        %v4096 = vunpack.c.l.b16 %v4080
        %v4097 = vpack.c.b16 %v4090, %v4089
        %v4098 = vpack.c.b16 %v4092, %v4091
        %v4099 = vpack.c.b16 %v4094, %v4093
        %v4100 = vpack.c.b16 %v4096, %v4095
        %4105 = vmatprep.subr.bf16.mxu0 %v4058
        %4106 = vmatpush1.bf16.msra.mxu0 %v4057
        %4107 = vmatprep.subr.bf16.mxu0 %v4060
        %4108 = vmatpush1.bf16.msra.mxu0 %v4059
        %4109 = vmatprep.subr.bf16.mxu0 %v4062
        %4110 = vmatpush1.bf16.msra.mxu0 %v4061
        %4111 = vmatprep.subr.bf16.mxu0 %v4064
        %4112 = vmatpush1.bf16.msra.mxu0 %v4063
        %4113 = vmatprep.subr.bf16.mxu0 %v4066
        %4114 = vmatpush1.bf16.msra.mxu0 %v4065
        %4115 = vmatprep.subr.bf16.mxu0 %v4068
        %4116 = vmatpush1.bf16.msra.mxu0 %v4067
        %4117 = vmatprep.subr.bf16.mxu0 %v4070
        %4118 = vmatpush1.bf16.msra.mxu0 %v4069
        %4119 = vmatprep.subr.bf16.mxu0 %v4072
        %4120 = vmatpush1.bf16.msra.mxu0 %v4071
        %4121 = vmatprep.subr.bf16.mxu0 0
        %4122 = vmatpush1.bf16.msra.mxu0 0
        %4123 = vmatprep.subr.bf16.mxu0 0
        %4124 = vmatpush1.bf16.msra.mxu0 0
        %4125 = vmatprep.subr.bf16.mxu0 0
        %4126 = vmatpush1.bf16.msra.mxu0 0
        %4127 = vmatprep.subr.bf16.mxu0 0
        %4128 = vmatpush1.bf16.msra.mxu0 0
        %4129 = vmatprep.subr.bf16.mxu0 0
        %4130 = vmatpush1.bf16.msra.mxu0 0
        %4131 = vmatprep.subr.bf16.mxu0 0
        %4132 = vmatpush1.bf16.msra.mxu0 0
        %4133 = vmatprep.subr.bf16.mxu0 0
        %4134 = vmatpush1.bf16.msra.mxu0 0
        %4135 = vmatprep.subr.bf16.mxu0 0
        %4136 = vmatpush1.bf16.msra.mxu0 0
        %4137 = vmatprep.mubr.bf16.mxu0 0
        %4138 = vmatmul.mubr.bf16.gmra.mrb[0].mxu0 %v4097
        %v4139 = vpop.f32.mrb[0].mxu0
        %v4140 = vadd.f32 0.0, %v4139
        %v4141 = vpop.f32.mrb[0].mxu0
        %v4142 = vadd.f32 0.0, %v4141
        %v4143 = vpop.f32.mrb[0].mxu0
        %v4144 = vadd.f32 0.0, %v4143
        %v4145 = vpop.f32.mrb[0].mxu0
        %v4146 = vadd.f32 0.0, %v4145
        %4147 = vmatprep.mubr.bf16.mxu0 0
        %4148 = vmatmul.mubr.bf16.gmra.mrb[0].mxu0 %v4098
        %v4149 = vpop.f32.mrb[0].mxu0
        %v4150 = vadd.f32 0.0, %v4149
        %v4151 = vpop.f32.mrb[0].mxu0
        %v4152 = vadd.f32 0.0, %v4151
        %v4153 = vpop.f32.mrb[0].mxu0
        %v4154 = vadd.f32 0.0, %v4153
        %v4155 = vpop.f32.mrb[0].mxu0
        %v4156 = vadd.f32 0.0, %v4155
        %4157 = vmatprep.mubr.bf16.mxu0 0
        %4158 = vmatmul.mubr.bf16.gmra.mrb[0].mxu0 %v4099
        %v4159 = vpop.f32.mrb[0].mxu0
        %v4160 = vadd.f32 0.0, %v4159
        %v4161 = vpop.f32.mrb[0].mxu0
        %v4162 = vadd.f32 0.0, %v4161
        %v4163 = vpop.f32.mrb[0].mxu0
        %v4164 = vadd.f32 0.0, %v4163
        %v4165 = vpop.f32.mrb[0].mxu0
        %v4166 = vadd.f32 0.0, %v4165
        %4167 = vmatprep.mubr.bf16.mxu0 0
        %4168 = vmatmul.mubr.bf16.gmra.mrb[0].mxu0 %v4100
        %v4169 = vpop.f32.mrb[0].mxu0
        %v4170 = vadd.f32 0.0, %v4169
        %v4171 = vpop.f32.mrb[0].mxu0
        %v4172 = vadd.f32 0.0, %v4171
        %v4173 = vpop.f32.mrb[0].mxu0
        %v4174 = vadd.f32 0.0, %v4173
        %v4175 = vpop.f32.mrb[0].mxu0
        %v4176 = vadd.f32 0.0, %v4175
        %4177 = vdwg.mxu0
        %v4178 = vpack.c.bf16 %v4144, %v4140
        %v4179 = vpack.c.bf16 %v4146, %v4142
        %v4180 = vpack.c.bf16 %v4154, %v4150
        %v4181 = vpack.c.bf16 %v4156, %v4152
        %v4182 = vpack.c.bf16 %v4164, %v4160
        %v4183 = vpack.c.bf16 %v4166, %v4162
        %v4184 = vpack.c.bf16 %v4174, %v4170
        %v4185 = vpack.c.bf16 %v4176, %v4172
        %v4186 = vld [vmem:[#allocation10] sm:$0xff]
        %v4187 = vld [vmem:[#allocation10 + $0x8] sm:$0xf]
        %v4188 = vld [vmem:[#allocation10 + $0xc] sm:$0xff]
        %v4189 = vld [vmem:[#allocation10 + $0x14] sm:$0xf]
        %v4190 = vld [vmem:[#allocation10 + $0x18] sm:$0xff]
        %v4191 = vld [vmem:[#allocation10 + $0x20] sm:$0xf]
        %v4192 = vld [vmem:[#allocation10 + $0x24] sm:$0xff]
        %v4193 = vld [vmem:[#allocation10 + $0x2c] sm:$0xf]
        %v4194 = vld [vmem:[#allocation10 + $0x30] sm:$0xff]
        %v4195 = vld [vmem:[#allocation10 + $0x38] sm:$0xf]
        %v4196 = vld [vmem:[#allocation10 + $0x3c] sm:$0xff]
        %v4197 = vld [vmem:[#allocation10 + $0x44] sm:$0xf]
        %v4198 = vld [vmem:[#allocation10 + $0x48] sm:$0xff]
        %v4199 = vld [vmem:[#allocation10 + $0x50] sm:$0xf]
        %v4200 = vld [vmem:[#allocation10 + $0x54] sm:$0xff]
        %v4201 = vld [vmem:[#allocation10 + $0x5c] sm:$0xf]
        %v4202 = vld [vmem:[#allocation10 + $0x60] sm:$0xff]
        %v4203 = vld [vmem:[#allocation10 + $0x68] sm:$0xf]
        %v4204 = vld [vmem:[#allocation10 + $0x6c] sm:$0xff]
        %v4205 = vld [vmem:[#allocation10 + $0x74] sm:$0xf]
        %v4206 = vld [vmem:[#allocation10 + $0x78] sm:$0xff]
        %v4207 = vld [vmem:[#allocation10 + $0x80] sm:$0xf]
        %v4208 = vld [vmem:[#allocation10 + $0x84] sm:$0xff]
        %v4209 = vld [vmem:[#allocation10 + $0x8c] sm:$0xf]
        %v4210 = vld [vmem:[#allocation10 + $0x90] sm:$0xff]
        %v4211 = vld [vmem:[#allocation10 + $0x98] sm:$0xf]
        %v4212 = vld [vmem:[#allocation10 + $0x9c] sm:$0xff]
        %v4213 = vld [vmem:[#allocation10 + $0xa4] sm:$0xf]
        %v4214 = vld [vmem:[#allocation10 + $0xa8] sm:$0xff]
        %v4215 = vld [vmem:[#allocation10 + $0xb0] sm:$0xf]
        %v4216 = vld [vmem:[#allocation10 + $0xb4] sm:$0xff]
        %v4217 = vld [vmem:[#allocation10 + $0xbc] sm:$0xf]
        %v4218 = vld [vmem:[#allocation10 + $0xc0] sm:$0xff]
        %v4219 = vld [vmem:[#allocation10 + $0xc8] sm:$0xf]
        %v4220 = vld [vmem:[#allocation10 + $0xcc] sm:$0xff]
        %v4221 = vld [vmem:[#allocation10 + $0xd4] sm:$0xf]
        %v4222 = vld [vmem:[#allocation10 + $0xd8] sm:$0xff]
        %v4223 = vld [vmem:[#allocation10 + $0xe0] sm:$0xf]
        %v4224 = vld [vmem:[#allocation10 + $0xe4] sm:$0xff]
        %v4225 = vld [vmem:[#allocation10 + $0xec] sm:$0xf]
        %v4226 = vld [vmem:[#allocation10 + $0xf0] sm:$0xff]
        %v4227 = vld [vmem:[#allocation10 + $0xf8] sm:$0xf]
        %v4228 = vld [vmem:[#allocation10 + $0xfc] sm:$0xff]
        %v4229 = vld [vmem:[#allocation10 + $0x104] sm:$0xf]
        %v4230 = vld [vmem:[#allocation10 + $0x108] sm:$0xff]
        %v4231 = vld [vmem:[#allocation10 + $0x110] sm:$0xf]
        %v4232 = vld [vmem:[#allocation10 + $0x114] sm:$0xff]
        %v4233 = vld [vmem:[#allocation10 + $0x11c] sm:$0xf]
        %s4234 = scalar_lea.vmem [#allocation9], 32
        %v4235 = vld [vmem:[%s4234] sm:$0xf]
        %v4236 = vld [vmem:[%s4234 + $0x4] sm:$0xf]
        %v4237 = vld [vmem:[%s4234 + $0x8] sm:$0xf]
        %v4238 = vld [vmem:[%s4234 + $0xc] sm:$0xf]
        %v4239 = vld [vmem:[%s4234 + $0x10] sm:$0xf]
        %v4240 = vld [vmem:[%s4234 + $0x14] sm:$0xf]
        %v4241 = vld [vmem:[%s4234 + $0x18] sm:$0xf]
        %v4242 = vld [vmem:[%s4234 + $0x1c] sm:$0xf]
        %v4251 = vunpack.c.l.b16 %v4235
        %v4252 = vunpack.c.l.b16 %v4236
        %v4253 = vunpack.c.l.b16 %v4237
        %v4254 = vunpack.c.l.b16 %v4238
        %v4255 = vunpack.c.l.b16 %v4239
        %v4256 = vunpack.c.l.b16 %v4240
        %v4257 = vunpack.c.l.b16 %v4241
        %v4258 = vunpack.c.l.b16 %v4242
        %v4259 = vpack.c.b16 %v4252, %v4251
        %v4260 = vpack.c.b16 %v4254, %v4253
        %v4261 = vpack.c.b16 %v4256, %v4255
        %v4262 = vpack.c.b16 %v4258, %v4257
        %4267 = vmatprep.subr.bf16.mxu0 %v4058
        %4268 = vmatpush1.bf16.msra.mxu0 %v4057
        %4269 = vmatprep.subr.bf16.mxu0 %v4060
        %4270 = vmatpush1.bf16.msra.mxu0 %v4059
        %4271 = vmatprep.subr.bf16.mxu0 %v4062
        %4272 = vmatpush1.bf16.msra.mxu0 %v4061
        %4273 = vmatprep.subr.bf16.mxu0 %v4064
        %4274 = vmatpush1.bf16.msra.mxu0 %v4063
        %4275 = vmatprep.subr.bf16.mxu0 %v4066
        %4276 = vmatpush1.bf16.msra.mxu0 %v4065
        %4277 = vmatprep.subr.bf16.mxu0 %v4068
        %4278 = vmatpush1.bf16.msra.mxu0 %v4067
        %4279 = vmatprep.subr.bf16.mxu0 %v4070
        %4280 = vmatpush1.bf16.msra.mxu0 %v4069
        %4281 = vmatprep.subr.bf16.mxu0 %v4072
        %4282 = vmatpush1.bf16.msra.mxu0 %v4071
        %4283 = vmatprep.subr.bf16.mxu0 0
        %4284 = vmatpush1.bf16.msra.mxu0 0
        %4285 = vmatprep.subr.bf16.mxu0 0
        %4286 = vmatpush1.bf16.msra.mxu0 0
        %4287 = vmatprep.subr.bf16.mxu0 0
        %4288 = vmatpush1.bf16.msra.mxu0 0
        %4289 = vmatprep.subr.bf16.mxu0 0
        %4290 = vmatpush1.bf16.msra.mxu0 0
        %4291 = vmatprep.subr.bf16.mxu0 0
        %4292 = vmatpush1.bf16.msra.mxu0 0
        %4293 = vmatprep.subr.bf16.mxu0 0
        %4294 = vmatpush1.bf16.msra.mxu0 0
        %4295 = vmatprep.subr.bf16.mxu0 0
        %4296 = vmatpush1.bf16.msra.mxu0 0
        %4297 = vmatprep.subr.bf16.mxu0 0
        %4298 = vmatpush1.bf16.msra.mxu0 0
        %4299 = vmatprep.mubr.bf16.mxu0 0
        %4300 = vmatmul.mubr.bf16.gmra.mrb[0].mxu0 %v4259
        %v4301 = vpop.f32.mrb[0].mxu0
        %v4302 = vadd.f32 0.0, %v4301
        %v4303 = vpop.f32.mrb[0].mxu0
        %v4304 = vadd.f32 0.0, %v4303
        %v4305 = vpop.f32.mrb[0].mxu0
        %v4306 = vadd.f32 0.0, %v4305
        %v4307 = vpop.f32.mrb[0].mxu0
        %v4308 = vadd.f32 0.0, %v4307
        %4309 = vmatprep.mubr.bf16.mxu0 0
        %4310 = vmatmul.mubr.bf16.gmra.mrb[0].mxu0 %v4260
        %v4311 = vpop.f32.mrb[0].mxu0
        %v4312 = vadd.f32 0.0, %v4311
        %v4313 = vpop.f32.mrb[0].mxu0
        %v4314 = vadd.f32 0.0, %v4313
        %v4315 = vpop.f32.mrb[0].mxu0
        %v4316 = vadd.f32 0.0, %v4315
        %v4317 = vpop.f32.mrb[0].mxu0
        %v4318 = vadd.f32 0.0, %v4317
        %4319 = vmatprep.mubr.bf16.mxu0 0
        %4320 = vmatmul.mubr.bf16.gmra.mrb[0].mxu0 %v4261
        %v4321 = vpop.f32.mrb[0].mxu0
        %v4322 = vadd.f32 0.0, %v4321
        %v4323 = vpop.f32.mrb[0].mxu0
        %v4324 = vadd.f32 0.0, %v4323
        %v4325 = vpop.f32.mrb[0].mxu0
        %v4326 = vadd.f32 0.0, %v4325
        %v4327 = vpop.f32.mrb[0].mxu0
        %v4328 = vadd.f32 0.0, %v4327
        %4329 = vmatprep.mubr.bf16.mxu0 0
        %4330 = vmatmul.mubr.bf16.gmra.mrb[0].mxu0 %v4262
        %v4331 = vpop.f32.mrb[0].mxu0
        %v4332 = vadd.f32 0.0, %v4331
        %v4333 = vpop.f32.mrb[0].mxu0
        %v4334 = vadd.f32 0.0, %v4333
        %v4335 = vpop.f32.mrb[0].mxu0
        %v4336 = vadd.f32 0.0, %v4335
        %v4337 = vpop.f32.mrb[0].mxu0
        %v4338 = vadd.f32 0.0, %v4337
        %4339 = vdwg.mxu0
        %v4340 = vpack.c.bf16 %v4306, %v4302
        %v4341 = vpack.c.bf16 %v4308, %v4304
        %v4342 = vpack.c.bf16 %v4316, %v4312
        %v4343 = vpack.c.bf16 %v4318, %v4314
        %v4344 = vpack.c.bf16 %v4326, %v4322
        %v4345 = vpack.c.bf16 %v4328, %v4324
        %v4346 = vpack.c.bf16 %v4336, %v4332
        %v4347 = vpack.c.bf16 %v4338, %v4334
        %s4348 = scalar_lea.vmem [#allocation10], 288
        %v4349 = vld [vmem:[%s4348] sm:$0xff]
        %v4350 = vld [vmem:[%s4348 + $0x8] sm:$0xf]
        %v4351 = vld [vmem:[%s4348 + $0xc] sm:$0xff]
        %v4352 = vld [vmem:[%s4348 + $0x14] sm:$0xf]
        %v4353 = vld [vmem:[%s4348 + $0x18] sm:$0xff]
        %v4354 = vld [vmem:[%s4348 + $0x20] sm:$0xf]
        %v4355 = vld [vmem:[%s4348 + $0x24] sm:$0xff]
        %v4356 = vld [vmem:[%s4348 + $0x2c] sm:$0xf]
        %v4357 = vld [vmem:[%s4348 + $0x30] sm:$0xff]
        %v4358 = vld [vmem:[%s4348 + $0x38] sm:$0xf]
        %v4359 = vld [vmem:[%s4348 + $0x3c] sm:$0xff]
        %v4360 = vld [vmem:[%s4348 + $0x44] sm:$0xf]
        %v4361 = vld [vmem:[%s4348 + $0x48] sm:$0xff]
        %v4362 = vld [vmem:[%s4348 + $0x50] sm:$0xf]
        %v4363 = vld [vmem:[%s4348 + $0x54] sm:$0xff]
        %v4364 = vld [vmem:[%s4348 + $0x5c] sm:$0xf]
        %v4365 = vld [vmem:[%s4348 + $0x60] sm:$0xff]
        %v4366 = vld [vmem:[%s4348 + $0x68] sm:$0xf]
        %v4367 = vld [vmem:[%s4348 + $0x6c] sm:$0xff]
        %v4368 = vld [vmem:[%s4348 + $0x74] sm:$0xf]
        %v4369 = vld [vmem:[%s4348 + $0x78] sm:$0xff]
        %v4370 = vld [vmem:[%s4348 + $0x80] sm:$0xf]
        %v4371 = vld [vmem:[%s4348 + $0x84] sm:$0xff]
        %v4372 = vld [vmem:[%s4348 + $0x8c] sm:$0xf]
        %v4373 = vld [vmem:[%s4348 + $0x90] sm:$0xff]
        %v4374 = vld [vmem:[%s4348 + $0x98] sm:$0xf]
        %v4375 = vld [vmem:[%s4348 + $0x9c] sm:$0xff]
        %v4376 = vld [vmem:[%s4348 + $0xa4] sm:$0xf]
        %v4377 = vld [vmem:[%s4348 + $0xa8] sm:$0xff]
        %v4378 = vld [vmem:[%s4348 + $0xb0] sm:$0xf]
        %v4379 = vld [vmem:[%s4348 + $0xb4] sm:$0xff]
        %v4380 = vld [vmem:[%s4348 + $0xbc] sm:$0xf]
        %v4381 = vld [vmem:[%s4348 + $0xc0] sm:$0xff]
        %v4382 = vld [vmem:[%s4348 + $0xc8] sm:$0xf]
        %v4383 = vld [vmem:[%s4348 + $0xcc] sm:$0xff]
        %v4384 = vld [vmem:[%s4348 + $0xd4] sm:$0xf]
        %v4385 = vld [vmem:[%s4348 + $0xd8] sm:$0xff]
        %v4386 = vld [vmem:[%s4348 + $0xe0] sm:$0xf]
        %v4387 = vld [vmem:[%s4348 + $0xe4] sm:$0xff]
        %v4388 = vld [vmem:[%s4348 + $0xec] sm:$0xf]
        %v4389 = vld [vmem:[%s4348 + $0xf0] sm:$0xff]
        %v4390 = vld [vmem:[%s4348 + $0xf8] sm:$0xf]
        %v4391 = vld [vmem:[%s4348 + $0xfc] sm:$0xff]
        %v4392 = vld [vmem:[%s4348 + $0x104] sm:$0xf]
        %v4393 = vld [vmem:[%s4348 + $0x108] sm:$0xff]
        %v4394 = vld [vmem:[%s4348 + $0x110] sm:$0xf]
        %v4395 = vld [vmem:[%s4348 + $0x114] sm:$0xff]
        %v4396 = vld [vmem:[%s4348 + $0x11c] sm:$0xf]
        %v4445 = vunpack.c.l.b16 %v4349
        %v4446 = vunpack.c.h.b16 %v4349
        %v4447 = vunpack.c.l.b16 %v4350
        %v4448 = vunpack.c.l.b16 %v4351
        %v4449 = vunpack.c.h.b16 %v4351
        %v4450 = vunpack.c.l.b16 %v4352
        %v4451 = vunpack.c.l.b16 %v4353
        %v4452 = vunpack.c.h.b16 %v4353
        %v4453 = vunpack.c.l.b16 %v4354
        %v4454 = vunpack.c.l.b16 %v4355
        %v4455 = vunpack.c.h.b16 %v4355
        %v4456 = vunpack.c.l.b16 %v4356
        %v4457 = vunpack.c.l.b16 %v4357
        %v4458 = vunpack.c.h.b16 %v4357
        %v4459 = vunpack.c.l.b16 %v4358
        %v4460 = vunpack.c.l.b16 %v4359
        %v4461 = vunpack.c.h.b16 %v4359
        %v4462 = vunpack.c.l.b16 %v4360
        %v4463 = vunpack.c.l.b16 %v4361
        %v4464 = vunpack.c.h.b16 %v4361
        %v4465 = vunpack.c.l.b16 %v4362
        %v4466 = vunpack.c.l.b16 %v4363
        %v4467 = vunpack.c.h.b16 %v4363
        %v4468 = vunpack.c.l.b16 %v4364
        %v4469 = vunpack.c.l.b16 %v4365
        %v4470 = vunpack.c.h.b16 %v4365
        %v4471 = vunpack.c.l.b16 %v4366
        %v4472 = vunpack.c.l.b16 %v4367
        %v4473 = vunpack.c.h.b16 %v4367
        %v4474 = vunpack.c.l.b16 %v4368
        %v4475 = vunpack.c.l.b16 %v4369
        %v4476 = vunpack.c.h.b16 %v4369
        %v4477 = vunpack.c.l.b16 %v4370
        %v4478 = vunpack.c.l.b16 %v4371
        %v4479 = vunpack.c.h.b16 %v4371
        %v4480 = vunpack.c.l.b16 %v4372
        %v4481 = vunpack.c.l.b16 %v4373
        %v4482 = vunpack.c.h.b16 %v4373
        %v4483 = vunpack.c.l.b16 %v4374
        %v4484 = vunpack.c.l.b16 %v4375
        %v4485 = vunpack.c.h.b16 %v4375
        %v4486 = vunpack.c.l.b16 %v4376
        %v4487 = vunpack.c.l.b16 %v4377
        %v4488 = vunpack.c.h.b16 %v4377
        %v4489 = vunpack.c.l.b16 %v4378
        %v4490 = vunpack.c.l.b16 %v4379
        %v4491 = vunpack.c.h.b16 %v4379
        %v4492 = vunpack.c.l.b16 %v4380
        %v4493 = vunpack.c.l.b16 %v4381
        %v4494 = vunpack.c.h.b16 %v4381
        %v4495 = vunpack.c.l.b16 %v4382
        %v4496 = vunpack.c.l.b16 %v4383
        %v4497 = vunpack.c.h.b16 %v4383
        %v4498 = vunpack.c.l.b16 %v4384
        %v4499 = vunpack.c.l.b16 %v4385
        %v4500 = vunpack.c.h.b16 %v4385
        %v4501 = vunpack.c.l.b16 %v4386
        %v4502 = vunpack.c.l.b16 %v4387
        %v4503 = vunpack.c.h.b16 %v4387
        %v4504 = vunpack.c.l.b16 %v4388
        %v4505 = vunpack.c.l.b16 %v4389
        %v4506 = vunpack.c.h.b16 %v4389
        %v4507 = vunpack.c.l.b16 %v4390
        %v4508 = vunpack.c.l.b16 %v4391
        %v4509 = vunpack.c.h.b16 %v4391
        %v4510 = vunpack.c.l.b16 %v4392
        %v4511 = vunpack.c.l.b16 %v4393
        %v4512 = vunpack.c.h.b16 %v4393
        %v4513 = vunpack.c.l.b16 %v4394
        %v4514 = vunpack.c.l.b16 %v4395
        %v4515 = vunpack.c.h.b16 %v4395
        %v4516 = vunpack.c.l.b16 %v4396
        %v4517 = vpack.c.b16 %v4448, %v4445
        %v4518 = vpack.c.b16 %v4449, %v4446
        %v4519 = vpack.c.b16 %v4450, %v4447
        %v4520 = vpack.c.b16 %v4454, %v4451
        %v4521 = vpack.c.b16 %v4455, %v4452
        %v4522 = vpack.c.b16 %v4456, %v4453
        %v4523 = vpack.c.b16 %v4460, %v4457
        %v4524 = vpack.c.b16 %v4461, %v4458
        %v4525 = vpack.c.b16 %v4462, %v4459
        %v4526 = vpack.c.b16 %v4466, %v4463
        %v4527 = vpack.c.b16 %v4467, %v4464
        %v4528 = vpack.c.b16 %v4468, %v4465
        %v4529 = vpack.c.b16 %v4472, %v4469
        %v4530 = vpack.c.b16 %v4473, %v4470
        %v4531 = vpack.c.b16 %v4474, %v4471
        %v4532 = vpack.c.b16 %v4478, %v4475
        %v4533 = vpack.c.b16 %v4479, %v4476
        %v4534 = vpack.c.b16 %v4480, %v4477
        %v4535 = vpack.c.b16 %v4484, %v4481
        %v4536 = vpack.c.b16 %v4485, %v4482
        %v4537 = vpack.c.b16 %v4486, %v4483
        %v4538 = vpack.c.b16 %v4490, %v4487
        %v4539 = vpack.c.b16 %v4491, %v4488
        %v4540 = vpack.c.b16 %v4492, %v4489
        %v4541 = vpack.c.b16 %v4496, %v4493
        %v4542 = vpack.c.b16 %v4497, %v4494
        %v4543 = vpack.c.b16 %v4498, %v4495
        %v4544 = vpack.c.b16 %v4502, %v4499
        %v4545 = vpack.c.b16 %v4503, %v4500
        %v4546 = vpack.c.b16 %v4504, %v4501
        %v4547 = vpack.c.b16 %v4508, %v4505
        %v4548 = vpack.c.b16 %v4509, %v4506
        %v4549 = vpack.c.b16 %v4510, %v4507
        %v4550 = vpack.c.b16 %v4514, %v4511
        %v4551 = vpack.c.b16 %v4515, %v4512
        %v4552 = vpack.c.b16 %v4516, %v4513
        %v4590 = vsel %vm3615, %v4341, 0
        %v4593 = vsel %vm3615, %v4343, 0
        %v4596 = vsel %vm3615, %v4345, 0
        %v4599 = vsel %vm3615, %v4347, 0
        %4601 = vmatprep.subr.bf16.mxu0 %v4518
        %4602 = vmatpush1.bf16.msra.mxu0 %v4517
        %4603 = vmatprep.subr.bf16.mxu0 %v4521
        %4604 = vmatpush1.bf16.msra.mxu0 %v4520
        %4605 = vmatprep.subr.bf16.mxu0 %v4524
        %4606 = vmatpush1.bf16.msra.mxu0 %v4523
        %4607 = vmatprep.subr.bf16.mxu0 %v4527
        %4608 = vmatpush1.bf16.msra.mxu0 %v4526
        %4609 = vmatprep.subr.bf16.mxu0 %v4530
        %4610 = vmatpush1.bf16.msra.mxu0 %v4529
        %4611 = vmatprep.subr.bf16.mxu0 %v4533
        %4612 = vmatpush1.bf16.msra.mxu0 %v4532
        %4613 = vmatprep.subr.bf16.mxu0 %v4536
        %4614 = vmatpush1.bf16.msra.mxu0 %v4535
        %4615 = vmatprep.subr.bf16.mxu0 %v4539
        %4616 = vmatpush1.bf16.msra.mxu0 %v4538
        %4617 = vmatprep.subr.bf16.mxu0 %v4542
        %4618 = vmatpush1.bf16.msra.mxu0 %v4541
        %4619 = vmatprep.subr.bf16.mxu0 %v4545
        %4620 = vmatpush1.bf16.msra.mxu0 %v4544
        %4621 = vmatprep.subr.bf16.mxu0 %v4548
        %4622 = vmatpush1.bf16.msra.mxu0 %v4547
        %4623 = vmatprep.subr.bf16.mxu0 %v4551
        %4624 = vmatpush1.bf16.msra.mxu0 %v4550
        %4625 = vmatprep.subr.bf16.mxu0 0
        %4626 = vmatpush1.bf16.msra.mxu0 0
        %4627 = vmatprep.subr.bf16.mxu0 0
        %4628 = vmatpush1.bf16.msra.mxu0 0
        %4629 = vmatprep.subr.bf16.mxu0 0
        %4630 = vmatpush1.bf16.msra.mxu0 0
        %4631 = vmatprep.subr.bf16.mxu0 0
        %4632 = vmatpush1.bf16.msra.mxu0 0
        %4633 = vmatprep.mubr.bf16.mxu0 %v4590
        %4634 = vmatmul.mubr.bf16.gmra.mrb[0].mxu0 %v4340
        %v4635 = vpop.f32.mrb[0].mxu0
        %v4636 = vadd.f32 0.0, %v4635
        %v4637 = vpop.f32.mrb[0].mxu0
        %v4638 = vadd.f32 0.0, %v4637
        %v4639 = vpop.f32.mrb[0].mxu0
        %v4640 = vadd.f32 0.0, %v4639
        %v4641 = vpop.f32.mrb[0].mxu0
        %v4642 = vadd.f32 0.0, %v4641
        %4643 = vmatprep.mubr.bf16.mxu0 %v4593
        %4644 = vmatmul.mubr.bf16.gmra.mrb[0].mxu0 %v4342
        %v4645 = vpop.f32.mrb[0].mxu0
        %v4646 = vadd.f32 0.0, %v4645
        %v4647 = vpop.f32.mrb[0].mxu0
        %v4648 = vadd.f32 0.0, %v4647
        %v4649 = vpop.f32.mrb[0].mxu0
        %v4650 = vadd.f32 0.0, %v4649
        %v4651 = vpop.f32.mrb[0].mxu0
        %v4652 = vadd.f32 0.0, %v4651
        %4653 = vmatprep.mubr.bf16.mxu0 %v4596
        %4654 = vmatmul.mubr.bf16.gmra.mrb[0].mxu0 %v4344
        %v4655 = vpop.f32.mrb[0].mxu0
        %v4656 = vadd.f32 0.0, %v4655
        %v4657 = vpop.f32.mrb[0].mxu0
        %v4658 = vadd.f32 0.0, %v4657
        %v4659 = vpop.f32.mrb[0].mxu0
        %v4660 = vadd.f32 0.0, %v4659
        %v4661 = vpop.f32.mrb[0].mxu0
        %v4662 = vadd.f32 0.0, %v4661
        %4663 = vmatprep.mubr.bf16.mxu0 %v4599
        %4664 = vmatmul.mubr.bf16.gmra.mrb[0].mxu0 %v4346
        %v4665 = vpop.f32.mrb[0].mxu0
        %v4666 = vadd.f32 0.0, %v4665
        %v4667 = vpop.f32.mrb[0].mxu0
        %v4668 = vadd.f32 0.0, %v4667
        %v4669 = vpop.f32.mrb[0].mxu0
        %v4670 = vadd.f32 0.0, %v4669
        %v4671 = vpop.f32.mrb[0].mxu0
        %v4672 = vadd.f32 0.0, %v4671
        %4673 = vdwg.mxu0
        %4674 = vmatprep.subr.bf16.mxu0 0
        %4675 = vmatpush1.bf16.msra.mxu0 %v4519
        %4676 = vmatprep.subr.bf16.mxu0 0
        %4677 = vmatpush1.bf16.msra.mxu0 %v4522
        %4678 = vmatprep.subr.bf16.mxu0 0
        %4679 = vmatpush1.bf16.msra.mxu0 %v4525
        %4680 = vmatprep.subr.bf16.mxu0 0
        %4681 = vmatpush1.bf16.msra.mxu0 %v4528
        %4682 = vmatprep.subr.bf16.mxu0 0
        %4683 = vmatpush1.bf16.msra.mxu0 %v4531
        %4684 = vmatprep.subr.bf16.mxu0 0
        %4685 = vmatpush1.bf16.msra.mxu0 %v4534
        %4686 = vmatprep.subr.bf16.mxu0 0
        %4687 = vmatpush1.bf16.msra.mxu0 %v4537
        %4688 = vmatprep.subr.bf16.mxu0 0
        %4689 = vmatpush1.bf16.msra.mxu0 %v4540
        %4690 = vmatprep.subr.bf16.mxu0 0
        %4691 = vmatpush1.bf16.msra.mxu0 %v4543
        %4692 = vmatprep.subr.bf16.mxu0 0
        %4693 = vmatpush1.bf16.msra.mxu0 %v4546
        %4694 = vmatprep.subr.bf16.mxu0 0
        %4695 = vmatpush1.bf16.msra.mxu0 %v4549
        %4696 = vmatprep.subr.bf16.mxu0 0
        %4697 = vmatpush1.bf16.msra.mxu0 %v4552
        %4698 = vmatprep.subr.bf16.mxu0 0
        %4699 = vmatpush1.bf16.msra.mxu0 0
        %4700 = vmatprep.subr.bf16.mxu0 0
        %4701 = vmatpush1.bf16.msra.mxu0 0
        %4702 = vmatprep.subr.bf16.mxu0 0
        %4703 = vmatpush1.bf16.msra.mxu0 0
        %4704 = vmatprep.subr.bf16.mxu0 0
        %4705 = vmatpush1.bf16.msra.mxu0 0
        %4706 = vmatprep.mubr.bf16.mxu0 %v4590
        %4707 = vmatmul.mubr.bf16.gmra.mrb[0].mxu0 %v4340
        %v4708 = vpop.f32.mrb[0].mxu0
        %v4709 = vadd.f32 0.0, %v4708
        %v4710 = vpop.f32.mrb[0].mxu0
        %v4711 = vpop.f32.mrb[0].mxu0
        %v4712 = vadd.f32 0.0, %v4711
        %v4713 = vpop.f32.mrb[0].mxu0
        %4714 = vmatprep.mubr.bf16.mxu0 %v4593
        %4715 = vmatmul.mubr.bf16.gmra.mrb[0].mxu0 %v4342
        %v4716 = vpop.f32.mrb[0].mxu0
        %v4717 = vadd.f32 0.0, %v4716
        %v4718 = vpop.f32.mrb[0].mxu0
        %v4719 = vpop.f32.mrb[0].mxu0
        %v4720 = vadd.f32 0.0, %v4719
        %v4721 = vpop.f32.mrb[0].mxu0
        %4722 = vmatprep.mubr.bf16.mxu0 %v4596
        %4723 = vmatmul.mubr.bf16.gmra.mrb[0].mxu0 %v4344
        %v4724 = vpop.f32.mrb[0].mxu0
        %v4725 = vadd.f32 0.0, %v4724
        %v4726 = vpop.f32.mrb[0].mxu0
        %v4727 = vpop.f32.mrb[0].mxu0
        %v4728 = vadd.f32 0.0, %v4727
        %v4729 = vpop.f32.mrb[0].mxu0
        %4730 = vmatprep.mubr.bf16.mxu0 %v4599
        %4731 = vmatmul.mubr.bf16.gmra.mrb[0].mxu0 %v4346
        %v4732 = vpop.f32.mrb[0].mxu0
        %v4733 = vadd.f32 0.0, %v4732
        %v4734 = vpop.f32.mrb[0].mxu0
        %v4735 = vpop.f32.mrb[0].mxu0
        %v4736 = vadd.f32 0.0, %v4735
        %v4737 = vpop.f32.mrb[0].mxu0
        %4738 = vdwg.mxu0
        %v4787 = vunpack.c.l.b16 %v4186
        %v4788 = vunpack.c.h.b16 %v4186
        %v4789 = vunpack.c.l.b16 %v4187
        %v4790 = vunpack.c.l.b16 %v4188
        %v4791 = vunpack.c.h.b16 %v4188
        %v4792 = vunpack.c.l.b16 %v4189
        %v4793 = vunpack.c.l.b16 %v4190
        %v4794 = vunpack.c.h.b16 %v4190
        %v4795 = vunpack.c.l.b16 %v4191
        %v4796 = vunpack.c.l.b16 %v4192
        %v4797 = vunpack.c.h.b16 %v4192
        %v4798 = vunpack.c.l.b16 %v4193
        %v4799 = vunpack.c.l.b16 %v4194
        %v4800 = vunpack.c.h.b16 %v4194
        %v4801 = vunpack.c.l.b16 %v4195
        %v4802 = vunpack.c.l.b16 %v4196
        %v4803 = vunpack.c.h.b16 %v4196
        %v4804 = vunpack.c.l.b16 %v4197
        %v4805 = vunpack.c.l.b16 %v4198
        %v4806 = vunpack.c.h.b16 %v4198
        %v4807 = vunpack.c.l.b16 %v4199
        %v4808 = vunpack.c.l.b16 %v4200
        %v4809 = vunpack.c.h.b16 %v4200
        %v4810 = vunpack.c.l.b16 %v4201
        %v4811 = vunpack.c.l.b16 %v4202
        %v4812 = vunpack.c.h.b16 %v4202
        %v4813 = vunpack.c.l.b16 %v4203
        %v4814 = vunpack.c.l.b16 %v4204
        %v4815 = vunpack.c.h.b16 %v4204
        %v4816 = vunpack.c.l.b16 %v4205
        %v4817 = vunpack.c.l.b16 %v4206
        %v4818 = vunpack.c.h.b16 %v4206
        %v4819 = vunpack.c.l.b16 %v4207
        %v4820 = vunpack.c.l.b16 %v4208
        %v4821 = vunpack.c.h.b16 %v4208
        %v4822 = vunpack.c.l.b16 %v4209
        %v4823 = vunpack.c.l.b16 %v4210
        %v4824 = vunpack.c.h.b16 %v4210
        %v4825 = vunpack.c.l.b16 %v4211
        %v4826 = vunpack.c.l.b16 %v4212
        %v4827 = vunpack.c.h.b16 %v4212
        %v4828 = vunpack.c.l.b16 %v4213
        %v4829 = vunpack.c.l.b16 %v4214
        %v4830 = vunpack.c.h.b16 %v4214
        %v4831 = vunpack.c.l.b16 %v4215
        %v4832 = vunpack.c.l.b16 %v4216
        %v4833 = vunpack.c.h.b16 %v4216
        %v4834 = vunpack.c.l.b16 %v4217
        %v4835 = vunpack.c.l.b16 %v4218
        %v4836 = vunpack.c.h.b16 %v4218
        %v4837 = vunpack.c.l.b16 %v4219
        %v4838 = vunpack.c.l.b16 %v4220
        %v4839 = vunpack.c.h.b16 %v4220
        %v4840 = vunpack.c.l.b16 %v4221
        %v4841 = vunpack.c.l.b16 %v4222
        %v4842 = vunpack.c.h.b16 %v4222
        %v4843 = vunpack.c.l.b16 %v4223
        %v4844 = vunpack.c.l.b16 %v4224
        %v4845 = vunpack.c.h.b16 %v4224
        %v4846 = vunpack.c.l.b16 %v4225
        %v4847 = vunpack.c.l.b16 %v4226
        %v4848 = vunpack.c.h.b16 %v4226
        %v4849 = vunpack.c.l.b16 %v4227
        %v4850 = vunpack.c.l.b16 %v4228
        %v4851 = vunpack.c.h.b16 %v4228
        %v4852 = vunpack.c.l.b16 %v4229
        %v4853 = vunpack.c.l.b16 %v4230
        %v4854 = vunpack.c.h.b16 %v4230
        %v4855 = vunpack.c.l.b16 %v4231
        %v4856 = vunpack.c.l.b16 %v4232
        %v4857 = vunpack.c.h.b16 %v4232
        %v4858 = vunpack.c.l.b16 %v4233
        %v4859 = vpack.c.b16 %v4790, %v4787
        %v4860 = vpack.c.b16 %v4791, %v4788
        %v4861 = vpack.c.b16 %v4792, %v4789
        %v4862 = vpack.c.b16 %v4796, %v4793
        %v4863 = vpack.c.b16 %v4797, %v4794
        %v4864 = vpack.c.b16 %v4798, %v4795
        %v4865 = vpack.c.b16 %v4802, %v4799
        %v4866 = vpack.c.b16 %v4803, %v4800
        %v4867 = vpack.c.b16 %v4804, %v4801
        %v4868 = vpack.c.b16 %v4808, %v4805
        %v4869 = vpack.c.b16 %v4809, %v4806
        %v4870 = vpack.c.b16 %v4810, %v4807
        %v4871 = vpack.c.b16 %v4814, %v4811
        %v4872 = vpack.c.b16 %v4815, %v4812
        %v4873 = vpack.c.b16 %v4816, %v4813
        %v4874 = vpack.c.b16 %v4820, %v4817
        %v4875 = vpack.c.b16 %v4821, %v4818
        %v4876 = vpack.c.b16 %v4822, %v4819
        %v4877 = vpack.c.b16 %v4826, %v4823
        %v4878 = vpack.c.b16 %v4827, %v4824
        %v4879 = vpack.c.b16 %v4828, %v4825
        %v4880 = vpack.c.b16 %v4832, %v4829
        %v4881 = vpack.c.b16 %v4833, %v4830
        %v4882 = vpack.c.b16 %v4834, %v4831
        %v4883 = vpack.c.b16 %v4838, %v4835
        %v4884 = vpack.c.b16 %v4839, %v4836
        %v4885 = vpack.c.b16 %v4840, %v4837
        %v4886 = vpack.c.b16 %v4844, %v4841
        %v4887 = vpack.c.b16 %v4845, %v4842
        %v4888 = vpack.c.b16 %v4846, %v4843
        %v4889 = vpack.c.b16 %v4850, %v4847
        %v4890 = vpack.c.b16 %v4851, %v4848
        %v4891 = vpack.c.b16 %v4852, %v4849
        %v4892 = vpack.c.b16 %v4856, %v4853
        %v4893 = vpack.c.b16 %v4857, %v4854
        %v4894 = vpack.c.b16 %v4858, %v4855
        %v4932 = vsel %vm3615, %v4179, 0
        %v4935 = vsel %vm3615, %v4181, 0
        %v4938 = vsel %vm3615, %v4183, 0
        %v4941 = vsel %vm3615, %v4185, 0
        %4943 = vmatprep.subr.bf16.mxu0 %v4860
        %4944 = vmatpush1.bf16.msra.mxu0 %v4859
        %4945 = vmatprep.subr.bf16.mxu0 %v4863
        %4946 = vmatpush1.bf16.msra.mxu0 %v4862
        %4947 = vmatprep.subr.bf16.mxu0 %v4866
        %4948 = vmatpush1.bf16.msra.mxu0 %v4865
        %4949 = vmatprep.subr.bf16.mxu0 %v4869
        %4950 = vmatpush1.bf16.msra.mxu0 %v4868
        %4951 = vmatprep.subr.bf16.mxu0 %v4872
        %4952 = vmatpush1.bf16.msra.mxu0 %v4871
        %4953 = vmatprep.subr.bf16.mxu0 %v4875
        %4954 = vmatpush1.bf16.msra.mxu0 %v4874
        %4955 = vmatprep.subr.bf16.mxu0 %v4878
        %4956 = vmatpush1.bf16.msra.mxu0 %v4877
        %4957 = vmatprep.subr.bf16.mxu0 %v4881
        %4958 = vmatpush1.bf16.msra.mxu0 %v4880
        %4959 = vmatprep.subr.bf16.mxu0 %v4884
        %4960 = vmatpush1.bf16.msra.mxu0 %v4883
        %4961 = vmatprep.subr.bf16.mxu0 %v4887
        %4962 = vmatpush1.bf16.msra.mxu0 %v4886
        %4963 = vmatprep.subr.bf16.mxu0 %v4890
        %4964 = vmatpush1.bf16.msra.mxu0 %v4889
        %4965 = vmatprep.subr.bf16.mxu0 %v4893
        %4966 = vmatpush1.bf16.msra.mxu0 %v4892
        %4967 = vmatprep.subr.bf16.mxu0 0
        %4968 = vmatpush1.bf16.msra.mxu0 0
        %4969 = vmatprep.subr.bf16.mxu0 0
        %4970 = vmatpush1.bf16.msra.mxu0 0
        %4971 = vmatprep.subr.bf16.mxu0 0
        %4972 = vmatpush1.bf16.msra.mxu0 0
        %4973 = vmatprep.subr.bf16.mxu0 0
        %4974 = vmatpush1.bf16.msra.mxu0 0
        %4975 = vmatprep.mubr.bf16.mxu0 %v4932
        %4976 = vmatmul.mubr.bf16.gmra.mrb[0].mxu0 %v4178
        %v4977 = vpop.f32.mrb[0].mxu0
        %v4978 = vadd.f32 %v4636, %v4977
        %v4979 = vpop.f32.mrb[0].mxu0
        %v4980 = vadd.f32 %v4638, %v4979
        %v4981 = vpop.f32.mrb[0].mxu0
        %v4982 = vadd.f32 %v4640, %v4981
        %v4983 = vpop.f32.mrb[0].mxu0
        %v4984 = vadd.f32 %v4642, %v4983
        %4985 = vmatprep.mubr.bf16.mxu0 %v4935
        %4986 = vmatmul.mubr.bf16.gmra.mrb[0].mxu0 %v4180
        %v4987 = vpop.f32.mrb[0].mxu0
        %v4988 = vadd.f32 %v4646, %v4987
        %v4989 = vpop.f32.mrb[0].mxu0
        %v4990 = vadd.f32 %v4648, %v4989
        %v4991 = vpop.f32.mrb[0].mxu0
        %v4992 = vadd.f32 %v4650, %v4991
        %v4993 = vpop.f32.mrb[0].mxu0
        %v4994 = vadd.f32 %v4652, %v4993
        %4995 = vmatprep.mubr.bf16.mxu0 %v4938
        %4996 = vmatmul.mubr.bf16.gmra.mrb[0].mxu0 %v4182
        %v4997 = vpop.f32.mrb[0].mxu0
        %v4998 = vadd.f32 %v4656, %v4997
        %v4999 = vpop.f32.mrb[0].mxu0
        %v5000 = vadd.f32 %v4658, %v4999
        %v5001 = vpop.f32.mrb[0].mxu0
        %v5002 = vadd.f32 %v4660, %v5001
        %v5003 = vpop.f32.mrb[0].mxu0
        %v5004 = vadd.f32 %v4662, %v5003
        %5005 = vmatprep.mubr.bf16.mxu0 %v4941
        %5006 = vmatmul.mubr.bf16.gmra.mrb[0].mxu0 %v4184
        %v5007 = vpop.f32.mrb[0].mxu0
        %v5008 = vadd.f32 %v4666, %v5007
        %v5009 = vpop.f32.mrb[0].mxu0
        %v5010 = vadd.f32 %v4668, %v5009
        %v5011 = vpop.f32.mrb[0].mxu0
        %v5012 = vadd.f32 %v4670, %v5011
        %v5013 = vpop.f32.mrb[0].mxu0
        %v5014 = vadd.f32 %v4672, %v5013
        %5015 = vdwg.mxu0
        %5016 = vmatprep.subr.bf16.mxu0 0
        %5017 = vmatpush1.bf16.msra.mxu0 %v4861
        %5018 = vmatprep.subr.bf16.mxu0 0
        %5019 = vmatpush1.bf16.msra.mxu0 %v4864
        %5020 = vmatprep.subr.bf16.mxu0 0
        %5021 = vmatpush1.bf16.msra.mxu0 %v4867
        %5022 = vmatprep.subr.bf16.mxu0 0
        %5023 = vmatpush1.bf16.msra.mxu0 %v4870
        %5024 = vmatprep.subr.bf16.mxu0 0
        %5025 = vmatpush1.bf16.msra.mxu0 %v4873
        %5026 = vmatprep.subr.bf16.mxu0 0
        %5027 = vmatpush1.bf16.msra.mxu0 %v4876
        %5028 = vmatprep.subr.bf16.mxu0 0
        %5029 = vmatpush1.bf16.msra.mxu0 %v4879
        %5030 = vmatprep.subr.bf16.mxu0 0
        %5031 = vmatpush1.bf16.msra.mxu0 %v4882
        %5032 = vmatprep.subr.bf16.mxu0 0
        %5033 = vmatpush1.bf16.msra.mxu0 %v4885
        %5034 = vmatprep.subr.bf16.mxu0 0
        %5035 = vmatpush1.bf16.msra.mxu0 %v4888
        %5036 = vmatprep.subr.bf16.mxu0 0
        %5037 = vmatpush1.bf16.msra.mxu0 %v4891
        %5038 = vmatprep.subr.bf16.mxu0 0
        %5039 = vmatpush1.bf16.msra.mxu0 %v4894
        %5040 = vmatprep.subr.bf16.mxu0 0
        %5041 = vmatpush1.bf16.msra.mxu0 0
        %5042 = vmatprep.subr.bf16.mxu0 0
        %5043 = vmatpush1.bf16.msra.mxu0 0
        %5044 = vmatprep.subr.bf16.mxu0 0
        %5045 = vmatpush1.bf16.msra.mxu0 0
        %5046 = vmatprep.subr.bf16.mxu0 0
        %5047 = vmatpush1.bf16.msra.mxu0 0
        %5048 = vmatprep.mubr.bf16.mxu0 %v4932
        %5049 = vmatmul.mubr.bf16.gmra.mrb[0].mxu0 %v4178
        %v5050 = vpop.f32.mrb[0].mxu0
        %v5051 = vadd.f32 %v4709, %v5050
        %v5052 = vpop.f32.mrb[0].mxu0
        %v5053 = vpop.f32.mrb[0].mxu0
        %v5054 = vadd.f32 %v4712, %v5053
        %v5055 = vpop.f32.mrb[0].mxu0
        %5056 = vmatprep.mubr.bf16.mxu0 %v4935
        %5057 = vmatmul.mubr.bf16.gmra.mrb[0].mxu0 %v4180
        %v5058 = vpop.f32.mrb[0].mxu0
        %v5059 = vadd.f32 %v4717, %v5058
        %v5060 = vpop.f32.mrb[0].mxu0
        %v5061 = vpop.f32.mrb[0].mxu0
        %v5062 = vadd.f32 %v4720, %v5061
        %v5063 = vpop.f32.mrb[0].mxu0
        %5064 = vmatprep.mubr.bf16.mxu0 %v4938
        %5065 = vmatmul.mubr.bf16.gmra.mrb[0].mxu0 %v4182
        %v5066 = vpop.f32.mrb[0].mxu0
        %v5067 = vadd.f32 %v4725, %v5066
        %v5068 = vpop.f32.mrb[0].mxu0
        %v5069 = vpop.f32.mrb[0].mxu0
        %v5070 = vadd.f32 %v4728, %v5069
        %v5071 = vpop.f32.mrb[0].mxu0
        %5072 = vmatprep.mubr.bf16.mxu0 %v4941
        %5073 = vmatmul.mubr.bf16.gmra.mrb[0].mxu0 %v4184
        %v5074 = vpop.f32.mrb[0].mxu0
        %v5075 = vadd.f32 %v4733, %v5074
        %v5076 = vpop.f32.mrb[0].mxu0
        %v5077 = vpop.f32.mrb[0].mxu0
        %v5078 = vadd.f32 %v4736, %v5077
        %v5079 = vpop.f32.mrb[0].mxu0
        %5080 = vdwg.mxu0
        %s5081 = scalar_lea.vmem [#allocation9], 64
        %v5082 = vld [vmem:[%s5081] sm:$0xf]
        %v5083 = vld [vmem:[%s5081 + $0x4] sm:$0xf]
        %v5084 = vld [vmem:[%s5081 + $0x8] sm:$0xf]
        %v5085 = vld [vmem:[%s5081 + $0xc] sm:$0xf]
        %v5086 = vld [vmem:[%s5081 + $0x10] sm:$0xf]
        %v5087 = vld [vmem:[%s5081 + $0x14] sm:$0xf]
        %v5088 = vld [vmem:[%s5081 + $0x18] sm:$0xf]
        %v5089 = vld [vmem:[%s5081 + $0x1c] sm:$0xf]
        %v5098 = vunpack.c.l.b16 %v5082
        %v5099 = vunpack.c.l.b16 %v5083
        %v5100 = vunpack.c.l.b16 %v5084
        %v5101 = vunpack.c.l.b16 %v5085
        %v5102 = vunpack.c.l.b16 %v5086
        %v5103 = vunpack.c.l.b16 %v5087
        %v5104 = vunpack.c.l.b16 %v5088
        %v5105 = vunpack.c.l.b16 %v5089
        %v5106 = vpack.c.b16 %v5099, %v5098
        %v5107 = vpack.c.b16 %v5101, %v5100
        %v5108 = vpack.c.b16 %v5103, %v5102
        %v5109 = vpack.c.b16 %v5105, %v5104
        %5114 = vmatprep.subr.bf16.mxu0 %v4058
        %5115 = vmatpush1.bf16.msra.mxu0 %v4057
        %5116 = vmatprep.subr.bf16.mxu0 %v4060
        %5117 = vmatpush1.bf16.msra.mxu0 %v4059
        %5118 = vmatprep.subr.bf16.mxu0 %v4062
        %5119 = vmatpush1.bf16.msra.mxu0 %v4061
        %5120 = vmatprep.subr.bf16.mxu0 %v4064
        %5121 = vmatpush1.bf16.msra.mxu0 %v4063
        %5122 = vmatprep.subr.bf16.mxu0 %v4066
        %5123 = vmatpush1.bf16.msra.mxu0 %v4065
        %5124 = vmatprep.subr.bf16.mxu0 %v4068
        %5125 = vmatpush1.bf16.msra.mxu0 %v4067
        %5126 = vmatprep.subr.bf16.mxu0 %v4070
        %5127 = vmatpush1.bf16.msra.mxu0 %v4069
        %5128 = vmatprep.subr.bf16.mxu0 %v4072
        %5129 = vmatpush1.bf16.msra.mxu0 %v4071
        %5130 = vmatprep.subr.bf16.mxu0 0
        %5131 = vmatpush1.bf16.msra.mxu0 0
        %5132 = vmatprep.subr.bf16.mxu0 0
        %5133 = vmatpush1.bf16.msra.mxu0 0
        %5134 = vmatprep.subr.bf16.mxu0 0
        %5135 = vmatpush1.bf16.msra.mxu0 0
        %5136 = vmatprep.subr.bf16.mxu0 0
        %5137 = vmatpush1.bf16.msra.mxu0 0
        %5138 = vmatprep.subr.bf16.mxu0 0
        %5139 = vmatpush1.bf16.msra.mxu0 0
        %5140 = vmatprep.subr.bf16.mxu0 0
        %5141 = vmatpush1.bf16.msra.mxu0 0
        %5142 = vmatprep.subr.bf16.mxu0 0
        %5143 = vmatpush1.bf16.msra.mxu0 0
        %5144 = vmatprep.subr.bf16.mxu0 0
        %5145 = vmatpush1.bf16.msra.mxu0 0
        %5146 = vmatprep.mubr.bf16.mxu0 0
        %5147 = vmatmul.mubr.bf16.gmra.mrb[0].mxu0 %v5106
        %v5148 = vpop.f32.mrb[0].mxu0
        %v5149 = vadd.f32 0.0, %v5148
        %v5150 = vpop.f32.mrb[0].mxu0
        %v5151 = vadd.f32 0.0, %v5150
        %v5152 = vpop.f32.mrb[0].mxu0
        %v5153 = vadd.f32 0.0, %v5152
        %v5154 = vpop.f32.mrb[0].mxu0
        %v5155 = vadd.f32 0.0, %v5154
        %5156 = vmatprep.mubr.bf16.mxu0 0
        %5157 = vmatmul.mubr.bf16.gmra.mrb[0].mxu0 %v5107
        %v5158 = vpop.f32.mrb[0].mxu0
        %v5159 = vadd.f32 0.0, %v5158
        %v5160 = vpop.f32.mrb[0].mxu0
        %v5161 = vadd.f32 0.0, %v5160
        %v5162 = vpop.f32.mrb[0].mxu0
        %v5163 = vadd.f32 0.0, %v5162
        %v5164 = vpop.f32.mrb[0].mxu0
        %v5165 = vadd.f32 0.0, %v5164
        %5166 = vmatprep.mubr.bf16.mxu0 0
        %5167 = vmatmul.mubr.bf16.gmra.mrb[0].mxu0 %v5108
        %v5168 = vpop.f32.mrb[0].mxu0
        %v5169 = vadd.f32 0.0, %v5168
        %v5170 = vpop.f32.mrb[0].mxu0
        %v5171 = vadd.f32 0.0, %v5170
        %v5172 = vpop.f32.mrb[0].mxu0
        %v5173 = vadd.f32 0.0, %v5172
        %v5174 = vpop.f32.mrb[0].mxu0
        %v5175 = vadd.f32 0.0, %v5174
        %5176 = vmatprep.mubr.bf16.mxu0 0
        %5177 = vmatmul.mubr.bf16.gmra.mrb[0].mxu0 %v5109
        %v5178 = vpop.f32.mrb[0].mxu0
        %v5179 = vadd.f32 0.0, %v5178
        %v5180 = vpop.f32.mrb[0].mxu0
        %v5181 = vadd.f32 0.0, %v5180
        %v5182 = vpop.f32.mrb[0].mxu0
        %v5183 = vadd.f32 0.0, %v5182
        %v5184 = vpop.f32.mrb[0].mxu0
        %v5185 = vadd.f32 0.0, %v5184
        %5186 = vdwg.mxu0
        %v5187 = vpack.c.bf16 %v5153, %v5149
        %v5188 = vpack.c.bf16 %v5155, %v5151
        %v5189 = vpack.c.bf16 %v5163, %v5159
        %v5190 = vpack.c.bf16 %v5165, %v5161
        %v5191 = vpack.c.bf16 %v5173, %v5169
        %v5192 = vpack.c.bf16 %v5175, %v5171
        %v5193 = vpack.c.bf16 %v5183, %v5179
        %v5194 = vpack.c.bf16 %v5185, %v5181
        %s5195 = scalar_lea.vmem [#allocation10], 576
        %v5196 = vld [vmem:[%s5195] sm:$0xff]
        %v5197 = vld [vmem:[%s5195 + $0x8] sm:$0xf]
        %v5198 = vld [vmem:[%s5195 + $0xc] sm:$0xff]
        %v5199 = vld [vmem:[%s5195 + $0x14] sm:$0xf]
        %v5200 = vld [vmem:[%s5195 + $0x18] sm:$0xff]
        %v5201 = vld [vmem:[%s5195 + $0x20] sm:$0xf]
        %v5202 = vld [vmem:[%s5195 + $0x24] sm:$0xff]
        %v5203 = vld [vmem:[%s5195 + $0x2c] sm:$0xf]
        %v5204 = vld [vmem:[%s5195 + $0x30] sm:$0xff]
        %v5205 = vld [vmem:[%s5195 + $0x38] sm:$0xf]
        %v5206 = vld [vmem:[%s5195 + $0x3c] sm:$0xff]
        %v5207 = vld [vmem:[%s5195 + $0x44] sm:$0xf]
        %v5208 = vld [vmem:[%s5195 + $0x48] sm:$0xff]
        %v5209 = vld [vmem:[%s5195 + $0x50] sm:$0xf]
        %v5210 = vld [vmem:[%s5195 + $0x54] sm:$0xff]
        %v5211 = vld [vmem:[%s5195 + $0x5c] sm:$0xf]
        %v5212 = vld [vmem:[%s5195 + $0x60] sm:$0xff]
        %v5213 = vld [vmem:[%s5195 + $0x68] sm:$0xf]
        %v5214 = vld [vmem:[%s5195 + $0x6c] sm:$0xff]
        %v5215 = vld [vmem:[%s5195 + $0x74] sm:$0xf]
        %v5216 = vld [vmem:[%s5195 + $0x78] sm:$0xff]
        %v5217 = vld [vmem:[%s5195 + $0x80] sm:$0xf]
        %v5218 = vld [vmem:[%s5195 + $0x84] sm:$0xff]
        %v5219 = vld [vmem:[%s5195 + $0x8c] sm:$0xf]
        %v5220 = vld [vmem:[%s5195 + $0x90] sm:$0xff]
        %v5221 = vld [vmem:[%s5195 + $0x98] sm:$0xf]
        %v5222 = vld [vmem:[%s5195 + $0x9c] sm:$0xff]
        %v5223 = vld [vmem:[%s5195 + $0xa4] sm:$0xf]
        %v5224 = vld [vmem:[%s5195 + $0xa8] sm:$0xff]
        %v5225 = vld [vmem:[%s5195 + $0xb0] sm:$0xf]
        %v5226 = vld [vmem:[%s5195 + $0xb4] sm:$0xff]
        %v5227 = vld [vmem:[%s5195 + $0xbc] sm:$0xf]
        %v5228 = vld [vmem:[%s5195 + $0xc0] sm:$0xff]
        %v5229 = vld [vmem:[%s5195 + $0xc8] sm:$0xf]
        %v5230 = vld [vmem:[%s5195 + $0xcc] sm:$0xff]
        %v5231 = vld [vmem:[%s5195 + $0xd4] sm:$0xf]
        %v5232 = vld [vmem:[%s5195 + $0xd8] sm:$0xff]
        %v5233 = vld [vmem:[%s5195 + $0xe0] sm:$0xf]
        %v5234 = vld [vmem:[%s5195 + $0xe4] sm:$0xff]
        %v5235 = vld [vmem:[%s5195 + $0xec] sm:$0xf]
        %v5236 = vld [vmem:[%s5195 + $0xf0] sm:$0xff]
        %v5237 = vld [vmem:[%s5195 + $0xf8] sm:$0xf]
        %v5238 = vld [vmem:[%s5195 + $0xfc] sm:$0xff]
        %v5239 = vld [vmem:[%s5195 + $0x104] sm:$0xf]
        %v5240 = vld [vmem:[%s5195 + $0x108] sm:$0xff]
        %v5241 = vld [vmem:[%s5195 + $0x110] sm:$0xf]
        %v5242 = vld [vmem:[%s5195 + $0x114] sm:$0xff]
        %v5243 = vld [vmem:[%s5195 + $0x11c] sm:$0xf]
        %v5292 = vunpack.c.l.b16 %v5196
        %v5293 = vunpack.c.h.b16 %v5196
        %v5294 = vunpack.c.l.b16 %v5197
        %v5295 = vunpack.c.l.b16 %v5198
        %v5296 = vunpack.c.h.b16 %v5198
        %v5297 = vunpack.c.l.b16 %v5199
        %v5298 = vunpack.c.l.b16 %v5200
        %v5299 = vunpack.c.h.b16 %v5200
        %v5300 = vunpack.c.l.b16 %v5201
        %v5301 = vunpack.c.l.b16 %v5202
        %v5302 = vunpack.c.h.b16 %v5202
        %v5303 = vunpack.c.l.b16 %v5203
        %v5304 = vunpack.c.l.b16 %v5204
        %v5305 = vunpack.c.h.b16 %v5204
        %v5306 = vunpack.c.l.b16 %v5205
        %v5307 = vunpack.c.l.b16 %v5206
        %v5308 = vunpack.c.h.b16 %v5206
        %v5309 = vunpack.c.l.b16 %v5207
        %v5310 = vunpack.c.l.b16 %v5208
        %v5311 = vunpack.c.h.b16 %v5208
        %v5312 = vunpack.c.l.b16 %v5209
        %v5313 = vunpack.c.l.b16 %v5210
        %v5314 = vunpack.c.h.b16 %v5210
        %v5315 = vunpack.c.l.b16 %v5211
        %v5316 = vunpack.c.l.b16 %v5212
        %v5317 = vunpack.c.h.b16 %v5212
        %v5318 = vunpack.c.l.b16 %v5213
        %v5319 = vunpack.c.l.b16 %v5214
        %v5320 = vunpack.c.h.b16 %v5214
        %v5321 = vunpack.c.l.b16 %v5215
        %v5322 = vunpack.c.l.b16 %v5216
        %v5323 = vunpack.c.h.b16 %v5216
        %v5324 = vunpack.c.l.b16 %v5217
        %v5325 = vunpack.c.l.b16 %v5218
        %v5326 = vunpack.c.h.b16 %v5218
        %v5327 = vunpack.c.l.b16 %v5219
        %v5328 = vunpack.c.l.b16 %v5220
        %v5329 = vunpack.c.h.b16 %v5220
        %v5330 = vunpack.c.l.b16 %v5221
        %v5331 = vunpack.c.l.b16 %v5222
        %v5332 = vunpack.c.h.b16 %v5222
        %v5333 = vunpack.c.l.b16 %v5223
        %v5334 = vunpack.c.l.b16 %v5224
        %v5335 = vunpack.c.h.b16 %v5224
        %v5336 = vunpack.c.l.b16 %v5225
        %v5337 = vunpack.c.l.b16 %v5226
        %v5338 = vunpack.c.h.b16 %v5226
        %v5339 = vunpack.c.l.b16 %v5227
        %v5340 = vunpack.c.l.b16 %v5228
        %v5341 = vunpack.c.h.b16 %v5228
        %v5342 = vunpack.c.l.b16 %v5229
        %v5343 = vunpack.c.l.b16 %v5230
        %v5344 = vunpack.c.h.b16 %v5230
        %v5345 = vunpack.c.l.b16 %v5231
        %v5346 = vunpack.c.l.b16 %v5232
        %v5347 = vunpack.c.h.b16 %v5232
        %v5348 = vunpack.c.l.b16 %v5233
        %v5349 = vunpack.c.l.b16 %v5234
        %v5350 = vunpack.c.h.b16 %v5234
        %v5351 = vunpack.c.l.b16 %v5235
        %v5352 = vunpack.c.l.b16 %v5236
        %v5353 = vunpack.c.h.b16 %v5236
        %v5354 = vunpack.c.l.b16 %v5237
        %v5355 = vunpack.c.l.b16 %v5238
        %v5356 = vunpack.c.h.b16 %v5238
        %v5357 = vunpack.c.l.b16 %v5239
        %v5358 = vunpack.c.l.b16 %v5240
        %v5359 = vunpack.c.h.b16 %v5240
        %v5360 = vunpack.c.l.b16 %v5241
        %v5361 = vunpack.c.l.b16 %v5242
        %v5362 = vunpack.c.h.b16 %v5242
        %v5363 = vunpack.c.l.b16 %v5243
        %v5364 = vpack.c.b16 %v5295, %v5292
        %v5365 = vpack.c.b16 %v5296, %v5293
        %v5366 = vpack.c.b16 %v5297, %v5294
        %v5367 = vpack.c.b16 %v5301, %v5298
        %v5368 = vpack.c.b16 %v5302, %v5299
        %v5369 = vpack.c.b16 %v5303, %v5300
        %v5370 = vpack.c.b16 %v5307, %v5304
        %v5371 = vpack.c.b16 %v5308, %v5305
        %v5372 = vpack.c.b16 %v5309, %v5306
        %v5373 = vpack.c.b16 %v5313, %v5310
        %v5374 = vpack.c.b16 %v5314, %v5311
        %v5375 = vpack.c.b16 %v5315, %v5312
        %v5376 = vpack.c.b16 %v5319, %v5316
        %v5377 = vpack.c.b16 %v5320, %v5317
        %v5378 = vpack.c.b16 %v5321, %v5318
        %v5379 = vpack.c.b16 %v5325, %v5322
        %v5380 = vpack.c.b16 %v5326, %v5323
        %v5381 = vpack.c.b16 %v5327, %v5324
        %v5382 = vpack.c.b16 %v5331, %v5328
        %v5383 = vpack.c.b16 %v5332, %v5329
        %v5384 = vpack.c.b16 %v5333, %v5330
        %v5385 = vpack.c.b16 %v5337, %v5334
        %v5386 = vpack.c.b16 %v5338, %v5335
        %v5387 = vpack.c.b16 %v5339, %v5336
        %v5388 = vpack.c.b16 %v5343, %v5340
        %v5389 = vpack.c.b16 %v5344, %v5341
        %v5390 = vpack.c.b16 %v5345, %v5342
        %v5391 = vpack.c.b16 %v5349, %v5346
        %v5392 = vpack.c.b16 %v5350, %v5347
        %v5393 = vpack.c.b16 %v5351, %v5348
        %v5394 = vpack.c.b16 %v5355, %v5352
        %v5395 = vpack.c.b16 %v5356, %v5353
        %v5396 = vpack.c.b16 %v5357, %v5354
        %v5397 = vpack.c.b16 %v5361, %v5358
        %v5398 = vpack.c.b16 %v5362, %v5359
        %v5399 = vpack.c.b16 %v5363, %v5360
        %v5437 = vsel %vm3615, %v5188, 0
        %v5440 = vsel %vm3615, %v5190, 0
        %v5443 = vsel %vm3615, %v5192, 0
        %v5446 = vsel %vm3615, %v5194, 0
        %5448 = vmatprep.subr.bf16.mxu0 %v5365
        %5449 = vmatpush1.bf16.msra.mxu0 %v5364
        %5450 = vmatprep.subr.bf16.mxu0 %v5368
        %5451 = vmatpush1.bf16.msra.mxu0 %v5367
        %5452 = vmatprep.subr.bf16.mxu0 %v5371
        %5453 = vmatpush1.bf16.msra.mxu0 %v5370
        %5454 = vmatprep.subr.bf16.mxu0 %v5374
        %5455 = vmatpush1.bf16.msra.mxu0 %v5373
        %5456 = vmatprep.subr.bf16.mxu0 %v5377
        %5457 = vmatpush1.bf16.msra.mxu0 %v5376
        %5458 = vmatprep.subr.bf16.mxu0 %v5380
        %5459 = vmatpush1.bf16.msra.mxu0 %v5379
        %5460 = vmatprep.subr.bf16.mxu0 %v5383
        %5461 = vmatpush1.bf16.msra.mxu0 %v5382
        %5462 = vmatprep.subr.bf16.mxu0 %v5386
        %5463 = vmatpush1.bf16.msra.mxu0 %v5385
        %5464 = vmatprep.subr.bf16.mxu0 %v5389
        %5465 = vmatpush1.bf16.msra.mxu0 %v5388
        %5466 = vmatprep.subr.bf16.mxu0 %v5392
        %5467 = vmatpush1.bf16.msra.mxu0 %v5391
        %5468 = vmatprep.subr.bf16.mxu0 %v5395
        %5469 = vmatpush1.bf16.msra.mxu0 %v5394
        %5470 = vmatprep.subr.bf16.mxu0 %v5398
        %5471 = vmatpush1.bf16.msra.mxu0 %v5397
        %5472 = vmatprep.subr.bf16.mxu0 0
        %5473 = vmatpush1.bf16.msra.mxu0 0
        %5474 = vmatprep.subr.bf16.mxu0 0
        %5475 = vmatpush1.bf16.msra.mxu0 0
        %5476 = vmatprep.subr.bf16.mxu0 0
        %5477 = vmatpush1.bf16.msra.mxu0 0
        %5478 = vmatprep.subr.bf16.mxu0 0
        %5479 = vmatpush1.bf16.msra.mxu0 0
        %5480 = vmatprep.mubr.bf16.mxu0 %v5437
        %5481 = vmatmul.mubr.bf16.gmra.mrb[0].mxu0 %v5187
        %v5482 = vpop.f32.mrb[0].mxu0
        %v5483 = vadd.f32 0.0, %v5482
        %v5484 = vpop.f32.mrb[0].mxu0
        %v5485 = vadd.f32 0.0, %v5484
        %v5486 = vpop.f32.mrb[0].mxu0
        %v5487 = vadd.f32 0.0, %v5486
        %v5488 = vpop.f32.mrb[0].mxu0
        %v5489 = vadd.f32 0.0, %v5488
        %5490 = vmatprep.mubr.bf16.mxu0 %v5440
        %5491 = vmatmul.mubr.bf16.gmra.mrb[0].mxu0 %v5189
        %v5492 = vpop.f32.mrb[0].mxu0
        %v5493 = vadd.f32 0.0, %v5492
        %v5494 = vpop.f32.mrb[0].mxu0
        %v5495 = vadd.f32 0.0, %v5494
        %v5496 = vpop.f32.mrb[0].mxu0
        %v5497 = vadd.f32 0.0, %v5496
        %v5498 = vpop.f32.mrb[0].mxu0
        %v5499 = vadd.f32 0.0, %v5498
        %5500 = vmatprep.mubr.bf16.mxu0 %v5443
        %5501 = vmatmul.mubr.bf16.gmra.mrb[0].mxu0 %v5191
        %v5502 = vpop.f32.mrb[0].mxu0
        %v5503 = vadd.f32 0.0, %v5502
        %v5504 = vpop.f32.mrb[0].mxu0
        %v5505 = vadd.f32 0.0, %v5504
        %v5506 = vpop.f32.mrb[0].mxu0
        %v5507 = vadd.f32 0.0, %v5506
        %v5508 = vpop.f32.mrb[0].mxu0
        %v5509 = vadd.f32 0.0, %v5508
        %5510 = vmatprep.mubr.bf16.mxu0 %v5446
        %5511 = vmatmul.mubr.bf16.gmra.mrb[0].mxu0 %v5193
        %v5512 = vpop.f32.mrb[0].mxu0
        %v5513 = vadd.f32 0.0, %v5512
        %v5514 = vpop.f32.mrb[0].mxu0
        %v5515 = vadd.f32 0.0, %v5514
        %v5516 = vpop.f32.mrb[0].mxu0
        %v5517 = vadd.f32 0.0, %v5516
        %v5518 = vpop.f32.mrb[0].mxu0
        %v5519 = vadd.f32 0.0, %v5518
        %5520 = vdwg.mxu0
        %5521 = vmatprep.subr.bf16.mxu0 0
        %5522 = vmatpush1.bf16.msra.mxu0 %v5366
        %5523 = vmatprep.subr.bf16.mxu0 0
        %5524 = vmatpush1.bf16.msra.mxu0 %v5369
        %5525 = vmatprep.subr.bf16.mxu0 0
        %5526 = vmatpush1.bf16.msra.mxu0 %v5372
        %5527 = vmatprep.subr.bf16.mxu0 0
        %5528 = vmatpush1.bf16.msra.mxu0 %v5375
        %5529 = vmatprep.subr.bf16.mxu0 0
        %5530 = vmatpush1.bf16.msra.mxu0 %v5378
        %5531 = vmatprep.subr.bf16.mxu0 0
        %5532 = vmatpush1.bf16.msra.mxu0 %v5381
        %5533 = vmatprep.subr.bf16.mxu0 0
        %5534 = vmatpush1.bf16.msra.mxu0 %v5384
        %5535 = vmatprep.subr.bf16.mxu0 0
        %5536 = vmatpush1.bf16.msra.mxu0 %v5387
        %5537 = vmatprep.subr.bf16.mxu0 0
        %5538 = vmatpush1.bf16.msra.mxu0 %v5390
        %5539 = vmatprep.subr.bf16.mxu0 0
        %5540 = vmatpush1.bf16.msra.mxu0 %v5393
        %5541 = vmatprep.subr.bf16.mxu0 0
        %5542 = vmatpush1.bf16.msra.mxu0 %v5396
        %5543 = vmatprep.subr.bf16.mxu0 0
        %5544 = vmatpush1.bf16.msra.mxu0 %v5399
        %5545 = vmatprep.subr.bf16.mxu0 0
        %5546 = vmatpush1.bf16.msra.mxu0 0
        %5547 = vmatprep.subr.bf16.mxu0 0
        %5548 = vmatpush1.bf16.msra.mxu0 0
        %5549 = vmatprep.subr.bf16.mxu0 0
        %5550 = vmatpush1.bf16.msra.mxu0 0
        %5551 = vmatprep.subr.bf16.mxu0 0
        %5552 = vmatpush1.bf16.msra.mxu0 0
        %5553 = vmatprep.mubr.bf16.mxu0 %v5437
        %5554 = vmatmul.mubr.bf16.gmra.mrb[0].mxu0 %v5187
        %v5555 = vpop.f32.mrb[0].mxu0
        %v5556 = vadd.f32 0.0, %v5555
        %v5557 = vpop.f32.mrb[0].mxu0
        %v5558 = vpop.f32.mrb[0].mxu0
        %v5559 = vadd.f32 0.0, %v5558
        %v5560 = vpop.f32.mrb[0].mxu0
        %5561 = vmatprep.mubr.bf16.mxu0 %v5440
        %5562 = vmatmul.mubr.bf16.gmra.mrb[0].mxu0 %v5189
        %v5563 = vpop.f32.mrb[0].mxu0
        %v5564 = vadd.f32 0.0, %v5563
        %v5565 = vpop.f32.mrb[0].mxu0
        %v5566 = vpop.f32.mrb[0].mxu0
        %v5567 = vadd.f32 0.0, %v5566
        %v5568 = vpop.f32.mrb[0].mxu0
        %5569 = vmatprep.mubr.bf16.mxu0 %v5443
        %5570 = vmatmul.mubr.bf16.gmra.mrb[0].mxu0 %v5191
        %v5571 = vpop.f32.mrb[0].mxu0
        %v5572 = vadd.f32 0.0, %v5571
        %v5573 = vpop.f32.mrb[0].mxu0
        %v5574 = vpop.f32.mrb[0].mxu0
        %v5575 = vadd.f32 0.0, %v5574
        %v5576 = vpop.f32.mrb[0].mxu0
        %5577 = vmatprep.mubr.bf16.mxu0 %v5446
        %5578 = vmatmul.mubr.bf16.gmra.mrb[0].mxu0 %v5193
        %v5579 = vpop.f32.mrb[0].mxu0
        %v5580 = vadd.f32 0.0, %v5579
        %v5581 = vpop.f32.mrb[0].mxu0
        %v5582 = vpop.f32.mrb[0].mxu0
        %v5583 = vadd.f32 0.0, %v5582
        %v5584 = vpop.f32.mrb[0].mxu0
        %5585 = vdwg.mxu0
        %v5586 = vadd.f32 %v4978, %v5483
        %v5587 = vadd.f32 %v4980, %v5485
        %v5588 = vadd.f32 %v5051, %v5556
        %v5589 = vadd.f32 %v4982, %v5487
        %v5590 = vadd.f32 %v4984, %v5489
        %v5591 = vadd.f32 %v5054, %v5559
        %v5592 = vadd.f32 %v4988, %v5493
        %v5593 = vadd.f32 %v4990, %v5495
        %v5594 = vadd.f32 %v5059, %v5564
        %v5595 = vadd.f32 %v4992, %v5497
        %v5596 = vadd.f32 %v4994, %v5499
        %v5597 = vadd.f32 %v5062, %v5567
        %v5598 = vadd.f32 %v4998, %v5503
        %v5599 = vadd.f32 %v5000, %v5505
        %v5600 = vadd.f32 %v5067, %v5572
        %v5601 = vadd.f32 %v5002, %v5507
        %v5602 = vadd.f32 %v5004, %v5509
        %v5603 = vadd.f32 %v5070, %v5575
        %v5604 = vadd.f32 %v5008, %v5513
        %v5605 = vadd.f32 %v5010, %v5515
        %v5606 = vadd.f32 %v5075, %v5580
        %v5607 = vadd.f32 %v5012, %v5517
        %v5608 = vadd.f32 %v5014, %v5519
        %v5609 = vadd.f32 %v5078, %v5583
        %s5610 = scalar_lea.vmem [#allocation9], 96
        %v5611 = vld [vmem:[%s5610] sm:$0xf]
        %v5612 = vld [vmem:[%s5610 + $0x4] sm:$0xf]
        %v5613 = vld [vmem:[%s5610 + $0x8] sm:$0xf]
        %v5614 = vld [vmem:[%s5610 + $0xc] sm:$0xf]
        %v5615 = vld [vmem:[%s5610 + $0x10] sm:$0xf]
        %v5616 = vld [vmem:[%s5610 + $0x14] sm:$0xf]
        %v5617 = vld [vmem:[%s5610 + $0x18] sm:$0xf]
        %v5618 = vld [vmem:[%s5610 + $0x1c] sm:$0xf]
        %v5627 = vunpack.c.l.b16 %v5611
        %v5628 = vunpack.c.l.b16 %v5612
        %v5629 = vunpack.c.l.b16 %v5613
        %v5630 = vunpack.c.l.b16 %v5614
        %v5631 = vunpack.c.l.b16 %v5615
        %v5632 = vunpack.c.l.b16 %v5616
        %v5633 = vunpack.c.l.b16 %v5617
        %v5634 = vunpack.c.l.b16 %v5618
        %v5635 = vpack.c.b16 %v5628, %v5627
        %v5636 = vpack.c.b16 %v5630, %v5629
        %v5637 = vpack.c.b16 %v5632, %v5631
        %v5638 = vpack.c.b16 %v5634, %v5633
        %5643 = vmatprep.subr.bf16.mxu0 %v4058
        %5644 = vmatpush1.bf16.msra.mxu0 %v4057
        %5645 = vmatprep.subr.bf16.mxu0 %v4060
        %5646 = vmatpush1.bf16.msra.mxu0 %v4059
        %5647 = vmatprep.subr.bf16.mxu0 %v4062
        %5648 = vmatpush1.bf16.msra.mxu0 %v4061
        %5649 = vmatprep.subr.bf16.mxu0 %v4064
        %5650 = vmatpush1.bf16.msra.mxu0 %v4063
        %5651 = vmatprep.subr.bf16.mxu0 %v4066
        %5652 = vmatpush1.bf16.msra.mxu0 %v4065
        %5653 = vmatprep.subr.bf16.mxu0 %v4068
        %5654 = vmatpush1.bf16.msra.mxu0 %v4067
        %5655 = vmatprep.subr.bf16.mxu0 %v4070
        %5656 = vmatpush1.bf16.msra.mxu0 %v4069
        %5657 = vmatprep.subr.bf16.mxu0 %v4072
        %5658 = vmatpush1.bf16.msra.mxu0 %v4071
        %5659 = vmatprep.subr.bf16.mxu0 0
        %5660 = vmatpush1.bf16.msra.mxu0 0
        %5661 = vmatprep.subr.bf16.mxu0 0
        %5662 = vmatpush1.bf16.msra.mxu0 0
        %5663 = vmatprep.subr.bf16.mxu0 0
        %5664 = vmatpush1.bf16.msra.mxu0 0
        %5665 = vmatprep.subr.bf16.mxu0 0
        %5666 = vmatpush1.bf16.msra.mxu0 0
        %5667 = vmatprep.subr.bf16.mxu0 0
        %5668 = vmatpush1.bf16.msra.mxu0 0
        %5669 = vmatprep.subr.bf16.mxu0 0
        %5670 = vmatpush1.bf16.msra.mxu0 0
        %5671 = vmatprep.subr.bf16.mxu0 0
        %5672 = vmatpush1.bf16.msra.mxu0 0
        %5673 = vmatprep.subr.bf16.mxu0 0
        %5674 = vmatpush1.bf16.msra.mxu0 0
        %5675 = vmatprep.mubr.bf16.mxu0 0
        %5676 = vmatmul.mubr.bf16.gmra.mrb[0].mxu0 %v5635
        %v5677 = vpop.f32.mrb[0].mxu0
        %v5678 = vadd.f32 0.0, %v5677
        %v5679 = vpop.f32.mrb[0].mxu0
        %v5680 = vadd.f32 0.0, %v5679
        %v5681 = vpop.f32.mrb[0].mxu0
        %v5682 = vadd.f32 0.0, %v5681
        %v5683 = vpop.f32.mrb[0].mxu0
        %v5684 = vadd.f32 0.0, %v5683
        %5685 = vmatprep.mubr.bf16.mxu0 0
        %5686 = vmatmul.mubr.bf16.gmra.mrb[0].mxu0 %v5636
        %v5687 = vpop.f32.mrb[0].mxu0
        %v5688 = vadd.f32 0.0, %v5687
        %v5689 = vpop.f32.mrb[0].mxu0
        %v5690 = vadd.f32 0.0, %v5689
        %v5691 = vpop.f32.mrb[0].mxu0
        %v5692 = vadd.f32 0.0, %v5691
        %v5693 = vpop.f32.mrb[0].mxu0
        %v5694 = vadd.f32 0.0, %v5693
        %5695 = vmatprep.mubr.bf16.mxu0 0
        %5696 = vmatmul.mubr.bf16.gmra.mrb[0].mxu0 %v5637
        %v5697 = vpop.f32.mrb[0].mxu0
        %v5698 = vadd.f32 0.0, %v5697
        %v5699 = vpop.f32.mrb[0].mxu0
        %v5700 = vadd.f32 0.0, %v5699
        %v5701 = vpop.f32.mrb[0].mxu0
        %v5702 = vadd.f32 0.0, %v5701
        %v5703 = vpop.f32.mrb[0].mxu0
        %v5704 = vadd.f32 0.0, %v5703
        %5705 = vmatprep.mubr.bf16.mxu0 0
        %5706 = vmatmul.mubr.bf16.gmra.mrb[0].mxu0 %v5638
        %v5707 = vpop.f32.mrb[0].mxu0
        %v5708 = vadd.f32 0.0, %v5707
        %v5709 = vpop.f32.mrb[0].mxu0
        %v5710 = vadd.f32 0.0, %v5709
        %v5711 = vpop.f32.mrb[0].mxu0
        %v5712 = vadd.f32 0.0, %v5711
        %v5713 = vpop.f32.mrb[0].mxu0
        %v5714 = vadd.f32 0.0, %v5713
        %5715 = vdwg.mxu0
        %v5716 = vpack.c.bf16 %v5682, %v5678
        %v5717 = vpack.c.bf16 %v5684, %v5680
        %v5718 = vpack.c.bf16 %v5692, %v5688
        %v5719 = vpack.c.bf16 %v5694, %v5690
        %v5720 = vpack.c.bf16 %v5702, %v5698
        %v5721 = vpack.c.bf16 %v5704, %v5700
        %v5722 = vpack.c.bf16 %v5712, %v5708
        %v5723 = vpack.c.bf16 %v5714, %v5710
        %s5724 = scalar_lea.vmem [#allocation10], 864
        %v5725 = vld [vmem:[%s5724] sm:$0xff]
        %v5726 = vld [vmem:[%s5724 + $0x8] sm:$0xf]
        %v5727 = vld [vmem:[%s5724 + $0xc] sm:$0xff]
        %v5728 = vld [vmem:[%s5724 + $0x14] sm:$0xf]
        %v5729 = vld [vmem:[%s5724 + $0x18] sm:$0xff]
        %v5730 = vld [vmem:[%s5724 + $0x20] sm:$0xf]
        %v5731 = vld [vmem:[%s5724 + $0x24] sm:$0xff]
        %v5732 = vld [vmem:[%s5724 + $0x2c] sm:$0xf]
        %v5733 = vld [vmem:[%s5724 + $0x30] sm:$0xff]
        %v5734 = vld [vmem:[%s5724 + $0x38] sm:$0xf]
        %v5735 = vld [vmem:[%s5724 + $0x3c] sm:$0xff]
        %v5736 = vld [vmem:[%s5724 + $0x44] sm:$0xf]
        %v5737 = vld [vmem:[%s5724 + $0x48] sm:$0xff]
        %v5738 = vld [vmem:[%s5724 + $0x50] sm:$0xf]
        %v5739 = vld [vmem:[%s5724 + $0x54] sm:$0xff]
        %v5740 = vld [vmem:[%s5724 + $0x5c] sm:$0xf]
        %v5741 = vld [vmem:[%s5724 + $0x60] sm:$0xff]
        %v5742 = vld [vmem:[%s5724 + $0x68] sm:$0xf]
        %v5743 = vld [vmem:[%s5724 + $0x6c] sm:$0xff]
        %v5744 = vld [vmem:[%s5724 + $0x74] sm:$0xf]
        %v5745 = vld [vmem:[%s5724 + $0x78] sm:$0xff]
        %v5746 = vld [vmem:[%s5724 + $0x80] sm:$0xf]
        %v5747 = vld [vmem:[%s5724 + $0x84] sm:$0xff]
        %v5748 = vld [vmem:[%s5724 + $0x8c] sm:$0xf]
        %v5749 = vld [vmem:[%s5724 + $0x90] sm:$0xff]
        %v5750 = vld [vmem:[%s5724 + $0x98] sm:$0xf]
        %v5751 = vld [vmem:[%s5724 + $0x9c] sm:$0xff]
        %v5752 = vld [vmem:[%s5724 + $0xa4] sm:$0xf]
        %v5753 = vld [vmem:[%s5724 + $0xa8] sm:$0xff]
        %v5754 = vld [vmem:[%s5724 + $0xb0] sm:$0xf]
        %v5755 = vld [vmem:[%s5724 + $0xb4] sm:$0xff]
        %v5756 = vld [vmem:[%s5724 + $0xbc] sm:$0xf]
        %v5757 = vld [vmem:[%s5724 + $0xc0] sm:$0xff]
        %v5758 = vld [vmem:[%s5724 + $0xc8] sm:$0xf]
        %v5759 = vld [vmem:[%s5724 + $0xcc] sm:$0xff]
        %v5760 = vld [vmem:[%s5724 + $0xd4] sm:$0xf]
        %v5761 = vld [vmem:[%s5724 + $0xd8] sm:$0xff]
        %v5762 = vld [vmem:[%s5724 + $0xe0] sm:$0xf]
        %v5763 = vld [vmem:[%s5724 + $0xe4] sm:$0xff]
        %v5764 = vld [vmem:[%s5724 + $0xec] sm:$0xf]
        %v5765 = vld [vmem:[%s5724 + $0xf0] sm:$0xff]
        %v5766 = vld [vmem:[%s5724 + $0xf8] sm:$0xf]
        %v5767 = vld [vmem:[%s5724 + $0xfc] sm:$0xff]
        %v5768 = vld [vmem:[%s5724 + $0x104] sm:$0xf]
        %v5769 = vld [vmem:[%s5724 + $0x108] sm:$0xff]
        %v5770 = vld [vmem:[%s5724 + $0x110] sm:$0xf]
        %v5771 = vld [vmem:[%s5724 + $0x114] sm:$0xff]
        %v5772 = vld [vmem:[%s5724 + $0x11c] sm:$0xf]
        %v5821 = vunpack.c.l.b16 %v5725
        %v5822 = vunpack.c.h.b16 %v5725
        %v5823 = vunpack.c.l.b16 %v5726
        %v5824 = vunpack.c.l.b16 %v5727
        %v5825 = vunpack.c.h.b16 %v5727
        %v5826 = vunpack.c.l.b16 %v5728
        %v5827 = vunpack.c.l.b16 %v5729
        %v5828 = vunpack.c.h.b16 %v5729
        %v5829 = vunpack.c.l.b16 %v5730
        %v5830 = vunpack.c.l.b16 %v5731
        %v5831 = vunpack.c.h.b16 %v5731
        %v5832 = vunpack.c.l.b16 %v5732
        %v5833 = vunpack.c.l.b16 %v5733
        %v5834 = vunpack.c.h.b16 %v5733
        %v5835 = vunpack.c.l.b16 %v5734
        %v5836 = vunpack.c.l.b16 %v5735
        %v5837 = vunpack.c.h.b16 %v5735
        %v5838 = vunpack.c.l.b16 %v5736
        %v5839 = vunpack.c.l.b16 %v5737
        %v5840 = vunpack.c.h.b16 %v5737
        %v5841 = vunpack.c.l.b16 %v5738
        %v5842 = vunpack.c.l.b16 %v5739
        %v5843 = vunpack.c.h.b16 %v5739
        %v5844 = vunpack.c.l.b16 %v5740
        %v5845 = vunpack.c.l.b16 %v5741
        %v5846 = vunpack.c.h.b16 %v5741
        %v5847 = vunpack.c.l.b16 %v5742
        %v5848 = vunpack.c.l.b16 %v5743
        %v5849 = vunpack.c.h.b16 %v5743
        %v5850 = vunpack.c.l.b16 %v5744
        %v5851 = vunpack.c.l.b16 %v5745
        %v5852 = vunpack.c.h.b16 %v5745
        %v5853 = vunpack.c.l.b16 %v5746
        %v5854 = vunpack.c.l.b16 %v5747
        %v5855 = vunpack.c.h.b16 %v5747
        %v5856 = vunpack.c.l.b16 %v5748
        %v5857 = vunpack.c.l.b16 %v5749
        %v5858 = vunpack.c.h.b16 %v5749
        %v5859 = vunpack.c.l.b16 %v5750
        %v5860 = vunpack.c.l.b16 %v5751
        %v5861 = vunpack.c.h.b16 %v5751
        %v5862 = vunpack.c.l.b16 %v5752
        %v5863 = vunpack.c.l.b16 %v5753
        %v5864 = vunpack.c.h.b16 %v5753
        %v5865 = vunpack.c.l.b16 %v5754
        %v5866 = vunpack.c.l.b16 %v5755
        %v5867 = vunpack.c.h.b16 %v5755
        %v5868 = vunpack.c.l.b16 %v5756
        %v5869 = vunpack.c.l.b16 %v5757
        %v5870 = vunpack.c.h.b16 %v5757
        %v5871 = vunpack.c.l.b16 %v5758
        %v5872 = vunpack.c.l.b16 %v5759
        %v5873 = vunpack.c.h.b16 %v5759
        %v5874 = vunpack.c.l.b16 %v5760
        %v5875 = vunpack.c.l.b16 %v5761
        %v5876 = vunpack.c.h.b16 %v5761
        %v5877 = vunpack.c.l.b16 %v5762
        %v5878 = vunpack.c.l.b16 %v5763
        %v5879 = vunpack.c.h.b16 %v5763
        %v5880 = vunpack.c.l.b16 %v5764
        %v5881 = vunpack.c.l.b16 %v5765
        %v5882 = vunpack.c.h.b16 %v5765
        %v5883 = vunpack.c.l.b16 %v5766
        %v5884 = vunpack.c.l.b16 %v5767
        %v5885 = vunpack.c.h.b16 %v5767
        %v5886 = vunpack.c.l.b16 %v5768
        %v5887 = vunpack.c.l.b16 %v5769
        %v5888 = vunpack.c.h.b16 %v5769
        %v5889 = vunpack.c.l.b16 %v5770
        %v5890 = vunpack.c.l.b16 %v5771
        %v5891 = vunpack.c.h.b16 %v5771
        %v5892 = vunpack.c.l.b16 %v5772
        %v5893 = vpack.c.b16 %v5824, %v5821
        %v5894 = vpack.c.b16 %v5825, %v5822
        %v5895 = vpack.c.b16 %v5826, %v5823
        %v5896 = vpack.c.b16 %v5830, %v5827
        %v5897 = vpack.c.b16 %v5831, %v5828
        %v5898 = vpack.c.b16 %v5832, %v5829
        %v5899 = vpack.c.b16 %v5836, %v5833
        %v5900 = vpack.c.b16 %v5837, %v5834
        %v5901 = vpack.c.b16 %v5838, %v5835
        %v5902 = vpack.c.b16 %v5842, %v5839
        %v5903 = vpack.c.b16 %v5843, %v5840
        %v5904 = vpack.c.b16 %v5844, %v5841
        %v5905 = vpack.c.b16 %v5848, %v5845
        %v5906 = vpack.c.b16 %v5849, %v5846
        %v5907 = vpack.c.b16 %v5850, %v5847
        %v5908 = vpack.c.b16 %v5854, %v5851
        %v5909 = vpack.c.b16 %v5855, %v5852
        %v5910 = vpack.c.b16 %v5856, %v5853
        %v5911 = vpack.c.b16 %v5860, %v5857
        %v5912 = vpack.c.b16 %v5861, %v5858
        %v5913 = vpack.c.b16 %v5862, %v5859
        %v5914 = vpack.c.b16 %v5866, %v5863
        %v5915 = vpack.c.b16 %v5867, %v5864
        %v5916 = vpack.c.b16 %v5868, %v5865
        %v5917 = vpack.c.b16 %v5872, %v5869
        %v5918 = vpack.c.b16 %v5873, %v5870
        %v5919 = vpack.c.b16 %v5874, %v5871
        %v5920 = vpack.c.b16 %v5878, %v5875
        %v5921 = vpack.c.b16 %v5879, %v5876
        %v5922 = vpack.c.b16 %v5880, %v5877
        %v5923 = vpack.c.b16 %v5884, %v5881
        %v5924 = vpack.c.b16 %v5885, %v5882
        %v5925 = vpack.c.b16 %v5886, %v5883
        %v5926 = vpack.c.b16 %v5890, %v5887
        %v5927 = vpack.c.b16 %v5891, %v5888
        %v5928 = vpack.c.b16 %v5892, %v5889
        %v5966 = vsel %vm3615, %v5717, 0
        %v5969 = vsel %vm3615, %v5719, 0
        %v5972 = vsel %vm3615, %v5721, 0
        %v5975 = vsel %vm3615, %v5723, 0
        %5977 = vmatprep.subr.bf16.mxu0 %v5894
        %5978 = vmatpush1.bf16.msra.mxu0 %v5893
        %5979 = vmatprep.subr.bf16.mxu0 %v5897
        %5980 = vmatpush1.bf16.msra.mxu0 %v5896
        %5981 = vmatprep.subr.bf16.mxu0 %v5900
        %5982 = vmatpush1.bf16.msra.mxu0 %v5899
        %5983 = vmatprep.subr.bf16.mxu0 %v5903
        %5984 = vmatpush1.bf16.msra.mxu0 %v5902
        %5985 = vmatprep.subr.bf16.mxu0 %v5906
        %5986 = vmatpush1.bf16.msra.mxu0 %v5905
        %5987 = vmatprep.subr.bf16.mxu0 %v5909
        %5988 = vmatpush1.bf16.msra.mxu0 %v5908
        %5989 = vmatprep.subr.bf16.mxu0 %v5912
        %5990 = vmatpush1.bf16.msra.mxu0 %v5911
        %5991 = vmatprep.subr.bf16.mxu0 %v5915
        %5992 = vmatpush1.bf16.msra.mxu0 %v5914
        %5993 = vmatprep.subr.bf16.mxu0 %v5918
        %5994 = vmatpush1.bf16.msra.mxu0 %v5917
        %5995 = vmatprep.subr.bf16.mxu0 %v5921
        %5996 = vmatpush1.bf16.msra.mxu0 %v5920
        %5997 = vmatprep.subr.bf16.mxu0 %v5924
        %5998 = vmatpush1.bf16.msra.mxu0 %v5923
        %5999 = vmatprep.subr.bf16.mxu0 %v5927
        %6000 = vmatpush1.bf16.msra.mxu0 %v5926
        %6001 = vmatprep.subr.bf16.mxu0 0
        %6002 = vmatpush1.bf16.msra.mxu0 0
        %6003 = vmatprep.subr.bf16.mxu0 0
        %6004 = vmatpush1.bf16.msra.mxu0 0
        %6005 = vmatprep.subr.bf16.mxu0 0
        %6006 = vmatpush1.bf16.msra.mxu0 0
        %6007 = vmatprep.subr.bf16.mxu0 0
        %6008 = vmatpush1.bf16.msra.mxu0 0
        %6009 = vmatprep.mubr.bf16.mxu0 %v5966
        %6010 = vmatmul.mubr.bf16.gmra.mrb[0].mxu0 %v5716
        %v6011 = vpop.f32.mrb[0].mxu0
        %v6012 = vadd.f32 0.0, %v6011
        %v6013 = vpop.f32.mrb[0].mxu0
        %v6014 = vadd.f32 0.0, %v6013
        %v6015 = vpop.f32.mrb[0].mxu0
        %v6016 = vadd.f32 0.0, %v6015
        %v6017 = vpop.f32.mrb[0].mxu0
        %v6018 = vadd.f32 0.0, %v6017
        %6019 = vmatprep.mubr.bf16.mxu0 %v5969
        %6020 = vmatmul.mubr.bf16.gmra.mrb[0].mxu0 %v5718
        %v6021 = vpop.f32.mrb[0].mxu0
        %v6022 = vadd.f32 0.0, %v6021
        %v6023 = vpop.f32.mrb[0].mxu0
        %v6024 = vadd.f32 0.0, %v6023
        %v6025 = vpop.f32.mrb[0].mxu0
        %v6026 = vadd.f32 0.0, %v6025
        %v6027 = vpop.f32.mrb[0].mxu0
        %v6028 = vadd.f32 0.0, %v6027
        %6029 = vmatprep.mubr.bf16.mxu0 %v5972
        %6030 = vmatmul.mubr.bf16.gmra.mrb[0].mxu0 %v5720
        %v6031 = vpop.f32.mrb[0].mxu0
        %v6032 = vadd.f32 0.0, %v6031
        %v6033 = vpop.f32.mrb[0].mxu0
        %v6034 = vadd.f32 0.0, %v6033
        %v6035 = vpop.f32.mrb[0].mxu0
        %v6036 = vadd.f32 0.0, %v6035
        %v6037 = vpop.f32.mrb[0].mxu0
        %v6038 = vadd.f32 0.0, %v6037
        %6039 = vmatprep.mubr.bf16.mxu0 %v5975
        %6040 = vmatmul.mubr.bf16.gmra.mrb[0].mxu0 %v5722
        %v6041 = vpop.f32.mrb[0].mxu0
        %v6042 = vadd.f32 0.0, %v6041
        %v6043 = vpop.f32.mrb[0].mxu0
        %v6044 = vadd.f32 0.0, %v6043
        %v6045 = vpop.f32.mrb[0].mxu0
        %v6046 = vadd.f32 0.0, %v6045
        %v6047 = vpop.f32.mrb[0].mxu0
        %v6048 = vadd.f32 0.0, %v6047
        %6049 = vdwg.mxu0
        %6050 = vmatprep.subr.bf16.mxu0 0
        %6051 = vmatpush1.bf16.msra.mxu0 %v5895
        %6052 = vmatprep.subr.bf16.mxu0 0
        %6053 = vmatpush1.bf16.msra.mxu0 %v5898
        %6054 = vmatprep.subr.bf16.mxu0 0
        %6055 = vmatpush1.bf16.msra.mxu0 %v5901
        %6056 = vmatprep.subr.bf16.mxu0 0
        %6057 = vmatpush1.bf16.msra.mxu0 %v5904
        %6058 = vmatprep.subr.bf16.mxu0 0
        %6059 = vmatpush1.bf16.msra.mxu0 %v5907
        %6060 = vmatprep.subr.bf16.mxu0 0
        %6061 = vmatpush1.bf16.msra.mxu0 %v5910
        %6062 = vmatprep.subr.bf16.mxu0 0
        %6063 = vmatpush1.bf16.msra.mxu0 %v5913
        %6064 = vmatprep.subr.bf16.mxu0 0
        %6065 = vmatpush1.bf16.msra.mxu0 %v5916
        %6066 = vmatprep.subr.bf16.mxu0 0
        %6067 = vmatpush1.bf16.msra.mxu0 %v5919
        %6068 = vmatprep.subr.bf16.mxu0 0
        %6069 = vmatpush1.bf16.msra.mxu0 %v5922
        %6070 = vmatprep.subr.bf16.mxu0 0
        %6071 = vmatpush1.bf16.msra.mxu0 %v5925
        %6072 = vmatprep.subr.bf16.mxu0 0
        %6073 = vmatpush1.bf16.msra.mxu0 %v5928
        %6074 = vmatprep.subr.bf16.mxu0 0
        %6075 = vmatpush1.bf16.msra.mxu0 0
        %6076 = vmatprep.subr.bf16.mxu0 0
        %6077 = vmatpush1.bf16.msra.mxu0 0
        %6078 = vmatprep.subr.bf16.mxu0 0
        %6079 = vmatpush1.bf16.msra.mxu0 0
        %6080 = vmatprep.subr.bf16.mxu0 0
        %6081 = vmatpush1.bf16.msra.mxu0 0
        %6082 = vmatprep.mubr.bf16.mxu0 %v5966
        %6083 = vmatmul.mubr.bf16.gmra.mrb[0].mxu0 %v5716
        %v6084 = vpop.f32.mrb[0].mxu0
        %v6085 = vadd.f32 0.0, %v6084
        %v6086 = vpop.f32.mrb[0].mxu0
        %v6087 = vpop.f32.mrb[0].mxu0
        %v6088 = vadd.f32 0.0, %v6087
        %v6089 = vpop.f32.mrb[0].mxu0
        %6090 = vmatprep.mubr.bf16.mxu0 %v5969
        %6091 = vmatmul.mubr.bf16.gmra.mrb[0].mxu0 %v5718
        %v6092 = vpop.f32.mrb[0].mxu0
        %v6093 = vadd.f32 0.0, %v6092
        %v6094 = vpop.f32.mrb[0].mxu0
        %v6095 = vpop.f32.mrb[0].mxu0
        %v6096 = vadd.f32 0.0, %v6095
        %v6097 = vpop.f32.mrb[0].mxu0
        %6098 = vmatprep.mubr.bf16.mxu0 %v5972
        %6099 = vmatmul.mubr.bf16.gmra.mrb[0].mxu0 %v5720
        %v6100 = vpop.f32.mrb[0].mxu0
        %v6101 = vadd.f32 0.0, %v6100
        %v6102 = vpop.f32.mrb[0].mxu0
        %v6103 = vpop.f32.mrb[0].mxu0
        %v6104 = vadd.f32 0.0, %v6103
        %v6105 = vpop.f32.mrb[0].mxu0
        %6106 = vmatprep.mubr.bf16.mxu0 %v5975
        %6107 = vmatmul.mubr.bf16.gmra.mrb[0].mxu0 %v5722
        %v6108 = vpop.f32.mrb[0].mxu0
        %v6109 = vadd.f32 0.0, %v6108
        %v6110 = vpop.f32.mrb[0].mxu0
        %v6111 = vpop.f32.mrb[0].mxu0
        %v6112 = vadd.f32 0.0, %v6111
        %v6113 = vpop.f32.mrb[0].mxu0
        %6114 = vdwg.mxu0
        %v6115 = vadd.f32 %v5586, %v6012
        %v6116 = vadd.f32 %v5587, %v6014
        %v6117 = vadd.f32 %v5588, %v6085
        %v6118 = vadd.f32 %v5589, %v6016
        %v6119 = vadd.f32 %v5590, %v6018
        %v6120 = vadd.f32 %v5591, %v6088
        %v6121 = vadd.f32 %v5592, %v6022
        %v6122 = vadd.f32 %v5593, %v6024
        %v6123 = vadd.f32 %v5594, %v6093
        %v6124 = vadd.f32 %v5595, %v6026
        %v6125 = vadd.f32 %v5596, %v6028
        %v6126 = vadd.f32 %v5597, %v6096
        %v6127 = vadd.f32 %v5598, %v6032
        %v6128 = vadd.f32 %v5599, %v6034
        %v6129 = vadd.f32 %v5600, %v6101
        %v6130 = vadd.f32 %v5601, %v6036
        %v6131 = vadd.f32 %v5602, %v6038
        %v6132 = vadd.f32 %v5603, %v6104
        %v6133 = vadd.f32 %v5604, %v6042
        %v6134 = vadd.f32 %v5605, %v6044
        %v6135 = vadd.f32 %v5606, %v6109
        %v6136 = vadd.f32 %v5607, %v6046
        %v6137 = vadd.f32 %v5608, %v6048
        %v6138 = vadd.f32 %v5609, %v6112
        %v6139 = vld [vmem:[%s9] sm:$0xff]
        %v6140 = vld [vmem:[%s9 + $0x8] sm:$0xff]
        %v6141 = vld [vmem:[%s9 + $0x10] sm:$0xff]
        %v6142 = vld [vmem:[%s9 + $0x18] sm:$0xff]
        %v6143 = vld [vmem:[%s9 + $0x20] sm:$0xff]
        %v6144 = vld [vmem:[%s9 + $0x28] sm:$0xff]
        %v6145 = vld [vmem:[%s9 + $0x30] sm:$0xff]
        %v6146 = vld [vmem:[%s9 + $0x38] sm:$0xff]
        %6148 = vset.pattern.permute.xlu0 0
        %6149 = vperm.xlu0 %6148, %v6139
        %v6150 = vpop.permute.xlu0 %6149
        %6153 = vset.pattern.permute.xlu0 0
        %6154 = vperm.xlu0 %6153, %v6140
        %v6155 = vpop.permute.xlu0 %6154
        %6158 = vset.pattern.permute.xlu0 0
        %6159 = vperm.xlu0 %6158, %v6141
        %v6160 = vpop.permute.xlu0 %6159
        %6163 = vset.pattern.permute.xlu0 0
        %6164 = vperm.xlu0 %6163, %v6142
        %v6165 = vpop.permute.xlu0 %6164
        %6168 = vset.pattern.permute.xlu0 0
        %6169 = vperm.xlu0 %6168, %v6143
        %v6170 = vpop.permute.xlu0 %6169
        %6173 = vset.pattern.permute.xlu0 0
        %6174 = vperm.xlu0 %6173, %v6144
        %v6175 = vpop.permute.xlu0 %6174
        %6178 = vset.pattern.permute.xlu0 0
        %6179 = vperm.xlu0 %6178, %v6145
        %v6180 = vpop.permute.xlu0 %6179
        %6183 = vset.pattern.permute.xlu0 0
        %6184 = vperm.xlu0 %6183, %v6146
        %v6185 = vpop.permute.xlu0 %6184
        %v6187 = vadd.f32 %v6115, %v6150
        %v6188 = vadd.f32 %v6116, %v6150
        %v6189 = vadd.f32 %v6117, %v6150
        %v6190 = vadd.f32 %v6118, %v6155
        %v6191 = vadd.f32 %v6119, %v6155
        %v6192 = vadd.f32 %v6120, %v6155
        %v6193 = vadd.f32 %v6121, %v6160
        %v6194 = vadd.f32 %v6122, %v6160
        %v6195 = vadd.f32 %v6123, %v6160
        %v6196 = vadd.f32 %v6124, %v6165
        %v6197 = vadd.f32 %v6125, %v6165
        %v6198 = vadd.f32 %v6126, %v6165
        %v6199 = vadd.f32 %v6127, %v6170
        %v6200 = vadd.f32 %v6128, %v6170
        %v6201 = vadd.f32 %v6129, %v6170
        %v6202 = vadd.f32 %v6130, %v6175
        %v6203 = vadd.f32 %v6131, %v6175
        %v6204 = vadd.f32 %v6132, %v6175
        %v6205 = vadd.f32 %v6133, %v6180
        %v6206 = vadd.f32 %v6134, %v6180
        %v6207 = vadd.f32 %v6135, %v6180
        %v6208 = vadd.f32 %v6136, %v6185
        %v6209 = vadd.f32 %v6137, %v6185
        %v6210 = vadd.f32 %v6138, %v6185
        %v6211 = vadd.f32 %v6187, %v6190
        %v6212 = vadd.f32 %v6211, %v6193
        %v6213 = vadd.f32 %v6212, %v6196
        %v6214 = vadd.f32 %v6213, %v6199
        %v6215 = vadd.f32 %v6214, %v6202
        %v6216 = vadd.f32 %v6215, %v6205
        %v6217 = vadd.f32 %v6216, %v6208
        %v6218 = vrot.slane %v6217, 4
        %v6219 = vadd.f32 %v6217, %v6218
        %v6220 = vrot.slane %v6219, 2
        %v6221 = vadd.f32 %v6219, %v6220
        %v6222 = vrot.slane %v6221, 1
        %v6223 = vadd.f32 %v6221, %v6222
        %v6224 = vadd.f32 %v6188, %v6191
        %v6225 = vadd.f32 %v6224, %v6194
        %v6226 = vadd.f32 %v6225, %v6197
        %v6227 = vadd.f32 %v6226, %v6200
        %v6228 = vadd.f32 %v6227, %v6203
        %v6229 = vadd.f32 %v6228, %v6206
        %v6230 = vadd.f32 %v6229, %v6209
        %v6231 = vrot.slane %v6230, 4
        %v6232 = vadd.f32 %v6230, %v6231
        %v6233 = vrot.slane %v6232, 2
        %v6234 = vadd.f32 %v6232, %v6233
        %v6235 = vrot.slane %v6234, 1
        %v6236 = vadd.f32 %v6234, %v6235
        %v6237 = vadd.f32 %v6189, %v6192
        %v6238 = vadd.f32 %v6237, %v6195
        %v6239 = vadd.f32 %v6238, %v6198
        %v6240 = vadd.f32 %v6239, %v6201
        %v6241 = vadd.f32 %v6240, %v6204
        %v6242 = vadd.f32 %v6241, %v6207
        %v6243 = vadd.f32 %v6242, %v6210
        %v6244 = vrot.slane %v6243, 4
        %v6245 = vadd.f32 %v6243, %v6244
        %v6246 = vrot.slane %v6245, 2
        %v6247 = vadd.f32 %v6245, %v6246
        %v6248 = vrot.slane %v6247, 1
        %v6249 = vadd.f32 %v6247, %v6248
        %v6250 = vmul.f32 %v6187, %v6187
        %v6251 = vmul.f32 %v6188, %v6188
        %v6252 = vmul.f32 %v6189, %v6189
        %v6253 = vmul.f32 %v6190, %v6190
        %v6254 = vmul.f32 %v6191, %v6191
        %v6255 = vmul.f32 %v6192, %v6192
        %v6256 = vmul.f32 %v6193, %v6193
        %v6257 = vmul.f32 %v6194, %v6194
        %v6258 = vmul.f32 %v6195, %v6195
        %v6259 = vmul.f32 %v6196, %v6196
        %v6260 = vmul.f32 %v6197, %v6197
        %v6261 = vmul.f32 %v6198, %v6198
        %v6262 = vmul.f32 %v6199, %v6199
        %v6263 = vmul.f32 %v6200, %v6200
        %v6264 = vmul.f32 %v6201, %v6201
        %v6265 = vmul.f32 %v6202, %v6202
        %v6266 = vmul.f32 %v6203, %v6203
        %v6267 = vmul.f32 %v6204, %v6204
        %v6268 = vmul.f32 %v6205, %v6205
        %v6269 = vmul.f32 %v6206, %v6206
        %v6270 = vmul.f32 %v6207, %v6207
        %v6271 = vmul.f32 %v6208, %v6208
        %v6272 = vmul.f32 %v6209, %v6209
        %v6273 = vmul.f32 %v6210, %v6210
        %v6274 = vadd.f32 %v6250, %v6253
        %v6275 = vadd.f32 %v6274, %v6256
        %v6276 = vadd.f32 %v6275, %v6259
        %v6277 = vadd.f32 %v6276, %v6262
        %v6278 = vadd.f32 %v6277, %v6265
        %v6279 = vadd.f32 %v6278, %v6268
        %v6280 = vadd.f32 %v6279, %v6271
        %v6281 = vrot.slane %v6280, 4
        %v6282 = vadd.f32 %v6280, %v6281
        %v6283 = vrot.slane %v6282, 2
        %v6284 = vadd.f32 %v6282, %v6283
        %v6285 = vrot.slane %v6284, 1
        %v6286 = vadd.f32 %v6284, %v6285
        %v6287 = vadd.f32 %v6251, %v6254
        %v6288 = vadd.f32 %v6287, %v6257
        %v6289 = vadd.f32 %v6288, %v6260
        %v6290 = vadd.f32 %v6289, %v6263
        %v6291 = vadd.f32 %v6290, %v6266
        %v6292 = vadd.f32 %v6291, %v6269
        %v6293 = vadd.f32 %v6292, %v6272
        %v6294 = vrot.slane %v6293, 4
        %v6295 = vadd.f32 %v6293, %v6294
        %v6296 = vrot.slane %v6295, 2
        %v6297 = vadd.f32 %v6295, %v6296
        %v6298 = vrot.slane %v6297, 1
        %v6299 = vadd.f32 %v6297, %v6298
        %v6300 = vadd.f32 %v6252, %v6255
        %v6301 = vadd.f32 %v6300, %v6258
        %v6302 = vadd.f32 %v6301, %v6261
        %v6303 = vadd.f32 %v6302, %v6264
        %v6304 = vadd.f32 %v6303, %v6267
        %v6305 = vadd.f32 %v6304, %v6270
        %v6306 = vadd.f32 %v6305, %v6273
        %v6307 = vrot.slane %v6306, 4
        %v6308 = vadd.f32 %v6306, %v6307
        %v6309 = vrot.slane %v6308, 2
        %v6310 = vadd.f32 %v6308, %v6309
        %v6311 = vrot.slane %v6310, 1
        %v6312 = vadd.f32 %v6310, %v6311
        %v6313 = vsel %vm1478, %v6223, %v6286
        %v6314 = vsel %vm1478, %v6236, %v6299
        %v6315 = vsel %vm1478, %v6249, %v6312
        %v6316 = vld [vmem:[#allocation12] sm:$0xff]
        %v6317 = vld [vmem:[#allocation12 + $0x8] sm:$0xff]
        %v6318 = vld [vmem:[#allocation12 + $0x10] sm:$0xff]
        %v6319 = vld [vmem:[#allocation12 + $0x18] sm:$0xff]
        %v6320 = vld [vmem:[#allocation12 + $0x20] sm:$0xff]
        %v6321 = vld [vmem:[#allocation12 + $0x28] sm:$0xff]
        %v6322 = vld [vmem:[#allocation12 + $0x30] sm:$0xff]
        %v6323 = vld [vmem:[#allocation12 + $0x38] sm:$0xff]
        %v6324 = vld [vmem:[#allocation12 + $0x40] sm:$0xff]
        %v6325 = vld [vmem:[#allocation12 + $0x48] sm:$0xff]
        %v6326 = vld [vmem:[#allocation12 + $0x50] sm:$0xff]
        %v6327 = vld [vmem:[#allocation12 + $0x58] sm:$0xff]
        %v6328 = vld [vmem:[#allocation12 + $0x60] sm:$0xff]
        %v6329 = vld [vmem:[#allocation12 + $0x68] sm:$0xff]
        %v6330 = vld [vmem:[#allocation12 + $0x70] sm:$0xff]
        %v6331 = vld [vmem:[#allocation12 + $0x78] sm:$0xff]
        %v6332 = vld [vmem:[#allocation12 + $0x80] sm:$0xff]
        %v6333 = vld [vmem:[#allocation12 + $0x88] sm:$0xff]
        %v6334 = vld [vmem:[#allocation12 + $0x90] sm:$0xff]
        %v6335 = vld [vmem:[#allocation12 + $0x98] sm:$0xff]
        %v6336 = vld [vmem:[#allocation12 + $0xa0] sm:$0xff]
        %v6337 = vld [vmem:[#allocation12 + $0xa8] sm:$0xff]
        %v6338 = vld [vmem:[#allocation12 + $0xb0] sm:$0xff]
        %v6339 = vld [vmem:[#allocation12 + $0xb8] sm:$0xff]
        %v6340 = vld [vmem:[#allocation12 + $0xc0] sm:$0xff]
        %v6341 = vld [vmem:[#allocation12 + $0xc8] sm:$0xff]
        %v6342 = vld [vmem:[#allocation12 + $0xd0] sm:$0xff]
        %v6343 = vld [vmem:[#allocation12 + $0xd8] sm:$0xff]
        %v6344 = vld [vmem:[#allocation12 + $0xe0] sm:$0xff]
        %v6345 = vld [vmem:[#allocation12 + $0xe8] sm:$0xff]
        %v6346 = vld [vmem:[#allocation12 + $0xf0] sm:$0xff]
        %v6347 = vld [vmem:[#allocation12 + $0xf8] sm:$0xff]
        %v6348 = vld [vmem:[#allocation12 + $0x100] sm:$0xff]
        %v6349 = vld [vmem:[#allocation12 + $0x108] sm:$0xff]
        %v6350 = vld [vmem:[#allocation12 + $0x110] sm:$0xff]
        %v6351 = vld [vmem:[#allocation12 + $0x118] sm:$0xff]
        %v6352 = vld [vmem:[#allocation12 + $0x120] sm:$0xff]
        %v6353 = vld [vmem:[#allocation12 + $0x128] sm:$0xff]
        %v6354 = vld [vmem:[#allocation12 + $0x130] sm:$0xff]
        %v6355 = vld [vmem:[#allocation12 + $0x138] sm:$0xff]
        %v6356 = vld [vmem:[#allocation12 + $0x140] sm:$0xff]
        %v6357 = vld [vmem:[#allocation12 + $0x148] sm:$0xff]
        %v6358 = vld [vmem:[#allocation12 + $0x150] sm:$0xff]
        %v6359 = vld [vmem:[#allocation12 + $0x158] sm:$0xff]
        %v6360 = vld [vmem:[#allocation12 + $0x160] sm:$0xff]
        %v6361 = vld [vmem:[#allocation12 + $0x168] sm:$0xff]
        %v6362 = vld [vmem:[#allocation12 + $0x170] sm:$0xff]
        %v6363 = vld [vmem:[#allocation12 + $0x178] sm:$0xff]
        %v6364 = vld [vmem:[#allocation12 + $0x180] sm:$0xff]
        %v6365 = vld [vmem:[#allocation12 + $0x188] sm:$0xff]
        %v6366 = vld [vmem:[#allocation12 + $0x190] sm:$0xff]
        %v6367 = vld [vmem:[#allocation12 + $0x198] sm:$0xff]
        %v6368 = vld [vmem:[#allocation12 + $0x1a0] sm:$0xff]
        %v6369 = vld [vmem:[#allocation12 + $0x1a8] sm:$0xff]
        %v6370 = vld [vmem:[#allocation12 + $0x1b0] sm:$0xff]
        %v6371 = vld [vmem:[#allocation12 + $0x1b8] sm:$0xff]
        %v6372 = vld [vmem:[#allocation12 + $0x1c0] sm:$0xff]
        %v6373 = vld [vmem:[#allocation12 + $0x1c8] sm:$0xff]
        %v6374 = vld [vmem:[#allocation12 + $0x1d0] sm:$0xff]
        %v6375 = vld [vmem:[#allocation12 + $0x1d8] sm:$0xff]
        %v6376 = vld [vmem:[#allocation12 + $0x1e0] sm:$0xff]
        %v6377 = vld [vmem:[#allocation12 + $0x1e8] sm:$0xff]
        %v6378 = vld [vmem:[#allocation12 + $0x1f0] sm:$0xff]
        %v6379 = vld [vmem:[#allocation12 + $0x1f8] sm:$0xff]
        %v6380 = vld [vmem:[#allocation12 + $0x200] sm:$0xff]
        %v6381 = vld [vmem:[#allocation12 + $0x208] sm:$0xff]
        %v6382 = vld [vmem:[#allocation12 + $0x210] sm:$0xff]
        %v6383 = vld [vmem:[#allocation12 + $0x218] sm:$0xff]
        %v6384 = vld [vmem:[#allocation12 + $0x220] sm:$0xff]
        %v6385 = vld [vmem:[#allocation12 + $0x228] sm:$0xff]
        %v6386 = vld [vmem:[#allocation12 + $0x230] sm:$0xff]
        %v6387 = vld [vmem:[#allocation12 + $0x238] sm:$0xff]
        %v6388 = vld [vmem:[#allocation12 + $0x240] sm:$0xff]
        %v6389 = vld [vmem:[#allocation12 + $0x248] sm:$0xff]
        %v6390 = vld [vmem:[#allocation12 + $0x250] sm:$0xff]
        %v6391 = vld [vmem:[#allocation12 + $0x258] sm:$0xff]
        %v6392 = vld [vmem:[#allocation12 + $0x260] sm:$0xff]
        %v6393 = vld [vmem:[#allocation12 + $0x268] sm:$0xff]
        %v6394 = vld [vmem:[#allocation12 + $0x270] sm:$0xff]
        %v6395 = vld [vmem:[#allocation12 + $0x278] sm:$0xff]
        %v6396 = vld [vmem:[#allocation12 + $0x280] sm:$0xff]
        %v6397 = vld [vmem:[#allocation12 + $0x288] sm:$0xff]
        %v6398 = vld [vmem:[#allocation12 + $0x290] sm:$0xff]
        %v6399 = vld [vmem:[#allocation12 + $0x298] sm:$0xff]
        %v6400 = vld [vmem:[#allocation12 + $0x2a0] sm:$0xff]
        %v6401 = vld [vmem:[#allocation12 + $0x2a8] sm:$0xff]
        %v6402 = vld [vmem:[#allocation12 + $0x2b0] sm:$0xff]
        %v6403 = vld [vmem:[#allocation12 + $0x2b8] sm:$0xff]
        %v6404 = vld [vmem:[#allocation12 + $0x2c0] sm:$0xff]
        %v6405 = vld [vmem:[#allocation12 + $0x2c8] sm:$0xff]
        %v6406 = vld [vmem:[#allocation12 + $0x2d0] sm:$0xff]
        %v6407 = vld [vmem:[#allocation12 + $0x2d8] sm:$0xff]
        %v6408 = vld [vmem:[#allocation12 + $0x2e0] sm:$0xff]
        %v6409 = vld [vmem:[#allocation12 + $0x2e8] sm:$0xff]
        %v6410 = vld [vmem:[#allocation12 + $0x2f0] sm:$0xff]
        %v6411 = vld [vmem:[#allocation12 + $0x2f8] sm:$0xff]
        %v6412 = vld [vmem:[#allocation12 + $0x300] sm:$0xff]
        %v6413 = vld [vmem:[#allocation12 + $0x308] sm:$0xff]
        %v6414 = vld [vmem:[#allocation12 + $0x310] sm:$0xff]
        %v6415 = vld [vmem:[#allocation12 + $0x318] sm:$0xff]
        %v6416 = vld [vmem:[#allocation12 + $0x320] sm:$0xff]
        %v6417 = vld [vmem:[#allocation12 + $0x328] sm:$0xff]
        %v6418 = vld [vmem:[#allocation12 + $0x330] sm:$0xff]
        %v6419 = vld [vmem:[#allocation12 + $0x338] sm:$0xff]
        %v6420 = vld [vmem:[#allocation12 + $0x340] sm:$0xff]
        %v6421 = vld [vmem:[#allocation12 + $0x348] sm:$0xff]
        %v6422 = vld [vmem:[#allocation12 + $0x350] sm:$0xff]
        %v6423 = vld [vmem:[#allocation12 + $0x358] sm:$0xff]
        %v6424 = vld [vmem:[#allocation12 + $0x360] sm:$0xff]
        %v6425 = vld [vmem:[#allocation12 + $0x368] sm:$0xff]
        %v6426 = vld [vmem:[#allocation12 + $0x370] sm:$0xff]
        %v6427 = vld [vmem:[#allocation12 + $0x378] sm:$0xff]
        %v6428 = vld [vmem:[#allocation12 + $0x380] sm:$0xff]
        %v6429 = vld [vmem:[#allocation12 + $0x388] sm:$0xff]
        %v6430 = vld [vmem:[#allocation12 + $0x390] sm:$0xff]
        %v6431 = vld [vmem:[#allocation12 + $0x398] sm:$0xff]
        %v6432 = vld [vmem:[#allocation12 + $0x3a0] sm:$0xff]
        %v6433 = vld [vmem:[#allocation12 + $0x3a8] sm:$0xff]
        %v6434 = vld [vmem:[#allocation12 + $0x3b0] sm:$0xff]
        %v6435 = vld [vmem:[#allocation12 + $0x3b8] sm:$0xff]
        %v6436 = vld [vmem:[#allocation12 + $0x3c0] sm:$0xff]
        %v6437 = vld [vmem:[#allocation12 + $0x3c8] sm:$0xff]
        %v6438 = vld [vmem:[#allocation12 + $0x3d0] sm:$0xff]
        %v6439 = vld [vmem:[#allocation12 + $0x3d8] sm:$0xff]
        %v6440 = vld [vmem:[#allocation12 + $0x3e0] sm:$0xff]
        %v6441 = vld [vmem:[#allocation12 + $0x3e8] sm:$0xff]
        %v6442 = vld [vmem:[#allocation12 + $0x3f0] sm:$0xff]
        %v6443 = vld [vmem:[#allocation12 + $0x3f8] sm:$0xff]
        %v6444 = vld [vmem:[#allocation12 + $0x400] sm:$0xff]
        %v6445 = vld [vmem:[#allocation12 + $0x408] sm:$0xff]
        %v6446 = vld [vmem:[#allocation12 + $0x410] sm:$0xff]
        %v6447 = vld [vmem:[#allocation12 + $0x418] sm:$0xff]
        %v6448 = vld [vmem:[#allocation12 + $0x420] sm:$0xff]
        %v6449 = vld [vmem:[#allocation12 + $0x428] sm:$0xff]
        %v6450 = vld [vmem:[#allocation12 + $0x430] sm:$0xff]
        %v6451 = vld [vmem:[#allocation12 + $0x438] sm:$0xff]
        %v6452 = vld [vmem:[#allocation12 + $0x440] sm:$0xff]
        %v6453 = vld [vmem:[#allocation12 + $0x448] sm:$0xff]
        %v6454 = vld [vmem:[#allocation12 + $0x450] sm:$0xff]
        %v6455 = vld [vmem:[#allocation12 + $0x458] sm:$0xff]
        %v6456 = vld [vmem:[#allocation12 + $0x460] sm:$0xff]
        %v6457 = vld [vmem:[#allocation12 + $0x468] sm:$0xff]
        %v6458 = vld [vmem:[#allocation12 + $0x470] sm:$0xff]
        %v6459 = vld [vmem:[#allocation12 + $0x478] sm:$0xff]
        %6460 = vmatprep.subr.mxu0 %v6317
        %6461 = vmatpush1.msra.mxu0 %v6316
        %6462 = vmatprep.subr.mxu0 %v6320
        %6463 = vmatpush1.msra.mxu0 %v6319
        %6464 = vmatprep.subr.mxu0 %v6323
        %6465 = vmatpush1.msra.mxu0 %v6322
        %6466 = vmatprep.subr.mxu0 %v6326
        %6467 = vmatpush1.msra.mxu0 %v6325
        %6468 = vmatprep.subr.mxu0 %v6329
        %6469 = vmatpush1.msra.mxu0 %v6328
        %6470 = vmatprep.subr.mxu0 %v6332
        %6471 = vmatpush1.msra.mxu0 %v6331
        %6472 = vmatprep.subr.mxu0 %v6335
        %6473 = vmatpush1.msra.mxu0 %v6334
        %6474 = vmatprep.subr.mxu0 %v6338
        %6475 = vmatpush1.msra.mxu0 %v6337
        %6476 = vmatprep.subr.mxu0 %v6341
        %6477 = vmatpush1.msra.mxu0 %v6340
        %6478 = vmatprep.subr.mxu0 %v6344
        %6479 = vmatpush1.msra.mxu0 %v6343
        %6480 = vmatprep.subr.mxu0 %v6347
        %6481 = vmatpush1.msra.mxu0 %v6346
        %6482 = vmatprep.subr.mxu0 %v6350
        %6483 = vmatpush1.msra.mxu0 %v6349
        %6484 = vmatprep.subr.mxu0 %v6353
        %6485 = vmatpush1.msra.mxu0 %v6352
        %6486 = vmatprep.subr.mxu0 %v6356
        %6487 = vmatpush1.msra.mxu0 %v6355
        %6488 = vmatprep.subr.mxu0 %v6359
        %6489 = vmatpush1.msra.mxu0 %v6358
        %6490 = vmatprep.subr.mxu0 %v6362
        %6491 = vmatpush1.msra.mxu0 %v6361
        %6492 = vmatprep.subr.mxu0 %v6365
        %6493 = vmatpush1.msra.mxu0 %v6364
        %6494 = vmatprep.subr.mxu0 %v6368
        %6495 = vmatpush1.msra.mxu0 %v6367
        %6496 = vmatprep.subr.mxu0 %v6371
        %6497 = vmatpush1.msra.mxu0 %v6370
        %6498 = vmatprep.subr.mxu0 %v6374
        %6499 = vmatpush1.msra.mxu0 %v6373
        %6500 = vmatprep.subr.mxu0 %v6377
        %6501 = vmatpush1.msra.mxu0 %v6376
        %6502 = vmatprep.subr.mxu0 %v6380
        %6503 = vmatpush1.msra.mxu0 %v6379
        %6504 = vmatprep.subr.mxu0 %v6383
        %6505 = vmatpush1.msra.mxu0 %v6382
        %6506 = vmatprep.subr.mxu0 %v6386
        %6507 = vmatpush1.msra.mxu0 %v6385
        %6508 = vmatprep.subr.mxu0 %v6389
        %6509 = vmatpush1.msra.mxu0 %v6388
        %6510 = vmatprep.subr.mxu0 %v6392
        %6511 = vmatpush1.msra.mxu0 %v6391
        %6512 = vmatprep.subr.mxu0 %v6395
        %6513 = vmatpush1.msra.mxu0 %v6394
        %6514 = vmatprep.subr.mxu0 %v6398
        %6515 = vmatpush1.msra.mxu0 %v6397
        %6516 = vmatprep.subr.mxu0 %v6401
        %6517 = vmatpush1.msra.mxu0 %v6400
        %6518 = vmatprep.subr.mxu0 %v6404
        %6519 = vmatpush1.msra.mxu0 %v6403
        %6520 = vmatprep.subr.mxu0 %v6407
        %6521 = vmatpush1.msra.mxu0 %v6406
        %6522 = vmatprep.subr.mxu0 %v6410
        %6523 = vmatpush1.msra.mxu0 %v6409
        %6524 = vmatprep.mubr.f32.mxu0 %v6314
        %6525 = vmatmul.mubr.f32.gmra.mrb[0].mxu0 %v6313
        %v6526 = vpop.f32.mrb[0].mxu0
        %v6527 = vadd.f32 0.0, %v6526
        %v6528 = vpop.f32.mrb[0].mxu0
        %v6529 = vadd.f32 0.0, %v6528
        %6530 = vdwg.mxu0
        %6531 = vmatprep.subr.mxu0 %v6413
        %6532 = vmatpush1.msra.mxu0 %v6412
        %6533 = vmatprep.subr.mxu0 %v6416
        %6534 = vmatpush1.msra.mxu0 %v6415
        %6535 = vmatprep.subr.mxu0 %v6419
        %6536 = vmatpush1.msra.mxu0 %v6418
        %6537 = vmatprep.subr.mxu0 %v6422
        %6538 = vmatpush1.msra.mxu0 %v6421
        %6539 = vmatprep.subr.mxu0 %v6425
        %6540 = vmatpush1.msra.mxu0 %v6424
        %6541 = vmatprep.subr.mxu0 %v6428
        %6542 = vmatpush1.msra.mxu0 %v6427
        %6543 = vmatprep.subr.mxu0 %v6431
        %6544 = vmatpush1.msra.mxu0 %v6430
        %6545 = vmatprep.subr.mxu0 %v6434
        %6546 = vmatpush1.msra.mxu0 %v6433
        %6547 = vmatprep.subr.mxu0 %v6437
        %6548 = vmatpush1.msra.mxu0 %v6436
        %6549 = vmatprep.subr.mxu0 %v6440
        %6550 = vmatpush1.msra.mxu0 %v6439
        %6551 = vmatprep.subr.mxu0 %v6443
        %6552 = vmatpush1.msra.mxu0 %v6442
        %6553 = vmatprep.subr.mxu0 %v6446
        %6554 = vmatpush1.msra.mxu0 %v6445
        %6555 = vmatprep.subr.mxu0 %v6449
        %6556 = vmatpush1.msra.mxu0 %v6448
        %6557 = vmatprep.subr.mxu0 %v6452
        %6558 = vmatpush1.msra.mxu0 %v6451
        %6559 = vmatprep.subr.mxu0 %v6455
        %6560 = vmatpush1.msra.mxu0 %v6454
        %6561 = vmatprep.subr.mxu0 %v6458
        %6562 = vmatpush1.msra.mxu0 %v6457
        %6563 = vmatprep.subr.mxu0 0.0
        %6564 = vmatpush1.msra.mxu0 0.0
        %6565 = vmatprep.subr.mxu0 0.0
        %6566 = vmatpush1.msra.mxu0 0.0
        %6567 = vmatprep.subr.mxu0 0.0
        %6568 = vmatpush1.msra.mxu0 0.0
        %6569 = vmatprep.subr.mxu0 0.0
        %6570 = vmatpush1.msra.mxu0 0.0
        %6571 = vmatprep.subr.mxu0 0.0
        %6572 = vmatpush1.msra.mxu0 0.0
        %6573 = vmatprep.subr.mxu0 0.0
        %6574 = vmatpush1.msra.mxu0 0.0
        %6575 = vmatprep.subr.mxu0 0.0
        %6576 = vmatpush1.msra.mxu0 0.0
        %6577 = vmatprep.subr.mxu0 0.0
        %6578 = vmatpush1.msra.mxu0 0.0
        %6579 = vmatprep.subr.mxu0 0.0
        %6580 = vmatpush1.msra.mxu0 0.0
        %6581 = vmatprep.subr.mxu0 0.0
        %6582 = vmatpush1.msra.mxu0 0.0
        %6583 = vmatprep.subr.mxu0 0.0
        %6584 = vmatpush1.msra.mxu0 0.0
        %6585 = vmatprep.subr.mxu0 0.0
        %6586 = vmatpush1.msra.mxu0 0.0
        %6587 = vmatprep.subr.mxu0 0.0
        %6588 = vmatpush1.msra.mxu0 0.0
        %6589 = vmatprep.subr.mxu0 0.0
        %6590 = vmatpush1.msra.mxu0 0.0
        %6591 = vmatprep.subr.mxu0 0.0
        %6592 = vmatpush1.msra.mxu0 0.0
        %6593 = vmatprep.subr.mxu0 0.0
        %6594 = vmatpush1.msra.mxu0 0.0
        %6595 = vmatprep.mubr.f32.mxu0 0.0
        %6596 = vmatmul.mubr.f32.gmra.mrb[0].mxu0 %v6315
        %v6597 = vpop.f32.mrb[0].mxu0
        %v6598 = vadd.f32 %v6527, %v6597
        %v6599 = vpop.f32.mrb[0].mxu0
        %v6600 = vadd.f32 %v6529, %v6599
        %6601 = vdwg.mxu0
        %6602 = vmatprep.subr.mxu0 0.0
        %6603 = vmatpush1.msra.mxu0 %v6318
        %6604 = vmatprep.subr.mxu0 0.0
        %6605 = vmatpush1.msra.mxu0 %v6321
        %6606 = vmatprep.subr.mxu0 0.0
        %6607 = vmatpush1.msra.mxu0 %v6324
        %6608 = vmatprep.subr.mxu0 0.0
        %6609 = vmatpush1.msra.mxu0 %v6327
        %6610 = vmatprep.subr.mxu0 0.0
        %6611 = vmatpush1.msra.mxu0 %v6330
        %6612 = vmatprep.subr.mxu0 0.0
        %6613 = vmatpush1.msra.mxu0 %v6333
        %6614 = vmatprep.subr.mxu0 0.0
        %6615 = vmatpush1.msra.mxu0 %v6336
        %6616 = vmatprep.subr.mxu0 0.0
        %6617 = vmatpush1.msra.mxu0 %v6339
        %6618 = vmatprep.subr.mxu0 0.0
        %6619 = vmatpush1.msra.mxu0 %v6342
        %6620 = vmatprep.subr.mxu0 0.0
        %6621 = vmatpush1.msra.mxu0 %v6345
        %6622 = vmatprep.subr.mxu0 0.0
        %6623 = vmatpush1.msra.mxu0 %v6348
        %6624 = vmatprep.subr.mxu0 0.0
        %6625 = vmatpush1.msra.mxu0 %v6351
        %6626 = vmatprep.subr.mxu0 0.0
        %6627 = vmatpush1.msra.mxu0 %v6354
        %6628 = vmatprep.subr.mxu0 0.0
        %6629 = vmatpush1.msra.mxu0 %v6357
        %6630 = vmatprep.subr.mxu0 0.0
        %6631 = vmatpush1.msra.mxu0 %v6360
        %6632 = vmatprep.subr.mxu0 0.0
        %6633 = vmatpush1.msra.mxu0 %v6363
        %6634 = vmatprep.subr.mxu0 0.0
        %6635 = vmatpush1.msra.mxu0 %v6366
        %6636 = vmatprep.subr.mxu0 0.0
        %6637 = vmatpush1.msra.mxu0 %v6369
        %6638 = vmatprep.subr.mxu0 0.0
        %6639 = vmatpush1.msra.mxu0 %v6372
        %6640 = vmatprep.subr.mxu0 0.0
        %6641 = vmatpush1.msra.mxu0 %v6375
        %6642 = vmatprep.subr.mxu0 0.0
        %6643 = vmatpush1.msra.mxu0 %v6378
        %6644 = vmatprep.subr.mxu0 0.0
        %6645 = vmatpush1.msra.mxu0 %v6381
        %6646 = vmatprep.subr.mxu0 0.0
        %6647 = vmatpush1.msra.mxu0 %v6384
        %6648 = vmatprep.subr.mxu0 0.0
        %6649 = vmatpush1.msra.mxu0 %v6387
        %6650 = vmatprep.subr.mxu0 0.0
        %6651 = vmatpush1.msra.mxu0 %v6390
        %6652 = vmatprep.subr.mxu0 0.0
        %6653 = vmatpush1.msra.mxu0 %v6393
        %6654 = vmatprep.subr.mxu0 0.0
        %6655 = vmatpush1.msra.mxu0 %v6396
        %6656 = vmatprep.subr.mxu0 0.0
        %6657 = vmatpush1.msra.mxu0 %v6399
        %6658 = vmatprep.subr.mxu0 0.0
        %6659 = vmatpush1.msra.mxu0 %v6402
        %6660 = vmatprep.subr.mxu0 0.0
        %6661 = vmatpush1.msra.mxu0 %v6405
        %6662 = vmatprep.subr.mxu0 0.0
        %6663 = vmatpush1.msra.mxu0 %v6408
        %6664 = vmatprep.subr.mxu0 0.0
        %6665 = vmatpush1.msra.mxu0 %v6411
        %6666 = vmatprep.mubr.f32.mxu0 %v6314
        %6667 = vmatmul.mubr.f32.gmra.mrb[0].mxu0 %v6313
        %v6668 = vpop.f32.mrb[0].mxu0
        %v6669 = vadd.f32 0.0, %v6668
        %v6670 = vpop.f32.mrb[0].mxu0
        %6671 = vdwg.mxu0
        %6672 = vmatprep.subr.mxu0 0.0
        %6673 = vmatpush1.msra.mxu0 %v6414
        %6674 = vmatprep.subr.mxu0 0.0
        %6675 = vmatpush1.msra.mxu0 %v6417
        %6676 = vmatprep.subr.mxu0 0.0
        %6677 = vmatpush1.msra.mxu0 %v6420
        %6678 = vmatprep.subr.mxu0 0.0
        %6679 = vmatpush1.msra.mxu0 %v6423
        %6680 = vmatprep.subr.mxu0 0.0
        %6681 = vmatpush1.msra.mxu0 %v6426
        %6682 = vmatprep.subr.mxu0 0.0
        %6683 = vmatpush1.msra.mxu0 %v6429
        %6684 = vmatprep.subr.mxu0 0.0
        %6685 = vmatpush1.msra.mxu0 %v6432
        %6686 = vmatprep.subr.mxu0 0.0
        %6687 = vmatpush1.msra.mxu0 %v6435
        %6688 = vmatprep.subr.mxu0 0.0
        %6689 = vmatpush1.msra.mxu0 %v6438
        %6690 = vmatprep.subr.mxu0 0.0
        %6691 = vmatpush1.msra.mxu0 %v6441
        %6692 = vmatprep.subr.mxu0 0.0
        %6693 = vmatpush1.msra.mxu0 %v6444
        %6694 = vmatprep.subr.mxu0 0.0
        %6695 = vmatpush1.msra.mxu0 %v6447
        %6696 = vmatprep.subr.mxu0 0.0
        %6697 = vmatpush1.msra.mxu0 %v6450
        %6698 = vmatprep.subr.mxu0 0.0
        %6699 = vmatpush1.msra.mxu0 %v6453
        %6700 = vmatprep.subr.mxu0 0.0
        %6701 = vmatpush1.msra.mxu0 %v6456
        %6702 = vmatprep.subr.mxu0 0.0
        %6703 = vmatpush1.msra.mxu0 %v6459
        %6704 = vmatprep.subr.mxu0 0.0
        %6705 = vmatpush1.msra.mxu0 0.0
        %6706 = vmatprep.subr.mxu0 0.0
        %6707 = vmatpush1.msra.mxu0 0.0
        %6708 = vmatprep.subr.mxu0 0.0
        %6709 = vmatpush1.msra.mxu0 0.0
        %6710 = vmatprep.subr.mxu0 0.0
        %6711 = vmatpush1.msra.mxu0 0.0
        %6712 = vmatprep.subr.mxu0 0.0
        %6713 = vmatpush1.msra.mxu0 0.0
        %6714 = vmatprep.subr.mxu0 0.0
        %6715 = vmatpush1.msra.mxu0 0.0
        %6716 = vmatprep.subr.mxu0 0.0
        %6717 = vmatpush1.msra.mxu0 0.0
        %6718 = vmatprep.subr.mxu0 0.0
        %6719 = vmatpush1.msra.mxu0 0.0
        %6720 = vmatprep.subr.mxu0 0.0
        %6721 = vmatpush1.msra.mxu0 0.0
        %6722 = vmatprep.subr.mxu0 0.0
        %6723 = vmatpush1.msra.mxu0 0.0
        %6724 = vmatprep.subr.mxu0 0.0
        %6725 = vmatpush1.msra.mxu0 0.0
        %6726 = vmatprep.subr.mxu0 0.0
        %6727 = vmatpush1.msra.mxu0 0.0
        %6728 = vmatprep.subr.mxu0 0.0
        %6729 = vmatpush1.msra.mxu0 0.0
        %6730 = vmatprep.subr.mxu0 0.0
        %6731 = vmatpush1.msra.mxu0 0.0
        %6732 = vmatprep.subr.mxu0 0.0
        %6733 = vmatpush1.msra.mxu0 0.0
        %6734 = vmatprep.subr.mxu0 0.0
        %6735 = vmatpush1.msra.mxu0 0.0
        %6736 = vmatprep.mubr.f32.mxu0 0.0
        %6737 = vmatmul.mubr.f32.gmra.mrb[0].mxu0 %v6315
        %v6738 = vpop.f32.mrb[0].mxu0
        %v6739 = vadd.f32 %v6669, %v6738
        %v6740 = vpop.f32.mrb[0].mxu0
        %6741 = vdwg.mxu0
        %v6742 = vmul.f32 %v6598, %v6598
        %v6743 = vmul.f32 %v6600, %v6600
        %v6744 = vmul.f32 %v6739, %v6739
        %v6748 = vrot.slane %v6742, 7
        %v6749 = vrot.slane %v6743, 7
        %v6750 = vrot.slane %v6744, 7
        %v6754 = vsub.f32 %v6598, %v6748
        %v6755 = vsub.f32 %v6600, %v6749
        %v6756 = vsub.f32 %v6739, %v6750
        %v6757 = vlaneseq
        %v6758 = vshrl.u32 %v6757, 7
        %v6759 = vsub.s32 0, %v6758
        %v6760 = vrot.slane %v6598, %v6759
        %v6761 = vlaneseq
        %v6762 = vshrl.u32 %v6761, 7
        %v6763 = vsub.s32 0, %v6762
        %v6764 = vrot.slane %v6600, %v6763
        %v6765 = vlaneseq
        %v6766 = vshrl.u32 %v6765, 7
        %v6767 = vsub.s32 0, %v6766
        %v6768 = vrot.slane %v6739, %v6767
        %v6769 = vsub.f32 %v6187, %v6760
        %v6770 = vsub.f32 %v6188, %v6764
        %v6771 = vsub.f32 %v6189, %v6768
        %v6772 = vsub.f32 %v6190, %v6760
        %v6773 = vsub.f32 %v6191, %v6764
        %v6774 = vsub.f32 %v6192, %v6768
        %v6775 = vsub.f32 %v6193, %v6760
        %v6776 = vsub.f32 %v6194, %v6764
        %v6777 = vsub.f32 %v6195, %v6768
        %v6778 = vsub.f32 %v6196, %v6760
        %v6779 = vsub.f32 %v6197, %v6764
        %v6780 = vsub.f32 %v6198, %v6768
        %v6781 = vsub.f32 %v6199, %v6760
        %v6782 = vsub.f32 %v6200, %v6764
        %v6783 = vsub.f32 %v6201, %v6768
        %v6784 = vsub.f32 %v6202, %v6760
        %v6785 = vsub.f32 %v6203, %v6764
        %v6786 = vsub.f32 %v6204, %v6768
        %v6787 = vsub.f32 %v6205, %v6760
        %v6788 = vsub.f32 %v6206, %v6764
        %v6789 = vsub.f32 %v6207, %v6768
        %v6790 = vsub.f32 %v6208, %v6760
        %v6791 = vsub.f32 %v6209, %v6764
        %v6792 = vsub.f32 %v6210, %v6768
        %v6793 = vadd.f32 %v6754, 1e-05
        %v6794 = vadd.f32 %v6755, 1e-05
        %v6795 = vadd.f32 %v6756, 1e-05
        %v6796 = vrsqrt.pop %v6793
        %v6797 = vrsqrt.pop %v6794
        %v6798 = vrsqrt.pop %v6795
        %v6799 = vlaneseq
        %v6800 = vshrl.u32 %v6799, 7
        %v6801 = vsub.s32 1, %v6800
        %v6802 = vrot.slane %v6796, %v6801
        %v6803 = vlaneseq
        %v6804 = vshrl.u32 %v6803, 7
        %v6805 = vsub.s32 1, %v6804
        %v6806 = vrot.slane %v6797, %v6805
        %v6807 = vlaneseq
        %v6808 = vshrl.u32 %v6807, 7
        %v6809 = vsub.s32 1, %v6808
        %v6810 = vrot.slane %v6798, %v6809
        %v6811 = vmul.f32 %v6769, %v6802
        %v6812 = vmul.f32 %v6770, %v6806
        %v6813 = vmul.f32 %v6771, %v6810
        %v6814 = vmul.f32 %v6772, %v6802
        %v6815 = vmul.f32 %v6773, %v6806
        %v6816 = vmul.f32 %v6774, %v6810
        %v6817 = vmul.f32 %v6775, %v6802
        %v6818 = vmul.f32 %v6776, %v6806
        %v6819 = vmul.f32 %v6777, %v6810
        %v6820 = vmul.f32 %v6778, %v6802
        %v6821 = vmul.f32 %v6779, %v6806
        %v6822 = vmul.f32 %v6780, %v6810
        %v6823 = vmul.f32 %v6781, %v6802
        %v6824 = vmul.f32 %v6782, %v6806
        %v6825 = vmul.f32 %v6783, %v6810
        %v6826 = vmul.f32 %v6784, %v6802
        %v6827 = vmul.f32 %v6785, %v6806
        %v6828 = vmul.f32 %v6786, %v6810
        %v6829 = vmul.f32 %v6787, %v6802
        %v6830 = vmul.f32 %v6788, %v6806
        %v6831 = vmul.f32 %v6789, %v6810
        %v6832 = vmul.f32 %v6790, %v6802
        %v6833 = vmul.f32 %v6791, %v6806
        %v6834 = vmul.f32 %v6792, %v6810
        %vm6835 = vcmp.ge.f32.partialorder %v6811, 0.0
        %vm6836 = vcmp.ge.f32.partialorder %v6812, 0.0
        %vm6837 = vcmp.ge.f32.partialorder %v6813, 0.0
        %vm6838 = vcmp.ge.f32.partialorder %v6814, 0.0
        %vm6839 = vcmp.ge.f32.partialorder %v6815, 0.0
        %vm6840 = vcmp.ge.f32.partialorder %v6816, 0.0
        %vm6841 = vcmp.ge.f32.partialorder %v6817, 0.0
        %vm6842 = vcmp.ge.f32.partialorder %v6818, 0.0
        %vm6843 = vcmp.ge.f32.partialorder %v6819, 0.0
        %vm6844 = vcmp.ge.f32.partialorder %v6820, 0.0
        %vm6845 = vcmp.ge.f32.partialorder %v6821, 0.0
        %vm6846 = vcmp.ge.f32.partialorder %v6822, 0.0
        %vm6847 = vcmp.ge.f32.partialorder %v6823, 0.0
        %vm6848 = vcmp.ge.f32.partialorder %v6824, 0.0
        %vm6849 = vcmp.ge.f32.partialorder %v6825, 0.0
        %vm6850 = vcmp.ge.f32.partialorder %v6826, 0.0
        %vm6851 = vcmp.ge.f32.partialorder %v6827, 0.0
        %vm6852 = vcmp.ge.f32.partialorder %v6828, 0.0
        %vm6853 = vcmp.ge.f32.partialorder %v6829, 0.0
        %vm6854 = vcmp.ge.f32.partialorder %v6830, 0.0
        %vm6855 = vcmp.ge.f32.partialorder %v6831, 0.0
        %vm6856 = vcmp.ge.f32.partialorder %v6832, 0.0
        %vm6857 = vcmp.ge.f32.partialorder %v6833, 0.0
        %vm6858 = vcmp.ge.f32.partialorder %v6834, 0.0
        %v6859 = vmul.f32 %v6811, 0.2
        %v6860 = vmul.f32 %v6812, 0.2
        %v6861 = vmul.f32 %v6813, 0.2
        %v6862 = vmul.f32 %v6814, 0.2
        %v6863 = vmul.f32 %v6815, 0.2
        %v6864 = vmul.f32 %v6816, 0.2
        %v6865 = vmul.f32 %v6817, 0.2
        %v6866 = vmul.f32 %v6818, 0.2
        %v6867 = vmul.f32 %v6819, 0.2
        %v6868 = vmul.f32 %v6820, 0.2
        %v6869 = vmul.f32 %v6821, 0.2
        %v6870 = vmul.f32 %v6822, 0.2
        %v6871 = vmul.f32 %v6823, 0.2
        %v6872 = vmul.f32 %v6824, 0.2
        %v6873 = vmul.f32 %v6825, 0.2
        %v6874 = vmul.f32 %v6826, 0.2
        %v6875 = vmul.f32 %v6827, 0.2
        %v6876 = vmul.f32 %v6828, 0.2
        %v6877 = vmul.f32 %v6829, 0.2
        %v6878 = vmul.f32 %v6830, 0.2
        %v6879 = vmul.f32 %v6831, 0.2
        %v6880 = vmul.f32 %v6832, 0.2
        %v6881 = vmul.f32 %v6833, 0.2
        %v6882 = vmul.f32 %v6834, 0.2
        %v6883 = vsel %vm6835, %v6811, %v6859
        %v6884 = vsel %vm6836, %v6812, %v6860
        %v6885 = vsel %vm6837, %v6813, %v6861
        %v6886 = vsel %vm6838, %v6814, %v6862
        %v6887 = vsel %vm6839, %v6815, %v6863
        %v6888 = vsel %vm6840, %v6816, %v6864
        %v6889 = vsel %vm6841, %v6817, %v6865
        %v6890 = vsel %vm6842, %v6818, %v6866
        %v6891 = vsel %vm6843, %v6819, %v6867
        %v6892 = vsel %vm6844, %v6820, %v6868
        %v6893 = vsel %vm6845, %v6821, %v6869
        %v6894 = vsel %vm6846, %v6822, %v6870
        %v6895 = vsel %vm6847, %v6823, %v6871
        %v6896 = vsel %vm6848, %v6824, %v6872
        %v6897 = vsel %vm6849, %v6825, %v6873
        %v6898 = vsel %vm6850, %v6826, %v6874
        %v6899 = vsel %vm6851, %v6827, %v6875
        %v6900 = vsel %vm6852, %v6828, %v6876
        %v6901 = vsel %vm6853, %v6829, %v6877
        %v6902 = vsel %vm6854, %v6830, %v6878
        %v6903 = vsel %vm6855, %v6831, %v6879
        %v6904 = vsel %vm6856, %v6832, %v6880
        %v6905 = vsel %vm6857, %v6833, %v6881
        %v6906 = vsel %vm6858, %v6834, %v6882
        %v6907 = vpack.c.bf16 %v6886, %v6883
        %v6908 = vpack.c.bf16 %v6887, %v6884
        %v6909 = vpack.c.bf16 %v6888, %v6885
        %v6910 = vpack.c.bf16 %v6892, %v6889
        %v6911 = vpack.c.bf16 %v6893, %v6890
        %v6912 = vpack.c.bf16 %v6894, %v6891
        %v6913 = vpack.c.bf16 %v6898, %v6895
        %v6914 = vpack.c.bf16 %v6899, %v6896
        %v6915 = vpack.c.bf16 %v6900, %v6897
        %v6916 = vpack.c.bf16 %v6904, %v6901
        %v6917 = vpack.c.bf16 %v6905, %v6902
        %v6918 = vpack.c.bf16 %v6906, %v6903
        %v6919 = vld [vmem:[%s12] sm:$0x3]
        %v6921 = vsel %vm3615, %v6919, 0
        %6923 = vmatprep.subr.bf16.mxu0 %v6908
        %6924 = vmatpush1.bf16.msra.mxu0 %v6907
        %6925 = vmatprep.subr.bf16.mxu0 %v6911
        %6926 = vmatpush1.bf16.msra.mxu0 %v6910
        %6927 = vmatprep.subr.bf16.mxu0 %v6914
        %6928 = vmatpush1.bf16.msra.mxu0 %v6913
        %6929 = vmatprep.subr.bf16.mxu0 %v6917
        %6930 = vmatpush1.bf16.msra.mxu0 %v6916
        %6931 = vmatprep.subr.bf16.mxu0 0
        %6932 = vmatpush1.bf16.msra.mxu0 0
        %6933 = vmatprep.subr.bf16.mxu0 0
        %6934 = vmatpush1.bf16.msra.mxu0 0
        %6935 = vmatprep.subr.bf16.mxu0 0
        %6936 = vmatpush1.bf16.msra.mxu0 0
        %6937 = vmatprep.subr.bf16.mxu0 0
        %6938 = vmatpush1.bf16.msra.mxu0 0
        %6939 = vmatprep.subr.bf16.mxu0 0
        %6940 = vmatpush1.bf16.msra.mxu0 0
        %6941 = vmatprep.subr.bf16.mxu0 0
        %6942 = vmatpush1.bf16.msra.mxu0 0
        %6943 = vmatprep.subr.bf16.mxu0 0
        %6944 = vmatpush1.bf16.msra.mxu0 0
        %6945 = vmatprep.subr.bf16.mxu0 0
        %6946 = vmatpush1.bf16.msra.mxu0 0
        %6947 = vmatprep.subr.bf16.mxu0 0
        %6948 = vmatpush1.bf16.msra.mxu0 0
        %6949 = vmatprep.subr.bf16.mxu0 0
        %6950 = vmatpush1.bf16.msra.mxu0 0
        %6951 = vmatprep.subr.bf16.mxu0 0
        %6952 = vmatpush1.bf16.msra.mxu0 0
        %6953 = vmatprep.subr.bf16.mxu0 0
        %6954 = vmatpush1.bf16.msra.mxu0 0
        %6955 = vmatprep.mubr.bf16.mxu0 0
        %6956 = vmatmul.mubr.bf16.gmra.mrb[0].mxu0 %v6921
        %v6957 = vpop.f32.mrb[0].mxu0
        %v6958 = vadd.f32 0.0, %v6957
        %v6959 = vpop.f32.mrb[0].mxu0
        %v6960 = vadd.f32 0.0, %v6959
        %v6961 = vpop.f32.mrb[0].mxu0
        %v6962 = vpop.f32.mrb[0].mxu0
        %6963 = vdwg.mxu0
        %6964 = vmatprep.subr.bf16.mxu0 0
        %6965 = vmatpush1.bf16.msra.mxu0 %v6909
        %6966 = vmatprep.subr.bf16.mxu0 0
        %6967 = vmatpush1.bf16.msra.mxu0 %v6912
        %6968 = vmatprep.subr.bf16.mxu0 0
        %6969 = vmatpush1.bf16.msra.mxu0 %v6915
        %6970 = vmatprep.subr.bf16.mxu0 0
        %6971 = vmatpush1.bf16.msra.mxu0 %v6918
        %6972 = vmatprep.subr.bf16.mxu0 0
        %6973 = vmatpush1.bf16.msra.mxu0 0
        %6974 = vmatprep.subr.bf16.mxu0 0
        %6975 = vmatpush1.bf16.msra.mxu0 0
        %6976 = vmatprep.subr.bf16.mxu0 0
        %6977 = vmatpush1.bf16.msra.mxu0 0
        %6978 = vmatprep.subr.bf16.mxu0 0
        %6979 = vmatpush1.bf16.msra.mxu0 0
        %6980 = vmatprep.subr.bf16.mxu0 0
        %6981 = vmatpush1.bf16.msra.mxu0 0
        %6982 = vmatprep.subr.bf16.mxu0 0
        %6983 = vmatpush1.bf16.msra.mxu0 0
        %6984 = vmatprep.subr.bf16.mxu0 0
        %6985 = vmatpush1.bf16.msra.mxu0 0
        %6986 = vmatprep.subr.bf16.mxu0 0
        %6987 = vmatpush1.bf16.msra.mxu0 0
        %6988 = vmatprep.subr.bf16.mxu0 0
        %6989 = vmatpush1.bf16.msra.mxu0 0
        %6990 = vmatprep.subr.bf16.mxu0 0
        %6991 = vmatpush1.bf16.msra.mxu0 0
        %6992 = vmatprep.subr.bf16.mxu0 0
        %6993 = vmatpush1.bf16.msra.mxu0 0
        %6994 = vmatprep.subr.bf16.mxu0 0
        %6995 = vmatpush1.bf16.msra.mxu0 0
        %6996 = vmatprep.mubr.bf16.mxu0 0
        %6997 = vmatmul.mubr.bf16.gmra.mrb[0].mxu0 %v6921
        %v6998 = vpop.f32.mrb[0].mxu0
        %v6999 = vadd.f32 0.0, %v6998
        %v7000 = vpop.f32.mrb[0].mxu0
        %v7001 = vpop.f32.mrb[0].mxu0
        %v7002 = vpop.f32.mrb[0].mxu0
        %7003 = vdwg.mxu0
        %v7004 = vpack.c.bf16 %v6958, %v6958
        %v7005 = vpack.c.bf16 %v6960, %v6960
        %v7006 = vpack.c.bf16 %v6999, %v6999
        %v7007 = vld [vmem:[#allocation13] sm:$0xff]
        %v7008 = vld [vmem:[#allocation13 + $0x8] sm:$0xff]
        %v7009 = vld [vmem:[#allocation13 + $0x10] sm:$0xff]
        %v7010 = vld [vmem:[#allocation13 + $0x18] sm:$0xff]
        %v7011 = vld [vmem:[#allocation13 + $0x20] sm:$0xff]
        %v7012 = vld [vmem:[#allocation13 + $0x28] sm:$0xff]
        %v7013 = vld [vmem:[#allocation13 + $0x30] sm:$0xff]
        %v7014 = vld [vmem:[#allocation13 + $0x38] sm:$0xff]
        %v7015 = vld [vmem:[#allocation13 + $0x40] sm:$0xff]
        %v7016 = vld [vmem:[#allocation13 + $0x48] sm:$0xff]
        %v7017 = vld [vmem:[#allocation13 + $0x50] sm:$0xff]
        %v7018 = vld [vmem:[#allocation13 + $0x58] sm:$0xff]
        %v7019 = vld [vmem:[#allocation13 + $0x60] sm:$0xff]
        %v7020 = vld [vmem:[#allocation13 + $0x68] sm:$0xff]
        %v7021 = vld [vmem:[#allocation13 + $0x70] sm:$0xff]
        %v7022 = vld [vmem:[#allocation13 + $0x78] sm:$0xff]
        %v7023 = vld [vmem:[#allocation13 + $0x80] sm:$0xff]
        %v7024 = vld [vmem:[#allocation13 + $0x88] sm:$0xff]
        %v7025 = vld [vmem:[#allocation13 + $0x90] sm:$0xff]
        %v7026 = vld [vmem:[#allocation13 + $0x98] sm:$0xff]
        %v7027 = vld [vmem:[#allocation13 + $0xa0] sm:$0xff]
        %v7028 = vld [vmem:[#allocation13 + $0xa8] sm:$0xff]
        %v7029 = vld [vmem:[#allocation13 + $0xb0] sm:$0xff]
        %v7030 = vld [vmem:[#allocation13 + $0xb8] sm:$0xff]
        %v7031 = vld [vmem:[#allocation13 + $0xc0] sm:$0xff]
        %v7032 = vld [vmem:[#allocation13 + $0xc8] sm:$0xff]
        %v7033 = vld [vmem:[#allocation13 + $0xd0] sm:$0xff]
        %v7034 = vld [vmem:[#allocation13 + $0xd8] sm:$0xff]
        %v7035 = vld [vmem:[#allocation13 + $0xe0] sm:$0xff]
        %v7036 = vld [vmem:[#allocation13 + $0xe8] sm:$0xff]
        %v7037 = vld [vmem:[#allocation13 + $0xf0] sm:$0xff]
        %v7038 = vld [vmem:[#allocation13 + $0xf8] sm:$0xff]
        %v7039 = vld [vmem:[#allocation13 + $0x100] sm:$0xff]
        %v7040 = vld [vmem:[#allocation13 + $0x108] sm:$0xff]
        %v7041 = vld [vmem:[#allocation13 + $0x110] sm:$0xff]
        %v7042 = vld [vmem:[#allocation13 + $0x118] sm:$0xff]
        %v7043 = vld [vmem:[#allocation13 + $0x120] sm:$0xff]
        %v7044 = vld [vmem:[#allocation13 + $0x128] sm:$0xff]
        %v7045 = vld [vmem:[#allocation13 + $0x130] sm:$0xff]
        %v7046 = vld [vmem:[#allocation13 + $0x138] sm:$0xff]
        %v7047 = vld [vmem:[#allocation13 + $0x140] sm:$0xff]
        %v7048 = vld [vmem:[#allocation13 + $0x148] sm:$0xff]
        %v7049 = vld [vmem:[#allocation13 + $0x150] sm:$0xff]
        %v7050 = vld [vmem:[#allocation13 + $0x158] sm:$0xff]
        %v7051 = vld [vmem:[#allocation13 + $0x160] sm:$0xff]
        %v7052 = vld [vmem:[#allocation13 + $0x168] sm:$0xff]
        %v7053 = vld [vmem:[#allocation13 + $0x170] sm:$0xff]
        %v7054 = vld [vmem:[#allocation13 + $0x178] sm:$0xff]
        %v7055 = vld [vmem:[#allocation13 + $0x180] sm:$0xff]
        %v7056 = vld [vmem:[#allocation13 + $0x188] sm:$0xff]
        %v7057 = vld [vmem:[#allocation13 + $0x190] sm:$0xff]
        %v7058 = vld [vmem:[#allocation13 + $0x198] sm:$0xff]
        %v7059 = vld [vmem:[#allocation13 + $0x1a0] sm:$0xff]
        %v7060 = vld [vmem:[#allocation13 + $0x1a8] sm:$0xff]
        %v7061 = vld [vmem:[#allocation13 + $0x1b0] sm:$0xff]
        %v7062 = vld [vmem:[#allocation13 + $0x1b8] sm:$0xff]
        %v7063 = vld [vmem:[#allocation13 + $0x1c0] sm:$0xff]
        %v7064 = vld [vmem:[#allocation13 + $0x1c8] sm:$0xff]
        %v7065 = vld [vmem:[#allocation13 + $0x1d0] sm:$0xff]
        %v7066 = vld [vmem:[#allocation13 + $0x1d8] sm:$0xff]
        %v7067 = vld [vmem:[#allocation13 + $0x1e0] sm:$0xff]
        %v7068 = vld [vmem:[#allocation13 + $0x1e8] sm:$0xff]
        %v7069 = vld [vmem:[#allocation13 + $0x1f0] sm:$0xff]
        %v7070 = vld [vmem:[#allocation13 + $0x1f8] sm:$0xff]
        %v7071 = vld [vmem:[#allocation13 + $0x200] sm:$0xff]
        %v7072 = vld [vmem:[#allocation13 + $0x208] sm:$0xff]
        %v7073 = vld [vmem:[#allocation13 + $0x210] sm:$0xff]
        %v7074 = vld [vmem:[#allocation13 + $0x218] sm:$0xff]
        %v7075 = vld [vmem:[#allocation13 + $0x220] sm:$0xff]
        %v7076 = vld [vmem:[#allocation13 + $0x228] sm:$0xff]
        %v7077 = vld [vmem:[#allocation13 + $0x230] sm:$0xff]
        %v7078 = vld [vmem:[#allocation13 + $0x238] sm:$0xff]
        %v7079 = vld [vmem:[#allocation13 + $0x240] sm:$0xff]
        %v7080 = vld [vmem:[#allocation13 + $0x248] sm:$0xff]
        %v7081 = vld [vmem:[#allocation13 + $0x250] sm:$0xff]
        %v7082 = vld [vmem:[#allocation13 + $0x258] sm:$0xff]
        %v7083 = vld [vmem:[#allocation13 + $0x260] sm:$0xff]
        %v7084 = vld [vmem:[#allocation13 + $0x268] sm:$0xff]
        %v7085 = vld [vmem:[#allocation13 + $0x270] sm:$0xff]
        %v7086 = vld [vmem:[#allocation13 + $0x278] sm:$0xff]
        %v7087 = vld [vmem:[#allocation13 + $0x280] sm:$0xff]
        %v7088 = vld [vmem:[#allocation13 + $0x288] sm:$0xff]
        %v7089 = vld [vmem:[#allocation13 + $0x290] sm:$0xff]
        %v7090 = vld [vmem:[#allocation13 + $0x298] sm:$0xff]
        %v7091 = vld [vmem:[#allocation13 + $0x2a0] sm:$0xff]
        %v7092 = vld [vmem:[#allocation13 + $0x2a8] sm:$0xff]
        %v7093 = vld [vmem:[#allocation13 + $0x2b0] sm:$0xff]
        %v7094 = vld [vmem:[#allocation13 + $0x2b8] sm:$0xff]
        %v7095 = vld [vmem:[#allocation13 + $0x2c0] sm:$0xff]
        %v7096 = vld [vmem:[#allocation13 + $0x2c8] sm:$0xff]
        %v7097 = vld [vmem:[#allocation13 + $0x2d0] sm:$0xff]
        %v7098 = vld [vmem:[#allocation13 + $0x2d8] sm:$0xff]
        %v7099 = vld [vmem:[#allocation13 + $0x2e0] sm:$0xff]
        %v7100 = vld [vmem:[#allocation13 + $0x2e8] sm:$0xff]
        %v7101 = vld [vmem:[#allocation13 + $0x2f0] sm:$0xff]
        %v7102 = vld [vmem:[#allocation13 + $0x2f8] sm:$0xff]
        %v7103 = vld [vmem:[#allocation13 + $0x300] sm:$0xff]
        %v7104 = vld [vmem:[#allocation13 + $0x308] sm:$0xff]
        %v7105 = vld [vmem:[#allocation13 + $0x310] sm:$0xff]
        %v7106 = vld [vmem:[#allocation13 + $0x318] sm:$0xff]
        %v7107 = vld [vmem:[#allocation13 + $0x320] sm:$0xff]
        %v7108 = vld [vmem:[#allocation13 + $0x328] sm:$0xff]
        %v7109 = vld [vmem:[#allocation13 + $0x330] sm:$0xff]
        %v7110 = vld [vmem:[#allocation13 + $0x338] sm:$0xff]
        %v7111 = vld [vmem:[#allocation13 + $0x340] sm:$0xff]
        %v7112 = vld [vmem:[#allocation13 + $0x348] sm:$0xff]
        %v7113 = vld [vmem:[#allocation13 + $0x350] sm:$0xff]
        %v7114 = vld [vmem:[#allocation13 + $0x358] sm:$0xff]
        %v7115 = vld [vmem:[#allocation13 + $0x360] sm:$0xff]
        %v7116 = vld [vmem:[#allocation13 + $0x368] sm:$0xff]
        %v7117 = vld [vmem:[#allocation13 + $0x370] sm:$0xff]
        %v7118 = vld [vmem:[#allocation13 + $0x378] sm:$0xff]
        %v7119 = vld [vmem:[#allocation13 + $0x380] sm:$0xff]
        %v7120 = vld [vmem:[#allocation13 + $0x388] sm:$0xff]
        %v7121 = vld [vmem:[#allocation13 + $0x390] sm:$0xff]
        %v7122 = vld [vmem:[#allocation13 + $0x398] sm:$0xff]
        %v7123 = vld [vmem:[#allocation13 + $0x3a0] sm:$0xff]
        %v7124 = vld [vmem:[#allocation13 + $0x3a8] sm:$0xff]
        %v7125 = vld [vmem:[#allocation13 + $0x3b0] sm:$0xff]
        %v7126 = vld [vmem:[#allocation13 + $0x3b8] sm:$0xff]
        %v7127 = vld [vmem:[#allocation13 + $0x3c0] sm:$0xff]
        %v7128 = vld [vmem:[#allocation13 + $0x3c8] sm:$0xff]
        %v7129 = vld [vmem:[#allocation13 + $0x3d0] sm:$0xff]
        %v7130 = vld [vmem:[#allocation13 + $0x3d8] sm:$0xff]
        %v7131 = vld [vmem:[#allocation13 + $0x3e0] sm:$0xff]
        %v7132 = vld [vmem:[#allocation13 + $0x3e8] sm:$0xff]
        %v7133 = vld [vmem:[#allocation13 + $0x3f0] sm:$0xff]
        %v7134 = vld [vmem:[#allocation13 + $0x3f8] sm:$0xff]
        %v7135 = vld [vmem:[#allocation13 + $0x400] sm:$0xff]
        %v7136 = vld [vmem:[#allocation13 + $0x408] sm:$0xff]
        %v7137 = vld [vmem:[#allocation13 + $0x410] sm:$0xff]
        %v7138 = vld [vmem:[#allocation13 + $0x418] sm:$0xff]
        %v7139 = vld [vmem:[#allocation13 + $0x420] sm:$0xff]
        %v7140 = vld [vmem:[#allocation13 + $0x428] sm:$0xff]
        %v7141 = vld [vmem:[#allocation13 + $0x430] sm:$0xff]
        %v7142 = vld [vmem:[#allocation13 + $0x438] sm:$0xff]
        %v7143 = vld [vmem:[#allocation13 + $0x440] sm:$0xff]
        %v7144 = vld [vmem:[#allocation13 + $0x448] sm:$0xff]
        %v7145 = vld [vmem:[#allocation13 + $0x450] sm:$0xff]
        %v7146 = vld [vmem:[#allocation13 + $0x458] sm:$0xff]
        %v7147 = vld [vmem:[#allocation13 + $0x460] sm:$0xff]
        %v7148 = vld [vmem:[#allocation13 + $0x468] sm:$0xff]
        %v7149 = vld [vmem:[#allocation13 + $0x470] sm:$0xff]
        %v7150 = vld [vmem:[#allocation13 + $0x478] sm:$0xff]
        %s7151 = scalar_lea.vmem %s12, 2
        %v7152 = vld [vmem:[%s7151] sm:$0x3]
        %v7154 = vsel %vm3615, %v7152, 0
        %7156 = vmatprep.subr.bf16.mxu0 %v6908
        %7157 = vmatpush1.bf16.msra.mxu0 %v6907
        %7158 = vmatprep.subr.bf16.mxu0 %v6911
        %7159 = vmatpush1.bf16.msra.mxu0 %v6910
        %7160 = vmatprep.subr.bf16.mxu0 %v6914
        %7161 = vmatpush1.bf16.msra.mxu0 %v6913
        %7162 = vmatprep.subr.bf16.mxu0 %v6917
        %7163 = vmatpush1.bf16.msra.mxu0 %v6916
        %7164 = vmatprep.subr.bf16.mxu0 0
        %7165 = vmatpush1.bf16.msra.mxu0 0
        %7166 = vmatprep.subr.bf16.mxu0 0
        %7167 = vmatpush1.bf16.msra.mxu0 0
        %7168 = vmatprep.subr.bf16.mxu0 0
        %7169 = vmatpush1.bf16.msra.mxu0 0
        %7170 = vmatprep.subr.bf16.mxu0 0
        %7171 = vmatpush1.bf16.msra.mxu0 0
        %7172 = vmatprep.subr.bf16.mxu0 0
        %7173 = vmatpush1.bf16.msra.mxu0 0
        %7174 = vmatprep.subr.bf16.mxu0 0
        %7175 = vmatpush1.bf16.msra.mxu0 0
        %7176 = vmatprep.subr.bf16.mxu0 0
        %7177 = vmatpush1.bf16.msra.mxu0 0
        %7178 = vmatprep.subr.bf16.mxu0 0
        %7179 = vmatpush1.bf16.msra.mxu0 0
        %7180 = vmatprep.subr.bf16.mxu0 0
        %7181 = vmatpush1.bf16.msra.mxu0 0
        %7182 = vmatprep.subr.bf16.mxu0 0
        %7183 = vmatpush1.bf16.msra.mxu0 0
        %7184 = vmatprep.subr.bf16.mxu0 0
        %7185 = vmatpush1.bf16.msra.mxu0 0
        %7186 = vmatprep.subr.bf16.mxu0 0
        %7187 = vmatpush1.bf16.msra.mxu0 0
        %7188 = vmatprep.mubr.bf16.mxu0 0
        %7189 = vmatmul.mubr.bf16.gmra.mrb[0].mxu0 %v7154
        %v7190 = vpop.f32.mrb[0].mxu0
        %v7191 = vadd.f32 0.0, %v7190
        %v7192 = vpop.f32.mrb[0].mxu0
        %v7193 = vadd.f32 0.0, %v7192
        %v7194 = vpop.f32.mrb[0].mxu0
        %v7195 = vpop.f32.mrb[0].mxu0
        %7196 = vdwg.mxu0
        %7197 = vmatprep.subr.bf16.mxu0 0
        %7198 = vmatpush1.bf16.msra.mxu0 %v6909
        %7199 = vmatprep.subr.bf16.mxu0 0
        %7200 = vmatpush1.bf16.msra.mxu0 %v6912
        %7201 = vmatprep.subr.bf16.mxu0 0
        %7202 = vmatpush1.bf16.msra.mxu0 %v6915
        %7203 = vmatprep.subr.bf16.mxu0 0
        %7204 = vmatpush1.bf16.msra.mxu0 %v6918
        %7205 = vmatprep.subr.bf16.mxu0 0
        %7206 = vmatpush1.bf16.msra.mxu0 0
        %7207 = vmatprep.subr.bf16.mxu0 0
        %7208 = vmatpush1.bf16.msra.mxu0 0
        %7209 = vmatprep.subr.bf16.mxu0 0
        %7210 = vmatpush1.bf16.msra.mxu0 0
        %7211 = vmatprep.subr.bf16.mxu0 0
        %7212 = vmatpush1.bf16.msra.mxu0 0
        %7213 = vmatprep.subr.bf16.mxu0 0
        %7214 = vmatpush1.bf16.msra.mxu0 0
        %7215 = vmatprep.subr.bf16.mxu0 0
        %7216 = vmatpush1.bf16.msra.mxu0 0
        %7217 = vmatprep.subr.bf16.mxu0 0
        %7218 = vmatpush1.bf16.msra.mxu0 0
        %7219 = vmatprep.subr.bf16.mxu0 0
        %7220 = vmatpush1.bf16.msra.mxu0 0
        %7221 = vmatprep.subr.bf16.mxu0 0
        %7222 = vmatpush1.bf16.msra.mxu0 0
        %7223 = vmatprep.subr.bf16.mxu0 0
        %7224 = vmatpush1.bf16.msra.mxu0 0
        %7225 = vmatprep.subr.bf16.mxu0 0
        %7226 = vmatpush1.bf16.msra.mxu0 0
        %7227 = vmatprep.subr.bf16.mxu0 0
        %7228 = vmatpush1.bf16.msra.mxu0 0
        %7229 = vmatprep.mubr.bf16.mxu0 0
        %7230 = vmatmul.mubr.bf16.gmra.mrb[0].mxu0 %v7154
        %v7231 = vpop.f32.mrb[0].mxu0
        %v7232 = vadd.f32 0.0, %v7231
        %v7233 = vpop.f32.mrb[0].mxu0
        %v7234 = vpop.f32.mrb[0].mxu0
        %v7235 = vpop.f32.mrb[0].mxu0
        %7236 = vdwg.mxu0
        %v7237 = vpack.c.bf16 %v7191, %v7191
        %v7238 = vpack.c.bf16 %v7193, %v7193
        %v7239 = vpack.c.bf16 %v7232, %v7232
        %s7240 = scalar_lea.vmem [#allocation13], 1152
        %v7241 = vld [vmem:[%s7240] sm:$0xff]
        %v7242 = vld [vmem:[%s7240 + $0x8] sm:$0xff]
        %v7243 = vld [vmem:[%s7240 + $0x10] sm:$0xff]
        %v7244 = vld [vmem:[%s7240 + $0x18] sm:$0xff]
        %v7245 = vld [vmem:[%s7240 + $0x20] sm:$0xff]
        %v7246 = vld [vmem:[%s7240 + $0x28] sm:$0xff]
        %v7247 = vld [vmem:[%s7240 + $0x30] sm:$0xff]
        %v7248 = vld [vmem:[%s7240 + $0x38] sm:$0xff]
        %v7249 = vld [vmem:[%s7240 + $0x40] sm:$0xff]
        %v7250 = vld [vmem:[%s7240 + $0x48] sm:$0xff]
        %v7251 = vld [vmem:[%s7240 + $0x50] sm:$0xff]
        %v7252 = vld [vmem:[%s7240 + $0x58] sm:$0xff]
        %v7253 = vld [vmem:[%s7240 + $0x60] sm:$0xff]
        %v7254 = vld [vmem:[%s7240 + $0x68] sm:$0xff]
        %v7255 = vld [vmem:[%s7240 + $0x70] sm:$0xff]
        %v7256 = vld [vmem:[%s7240 + $0x78] sm:$0xff]
        %v7257 = vld [vmem:[%s7240 + $0x80] sm:$0xff]
        %v7258 = vld [vmem:[%s7240 + $0x88] sm:$0xff]
        %v7259 = vld [vmem:[%s7240 + $0x90] sm:$0xff]
        %v7260 = vld [vmem:[%s7240 + $0x98] sm:$0xff]
        %v7261 = vld [vmem:[%s7240 + $0xa0] sm:$0xff]
        %v7262 = vld [vmem:[%s7240 + $0xa8] sm:$0xff]
        %v7263 = vld [vmem:[%s7240 + $0xb0] sm:$0xff]
        %v7264 = vld [vmem:[%s7240 + $0xb8] sm:$0xff]
        %v7265 = vld [vmem:[%s7240 + $0xc0] sm:$0xff]
        %v7266 = vld [vmem:[%s7240 + $0xc8] sm:$0xff]
        %v7267 = vld [vmem:[%s7240 + $0xd0] sm:$0xff]
        %v7268 = vld [vmem:[%s7240 + $0xd8] sm:$0xff]
        %v7269 = vld [vmem:[%s7240 + $0xe0] sm:$0xff]
        %v7270 = vld [vmem:[%s7240 + $0xe8] sm:$0xff]
        %v7271 = vld [vmem:[%s7240 + $0xf0] sm:$0xff]
        %v7272 = vld [vmem:[%s7240 + $0xf8] sm:$0xff]
        %v7273 = vld [vmem:[%s7240 + $0x100] sm:$0xff]
        %v7274 = vld [vmem:[%s7240 + $0x108] sm:$0xff]
        %v7275 = vld [vmem:[%s7240 + $0x110] sm:$0xff]
        %v7276 = vld [vmem:[%s7240 + $0x118] sm:$0xff]
        %v7277 = vld [vmem:[%s7240 + $0x120] sm:$0xff]
        %v7278 = vld [vmem:[%s7240 + $0x128] sm:$0xff]
        %v7279 = vld [vmem:[%s7240 + $0x130] sm:$0xff]
        %v7280 = vld [vmem:[%s7240 + $0x138] sm:$0xff]
        %v7281 = vld [vmem:[%s7240 + $0x140] sm:$0xff]
        %v7282 = vld [vmem:[%s7240 + $0x148] sm:$0xff]
        %v7283 = vld [vmem:[%s7240 + $0x150] sm:$0xff]
        %v7284 = vld [vmem:[%s7240 + $0x158] sm:$0xff]
        %v7285 = vld [vmem:[%s7240 + $0x160] sm:$0xff]
        %v7286 = vld [vmem:[%s7240 + $0x168] sm:$0xff]
        %v7287 = vld [vmem:[%s7240 + $0x170] sm:$0xff]
        %v7288 = vld [vmem:[%s7240 + $0x178] sm:$0xff]
        %v7289 = vld [vmem:[%s7240 + $0x180] sm:$0xff]
        %v7290 = vld [vmem:[%s7240 + $0x188] sm:$0xff]
        %v7291 = vld [vmem:[%s7240 + $0x190] sm:$0xff]
        %v7292 = vld [vmem:[%s7240 + $0x198] sm:$0xff]
        %v7293 = vld [vmem:[%s7240 + $0x1a0] sm:$0xff]
        %v7294 = vld [vmem:[%s7240 + $0x1a8] sm:$0xff]
        %v7295 = vld [vmem:[%s7240 + $0x1b0] sm:$0xff]
        %v7296 = vld [vmem:[%s7240 + $0x1b8] sm:$0xff]
        %v7297 = vld [vmem:[%s7240 + $0x1c0] sm:$0xff]
        %v7298 = vld [vmem:[%s7240 + $0x1c8] sm:$0xff]
        %v7299 = vld [vmem:[%s7240 + $0x1d0] sm:$0xff]
        %v7300 = vld [vmem:[%s7240 + $0x1d8] sm:$0xff]
        %v7301 = vld [vmem:[%s7240 + $0x1e0] sm:$0xff]
        %v7302 = vld [vmem:[%s7240 + $0x1e8] sm:$0xff]
        %v7303 = vld [vmem:[%s7240 + $0x1f0] sm:$0xff]
        %v7304 = vld [vmem:[%s7240 + $0x1f8] sm:$0xff]
        %v7305 = vld [vmem:[%s7240 + $0x200] sm:$0xff]
        %v7306 = vld [vmem:[%s7240 + $0x208] sm:$0xff]
        %v7307 = vld [vmem:[%s7240 + $0x210] sm:$0xff]
        %v7308 = vld [vmem:[%s7240 + $0x218] sm:$0xff]
        %v7309 = vld [vmem:[%s7240 + $0x220] sm:$0xff]
        %v7310 = vld [vmem:[%s7240 + $0x228] sm:$0xff]
        %v7311 = vld [vmem:[%s7240 + $0x230] sm:$0xff]
        %v7312 = vld [vmem:[%s7240 + $0x238] sm:$0xff]
        %v7313 = vld [vmem:[%s7240 + $0x240] sm:$0xff]
        %v7314 = vld [vmem:[%s7240 + $0x248] sm:$0xff]
        %v7315 = vld [vmem:[%s7240 + $0x250] sm:$0xff]
        %v7316 = vld [vmem:[%s7240 + $0x258] sm:$0xff]
        %v7317 = vld [vmem:[%s7240 + $0x260] sm:$0xff]
        %v7318 = vld [vmem:[%s7240 + $0x268] sm:$0xff]
        %v7319 = vld [vmem:[%s7240 + $0x270] sm:$0xff]
        %v7320 = vld [vmem:[%s7240 + $0x278] sm:$0xff]
        %v7321 = vld [vmem:[%s7240 + $0x280] sm:$0xff]
        %v7322 = vld [vmem:[%s7240 + $0x288] sm:$0xff]
        %v7323 = vld [vmem:[%s7240 + $0x290] sm:$0xff]
        %v7324 = vld [vmem:[%s7240 + $0x298] sm:$0xff]
        %v7325 = vld [vmem:[%s7240 + $0x2a0] sm:$0xff]
        %v7326 = vld [vmem:[%s7240 + $0x2a8] sm:$0xff]
        %v7327 = vld [vmem:[%s7240 + $0x2b0] sm:$0xff]
        %v7328 = vld [vmem:[%s7240 + $0x2b8] sm:$0xff]
        %v7329 = vld [vmem:[%s7240 + $0x2c0] sm:$0xff]
        %v7330 = vld [vmem:[%s7240 + $0x2c8] sm:$0xff]
        %v7331 = vld [vmem:[%s7240 + $0x2d0] sm:$0xff]
        %v7332 = vld [vmem:[%s7240 + $0x2d8] sm:$0xff]
        %v7333 = vld [vmem:[%s7240 + $0x2e0] sm:$0xff]
        %v7334 = vld [vmem:[%s7240 + $0x2e8] sm:$0xff]
        %v7335 = vld [vmem:[%s7240 + $0x2f0] sm:$0xff]
        %v7336 = vld [vmem:[%s7240 + $0x2f8] sm:$0xff]
        %v7337 = vld [vmem:[%s7240 + $0x300] sm:$0xff]
        %v7338 = vld [vmem:[%s7240 + $0x308] sm:$0xff]
        %v7339 = vld [vmem:[%s7240 + $0x310] sm:$0xff]
        %v7340 = vld [vmem:[%s7240 + $0x318] sm:$0xff]
        %v7341 = vld [vmem:[%s7240 + $0x320] sm:$0xff]
        %v7342 = vld [vmem:[%s7240 + $0x328] sm:$0xff]
        %v7343 = vld [vmem:[%s7240 + $0x330] sm:$0xff]
        %v7344 = vld [vmem:[%s7240 + $0x338] sm:$0xff]
        %v7345 = vld [vmem:[%s7240 + $0x340] sm:$0xff]
        %v7346 = vld [vmem:[%s7240 + $0x348] sm:$0xff]
        %v7347 = vld [vmem:[%s7240 + $0x350] sm:$0xff]
        %v7348 = vld [vmem:[%s7240 + $0x358] sm:$0xff]
        %v7349 = vld [vmem:[%s7240 + $0x360] sm:$0xff]
        %v7350 = vld [vmem:[%s7240 + $0x368] sm:$0xff]
        %v7351 = vld [vmem:[%s7240 + $0x370] sm:$0xff]
        %v7352 = vld [vmem:[%s7240 + $0x378] sm:$0xff]
        %v7353 = vld [vmem:[%s7240 + $0x380] sm:$0xff]
        %v7354 = vld [vmem:[%s7240 + $0x388] sm:$0xff]
        %v7355 = vld [vmem:[%s7240 + $0x390] sm:$0xff]
        %v7356 = vld [vmem:[%s7240 + $0x398] sm:$0xff]
        %v7357 = vld [vmem:[%s7240 + $0x3a0] sm:$0xff]
        %v7358 = vld [vmem:[%s7240 + $0x3a8] sm:$0xff]
        %v7359 = vld [vmem:[%s7240 + $0x3b0] sm:$0xff]
        %v7360 = vld [vmem:[%s7240 + $0x3b8] sm:$0xff]
        %v7361 = vld [vmem:[%s7240 + $0x3c0] sm:$0xff]
        %v7362 = vld [vmem:[%s7240 + $0x3c8] sm:$0xff]
        %v7363 = vld [vmem:[%s7240 + $0x3d0] sm:$0xff]
        %v7364 = vld [vmem:[%s7240 + $0x3d8] sm:$0xff]
        %v7365 = vld [vmem:[%s7240 + $0x3e0] sm:$0xff]
        %v7366 = vld [vmem:[%s7240 + $0x3e8] sm:$0xff]
        %v7367 = vld [vmem:[%s7240 + $0x3f0] sm:$0xff]
        %v7368 = vld [vmem:[%s7240 + $0x3f8] sm:$0xff]
        %v7369 = vld [vmem:[%s7240 + $0x400] sm:$0xff]
        %v7370 = vld [vmem:[%s7240 + $0x408] sm:$0xff]
        %v7371 = vld [vmem:[%s7240 + $0x410] sm:$0xff]
        %v7372 = vld [vmem:[%s7240 + $0x418] sm:$0xff]
        %v7373 = vld [vmem:[%s7240 + $0x420] sm:$0xff]
        %v7374 = vld [vmem:[%s7240 + $0x428] sm:$0xff]
        %v7375 = vld [vmem:[%s7240 + $0x430] sm:$0xff]
        %v7376 = vld [vmem:[%s7240 + $0x438] sm:$0xff]
        %v7377 = vld [vmem:[%s7240 + $0x440] sm:$0xff]
        %v7378 = vld [vmem:[%s7240 + $0x448] sm:$0xff]
        %v7379 = vld [vmem:[%s7240 + $0x450] sm:$0xff]
        %v7380 = vld [vmem:[%s7240 + $0x458] sm:$0xff]
        %v7381 = vld [vmem:[%s7240 + $0x460] sm:$0xff]
        %v7382 = vld [vmem:[%s7240 + $0x468] sm:$0xff]
        %v7383 = vld [vmem:[%s7240 + $0x470] sm:$0xff]
        %v7384 = vld [vmem:[%s7240 + $0x478] sm:$0xff]
        %v7529 = vunpack.c.l.b16 %v7241
        %v7530 = vunpack.c.h.b16 %v7241
        %v7531 = vunpack.c.l.b16 %v7242
        %v7532 = vunpack.c.h.b16 %v7242
        %v7533 = vunpack.c.l.b16 %v7243
        %v7534 = vunpack.c.h.b16 %v7243
        %v7535 = vunpack.c.l.b16 %v7244
        %v7536 = vunpack.c.h.b16 %v7244
        %v7537 = vunpack.c.l.b16 %v7245
        %v7538 = vunpack.c.h.b16 %v7245
        %v7539 = vunpack.c.l.b16 %v7246
        %v7540 = vunpack.c.h.b16 %v7246
        %v7541 = vunpack.c.l.b16 %v7247
        %v7542 = vunpack.c.h.b16 %v7247
        %v7543 = vunpack.c.l.b16 %v7248
        %v7544 = vunpack.c.h.b16 %v7248
        %v7545 = vunpack.c.l.b16 %v7249
        %v7546 = vunpack.c.h.b16 %v7249
        %v7547 = vunpack.c.l.b16 %v7250
        %v7548 = vunpack.c.h.b16 %v7250
        %v7549 = vunpack.c.l.b16 %v7251
        %v7550 = vunpack.c.h.b16 %v7251
        %v7551 = vunpack.c.l.b16 %v7252
        %v7552 = vunpack.c.h.b16 %v7252
        %v7553 = vunpack.c.l.b16 %v7253
        %v7554 = vunpack.c.h.b16 %v7253
        %v7555 = vunpack.c.l.b16 %v7254
        %v7556 = vunpack.c.h.b16 %v7254
        %v7557 = vunpack.c.l.b16 %v7255
        %v7558 = vunpack.c.h.b16 %v7255
        %v7559 = vunpack.c.l.b16 %v7256
        %v7560 = vunpack.c.h.b16 %v7256
        %v7561 = vunpack.c.l.b16 %v7257
        %v7562 = vunpack.c.h.b16 %v7257
        %v7563 = vunpack.c.l.b16 %v7258
        %v7564 = vunpack.c.h.b16 %v7258
        %v7565 = vunpack.c.l.b16 %v7259
        %v7566 = vunpack.c.h.b16 %v7259
        %v7567 = vunpack.c.l.b16 %v7260
        %v7568 = vunpack.c.h.b16 %v7260
        %v7569 = vunpack.c.l.b16 %v7261
        %v7570 = vunpack.c.h.b16 %v7261
        %v7571 = vunpack.c.l.b16 %v7262
        %v7572 = vunpack.c.h.b16 %v7262
        %v7573 = vunpack.c.l.b16 %v7263
        %v7574 = vunpack.c.h.b16 %v7263
        %v7575 = vunpack.c.l.b16 %v7264
        %v7576 = vunpack.c.h.b16 %v7264
        %v7577 = vunpack.c.l.b16 %v7265
        %v7578 = vunpack.c.h.b16 %v7265
        %v7579 = vunpack.c.l.b16 %v7266
        %v7580 = vunpack.c.h.b16 %v7266
        %v7581 = vunpack.c.l.b16 %v7267
        %v7582 = vunpack.c.h.b16 %v7267
        %v7583 = vunpack.c.l.b16 %v7268
        %v7584 = vunpack.c.h.b16 %v7268
        %v7585 = vunpack.c.l.b16 %v7269
        %v7586 = vunpack.c.h.b16 %v7269
        %v7587 = vunpack.c.l.b16 %v7270
        %v7588 = vunpack.c.h.b16 %v7270
        %v7589 = vunpack.c.l.b16 %v7271
        %v7590 = vunpack.c.h.b16 %v7271
        %v7591 = vunpack.c.l.b16 %v7272
        %v7592 = vunpack.c.h.b16 %v7272
        %v7593 = vunpack.c.l.b16 %v7273
        %v7594 = vunpack.c.h.b16 %v7273
        %v7595 = vunpack.c.l.b16 %v7274
        %v7596 = vunpack.c.h.b16 %v7274
        %v7597 = vunpack.c.l.b16 %v7275
        %v7598 = vunpack.c.h.b16 %v7275
        %v7599 = vunpack.c.l.b16 %v7276
        %v7600 = vunpack.c.h.b16 %v7276
        %v7601 = vunpack.c.l.b16 %v7277
        %v7602 = vunpack.c.h.b16 %v7277
        %v7603 = vunpack.c.l.b16 %v7278
        %v7604 = vunpack.c.h.b16 %v7278
        %v7605 = vunpack.c.l.b16 %v7279
        %v7606 = vunpack.c.h.b16 %v7279
        %v7607 = vunpack.c.l.b16 %v7280
        %v7608 = vunpack.c.h.b16 %v7280
        %v7609 = vunpack.c.l.b16 %v7281
        %v7610 = vunpack.c.h.b16 %v7281
        %v7611 = vunpack.c.l.b16 %v7282
        %v7612 = vunpack.c.h.b16 %v7282
        %v7613 = vunpack.c.l.b16 %v7283
        %v7614 = vunpack.c.h.b16 %v7283
        %v7615 = vunpack.c.l.b16 %v7284
        %v7616 = vunpack.c.h.b16 %v7284
        %v7617 = vunpack.c.l.b16 %v7285
        %v7618 = vunpack.c.h.b16 %v7285
        %v7619 = vunpack.c.l.b16 %v7286
        %v7620 = vunpack.c.h.b16 %v7286
        %v7621 = vunpack.c.l.b16 %v7287
        %v7622 = vunpack.c.h.b16 %v7287
        %v7623 = vunpack.c.l.b16 %v7288
        %v7624 = vunpack.c.h.b16 %v7288
        %v7625 = vunpack.c.l.b16 %v7289
        %v7626 = vunpack.c.h.b16 %v7289
        %v7627 = vunpack.c.l.b16 %v7290
        %v7628 = vunpack.c.h.b16 %v7290
        %v7629 = vunpack.c.l.b16 %v7291
        %v7630 = vunpack.c.h.b16 %v7291
        %v7631 = vunpack.c.l.b16 %v7292
        %v7632 = vunpack.c.h.b16 %v7292
        %v7633 = vunpack.c.l.b16 %v7293
        %v7634 = vunpack.c.h.b16 %v7293
        %v7635 = vunpack.c.l.b16 %v7294
        %v7636 = vunpack.c.h.b16 %v7294
        %v7637 = vunpack.c.l.b16 %v7295
        %v7638 = vunpack.c.h.b16 %v7295
        %v7639 = vunpack.c.l.b16 %v7296
        %v7640 = vunpack.c.h.b16 %v7296
        %v7641 = vunpack.c.l.b16 %v7297
        %v7642 = vunpack.c.h.b16 %v7297
        %v7643 = vunpack.c.l.b16 %v7298
        %v7644 = vunpack.c.h.b16 %v7298
        %v7645 = vunpack.c.l.b16 %v7299
        %v7646 = vunpack.c.h.b16 %v7299
        %v7647 = vunpack.c.l.b16 %v7300
        %v7648 = vunpack.c.h.b16 %v7300
        %v7649 = vunpack.c.l.b16 %v7301
        %v7650 = vunpack.c.h.b16 %v7301
        %v7651 = vunpack.c.l.b16 %v7302
        %v7652 = vunpack.c.h.b16 %v7302
        %v7653 = vunpack.c.l.b16 %v7303
        %v7654 = vunpack.c.h.b16 %v7303
        %v7655 = vunpack.c.l.b16 %v7304
        %v7656 = vunpack.c.h.b16 %v7304
        %v7657 = vunpack.c.l.b16 %v7305
        %v7658 = vunpack.c.h.b16 %v7305
        %v7659 = vunpack.c.l.b16 %v7306
        %v7660 = vunpack.c.h.b16 %v7306
        %v7661 = vunpack.c.l.b16 %v7307
        %v7662 = vunpack.c.h.b16 %v7307
        %v7663 = vunpack.c.l.b16 %v7308
        %v7664 = vunpack.c.h.b16 %v7308
        %v7665 = vunpack.c.l.b16 %v7309
        %v7666 = vunpack.c.h.b16 %v7309
        %v7667 = vunpack.c.l.b16 %v7310
        %v7668 = vunpack.c.h.b16 %v7310
        %v7669 = vunpack.c.l.b16 %v7311
        %v7670 = vunpack.c.h.b16 %v7311
        %v7671 = vunpack.c.l.b16 %v7312
        %v7672 = vunpack.c.h.b16 %v7312
        %v7673 = vunpack.c.l.b16 %v7313
        %v7674 = vunpack.c.h.b16 %v7313
        %v7675 = vunpack.c.l.b16 %v7314
        %v7676 = vunpack.c.h.b16 %v7314
        %v7677 = vunpack.c.l.b16 %v7315
        %v7678 = vunpack.c.h.b16 %v7315
        %v7679 = vunpack.c.l.b16 %v7316
        %v7680 = vunpack.c.h.b16 %v7316
        %v7681 = vunpack.c.l.b16 %v7317
        %v7682 = vunpack.c.h.b16 %v7317
        %v7683 = vunpack.c.l.b16 %v7318
        %v7684 = vunpack.c.h.b16 %v7318
        %v7685 = vunpack.c.l.b16 %v7319
        %v7686 = vunpack.c.h.b16 %v7319
        %v7687 = vunpack.c.l.b16 %v7320
        %v7688 = vunpack.c.h.b16 %v7320
        %v7689 = vunpack.c.l.b16 %v7321
        %v7690 = vunpack.c.h.b16 %v7321
        %v7691 = vunpack.c.l.b16 %v7322
        %v7692 = vunpack.c.h.b16 %v7322
        %v7693 = vunpack.c.l.b16 %v7323
        %v7694 = vunpack.c.h.b16 %v7323
        %v7695 = vunpack.c.l.b16 %v7324
        %v7696 = vunpack.c.h.b16 %v7324
        %v7697 = vunpack.c.l.b16 %v7325
        %v7698 = vunpack.c.h.b16 %v7325
        %v7699 = vunpack.c.l.b16 %v7326
        %v7700 = vunpack.c.h.b16 %v7326
        %v7701 = vunpack.c.l.b16 %v7327
        %v7702 = vunpack.c.h.b16 %v7327
        %v7703 = vunpack.c.l.b16 %v7328
        %v7704 = vunpack.c.h.b16 %v7328
        %v7705 = vunpack.c.l.b16 %v7329
        %v7706 = vunpack.c.h.b16 %v7329
        %v7707 = vunpack.c.l.b16 %v7330
        %v7708 = vunpack.c.h.b16 %v7330
        %v7709 = vunpack.c.l.b16 %v7331
        %v7710 = vunpack.c.h.b16 %v7331
        %v7711 = vunpack.c.l.b16 %v7332
        %v7712 = vunpack.c.h.b16 %v7332
        %v7713 = vunpack.c.l.b16 %v7333
        %v7714 = vunpack.c.h.b16 %v7333
        %v7715 = vunpack.c.l.b16 %v7334
        %v7716 = vunpack.c.h.b16 %v7334
        %v7717 = vunpack.c.l.b16 %v7335
        %v7718 = vunpack.c.h.b16 %v7335
        %v7719 = vunpack.c.l.b16 %v7336
        %v7720 = vunpack.c.h.b16 %v7336
        %v7721 = vunpack.c.l.b16 %v7337
        %v7722 = vunpack.c.h.b16 %v7337
        %v7723 = vunpack.c.l.b16 %v7338
        %v7724 = vunpack.c.h.b16 %v7338
        %v7725 = vunpack.c.l.b16 %v7339
        %v7726 = vunpack.c.h.b16 %v7339
        %v7727 = vunpack.c.l.b16 %v7340
        %v7728 = vunpack.c.h.b16 %v7340
        %v7729 = vunpack.c.l.b16 %v7341
        %v7730 = vunpack.c.h.b16 %v7341
        %v7731 = vunpack.c.l.b16 %v7342
        %v7732 = vunpack.c.h.b16 %v7342
        %v7733 = vunpack.c.l.b16 %v7343
        %v7734 = vunpack.c.h.b16 %v7343
        %v7735 = vunpack.c.l.b16 %v7344
        %v7736 = vunpack.c.h.b16 %v7344
        %v7737 = vunpack.c.l.b16 %v7345
        %v7738 = vunpack.c.h.b16 %v7345
        %v7739 = vunpack.c.l.b16 %v7346
        %v7740 = vunpack.c.h.b16 %v7346
        %v7741 = vunpack.c.l.b16 %v7347
        %v7742 = vunpack.c.h.b16 %v7347
        %v7743 = vunpack.c.l.b16 %v7348
        %v7744 = vunpack.c.h.b16 %v7348
        %v7745 = vunpack.c.l.b16 %v7349
        %v7746 = vunpack.c.h.b16 %v7349
        %v7747 = vunpack.c.l.b16 %v7350
        %v7748 = vunpack.c.h.b16 %v7350
        %v7749 = vunpack.c.l.b16 %v7351
        %v7750 = vunpack.c.h.b16 %v7351
        %v7751 = vunpack.c.l.b16 %v7352
        %v7752 = vunpack.c.h.b16 %v7352
        %v7753 = vunpack.c.l.b16 %v7353
        %v7754 = vunpack.c.h.b16 %v7353
        %v7755 = vunpack.c.l.b16 %v7354
        %v7756 = vunpack.c.h.b16 %v7354
        %v7757 = vunpack.c.l.b16 %v7355
        %v7758 = vunpack.c.h.b16 %v7355
        %v7759 = vunpack.c.l.b16 %v7356
        %v7760 = vunpack.c.h.b16 %v7356
        %v7761 = vunpack.c.l.b16 %v7357
        %v7762 = vunpack.c.h.b16 %v7357
        %v7763 = vunpack.c.l.b16 %v7358
        %v7764 = vunpack.c.h.b16 %v7358
        %v7765 = vunpack.c.l.b16 %v7359
        %v7766 = vunpack.c.h.b16 %v7359
        %v7767 = vunpack.c.l.b16 %v7360
        %v7768 = vunpack.c.h.b16 %v7360
        %v7769 = vunpack.c.l.b16 %v7361
        %v7770 = vunpack.c.h.b16 %v7361
        %v7771 = vunpack.c.l.b16 %v7362
        %v7772 = vunpack.c.h.b16 %v7362
        %v7773 = vunpack.c.l.b16 %v7363
        %v7774 = vunpack.c.h.b16 %v7363
        %v7775 = vunpack.c.l.b16 %v7364
        %v7776 = vunpack.c.h.b16 %v7364
        %v7777 = vunpack.c.l.b16 %v7365
        %v7778 = vunpack.c.h.b16 %v7365
        %v7779 = vunpack.c.l.b16 %v7366
        %v7780 = vunpack.c.h.b16 %v7366
        %v7781 = vunpack.c.l.b16 %v7367
        %v7782 = vunpack.c.h.b16 %v7367
        %v7783 = vunpack.c.l.b16 %v7368
        %v7784 = vunpack.c.h.b16 %v7368
        %v7785 = vunpack.c.l.b16 %v7369
        %v7786 = vunpack.c.h.b16 %v7369
        %v7787 = vunpack.c.l.b16 %v7370
        %v7788 = vunpack.c.h.b16 %v7370
        %v7789 = vunpack.c.l.b16 %v7371
        %v7790 = vunpack.c.h.b16 %v7371
        %v7791 = vunpack.c.l.b16 %v7372
        %v7792 = vunpack.c.h.b16 %v7372
        %v7793 = vunpack.c.l.b16 %v7373
        %v7794 = vunpack.c.h.b16 %v7373
        %v7795 = vunpack.c.l.b16 %v7374
        %v7796 = vunpack.c.h.b16 %v7374
        %v7797 = vunpack.c.l.b16 %v7375
        %v7798 = vunpack.c.h.b16 %v7375
        %v7799 = vunpack.c.l.b16 %v7376
        %v7800 = vunpack.c.h.b16 %v7376
        %v7801 = vunpack.c.l.b16 %v7377
        %v7802 = vunpack.c.h.b16 %v7377
        %v7803 = vunpack.c.l.b16 %v7378
        %v7804 = vunpack.c.h.b16 %v7378
        %v7805 = vunpack.c.l.b16 %v7379
        %v7806 = vunpack.c.h.b16 %v7379
        %v7807 = vunpack.c.l.b16 %v7380
        %v7808 = vunpack.c.h.b16 %v7380
        %v7809 = vunpack.c.l.b16 %v7381
        %v7810 = vunpack.c.h.b16 %v7381
        %v7811 = vunpack.c.l.b16 %v7382
        %v7812 = vunpack.c.h.b16 %v7382
        %v7813 = vunpack.c.l.b16 %v7383
        %v7814 = vunpack.c.h.b16 %v7383
        %v7815 = vunpack.c.l.b16 %v7384
        %v7816 = vunpack.c.h.b16 %v7384
        %v7817 = vpack.c.b16 %v7535, %v7529
        %v7818 = vpack.c.b16 %v7536, %v7530
        %v7819 = vpack.c.b16 %v7537, %v7531
        %v7820 = vpack.c.b16 %v7538, %v7532
        %v7821 = vpack.c.b16 %v7539, %v7533
        %v7822 = vpack.c.b16 %v7540, %v7534
        %v7823 = vpack.c.b16 %v7547, %v7541
        %v7824 = vpack.c.b16 %v7548, %v7542
        %v7825 = vpack.c.b16 %v7549, %v7543
        %v7826 = vpack.c.b16 %v7550, %v7544
        %v7827 = vpack.c.b16 %v7551, %v7545
        %v7828 = vpack.c.b16 %v7552, %v7546
        %v7829 = vpack.c.b16 %v7559, %v7553
        %v7830 = vpack.c.b16 %v7560, %v7554
        %v7831 = vpack.c.b16 %v7561, %v7555
        %v7832 = vpack.c.b16 %v7562, %v7556
        %v7833 = vpack.c.b16 %v7563, %v7557
        %v7834 = vpack.c.b16 %v7564, %v7558
        %v7835 = vpack.c.b16 %v7571, %v7565
        %v7836 = vpack.c.b16 %v7572, %v7566
        %v7837 = vpack.c.b16 %v7573, %v7567
        %v7838 = vpack.c.b16 %v7574, %v7568
        %v7839 = vpack.c.b16 %v7575, %v7569
        %v7840 = vpack.c.b16 %v7576, %v7570
        %v7841 = vpack.c.b16 %v7583, %v7577
        %v7842 = vpack.c.b16 %v7584, %v7578
        %v7843 = vpack.c.b16 %v7585, %v7579
        %v7844 = vpack.c.b16 %v7586, %v7580
        %v7845 = vpack.c.b16 %v7587, %v7581
        %v7846 = vpack.c.b16 %v7588, %v7582
        %v7847 = vpack.c.b16 %v7595, %v7589
        %v7848 = vpack.c.b16 %v7596, %v7590
        %v7849 = vpack.c.b16 %v7597, %v7591
        %v7850 = vpack.c.b16 %v7598, %v7592
        %v7851 = vpack.c.b16 %v7599, %v7593
        %v7852 = vpack.c.b16 %v7600, %v7594
        %v7853 = vpack.c.b16 %v7607, %v7601
        %v7854 = vpack.c.b16 %v7608, %v7602
        %v7855 = vpack.c.b16 %v7609, %v7603
        %v7856 = vpack.c.b16 %v7610, %v7604
        %v7857 = vpack.c.b16 %v7611, %v7605
        %v7858 = vpack.c.b16 %v7612, %v7606
        %v7859 = vpack.c.b16 %v7619, %v7613
        %v7860 = vpack.c.b16 %v7620, %v7614
        %v7861 = vpack.c.b16 %v7621, %v7615
        %v7862 = vpack.c.b16 %v7622, %v7616
        %v7863 = vpack.c.b16 %v7623, %v7617
        %v7864 = vpack.c.b16 %v7624, %v7618
        %v7865 = vpack.c.b16 %v7631, %v7625
        %v7866 = vpack.c.b16 %v7632, %v7626
        %v7867 = vpack.c.b16 %v7633, %v7627
        %v7868 = vpack.c.b16 %v7634, %v7628
        %v7869 = vpack.c.b16 %v7635, %v7629
        %v7870 = vpack.c.b16 %v7636, %v7630
        %v7871 = vpack.c.b16 %v7643, %v7637
        %v7872 = vpack.c.b16 %v7644, %v7638
        %v7873 = vpack.c.b16 %v7645, %v7639
        %v7874 = vpack.c.b16 %v7646, %v7640
        %v7875 = vpack.c.b16 %v7647, %v7641
        %v7876 = vpack.c.b16 %v7648, %v7642
        %v7877 = vpack.c.b16 %v7655, %v7649
        %v7878 = vpack.c.b16 %v7656, %v7650
        %v7879 = vpack.c.b16 %v7657, %v7651
        %v7880 = vpack.c.b16 %v7658, %v7652
        %v7881 = vpack.c.b16 %v7659, %v7653
        %v7882 = vpack.c.b16 %v7660, %v7654
        %v7883 = vpack.c.b16 %v7667, %v7661
        %v7884 = vpack.c.b16 %v7668, %v7662
        %v7885 = vpack.c.b16 %v7669, %v7663
        %v7886 = vpack.c.b16 %v7670, %v7664
        %v7887 = vpack.c.b16 %v7671, %v7665
        %v7888 = vpack.c.b16 %v7672, %v7666
        %v7889 = vpack.c.b16 %v7679, %v7673
        %v7890 = vpack.c.b16 %v7680, %v7674
        %v7891 = vpack.c.b16 %v7681, %v7675
        %v7892 = vpack.c.b16 %v7682, %v7676
        %v7893 = vpack.c.b16 %v7683, %v7677
        %v7894 = vpack.c.b16 %v7684, %v7678
        %v7895 = vpack.c.b16 %v7691, %v7685
        %v7896 = vpack.c.b16 %v7692, %v7686
        %v7897 = vpack.c.b16 %v7693, %v7687
        %v7898 = vpack.c.b16 %v7694, %v7688
        %v7899 = vpack.c.b16 %v7695, %v7689
        %v7900 = vpack.c.b16 %v7696, %v7690
        %v7901 = vpack.c.b16 %v7703, %v7697
        %v7902 = vpack.c.b16 %v7704, %v7698
        %v7903 = vpack.c.b16 %v7705, %v7699
        %v7904 = vpack.c.b16 %v7706, %v7700
        %v7905 = vpack.c.b16 %v7707, %v7701
        %v7906 = vpack.c.b16 %v7708, %v7702
        %v7907 = vpack.c.b16 %v7715, %v7709
        %v7908 = vpack.c.b16 %v7716, %v7710
        %v7909 = vpack.c.b16 %v7717, %v7711
        %v7910 = vpack.c.b16 %v7718, %v7712
        %v7911 = vpack.c.b16 %v7719, %v7713
        %v7912 = vpack.c.b16 %v7720, %v7714
        %v7913 = vpack.c.b16 %v7727, %v7721
        %v7914 = vpack.c.b16 %v7728, %v7722
        %v7915 = vpack.c.b16 %v7729, %v7723
        %v7916 = vpack.c.b16 %v7730, %v7724
        %v7917 = vpack.c.b16 %v7731, %v7725
        %v7918 = vpack.c.b16 %v7732, %v7726
        %v7919 = vpack.c.b16 %v7739, %v7733
        %v7920 = vpack.c.b16 %v7740, %v7734
        %v7921 = vpack.c.b16 %v7741, %v7735
        %v7922 = vpack.c.b16 %v7742, %v7736
        %v7923 = vpack.c.b16 %v7743, %v7737
        %v7924 = vpack.c.b16 %v7744, %v7738
        %v7925 = vpack.c.b16 %v7751, %v7745
        %v7926 = vpack.c.b16 %v7752, %v7746
        %v7927 = vpack.c.b16 %v7753, %v7747
        %v7928 = vpack.c.b16 %v7754, %v7748
        %v7929 = vpack.c.b16 %v7755, %v7749
        %v7930 = vpack.c.b16 %v7756, %v7750
        %v7931 = vpack.c.b16 %v7763, %v7757
        %v7932 = vpack.c.b16 %v7764, %v7758
        %v7933 = vpack.c.b16 %v7765, %v7759
        %v7934 = vpack.c.b16 %v7766, %v7760
        %v7935 = vpack.c.b16 %v7767, %v7761
        %v7936 = vpack.c.b16 %v7768, %v7762
        %v7937 = vpack.c.b16 %v7775, %v7769
        %v7938 = vpack.c.b16 %v7776, %v7770
        %v7939 = vpack.c.b16 %v7777, %v7771
        %v7940 = vpack.c.b16 %v7778, %v7772
        %v7941 = vpack.c.b16 %v7779, %v7773
        %v7942 = vpack.c.b16 %v7780, %v7774
        %v7943 = vpack.c.b16 %v7787, %v7781
        %v7944 = vpack.c.b16 %v7788, %v7782
        %v7945 = vpack.c.b16 %v7789, %v7783
        %v7946 = vpack.c.b16 %v7790, %v7784
        %v7947 = vpack.c.b16 %v7791, %v7785
        %v7948 = vpack.c.b16 %v7792, %v7786
        %v7949 = vpack.c.b16 %v7799, %v7793
        %v7950 = vpack.c.b16 %v7800, %v7794
        %v7951 = vpack.c.b16 %v7801, %v7795
        %v7952 = vpack.c.b16 %v7802, %v7796
        %v7953 = vpack.c.b16 %v7803, %v7797
        %v7954 = vpack.c.b16 %v7804, %v7798
        %v7955 = vpack.c.b16 %v7811, %v7805
        %v7956 = vpack.c.b16 %v7812, %v7806
        %v7957 = vpack.c.b16 %v7813, %v7807
        %v7958 = vpack.c.b16 %v7814, %v7808
        %v7959 = vpack.c.b16 %v7815, %v7809
        %v7960 = vpack.c.b16 %v7816, %v7810
        %8105 = vmatprep.subr.bf16.mxu0 %v7818
        %8106 = vmatpush1.bf16.msra.mxu0 %v7817
        %8107 = vmatprep.subr.bf16.mxu0 %v7824
        %8108 = vmatpush1.bf16.msra.mxu0 %v7823
        %8109 = vmatprep.subr.bf16.mxu0 %v7830
        %8110 = vmatpush1.bf16.msra.mxu0 %v7829
        %8111 = vmatprep.subr.bf16.mxu0 %v7836
        %8112 = vmatpush1.bf16.msra.mxu0 %v7835
        %8113 = vmatprep.subr.bf16.mxu0 %v7842
        %8114 = vmatpush1.bf16.msra.mxu0 %v7841
        %8115 = vmatprep.subr.bf16.mxu0 %v7848
        %8116 = vmatpush1.bf16.msra.mxu0 %v7847
        %8117 = vmatprep.subr.bf16.mxu0 %v7854
        %8118 = vmatpush1.bf16.msra.mxu0 %v7853
        %8119 = vmatprep.subr.bf16.mxu0 %v7860
        %8120 = vmatpush1.bf16.msra.mxu0 %v7859
        %8121 = vmatprep.subr.bf16.mxu0 %v7866
        %8122 = vmatpush1.bf16.msra.mxu0 %v7865
        %8123 = vmatprep.subr.bf16.mxu0 %v7872
        %8124 = vmatpush1.bf16.msra.mxu0 %v7871
        %8125 = vmatprep.subr.bf16.mxu0 %v7878
        %8126 = vmatpush1.bf16.msra.mxu0 %v7877
        %8127 = vmatprep.subr.bf16.mxu0 %v7884
        %8128 = vmatpush1.bf16.msra.mxu0 %v7883
        %8129 = vmatprep.subr.bf16.mxu0 %v7890
        %8130 = vmatpush1.bf16.msra.mxu0 %v7889
        %8131 = vmatprep.subr.bf16.mxu0 %v7896
        %8132 = vmatpush1.bf16.msra.mxu0 %v7895
        %8133 = vmatprep.subr.bf16.mxu0 %v7902
        %8134 = vmatpush1.bf16.msra.mxu0 %v7901
        %8135 = vmatprep.subr.bf16.mxu0 %v7908
        %8136 = vmatpush1.bf16.msra.mxu0 %v7907
        %8137 = vmatprep.mubr.bf16.mxu0 %v7238
        %8138 = vmatmul.mubr.bf16.gmra.mrb[0].mxu0 %v7237
        %v8139 = vpop.f32.mrb[0].mxu0
        %v8140 = vadd.f32 0.0, %v8139
        %v8141 = vpop.f32.mrb[0].mxu0
        %v8142 = vadd.f32 0.0, %v8141
        %v8143 = vpop.f32.mrb[0].mxu0
        %v8144 = vpop.f32.mrb[0].mxu0
        %8145 = vdwg.mxu0
        %8146 = vmatprep.subr.bf16.mxu0 %v7914
        %8147 = vmatpush1.bf16.msra.mxu0 %v7913
        %8148 = vmatprep.subr.bf16.mxu0 %v7920
        %8149 = vmatpush1.bf16.msra.mxu0 %v7919
        %8150 = vmatprep.subr.bf16.mxu0 %v7926
        %8151 = vmatpush1.bf16.msra.mxu0 %v7925
        %8152 = vmatprep.subr.bf16.mxu0 %v7932
        %8153 = vmatpush1.bf16.msra.mxu0 %v7931
        %8154 = vmatprep.subr.bf16.mxu0 %v7938
        %8155 = vmatpush1.bf16.msra.mxu0 %v7937
        %8156 = vmatprep.subr.bf16.mxu0 %v7944
        %8157 = vmatpush1.bf16.msra.mxu0 %v7943
        %8158 = vmatprep.subr.bf16.mxu0 %v7950
        %8159 = vmatpush1.bf16.msra.mxu0 %v7949
        %8160 = vmatprep.subr.bf16.mxu0 %v7956
        %8161 = vmatpush1.bf16.msra.mxu0 %v7955
        %8162 = vmatprep.subr.bf16.mxu0 0
        %8163 = vmatpush1.bf16.msra.mxu0 0
        %8164 = vmatprep.subr.bf16.mxu0 0
        %8165 = vmatpush1.bf16.msra.mxu0 0
        %8166 = vmatprep.subr.bf16.mxu0 0
        %8167 = vmatpush1.bf16.msra.mxu0 0
        %8168 = vmatprep.subr.bf16.mxu0 0
        %8169 = vmatpush1.bf16.msra.mxu0 0
        %8170 = vmatprep.subr.bf16.mxu0 0
        %8171 = vmatpush1.bf16.msra.mxu0 0
        %8172 = vmatprep.subr.bf16.mxu0 0
        %8173 = vmatpush1.bf16.msra.mxu0 0
        %8174 = vmatprep.subr.bf16.mxu0 0
        %8175 = vmatpush1.bf16.msra.mxu0 0
        %8176 = vmatprep.subr.bf16.mxu0 0
        %8177 = vmatpush1.bf16.msra.mxu0 0
        %8178 = vmatprep.mubr.bf16.mxu0 0
        %8179 = vmatmul.mubr.bf16.gmra.mrb[0].mxu0 %v7239
        %v8180 = vpop.f32.mrb[0].mxu0
        %v8181 = vadd.f32 %v8140, %v8180
        %v8182 = vpop.f32.mrb[0].mxu0
        %v8183 = vadd.f32 %v8142, %v8182
        %v8184 = vpop.f32.mrb[0].mxu0
        %v8185 = vpop.f32.mrb[0].mxu0
        %8186 = vdwg.mxu0
        %8187 = vmatprep.subr.bf16.mxu0 %v7820
        %8188 = vmatpush1.bf16.msra.mxu0 %v7819
        %8189 = vmatprep.subr.bf16.mxu0 %v7826
        %8190 = vmatpush1.bf16.msra.mxu0 %v7825
        %8191 = vmatprep.subr.bf16.mxu0 %v7832
        %8192 = vmatpush1.bf16.msra.mxu0 %v7831
        %8193 = vmatprep.subr.bf16.mxu0 %v7838
        %8194 = vmatpush1.bf16.msra.mxu0 %v7837
        %8195 = vmatprep.subr.bf16.mxu0 %v7844
        %8196 = vmatpush1.bf16.msra.mxu0 %v7843
        %8197 = vmatprep.subr.bf16.mxu0 %v7850
        %8198 = vmatpush1.bf16.msra.mxu0 %v7849
        %8199 = vmatprep.subr.bf16.mxu0 %v7856
        %8200 = vmatpush1.bf16.msra.mxu0 %v7855
        %8201 = vmatprep.subr.bf16.mxu0 %v7862
        %8202 = vmatpush1.bf16.msra.mxu0 %v7861
        %8203 = vmatprep.subr.bf16.mxu0 %v7868
        %8204 = vmatpush1.bf16.msra.mxu0 %v7867
        %8205 = vmatprep.subr.bf16.mxu0 %v7874
        %8206 = vmatpush1.bf16.msra.mxu0 %v7873
        %8207 = vmatprep.subr.bf16.mxu0 %v7880
        %8208 = vmatpush1.bf16.msra.mxu0 %v7879
        %8209 = vmatprep.subr.bf16.mxu0 %v7886
        %8210 = vmatpush1.bf16.msra.mxu0 %v7885
        %8211 = vmatprep.subr.bf16.mxu0 %v7892
        %8212 = vmatpush1.bf16.msra.mxu0 %v7891
        %8213 = vmatprep.subr.bf16.mxu0 %v7898
        %8214 = vmatpush1.bf16.msra.mxu0 %v7897
        %8215 = vmatprep.subr.bf16.mxu0 %v7904
        %8216 = vmatpush1.bf16.msra.mxu0 %v7903
        %8217 = vmatprep.subr.bf16.mxu0 %v7910
        %8218 = vmatpush1.bf16.msra.mxu0 %v7909
        %8219 = vmatprep.mubr.bf16.mxu0 %v7238
        %8220 = vmatmul.mubr.bf16.gmra.mrb[0].mxu0 %v7237
        %v8221 = vpop.f32.mrb[0].mxu0
        %v8222 = vadd.f32 0.0, %v8221
        %v8223 = vpop.f32.mrb[0].mxu0
        %v8224 = vadd.f32 0.0, %v8223
        %v8225 = vpop.f32.mrb[0].mxu0
        %v8226 = vpop.f32.mrb[0].mxu0
        %8227 = vdwg.mxu0
        %8228 = vmatprep.subr.bf16.mxu0 %v7916
        %8229 = vmatpush1.bf16.msra.mxu0 %v7915
        %8230 = vmatprep.subr.bf16.mxu0 %v7922
        %8231 = vmatpush1.bf16.msra.mxu0 %v7921
        %8232 = vmatprep.subr.bf16.mxu0 %v7928
        %8233 = vmatpush1.bf16.msra.mxu0 %v7927
        %8234 = vmatprep.subr.bf16.mxu0 %v7934
        %8235 = vmatpush1.bf16.msra.mxu0 %v7933
        %8236 = vmatprep.subr.bf16.mxu0 %v7940
        %8237 = vmatpush1.bf16.msra.mxu0 %v7939
        %8238 = vmatprep.subr.bf16.mxu0 %v7946
        %8239 = vmatpush1.bf16.msra.mxu0 %v7945
        %8240 = vmatprep.subr.bf16.mxu0 %v7952
        %8241 = vmatpush1.bf16.msra.mxu0 %v7951
        %8242 = vmatprep.subr.bf16.mxu0 %v7958
        %8243 = vmatpush1.bf16.msra.mxu0 %v7957
        %8244 = vmatprep.subr.bf16.mxu0 0
        %8245 = vmatpush1.bf16.msra.mxu0 0
        %8246 = vmatprep.subr.bf16.mxu0 0
        %8247 = vmatpush1.bf16.msra.mxu0 0
        %8248 = vmatprep.subr.bf16.mxu0 0
        %8249 = vmatpush1.bf16.msra.mxu0 0
        %8250 = vmatprep.subr.bf16.mxu0 0
        %8251 = vmatpush1.bf16.msra.mxu0 0
        %8252 = vmatprep.subr.bf16.mxu0 0
        %8253 = vmatpush1.bf16.msra.mxu0 0
        %8254 = vmatprep.subr.bf16.mxu0 0
        %8255 = vmatpush1.bf16.msra.mxu0 0
        %8256 = vmatprep.subr.bf16.mxu0 0
        %8257 = vmatpush1.bf16.msra.mxu0 0
        %8258 = vmatprep.subr.bf16.mxu0 0
        %8259 = vmatpush1.bf16.msra.mxu0 0
        %8260 = vmatprep.mubr.bf16.mxu0 0
        %8261 = vmatmul.mubr.bf16.gmra.mrb[0].mxu0 %v7239
        %v8262 = vpop.f32.mrb[0].mxu0
        %v8263 = vadd.f32 %v8222, %v8262
        %v8264 = vpop.f32.mrb[0].mxu0
        %v8265 = vadd.f32 %v8224, %v8264
        %v8266 = vpop.f32.mrb[0].mxu0
        %v8267 = vpop.f32.mrb[0].mxu0
        %8268 = vdwg.mxu0
        %8269 = vmatprep.subr.bf16.mxu0 %v7822
        %8270 = vmatpush1.bf16.msra.mxu0 %v7821
        %8271 = vmatprep.subr.bf16.mxu0 %v7828
        %8272 = vmatpush1.bf16.msra.mxu0 %v7827
        %8273 = vmatprep.subr.bf16.mxu0 %v7834
        %8274 = vmatpush1.bf16.msra.mxu0 %v7833
        %8275 = vmatprep.subr.bf16.mxu0 %v7840
        %8276 = vmatpush1.bf16.msra.mxu0 %v7839
        %8277 = vmatprep.subr.bf16.mxu0 %v7846
        %8278 = vmatpush1.bf16.msra.mxu0 %v7845
        %8279 = vmatprep.subr.bf16.mxu0 %v7852
        %8280 = vmatpush1.bf16.msra.mxu0 %v7851
        %8281 = vmatprep.subr.bf16.mxu0 %v7858
        %8282 = vmatpush1.bf16.msra.mxu0 %v7857
        %8283 = vmatprep.subr.bf16.mxu0 %v7864
        %8284 = vmatpush1.bf16.msra.mxu0 %v7863
        %8285 = vmatprep.subr.bf16.mxu0 %v7870
        %8286 = vmatpush1.bf16.msra.mxu0 %v7869
        %8287 = vmatprep.subr.bf16.mxu0 %v7876
        %8288 = vmatpush1.bf16.msra.mxu0 %v7875
        %8289 = vmatprep.subr.bf16.mxu0 %v7882
        %8290 = vmatpush1.bf16.msra.mxu0 %v7881
        %8291 = vmatprep.subr.bf16.mxu0 %v7888
        %8292 = vmatpush1.bf16.msra.mxu0 %v7887
        %8293 = vmatprep.subr.bf16.mxu0 %v7894
        %8294 = vmatpush1.bf16.msra.mxu0 %v7893
        %8295 = vmatprep.subr.bf16.mxu0 %v7900
        %8296 = vmatpush1.bf16.msra.mxu0 %v7899
        %8297 = vmatprep.subr.bf16.mxu0 %v7906
        %8298 = vmatpush1.bf16.msra.mxu0 %v7905
        %8299 = vmatprep.subr.bf16.mxu0 %v7912
        %8300 = vmatpush1.bf16.msra.mxu0 %v7911
        %8301 = vmatprep.mubr.bf16.mxu0 %v7238
        %8302 = vmatmul.mubr.bf16.gmra.mrb[0].mxu0 %v7237
        %v8303 = vpop.f32.mrb[0].mxu0
        %v8304 = vadd.f32 0.0, %v8303
        %v8305 = vpop.f32.mrb[0].mxu0
        %v8306 = vadd.f32 0.0, %v8305
        %v8307 = vpop.f32.mrb[0].mxu0
        %v8308 = vpop.f32.mrb[0].mxu0
        %8309 = vdwg.mxu0
        %8310 = vmatprep.subr.bf16.mxu0 %v7918
        %8311 = vmatpush1.bf16.msra.mxu0 %v7917
        %8312 = vmatprep.subr.bf16.mxu0 %v7924
        %8313 = vmatpush1.bf16.msra.mxu0 %v7923
        %8314 = vmatprep.subr.bf16.mxu0 %v7930
        %8315 = vmatpush1.bf16.msra.mxu0 %v7929
        %8316 = vmatprep.subr.bf16.mxu0 %v7936
        %8317 = vmatpush1.bf16.msra.mxu0 %v7935
        %8318 = vmatprep.subr.bf16.mxu0 %v7942
        %8319 = vmatpush1.bf16.msra.mxu0 %v7941
        %8320 = vmatprep.subr.bf16.mxu0 %v7948
        %8321 = vmatpush1.bf16.msra.mxu0 %v7947
        %8322 = vmatprep.subr.bf16.mxu0 %v7954
        %8323 = vmatpush1.bf16.msra.mxu0 %v7953
        %8324 = vmatprep.subr.bf16.mxu0 %v7960
        %8325 = vmatpush1.bf16.msra.mxu0 %v7959
        %8326 = vmatprep.subr.bf16.mxu0 0
        %8327 = vmatpush1.bf16.msra.mxu0 0
        %8328 = vmatprep.subr.bf16.mxu0 0
        %8329 = vmatpush1.bf16.msra.mxu0 0
        %8330 = vmatprep.subr.bf16.mxu0 0
        %8331 = vmatpush1.bf16.msra.mxu0 0
        %8332 = vmatprep.subr.bf16.mxu0 0
        %8333 = vmatpush1.bf16.msra.mxu0 0
        %8334 = vmatprep.subr.bf16.mxu0 0
        %8335 = vmatpush1.bf16.msra.mxu0 0
        %8336 = vmatprep.subr.bf16.mxu0 0
        %8337 = vmatpush1.bf16.msra.mxu0 0
        %8338 = vmatprep.subr.bf16.mxu0 0
        %8339 = vmatpush1.bf16.msra.mxu0 0
        %8340 = vmatprep.subr.bf16.mxu0 0
        %8341 = vmatpush1.bf16.msra.mxu0 0
        %8342 = vmatprep.mubr.bf16.mxu0 0
        %8343 = vmatmul.mubr.bf16.gmra.mrb[0].mxu0 %v7239
        %v8344 = vpop.f32.mrb[0].mxu0
        %v8345 = vadd.f32 %v8304, %v8344
        %v8346 = vpop.f32.mrb[0].mxu0
        %v8347 = vadd.f32 %v8306, %v8346
        %v8348 = vpop.f32.mrb[0].mxu0
        %v8349 = vpop.f32.mrb[0].mxu0
        %8350 = vdwg.mxu0
        %v8495 = vunpack.c.l.b16 %v7007
        %v8496 = vunpack.c.h.b16 %v7007
        %v8497 = vunpack.c.l.b16 %v7008
        %v8498 = vunpack.c.h.b16 %v7008
        %v8499 = vunpack.c.l.b16 %v7009
        %v8500 = vunpack.c.h.b16 %v7009
        %v8501 = vunpack.c.l.b16 %v7010
        %v8502 = vunpack.c.h.b16 %v7010
        %v8503 = vunpack.c.l.b16 %v7011
        %v8504 = vunpack.c.h.b16 %v7011
        %v8505 = vunpack.c.l.b16 %v7012
        %v8506 = vunpack.c.h.b16 %v7012
        %v8507 = vunpack.c.l.b16 %v7013
        %v8508 = vunpack.c.h.b16 %v7013
        %v8509 = vunpack.c.l.b16 %v7014
        %v8510 = vunpack.c.h.b16 %v7014
        %v8511 = vunpack.c.l.b16 %v7015
        %v8512 = vunpack.c.h.b16 %v7015
        %v8513 = vunpack.c.l.b16 %v7016
        %v8514 = vunpack.c.h.b16 %v7016
        %v8515 = vunpack.c.l.b16 %v7017
        %v8516 = vunpack.c.h.b16 %v7017
        %v8517 = vunpack.c.l.b16 %v7018
        %v8518 = vunpack.c.h.b16 %v7018
        %v8519 = vunpack.c.l.b16 %v7019
        %v8520 = vunpack.c.h.b16 %v7019
        %v8521 = vunpack.c.l.b16 %v7020
        %v8522 = vunpack.c.h.b16 %v7020
        %v8523 = vunpack.c.l.b16 %v7021
        %v8524 = vunpack.c.h.b16 %v7021
        %v8525 = vunpack.c.l.b16 %v7022
        %v8526 = vunpack.c.h.b16 %v7022
        %v8527 = vunpack.c.l.b16 %v7023
        %v8528 = vunpack.c.h.b16 %v7023
        %v8529 = vunpack.c.l.b16 %v7024
        %v8530 = vunpack.c.h.b16 %v7024
        %v8531 = vunpack.c.l.b16 %v7025
        %v8532 = vunpack.c.h.b16 %v7025
        %v8533 = vunpack.c.l.b16 %v7026
        %v8534 = vunpack.c.h.b16 %v7026
        %v8535 = vunpack.c.l.b16 %v7027
        %v8536 = vunpack.c.h.b16 %v7027
        %v8537 = vunpack.c.l.b16 %v7028
        %v8538 = vunpack.c.h.b16 %v7028
        %v8539 = vunpack.c.l.b16 %v7029
        %v8540 = vunpack.c.h.b16 %v7029
        %v8541 = vunpack.c.l.b16 %v7030
        %v8542 = vunpack.c.h.b16 %v7030
        %v8543 = vunpack.c.l.b16 %v7031
        %v8544 = vunpack.c.h.b16 %v7031
        %v8545 = vunpack.c.l.b16 %v7032
        %v8546 = vunpack.c.h.b16 %v7032
        %v8547 = vunpack.c.l.b16 %v7033
        %v8548 = vunpack.c.h.b16 %v7033
        %v8549 = vunpack.c.l.b16 %v7034
        %v8550 = vunpack.c.h.b16 %v7034
        %v8551 = vunpack.c.l.b16 %v7035
        %v8552 = vunpack.c.h.b16 %v7035
        %v8553 = vunpack.c.l.b16 %v7036
        %v8554 = vunpack.c.h.b16 %v7036
        %v8555 = vunpack.c.l.b16 %v7037
        %v8556 = vunpack.c.h.b16 %v7037
        %v8557 = vunpack.c.l.b16 %v7038
        %v8558 = vunpack.c.h.b16 %v7038
        %v8559 = vunpack.c.l.b16 %v7039
        %v8560 = vunpack.c.h.b16 %v7039
        %v8561 = vunpack.c.l.b16 %v7040
        %v8562 = vunpack.c.h.b16 %v7040
        %v8563 = vunpack.c.l.b16 %v7041
        %v8564 = vunpack.c.h.b16 %v7041
        %v8565 = vunpack.c.l.b16 %v7042
        %v8566 = vunpack.c.h.b16 %v7042
        %v8567 = vunpack.c.l.b16 %v7043
        %v8568 = vunpack.c.h.b16 %v7043
        %v8569 = vunpack.c.l.b16 %v7044
        %v8570 = vunpack.c.h.b16 %v7044
        %v8571 = vunpack.c.l.b16 %v7045
        %v8572 = vunpack.c.h.b16 %v7045
        %v8573 = vunpack.c.l.b16 %v7046
        %v8574 = vunpack.c.h.b16 %v7046
        %v8575 = vunpack.c.l.b16 %v7047
        %v8576 = vunpack.c.h.b16 %v7047
        %v8577 = vunpack.c.l.b16 %v7048
        %v8578 = vunpack.c.h.b16 %v7048
        %v8579 = vunpack.c.l.b16 %v7049
        %v8580 = vunpack.c.h.b16 %v7049
        %v8581 = vunpack.c.l.b16 %v7050
        %v8582 = vunpack.c.h.b16 %v7050
        %v8583 = vunpack.c.l.b16 %v7051
        %v8584 = vunpack.c.h.b16 %v7051
        %v8585 = vunpack.c.l.b16 %v7052
        %v8586 = vunpack.c.h.b16 %v7052
        %v8587 = vunpack.c.l.b16 %v7053
        %v8588 = vunpack.c.h.b16 %v7053
        %v8589 = vunpack.c.l.b16 %v7054
        %v8590 = vunpack.c.h.b16 %v7054
        %v8591 = vunpack.c.l.b16 %v7055
        %v8592 = vunpack.c.h.b16 %v7055
        %v8593 = vunpack.c.l.b16 %v7056
        %v8594 = vunpack.c.h.b16 %v7056
        %v8595 = vunpack.c.l.b16 %v7057
        %v8596 = vunpack.c.h.b16 %v7057
        %v8597 = vunpack.c.l.b16 %v7058
        %v8598 = vunpack.c.h.b16 %v7058
        %v8599 = vunpack.c.l.b16 %v7059
        %v8600 = vunpack.c.h.b16 %v7059
        %v8601 = vunpack.c.l.b16 %v7060
        %v8602 = vunpack.c.h.b16 %v7060
        %v8603 = vunpack.c.l.b16 %v7061
        %v8604 = vunpack.c.h.b16 %v7061
        %v8605 = vunpack.c.l.b16 %v7062
        %v8606 = vunpack.c.h.b16 %v7062
        %v8607 = vunpack.c.l.b16 %v7063
        %v8608 = vunpack.c.h.b16 %v7063
        %v8609 = vunpack.c.l.b16 %v7064
        %v8610 = vunpack.c.h.b16 %v7064
        %v8611 = vunpack.c.l.b16 %v7065
        %v8612 = vunpack.c.h.b16 %v7065
        %v8613 = vunpack.c.l.b16 %v7066
        %v8614 = vunpack.c.h.b16 %v7066
        %v8615 = vunpack.c.l.b16 %v7067
        %v8616 = vunpack.c.h.b16 %v7067
        %v8617 = vunpack.c.l.b16 %v7068
        %v8618 = vunpack.c.h.b16 %v7068
        %v8619 = vunpack.c.l.b16 %v7069
        %v8620 = vunpack.c.h.b16 %v7069
        %v8621 = vunpack.c.l.b16 %v7070
        %v8622 = vunpack.c.h.b16 %v7070
        %v8623 = vunpack.c.l.b16 %v7071
        %v8624 = vunpack.c.h.b16 %v7071
        %v8625 = vunpack.c.l.b16 %v7072
        %v8626 = vunpack.c.h.b16 %v7072
        %v8627 = vunpack.c.l.b16 %v7073
        %v8628 = vunpack.c.h.b16 %v7073
        %v8629 = vunpack.c.l.b16 %v7074
        %v8630 = vunpack.c.h.b16 %v7074
        %v8631 = vunpack.c.l.b16 %v7075
        %v8632 = vunpack.c.h.b16 %v7075
        %v8633 = vunpack.c.l.b16 %v7076
        %v8634 = vunpack.c.h.b16 %v7076
        %v8635 = vunpack.c.l.b16 %v7077
        %v8636 = vunpack.c.h.b16 %v7077
        %v8637 = vunpack.c.l.b16 %v7078
        %v8638 = vunpack.c.h.b16 %v7078
        %v8639 = vunpack.c.l.b16 %v7079
        %v8640 = vunpack.c.h.b16 %v7079
        %v8641 = vunpack.c.l.b16 %v7080
        %v8642 = vunpack.c.h.b16 %v7080
        %v8643 = vunpack.c.l.b16 %v7081
        %v8644 = vunpack.c.h.b16 %v7081
        %v8645 = vunpack.c.l.b16 %v7082
        %v8646 = vunpack.c.h.b16 %v7082
        %v8647 = vunpack.c.l.b16 %v7083
        %v8648 = vunpack.c.h.b16 %v7083
        %v8649 = vunpack.c.l.b16 %v7084
        %v8650 = vunpack.c.h.b16 %v7084
        %v8651 = vunpack.c.l.b16 %v7085
        %v8652 = vunpack.c.h.b16 %v7085
        %v8653 = vunpack.c.l.b16 %v7086
        %v8654 = vunpack.c.h.b16 %v7086
        %v8655 = vunpack.c.l.b16 %v7087
        %v8656 = vunpack.c.h.b16 %v7087
        %v8657 = vunpack.c.l.b16 %v7088
        %v8658 = vunpack.c.h.b16 %v7088
        %v8659 = vunpack.c.l.b16 %v7089
        %v8660 = vunpack.c.h.b16 %v7089
        %v8661 = vunpack.c.l.b16 %v7090
        %v8662 = vunpack.c.h.b16 %v7090
        %v8663 = vunpack.c.l.b16 %v7091
        %v8664 = vunpack.c.h.b16 %v7091
        %v8665 = vunpack.c.l.b16 %v7092
        %v8666 = vunpack.c.h.b16 %v7092
        %v8667 = vunpack.c.l.b16 %v7093
        %v8668 = vunpack.c.h.b16 %v7093
        %v8669 = vunpack.c.l.b16 %v7094
        %v8670 = vunpack.c.h.b16 %v7094
        %v8671 = vunpack.c.l.b16 %v7095
        %v8672 = vunpack.c.h.b16 %v7095
        %v8673 = vunpack.c.l.b16 %v7096
        %v8674 = vunpack.c.h.b16 %v7096
        %v8675 = vunpack.c.l.b16 %v7097
        %v8676 = vunpack.c.h.b16 %v7097
        %v8677 = vunpack.c.l.b16 %v7098
        %v8678 = vunpack.c.h.b16 %v7098
        %v8679 = vunpack.c.l.b16 %v7099
        %v8680 = vunpack.c.h.b16 %v7099
        %v8681 = vunpack.c.l.b16 %v7100
        %v8682 = vunpack.c.h.b16 %v7100
        %v8683 = vunpack.c.l.b16 %v7101
        %v8684 = vunpack.c.h.b16 %v7101
        %v8685 = vunpack.c.l.b16 %v7102
        %v8686 = vunpack.c.h.b16 %v7102
        %v8687 = vunpack.c.l.b16 %v7103
        %v8688 = vunpack.c.h.b16 %v7103
        %v8689 = vunpack.c.l.b16 %v7104
        %v8690 = vunpack.c.h.b16 %v7104
        %v8691 = vunpack.c.l.b16 %v7105
        %v8692 = vunpack.c.h.b16 %v7105
        %v8693 = vunpack.c.l.b16 %v7106
        %v8694 = vunpack.c.h.b16 %v7106
        %v8695 = vunpack.c.l.b16 %v7107
        %v8696 = vunpack.c.h.b16 %v7107
        %v8697 = vunpack.c.l.b16 %v7108
        %v8698 = vunpack.c.h.b16 %v7108
        %v8699 = vunpack.c.l.b16 %v7109
        %v8700 = vunpack.c.h.b16 %v7109
        %v8701 = vunpack.c.l.b16 %v7110
        %v8702 = vunpack.c.h.b16 %v7110
        %v8703 = vunpack.c.l.b16 %v7111
        %v8704 = vunpack.c.h.b16 %v7111
        %v8705 = vunpack.c.l.b16 %v7112
        %v8706 = vunpack.c.h.b16 %v7112
        %v8707 = vunpack.c.l.b16 %v7113
        %v8708 = vunpack.c.h.b16 %v7113
        %v8709 = vunpack.c.l.b16 %v7114
        %v8710 = vunpack.c.h.b16 %v7114
        %v8711 = vunpack.c.l.b16 %v7115
        %v8712 = vunpack.c.h.b16 %v7115
        %v8713 = vunpack.c.l.b16 %v7116
        %v8714 = vunpack.c.h.b16 %v7116
        %v8715 = vunpack.c.l.b16 %v7117
        %v8716 = vunpack.c.h.b16 %v7117
        %v8717 = vunpack.c.l.b16 %v7118
        %v8718 = vunpack.c.h.b16 %v7118
        %v8719 = vunpack.c.l.b16 %v7119
        %v8720 = vunpack.c.h.b16 %v7119
        %v8721 = vunpack.c.l.b16 %v7120
        %v8722 = vunpack.c.h.b16 %v7120
        %v8723 = vunpack.c.l.b16 %v7121
        %v8724 = vunpack.c.h.b16 %v7121
        %v8725 = vunpack.c.l.b16 %v7122
        %v8726 = vunpack.c.h.b16 %v7122
        %v8727 = vunpack.c.l.b16 %v7123
        %v8728 = vunpack.c.h.b16 %v7123
        %v8729 = vunpack.c.l.b16 %v7124
        %v8730 = vunpack.c.h.b16 %v7124
        %v8731 = vunpack.c.l.b16 %v7125
        %v8732 = vunpack.c.h.b16 %v7125
        %v8733 = vunpack.c.l.b16 %v7126
        %v8734 = vunpack.c.h.b16 %v7126
        %v8735 = vunpack.c.l.b16 %v7127
        %v8736 = vunpack.c.h.b16 %v7127
        %v8737 = vunpack.c.l.b16 %v7128
        %v8738 = vunpack.c.h.b16 %v7128
        %v8739 = vunpack.c.l.b16 %v7129
        %v8740 = vunpack.c.h.b16 %v7129
        %v8741 = vunpack.c.l.b16 %v7130
        %v8742 = vunpack.c.h.b16 %v7130
        %v8743 = vunpack.c.l.b16 %v7131
        %v8744 = vunpack.c.h.b16 %v7131
        %v8745 = vunpack.c.l.b16 %v7132
        %v8746 = vunpack.c.h.b16 %v7132
        %v8747 = vunpack.c.l.b16 %v7133
        %v8748 = vunpack.c.h.b16 %v7133
        %v8749 = vunpack.c.l.b16 %v7134
        %v8750 = vunpack.c.h.b16 %v7134
        %v8751 = vunpack.c.l.b16 %v7135
        %v8752 = vunpack.c.h.b16 %v7135
        %v8753 = vunpack.c.l.b16 %v7136
        %v8754 = vunpack.c.h.b16 %v7136
        %v8755 = vunpack.c.l.b16 %v7137
        %v8756 = vunpack.c.h.b16 %v7137
        %v8757 = vunpack.c.l.b16 %v7138
        %v8758 = vunpack.c.h.b16 %v7138
        %v8759 = vunpack.c.l.b16 %v7139
        %v8760 = vunpack.c.h.b16 %v7139
        %v8761 = vunpack.c.l.b16 %v7140
        %v8762 = vunpack.c.h.b16 %v7140
        %v8763 = vunpack.c.l.b16 %v7141
        %v8764 = vunpack.c.h.b16 %v7141
        %v8765 = vunpack.c.l.b16 %v7142
        %v8766 = vunpack.c.h.b16 %v7142
        %v8767 = vunpack.c.l.b16 %v7143
        %v8768 = vunpack.c.h.b16 %v7143
        %v8769 = vunpack.c.l.b16 %v7144
        %v8770 = vunpack.c.h.b16 %v7144
        %v8771 = vunpack.c.l.b16 %v7145
        %v8772 = vunpack.c.h.b16 %v7145
        %v8773 = vunpack.c.l.b16 %v7146
        %v8774 = vunpack.c.h.b16 %v7146
        %v8775 = vunpack.c.l.b16 %v7147
        %v8776 = vunpack.c.h.b16 %v7147
        %v8777 = vunpack.c.l.b16 %v7148
        %v8778 = vunpack.c.h.b16 %v7148
        %v8779 = vunpack.c.l.b16 %v7149
        %v8780 = vunpack.c.h.b16 %v7149
        %v8781 = vunpack.c.l.b16 %v7150
        %v8782 = vunpack.c.h.b16 %v7150
        %v8783 = vpack.c.b16 %v8501, %v8495
        %v8784 = vpack.c.b16 %v8502, %v8496
        %v8785 = vpack.c.b16 %v8503, %v8497
        %v8786 = vpack.c.b16 %v8504, %v8498
        %v8787 = vpack.c.b16 %v8505, %v8499
        %v8788 = vpack.c.b16 %v8506, %v8500
        %v8789 = vpack.c.b16 %v8513, %v8507
        %v8790 = vpack.c.b16 %v8514, %v8508
        %v8791 = vpack.c.b16 %v8515, %v8509
        %v8792 = vpack.c.b16 %v8516, %v8510
        %v8793 = vpack.c.b16 %v8517, %v8511
        %v8794 = vpack.c.b16 %v8518, %v8512
        %v8795 = vpack.c.b16 %v8525, %v8519
        %v8796 = vpack.c.b16 %v8526, %v8520
        %v8797 = vpack.c.b16 %v8527, %v8521
        %v8798 = vpack.c.b16 %v8528, %v8522
        %v8799 = vpack.c.b16 %v8529, %v8523
        %v8800 = vpack.c.b16 %v8530, %v8524
        %v8801 = vpack.c.b16 %v8537, %v8531
        %v8802 = vpack.c.b16 %v8538, %v8532
        %v8803 = vpack.c.b16 %v8539, %v8533
        %v8804 = vpack.c.b16 %v8540, %v8534
        %v8805 = vpack.c.b16 %v8541, %v8535
        %v8806 = vpack.c.b16 %v8542, %v8536
        %v8807 = vpack.c.b16 %v8549, %v8543
        %v8808 = vpack.c.b16 %v8550, %v8544
        %v8809 = vpack.c.b16 %v8551, %v8545
        %v8810 = vpack.c.b16 %v8552, %v8546
        %v8811 = vpack.c.b16 %v8553, %v8547
        %v8812 = vpack.c.b16 %v8554, %v8548
        %v8813 = vpack.c.b16 %v8561, %v8555
        %v8814 = vpack.c.b16 %v8562, %v8556
        %v8815 = vpack.c.b16 %v8563, %v8557
        %v8816 = vpack.c.b16 %v8564, %v8558
        %v8817 = vpack.c.b16 %v8565, %v8559
        %v8818 = vpack.c.b16 %v8566, %v8560
        %v8819 = vpack.c.b16 %v8573, %v8567
        %v8820 = vpack.c.b16 %v8574, %v8568
        %v8821 = vpack.c.b16 %v8575, %v8569
        %v8822 = vpack.c.b16 %v8576, %v8570
        %v8823 = vpack.c.b16 %v8577, %v8571
        %v8824 = vpack.c.b16 %v8578, %v8572
        %v8825 = vpack.c.b16 %v8585, %v8579
        %v8826 = vpack.c.b16 %v8586, %v8580
        %v8827 = vpack.c.b16 %v8587, %v8581
        %v8828 = vpack.c.b16 %v8588, %v8582
        %v8829 = vpack.c.b16 %v8589, %v8583
        %v8830 = vpack.c.b16 %v8590, %v8584
        %v8831 = vpack.c.b16 %v8597, %v8591
        %v8832 = vpack.c.b16 %v8598, %v8592
        %v8833 = vpack.c.b16 %v8599, %v8593
        %v8834 = vpack.c.b16 %v8600, %v8594
        %v8835 = vpack.c.b16 %v8601, %v8595
        %v8836 = vpack.c.b16 %v8602, %v8596
        %v8837 = vpack.c.b16 %v8609, %v8603
        %v8838 = vpack.c.b16 %v8610, %v8604
        %v8839 = vpack.c.b16 %v8611, %v8605
        %v8840 = vpack.c.b16 %v8612, %v8606
        %v8841 = vpack.c.b16 %v8613, %v8607
        %v8842 = vpack.c.b16 %v8614, %v8608
        %v8843 = vpack.c.b16 %v8621, %v8615
        %v8844 = vpack.c.b16 %v8622, %v8616
        %v8845 = vpack.c.b16 %v8623, %v8617
        %v8846 = vpack.c.b16 %v8624, %v8618
        %v8847 = vpack.c.b16 %v8625, %v8619
        %v8848 = vpack.c.b16 %v8626, %v8620
        %v8849 = vpack.c.b16 %v8633, %v8627
        %v8850 = vpack.c.b16 %v8634, %v8628
        %v8851 = vpack.c.b16 %v8635, %v8629
        %v8852 = vpack.c.b16 %v8636, %v8630
        %v8853 = vpack.c.b16 %v8637, %v8631
        %v8854 = vpack.c.b16 %v8638, %v8632
        %v8855 = vpack.c.b16 %v8645, %v8639
        %v8856 = vpack.c.b16 %v8646, %v8640
        %v8857 = vpack.c.b16 %v8647, %v8641
        %v8858 = vpack.c.b16 %v8648, %v8642
        %v8859 = vpack.c.b16 %v8649, %v8643
        %v8860 = vpack.c.b16 %v8650, %v8644
        %v8861 = vpack.c.b16 %v8657, %v8651
        %v8862 = vpack.c.b16 %v8658, %v8652
        %v8863 = vpack.c.b16 %v8659, %v8653
        %v8864 = vpack.c.b16 %v8660, %v8654
        %v8865 = vpack.c.b16 %v8661, %v8655
        %v8866 = vpack.c.b16 %v8662, %v8656
        %v8867 = vpack.c.b16 %v8669, %v8663
        %v8868 = vpack.c.b16 %v8670, %v8664
        %v8869 = vpack.c.b16 %v8671, %v8665
        %v8870 = vpack.c.b16 %v8672, %v8666
        %v8871 = vpack.c.b16 %v8673, %v8667
        %v8872 = vpack.c.b16 %v8674, %v8668
        %v8873 = vpack.c.b16 %v8681, %v8675
        %v8874 = vpack.c.b16 %v8682, %v8676
        %v8875 = vpack.c.b16 %v8683, %v8677
        %v8876 = vpack.c.b16 %v8684, %v8678
        %v8877 = vpack.c.b16 %v8685, %v8679
        %v8878 = vpack.c.b16 %v8686, %v8680
        %v8879 = vpack.c.b16 %v8693, %v8687
        %v8880 = vpack.c.b16 %v8694, %v8688
        %v8881 = vpack.c.b16 %v8695, %v8689
        %v8882 = vpack.c.b16 %v8696, %v8690
        %v8883 = vpack.c.b16 %v8697, %v8691
        %v8884 = vpack.c.b16 %v8698, %v8692
        %v8885 = vpack.c.b16 %v8705, %v8699
        %v8886 = vpack.c.b16 %v8706, %v8700
        %v8887 = vpack.c.b16 %v8707, %v8701
        %v8888 = vpack.c.b16 %v8708, %v8702
        %v8889 = vpack.c.b16 %v8709, %v8703
        %v8890 = vpack.c.b16 %v8710, %v8704
        %v8891 = vpack.c.b16 %v8717, %v8711
        %v8892 = vpack.c.b16 %v8718, %v8712
        %v8893 = vpack.c.b16 %v8719, %v8713
        %v8894 = vpack.c.b16 %v8720, %v8714
        %v8895 = vpack.c.b16 %v8721, %v8715
        %v8896 = vpack.c.b16 %v8722, %v8716
        %v8897 = vpack.c.b16 %v8729, %v8723
        %v8898 = vpack.c.b16 %v8730, %v8724
        %v8899 = vpack.c.b16 %v8731, %v8725
        %v8900 = vpack.c.b16 %v8732, %v8726
        %v8901 = vpack.c.b16 %v8733, %v8727
        %v8902 = vpack.c.b16 %v8734, %v8728
        %v8903 = vpack.c.b16 %v8741, %v8735
        %v8904 = vpack.c.b16 %v8742, %v8736
        %v8905 = vpack.c.b16 %v8743, %v8737
        %v8906 = vpack.c.b16 %v8744, %v8738
        %v8907 = vpack.c.b16 %v8745, %v8739
        %v8908 = vpack.c.b16 %v8746, %v8740
        %v8909 = vpack.c.b16 %v8753, %v8747
        %v8910 = vpack.c.b16 %v8754, %v8748
        %v8911 = vpack.c.b16 %v8755, %v8749
        %v8912 = vpack.c.b16 %v8756, %v8750
        %v8913 = vpack.c.b16 %v8757, %v8751
        %v8914 = vpack.c.b16 %v8758, %v8752
        %v8915 = vpack.c.b16 %v8765, %v8759
        %v8916 = vpack.c.b16 %v8766, %v8760
        %v8917 = vpack.c.b16 %v8767, %v8761
        %v8918 = vpack.c.b16 %v8768, %v8762
        %v8919 = vpack.c.b16 %v8769, %v8763
        %v8920 = vpack.c.b16 %v8770, %v8764
        %v8921 = vpack.c.b16 %v8777, %v8771
        %v8922 = vpack.c.b16 %v8778, %v8772
        %v8923 = vpack.c.b16 %v8779, %v8773
        %v8924 = vpack.c.b16 %v8780, %v8774
        %v8925 = vpack.c.b16 %v8781, %v8775
        %v8926 = vpack.c.b16 %v8782, %v8776
        %9071 = vmatprep.subr.bf16.mxu0 %v8784
        %9072 = vmatpush1.bf16.msra.mxu0 %v8783
        %9073 = vmatprep.subr.bf16.mxu0 %v8790
        %9074 = vmatpush1.bf16.msra.mxu0 %v8789
        %9075 = vmatprep.subr.bf16.mxu0 %v8796
        %9076 = vmatpush1.bf16.msra.mxu0 %v8795
        %9077 = vmatprep.subr.bf16.mxu0 %v8802
        %9078 = vmatpush1.bf16.msra.mxu0 %v8801
        %9079 = vmatprep.subr.bf16.mxu0 %v8808
        %9080 = vmatpush1.bf16.msra.mxu0 %v8807
        %9081 = vmatprep.subr.bf16.mxu0 %v8814
        %9082 = vmatpush1.bf16.msra.mxu0 %v8813
        %9083 = vmatprep.subr.bf16.mxu0 %v8820
        %9084 = vmatpush1.bf16.msra.mxu0 %v8819
        %9085 = vmatprep.subr.bf16.mxu0 %v8826
        %9086 = vmatpush1.bf16.msra.mxu0 %v8825
        %9087 = vmatprep.subr.bf16.mxu0 %v8832
        %9088 = vmatpush1.bf16.msra.mxu0 %v8831
        %9089 = vmatprep.subr.bf16.mxu0 %v8838
        %9090 = vmatpush1.bf16.msra.mxu0 %v8837
        %9091 = vmatprep.subr.bf16.mxu0 %v8844
        %9092 = vmatpush1.bf16.msra.mxu0 %v8843
        %9093 = vmatprep.subr.bf16.mxu0 %v8850
        %9094 = vmatpush1.bf16.msra.mxu0 %v8849
        %9095 = vmatprep.subr.bf16.mxu0 %v8856
        %9096 = vmatpush1.bf16.msra.mxu0 %v8855
        %9097 = vmatprep.subr.bf16.mxu0 %v8862
        %9098 = vmatpush1.bf16.msra.mxu0 %v8861
        %9099 = vmatprep.subr.bf16.mxu0 %v8868
        %9100 = vmatpush1.bf16.msra.mxu0 %v8867
        %9101 = vmatprep.subr.bf16.mxu0 %v8874
        %9102 = vmatpush1.bf16.msra.mxu0 %v8873
        %9103 = vmatprep.mubr.bf16.mxu0 %v7005
        %9104 = vmatmul.mubr.bf16.gmra.mrb[0].mxu0 %v7004
        %v9105 = vpop.f32.mrb[0].mxu0
        %v9106 = vadd.f32 %v8181, %v9105
        %v9107 = vpop.f32.mrb[0].mxu0
        %v9108 = vadd.f32 %v8183, %v9107
        %v9109 = vpop.f32.mrb[0].mxu0
        %v9110 = vpop.f32.mrb[0].mxu0
        %9111 = vdwg.mxu0
        %9112 = vmatprep.subr.bf16.mxu0 %v8880
        %9113 = vmatpush1.bf16.msra.mxu0 %v8879
        %9114 = vmatprep.subr.bf16.mxu0 %v8886
        %9115 = vmatpush1.bf16.msra.mxu0 %v8885
        %9116 = vmatprep.subr.bf16.mxu0 %v8892
        %9117 = vmatpush1.bf16.msra.mxu0 %v8891
        %9118 = vmatprep.subr.bf16.mxu0 %v8898
        %9119 = vmatpush1.bf16.msra.mxu0 %v8897
        %9120 = vmatprep.subr.bf16.mxu0 %v8904
        %9121 = vmatpush1.bf16.msra.mxu0 %v8903
        %9122 = vmatprep.subr.bf16.mxu0 %v8910
        %9123 = vmatpush1.bf16.msra.mxu0 %v8909
        %9124 = vmatprep.subr.bf16.mxu0 %v8916
        %9125 = vmatpush1.bf16.msra.mxu0 %v8915
        %9126 = vmatprep.subr.bf16.mxu0 %v8922
        %9127 = vmatpush1.bf16.msra.mxu0 %v8921
        %9128 = vmatprep.subr.bf16.mxu0 0
        %9129 = vmatpush1.bf16.msra.mxu0 0
        %9130 = vmatprep.subr.bf16.mxu0 0
        %9131 = vmatpush1.bf16.msra.mxu0 0
        %9132 = vmatprep.subr.bf16.mxu0 0
        %9133 = vmatpush1.bf16.msra.mxu0 0
        %9134 = vmatprep.subr.bf16.mxu0 0
        %9135 = vmatpush1.bf16.msra.mxu0 0
        %9136 = vmatprep.subr.bf16.mxu0 0
        %9137 = vmatpush1.bf16.msra.mxu0 0
        %9138 = vmatprep.subr.bf16.mxu0 0
        %9139 = vmatpush1.bf16.msra.mxu0 0
        %9140 = vmatprep.subr.bf16.mxu0 0
        %9141 = vmatpush1.bf16.msra.mxu0 0
        %9142 = vmatprep.subr.bf16.mxu0 0
        %9143 = vmatpush1.bf16.msra.mxu0 0
        %9144 = vmatprep.mubr.bf16.mxu0 0
        %9145 = vmatmul.mubr.bf16.gmra.mrb[0].mxu0 %v7006
        %v9146 = vpop.f32.mrb[0].mxu0
        %v9147 = vadd.f32 %v9106, %v9146
        %v9148 = vpop.f32.mrb[0].mxu0
        %v9149 = vadd.f32 %v9108, %v9148
        %v9150 = vpop.f32.mrb[0].mxu0
        %v9151 = vpop.f32.mrb[0].mxu0
        %9152 = vdwg.mxu0
        %9153 = vmatprep.subr.bf16.mxu0 %v8786
        %9154 = vmatpush1.bf16.msra.mxu0 %v8785
        %9155 = vmatprep.subr.bf16.mxu0 %v8792
        %9156 = vmatpush1.bf16.msra.mxu0 %v8791
        %9157 = vmatprep.subr.bf16.mxu0 %v8798
        %9158 = vmatpush1.bf16.msra.mxu0 %v8797
        %9159 = vmatprep.subr.bf16.mxu0 %v8804
        %9160 = vmatpush1.bf16.msra.mxu0 %v8803
        %9161 = vmatprep.subr.bf16.mxu0 %v8810
        %9162 = vmatpush1.bf16.msra.mxu0 %v8809
        %9163 = vmatprep.subr.bf16.mxu0 %v8816
        %9164 = vmatpush1.bf16.msra.mxu0 %v8815
        %9165 = vmatprep.subr.bf16.mxu0 %v8822
        %9166 = vmatpush1.bf16.msra.mxu0 %v8821
        %9167 = vmatprep.subr.bf16.mxu0 %v8828
        %9168 = vmatpush1.bf16.msra.mxu0 %v8827
        %9169 = vmatprep.subr.bf16.mxu0 %v8834
        %9170 = vmatpush1.bf16.msra.mxu0 %v8833
        %9171 = vmatprep.subr.bf16.mxu0 %v8840
        %9172 = vmatpush1.bf16.msra.mxu0 %v8839
        %9173 = vmatprep.subr.bf16.mxu0 %v8846
        %9174 = vmatpush1.bf16.msra.mxu0 %v8845
        %9175 = vmatprep.subr.bf16.mxu0 %v8852
        %9176 = vmatpush1.bf16.msra.mxu0 %v8851
        %9177 = vmatprep.subr.bf16.mxu0 %v8858
        %9178 = vmatpush1.bf16.msra.mxu0 %v8857
        %9179 = vmatprep.subr.bf16.mxu0 %v8864
        %9180 = vmatpush1.bf16.msra.mxu0 %v8863
        %9181 = vmatprep.subr.bf16.mxu0 %v8870
        %9182 = vmatpush1.bf16.msra.mxu0 %v8869
        %9183 = vmatprep.subr.bf16.mxu0 %v8876
        %9184 = vmatpush1.bf16.msra.mxu0 %v8875
        %9185 = vmatprep.mubr.bf16.mxu0 %v7005
        %9186 = vmatmul.mubr.bf16.gmra.mrb[0].mxu0 %v7004
        %v9187 = vpop.f32.mrb[0].mxu0
        %v9188 = vadd.f32 %v8263, %v9187
        %v9189 = vpop.f32.mrb[0].mxu0
        %v9190 = vadd.f32 %v8265, %v9189
        %v9191 = vpop.f32.mrb[0].mxu0
        %v9192 = vpop.f32.mrb[0].mxu0
        %9193 = vdwg.mxu0
        %9194 = vmatprep.subr.bf16.mxu0 %v8882
        %9195 = vmatpush1.bf16.msra.mxu0 %v8881
        %9196 = vmatprep.subr.bf16.mxu0 %v8888
        %9197 = vmatpush1.bf16.msra.mxu0 %v8887
        %9198 = vmatprep.subr.bf16.mxu0 %v8894
        %9199 = vmatpush1.bf16.msra.mxu0 %v8893
        %9200 = vmatprep.subr.bf16.mxu0 %v8900
        %9201 = vmatpush1.bf16.msra.mxu0 %v8899
        %9202 = vmatprep.subr.bf16.mxu0 %v8906
        %9203 = vmatpush1.bf16.msra.mxu0 %v8905
        %9204 = vmatprep.subr.bf16.mxu0 %v8912
        %9205 = vmatpush1.bf16.msra.mxu0 %v8911
        %9206 = vmatprep.subr.bf16.mxu0 %v8918
        %9207 = vmatpush1.bf16.msra.mxu0 %v8917
        %9208 = vmatprep.subr.bf16.mxu0 %v8924
        %9209 = vmatpush1.bf16.msra.mxu0 %v8923
        %9210 = vmatprep.subr.bf16.mxu0 0
        %9211 = vmatpush1.bf16.msra.mxu0 0
        %9212 = vmatprep.subr.bf16.mxu0 0
        %9213 = vmatpush1.bf16.msra.mxu0 0
        %9214 = vmatprep.subr.bf16.mxu0 0
        %9215 = vmatpush1.bf16.msra.mxu0 0
        %9216 = vmatprep.subr.bf16.mxu0 0
        %9217 = vmatpush1.bf16.msra.mxu0 0
        %9218 = vmatprep.subr.bf16.mxu0 0
        %9219 = vmatpush1.bf16.msra.mxu0 0
        %9220 = vmatprep.subr.bf16.mxu0 0
        %9221 = vmatpush1.bf16.msra.mxu0 0
        %9222 = vmatprep.subr.bf16.mxu0 0
        %9223 = vmatpush1.bf16.msra.mxu0 0
        %9224 = vmatprep.subr.bf16.mxu0 0
        %9225 = vmatpush1.bf16.msra.mxu0 0
        %9226 = vmatprep.mubr.bf16.mxu0 0
        %9227 = vmatmul.mubr.bf16.gmra.mrb[0].mxu0 %v7006
        %v9228 = vpop.f32.mrb[0].mxu0
        %v9229 = vadd.f32 %v9188, %v9228
        %v9230 = vpop.f32.mrb[0].mxu0
        %v9231 = vadd.f32 %v9190, %v9230
        %v9232 = vpop.f32.mrb[0].mxu0
        %v9233 = vpop.f32.mrb[0].mxu0
        %9234 = vdwg.mxu0
        %9235 = vmatprep.subr.bf16.mxu0 %v8788
        %9236 = vmatpush1.bf16.msra.mxu0 %v8787
        %9237 = vmatprep.subr.bf16.mxu0 %v8794
        %9238 = vmatpush1.bf16.msra.mxu0 %v8793
        %9239 = vmatprep.subr.bf16.mxu0 %v8800
        %9240 = vmatpush1.bf16.msra.mxu0 %v8799
        %9241 = vmatprep.subr.bf16.mxu0 %v8806
        %9242 = vmatpush1.bf16.msra.mxu0 %v8805
        %9243 = vmatprep.subr.bf16.mxu0 %v8812
        %9244 = vmatpush1.bf16.msra.mxu0 %v8811
        %9245 = vmatprep.subr.bf16.mxu0 %v8818
        %9246 = vmatpush1.bf16.msra.mxu0 %v8817
        %9247 = vmatprep.subr.bf16.mxu0 %v8824
        %9248 = vmatpush1.bf16.msra.mxu0 %v8823
        %9249 = vmatprep.subr.bf16.mxu0 %v8830
        %9250 = vmatpush1.bf16.msra.mxu0 %v8829
        %9251 = vmatprep.subr.bf16.mxu0 %v8836
        %9252 = vmatpush1.bf16.msra.mxu0 %v8835
        %9253 = vmatprep.subr.bf16.mxu0 %v8842
        %9254 = vmatpush1.bf16.msra.mxu0 %v8841
        %9255 = vmatprep.subr.bf16.mxu0 %v8848
        %9256 = vmatpush1.bf16.msra.mxu0 %v8847
        %9257 = vmatprep.subr.bf16.mxu0 %v8854
        %9258 = vmatpush1.bf16.msra.mxu0 %v8853
        %9259 = vmatprep.subr.bf16.mxu0 %v8860
        %9260 = vmatpush1.bf16.msra.mxu0 %v8859
        %9261 = vmatprep.subr.bf16.mxu0 %v8866
        %9262 = vmatpush1.bf16.msra.mxu0 %v8865
        %9263 = vmatprep.subr.bf16.mxu0 %v8872
        %9264 = vmatpush1.bf16.msra.mxu0 %v8871
        %9265 = vmatprep.subr.bf16.mxu0 %v8878
        %9266 = vmatpush1.bf16.msra.mxu0 %v8877
        %9267 = vmatprep.mubr.bf16.mxu0 %v7005
        %9268 = vmatmul.mubr.bf16.gmra.mrb[0].mxu0 %v7004
        %v9269 = vpop.f32.mrb[0].mxu0
        %v9270 = vadd.f32 %v8345, %v9269
        %v9271 = vpop.f32.mrb[0].mxu0
        %v9272 = vadd.f32 %v8347, %v9271
        %v9273 = vpop.f32.mrb[0].mxu0
        %v9274 = vpop.f32.mrb[0].mxu0
        %9275 = vdwg.mxu0
        %9276 = vmatprep.subr.bf16.mxu0 %v8884
        %9277 = vmatpush1.bf16.msra.mxu0 %v8883
        %9278 = vmatprep.subr.bf16.mxu0 %v8890
        %9279 = vmatpush1.bf16.msra.mxu0 %v8889
        %9280 = vmatprep.subr.bf16.mxu0 %v8896
        %9281 = vmatpush1.bf16.msra.mxu0 %v8895
        %9282 = vmatprep.subr.bf16.mxu0 %v8902
        %9283 = vmatpush1.bf16.msra.mxu0 %v8901
        %9284 = vmatprep.subr.bf16.mxu0 %v8908
        %9285 = vmatpush1.bf16.msra.mxu0 %v8907
        %9286 = vmatprep.subr.bf16.mxu0 %v8914
        %9287 = vmatpush1.bf16.msra.mxu0 %v8913
        %9288 = vmatprep.subr.bf16.mxu0 %v8920
        %9289 = vmatpush1.bf16.msra.mxu0 %v8919
        %9290 = vmatprep.subr.bf16.mxu0 %v8926
        %9291 = vmatpush1.bf16.msra.mxu0 %v8925
        %9292 = vmatprep.subr.bf16.mxu0 0
        %9293 = vmatpush1.bf16.msra.mxu0 0
        %9294 = vmatprep.subr.bf16.mxu0 0
        %9295 = vmatpush1.bf16.msra.mxu0 0
        %9296 = vmatprep.subr.bf16.mxu0 0
        %9297 = vmatpush1.bf16.msra.mxu0 0
        %9298 = vmatprep.subr.bf16.mxu0 0
        %9299 = vmatpush1.bf16.msra.mxu0 0
        %9300 = vmatprep.subr.bf16.mxu0 0
        %9301 = vmatpush1.bf16.msra.mxu0 0
        %9302 = vmatprep.subr.bf16.mxu0 0
        %9303 = vmatpush1.bf16.msra.mxu0 0
        %9304 = vmatprep.subr.bf16.mxu0 0
        %9305 = vmatpush1.bf16.msra.mxu0 0
        %9306 = vmatprep.subr.bf16.mxu0 0
        %9307 = vmatpush1.bf16.msra.mxu0 0
        %9308 = vmatprep.mubr.bf16.mxu0 0
        %9309 = vmatmul.mubr.bf16.gmra.mrb[0].mxu0 %v7006
        %v9310 = vpop.f32.mrb[0].mxu0
        %v9311 = vadd.f32 %v9270, %v9310
        %v9312 = vpop.f32.mrb[0].mxu0
        %v9313 = vadd.f32 %v9272, %v9312
        %v9314 = vpop.f32.mrb[0].mxu0
        %v9315 = vpop.f32.mrb[0].mxu0
        %9316 = vdwg.mxu0
        %s9317 = scalar_lea.vmem %s12, 4
        %v9318 = vld [vmem:[%s9317] sm:$0x3]
        %v9320 = vsel %vm3615, %v9318, 0
        %9322 = vmatprep.subr.bf16.mxu0 %v6908
        %9323 = vmatpush1.bf16.msra.mxu0 %v6907
        %9324 = vmatprep.subr.bf16.mxu0 %v6911
        %9325 = vmatpush1.bf16.msra.mxu0 %v6910
        %9326 = vmatprep.subr.bf16.mxu0 %v6914
        %9327 = vmatpush1.bf16.msra.mxu0 %v6913
        %9328 = vmatprep.subr.bf16.mxu0 %v6917
        %9329 = vmatpush1.bf16.msra.mxu0 %v6916
        %9330 = vmatprep.subr.bf16.mxu0 0
        %9331 = vmatpush1.bf16.msra.mxu0 0
        %9332 = vmatprep.subr.bf16.mxu0 0
        %9333 = vmatpush1.bf16.msra.mxu0 0
        %9334 = vmatprep.subr.bf16.mxu0 0
        %9335 = vmatpush1.bf16.msra.mxu0 0
        %9336 = vmatprep.subr.bf16.mxu0 0
        %9337 = vmatpush1.bf16.msra.mxu0 0
        %9338 = vmatprep.subr.bf16.mxu0 0
        %9339 = vmatpush1.bf16.msra.mxu0 0
        %9340 = vmatprep.subr.bf16.mxu0 0
        %9341 = vmatpush1.bf16.msra.mxu0 0
        %9342 = vmatprep.subr.bf16.mxu0 0
        %9343 = vmatpush1.bf16.msra.mxu0 0
        %9344 = vmatprep.subr.bf16.mxu0 0
        %9345 = vmatpush1.bf16.msra.mxu0 0
        %9346 = vmatprep.subr.bf16.mxu0 0
        %9347 = vmatpush1.bf16.msra.mxu0 0
        %9348 = vmatprep.subr.bf16.mxu0 0
        %9349 = vmatpush1.bf16.msra.mxu0 0
        %9350 = vmatprep.subr.bf16.mxu0 0
        %9351 = vmatpush1.bf16.msra.mxu0 0
        %9352 = vmatprep.subr.bf16.mxu0 0
        %9353 = vmatpush1.bf16.msra.mxu0 0
        %9354 = vmatprep.mubr.bf16.mxu0 0
        %9355 = vmatmul.mubr.bf16.gmra.mrb[0].mxu0 %v9320
        %v9356 = vpop.f32.mrb[0].mxu0
        %v9357 = vadd.f32 0.0, %v9356
        %v9358 = vpop.f32.mrb[0].mxu0
        %v9359 = vadd.f32 0.0, %v9358
        %v9360 = vpop.f32.mrb[0].mxu0
        %v9361 = vpop.f32.mrb[0].mxu0
        %9362 = vdwg.mxu0
        %9363 = vmatprep.subr.bf16.mxu0 0
        %9364 = vmatpush1.bf16.msra.mxu0 %v6909
        %9365 = vmatprep.subr.bf16.mxu0 0
        %9366 = vmatpush1.bf16.msra.mxu0 %v6912
        %9367 = vmatprep.subr.bf16.mxu0 0
        %9368 = vmatpush1.bf16.msra.mxu0 %v6915
        %9369 = vmatprep.subr.bf16.mxu0 0
        %9370 = vmatpush1.bf16.msra.mxu0 %v6918
        %9371 = vmatprep.subr.bf16.mxu0 0
        %9372 = vmatpush1.bf16.msra.mxu0 0
        %9373 = vmatprep.subr.bf16.mxu0 0
        %9374 = vmatpush1.bf16.msra.mxu0 0
        %9375 = vmatprep.subr.bf16.mxu0 0
        %9376 = vmatpush1.bf16.msra.mxu0 0
        %9377 = vmatprep.subr.bf16.mxu0 0
        %9378 = vmatpush1.bf16.msra.mxu0 0
        %9379 = vmatprep.subr.bf16.mxu0 0
        %9380 = vmatpush1.bf16.msra.mxu0 0
        %9381 = vmatprep.subr.bf16.mxu0 0
        %9382 = vmatpush1.bf16.msra.mxu0 0
        %9383 = vmatprep.subr.bf16.mxu0 0
        %9384 = vmatpush1.bf16.msra.mxu0 0
        %9385 = vmatprep.subr.bf16.mxu0 0
        %9386 = vmatpush1.bf16.msra.mxu0 0
        %9387 = vmatprep.subr.bf16.mxu0 0
        %9388 = vmatpush1.bf16.msra.mxu0 0
        %9389 = vmatprep.subr.bf16.mxu0 0
        %9390 = vmatpush1.bf16.msra.mxu0 0
        %9391 = vmatprep.subr.bf16.mxu0 0
        %9392 = vmatpush1.bf16.msra.mxu0 0
        %9393 = vmatprep.subr.bf16.mxu0 0
        %9394 = vmatpush1.bf16.msra.mxu0 0
        %9395 = vmatprep.mubr.bf16.mxu0 0
        %9396 = vmatmul.mubr.bf16.gmra.mrb[0].mxu0 %v9320
        %v9397 = vpop.f32.mrb[0].mxu0
        %v9398 = vadd.f32 0.0, %v9397
        %v9399 = vpop.f32.mrb[0].mxu0
        %v9400 = vpop.f32.mrb[0].mxu0
        %v9401 = vpop.f32.mrb[0].mxu0
        %9402 = vdwg.mxu0
        %v9403 = vpack.c.bf16 %v9357, %v9357
        %v9404 = vpack.c.bf16 %v9359, %v9359
        %v9405 = vpack.c.bf16 %v9398, %v9398
        %s9406 = scalar_lea.vmem [#allocation13], 2304
        %v9407 = vld [vmem:[%s9406] sm:$0xff]
        %v9408 = vld [vmem:[%s9406 + $0x8] sm:$0xff]
        %v9409 = vld [vmem:[%s9406 + $0x10] sm:$0xff]
        %v9410 = vld [vmem:[%s9406 + $0x18] sm:$0xff]
        %v9411 = vld [vmem:[%s9406 + $0x20] sm:$0xff]
        %v9412 = vld [vmem:[%s9406 + $0x28] sm:$0xff]
        %v9413 = vld [vmem:[%s9406 + $0x30] sm:$0xff]
        %v9414 = vld [vmem:[%s9406 + $0x38] sm:$0xff]
        %v9415 = vld [vmem:[%s9406 + $0x40] sm:$0xff]
        %v9416 = vld [vmem:[%s9406 + $0x48] sm:$0xff]
        %v9417 = vld [vmem:[%s9406 + $0x50] sm:$0xff]
        %v9418 = vld [vmem:[%s9406 + $0x58] sm:$0xff]
        %v9419 = vld [vmem:[%s9406 + $0x60] sm:$0xff]
        %v9420 = vld [vmem:[%s9406 + $0x68] sm:$0xff]
        %v9421 = vld [vmem:[%s9406 + $0x70] sm:$0xff]
        %v9422 = vld [vmem:[%s9406 + $0x78] sm:$0xff]
        %v9423 = vld [vmem:[%s9406 + $0x80] sm:$0xff]
        %v9424 = vld [vmem:[%s9406 + $0x88] sm:$0xff]
        %v9425 = vld [vmem:[%s9406 + $0x90] sm:$0xff]
        %v9426 = vld [vmem:[%s9406 + $0x98] sm:$0xff]
        %v9427 = vld [vmem:[%s9406 + $0xa0] sm:$0xff]
        %v9428 = vld [vmem:[%s9406 + $0xa8] sm:$0xff]
        %v9429 = vld [vmem:[%s9406 + $0xb0] sm:$0xff]
        %v9430 = vld [vmem:[%s9406 + $0xb8] sm:$0xff]
        %v9431 = vld [vmem:[%s9406 + $0xc0] sm:$0xff]
        %v9432 = vld [vmem:[%s9406 + $0xc8] sm:$0xff]
        %v9433 = vld [vmem:[%s9406 + $0xd0] sm:$0xff]
        %v9434 = vld [vmem:[%s9406 + $0xd8] sm:$0xff]
        %v9435 = vld [vmem:[%s9406 + $0xe0] sm:$0xff]
        %v9436 = vld [vmem:[%s9406 + $0xe8] sm:$0xff]
        %v9437 = vld [vmem:[%s9406 + $0xf0] sm:$0xff]
        %v9438 = vld [vmem:[%s9406 + $0xf8] sm:$0xff]
        %v9439 = vld [vmem:[%s9406 + $0x100] sm:$0xff]
        %v9440 = vld [vmem:[%s9406 + $0x108] sm:$0xff]
        %v9441 = vld [vmem:[%s9406 + $0x110] sm:$0xff]
        %v9442 = vld [vmem:[%s9406 + $0x118] sm:$0xff]
        %v9443 = vld [vmem:[%s9406 + $0x120] sm:$0xff]
        %v9444 = vld [vmem:[%s9406 + $0x128] sm:$0xff]
        %v9445 = vld [vmem:[%s9406 + $0x130] sm:$0xff]
        %v9446 = vld [vmem:[%s9406 + $0x138] sm:$0xff]
        %v9447 = vld [vmem:[%s9406 + $0x140] sm:$0xff]
        %v9448 = vld [vmem:[%s9406 + $0x148] sm:$0xff]
        %v9449 = vld [vmem:[%s9406 + $0x150] sm:$0xff]
        %v9450 = vld [vmem:[%s9406 + $0x158] sm:$0xff]
        %v9451 = vld [vmem:[%s9406 + $0x160] sm:$0xff]
        %v9452 = vld [vmem:[%s9406 + $0x168] sm:$0xff]
        %v9453 = vld [vmem:[%s9406 + $0x170] sm:$0xff]
        %v9454 = vld [vmem:[%s9406 + $0x178] sm:$0xff]
        %v9455 = vld [vmem:[%s9406 + $0x180] sm:$0xff]
        %v9456 = vld [vmem:[%s9406 + $0x188] sm:$0xff]
        %v9457 = vld [vmem:[%s9406 + $0x190] sm:$0xff]
        %v9458 = vld [vmem:[%s9406 + $0x198] sm:$0xff]
        %v9459 = vld [vmem:[%s9406 + $0x1a0] sm:$0xff]
        %v9460 = vld [vmem:[%s9406 + $0x1a8] sm:$0xff]
        %v9461 = vld [vmem:[%s9406 + $0x1b0] sm:$0xff]
        %v9462 = vld [vmem:[%s9406 + $0x1b8] sm:$0xff]
        %v9463 = vld [vmem:[%s9406 + $0x1c0] sm:$0xff]
        %v9464 = vld [vmem:[%s9406 + $0x1c8] sm:$0xff]
        %v9465 = vld [vmem:[%s9406 + $0x1d0] sm:$0xff]
        %v9466 = vld [vmem:[%s9406 + $0x1d8] sm:$0xff]
        %v9467 = vld [vmem:[%s9406 + $0x1e0] sm:$0xff]
        %v9468 = vld [vmem:[%s9406 + $0x1e8] sm:$0xff]
        %v9469 = vld [vmem:[%s9406 + $0x1f0] sm:$0xff]
        %v9470 = vld [vmem:[%s9406 + $0x1f8] sm:$0xff]
        %v9471 = vld [vmem:[%s9406 + $0x200] sm:$0xff]
        %v9472 = vld [vmem:[%s9406 + $0x208] sm:$0xff]
        %v9473 = vld [vmem:[%s9406 + $0x210] sm:$0xff]
        %v9474 = vld [vmem:[%s9406 + $0x218] sm:$0xff]
        %v9475 = vld [vmem:[%s9406 + $0x220] sm:$0xff]
        %v9476 = vld [vmem:[%s9406 + $0x228] sm:$0xff]
        %v9477 = vld [vmem:[%s9406 + $0x230] sm:$0xff]
        %v9478 = vld [vmem:[%s9406 + $0x238] sm:$0xff]
        %v9479 = vld [vmem:[%s9406 + $0x240] sm:$0xff]
        %v9480 = vld [vmem:[%s9406 + $0x248] sm:$0xff]
        %v9481 = vld [vmem:[%s9406 + $0x250] sm:$0xff]
        %v9482 = vld [vmem:[%s9406 + $0x258] sm:$0xff]
        %v9483 = vld [vmem:[%s9406 + $0x260] sm:$0xff]
        %v9484 = vld [vmem:[%s9406 + $0x268] sm:$0xff]
        %v9485 = vld [vmem:[%s9406 + $0x270] sm:$0xff]
        %v9486 = vld [vmem:[%s9406 + $0x278] sm:$0xff]
        %v9487 = vld [vmem:[%s9406 + $0x280] sm:$0xff]
        %v9488 = vld [vmem:[%s9406 + $0x288] sm:$0xff]
        %v9489 = vld [vmem:[%s9406 + $0x290] sm:$0xff]
        %v9490 = vld [vmem:[%s9406 + $0x298] sm:$0xff]
        %v9491 = vld [vmem:[%s9406 + $0x2a0] sm:$0xff]
        %v9492 = vld [vmem:[%s9406 + $0x2a8] sm:$0xff]
        %v9493 = vld [vmem:[%s9406 + $0x2b0] sm:$0xff]
        %v9494 = vld [vmem:[%s9406 + $0x2b8] sm:$0xff]
        %v9495 = vld [vmem:[%s9406 + $0x2c0] sm:$0xff]
        %v9496 = vld [vmem:[%s9406 + $0x2c8] sm:$0xff]
        %v9497 = vld [vmem:[%s9406 + $0x2d0] sm:$0xff]
        %v9498 = vld [vmem:[%s9406 + $0x2d8] sm:$0xff]
        %v9499 = vld [vmem:[%s9406 + $0x2e0] sm:$0xff]
        %v9500 = vld [vmem:[%s9406 + $0x2e8] sm:$0xff]
        %v9501 = vld [vmem:[%s9406 + $0x2f0] sm:$0xff]
        %v9502 = vld [vmem:[%s9406 + $0x2f8] sm:$0xff]
        %v9503 = vld [vmem:[%s9406 + $0x300] sm:$0xff]
        %v9504 = vld [vmem:[%s9406 + $0x308] sm:$0xff]
        %v9505 = vld [vmem:[%s9406 + $0x310] sm:$0xff]
        %v9506 = vld [vmem:[%s9406 + $0x318] sm:$0xff]
        %v9507 = vld [vmem:[%s9406 + $0x320] sm:$0xff]
        %v9508 = vld [vmem:[%s9406 + $0x328] sm:$0xff]
        %v9509 = vld [vmem:[%s9406 + $0x330] sm:$0xff]
        %v9510 = vld [vmem:[%s9406 + $0x338] sm:$0xff]
        %v9511 = vld [vmem:[%s9406 + $0x340] sm:$0xff]
        %v9512 = vld [vmem:[%s9406 + $0x348] sm:$0xff]
        %v9513 = vld [vmem:[%s9406 + $0x350] sm:$0xff]
        %v9514 = vld [vmem:[%s9406 + $0x358] sm:$0xff]
        %v9515 = vld [vmem:[%s9406 + $0x360] sm:$0xff]
        %v9516 = vld [vmem:[%s9406 + $0x368] sm:$0xff]
        %v9517 = vld [vmem:[%s9406 + $0x370] sm:$0xff]
        %v9518 = vld [vmem:[%s9406 + $0x378] sm:$0xff]
        %v9519 = vld [vmem:[%s9406 + $0x380] sm:$0xff]
        %v9520 = vld [vmem:[%s9406 + $0x388] sm:$0xff]
        %v9521 = vld [vmem:[%s9406 + $0x390] sm:$0xff]
        %v9522 = vld [vmem:[%s9406 + $0x398] sm:$0xff]
        %v9523 = vld [vmem:[%s9406 + $0x3a0] sm:$0xff]
        %v9524 = vld [vmem:[%s9406 + $0x3a8] sm:$0xff]
        %v9525 = vld [vmem:[%s9406 + $0x3b0] sm:$0xff]
        %v9526 = vld [vmem:[%s9406 + $0x3b8] sm:$0xff]
        %v9527 = vld [vmem:[%s9406 + $0x3c0] sm:$0xff]
        %v9528 = vld [vmem:[%s9406 + $0x3c8] sm:$0xff]
        %v9529 = vld [vmem:[%s9406 + $0x3d0] sm:$0xff]
        %v9530 = vld [vmem:[%s9406 + $0x3d8] sm:$0xff]
        %v9531 = vld [vmem:[%s9406 + $0x3e0] sm:$0xff]
        %v9532 = vld [vmem:[%s9406 + $0x3e8] sm:$0xff]
        %v9533 = vld [vmem:[%s9406 + $0x3f0] sm:$0xff]
        %v9534 = vld [vmem:[%s9406 + $0x3f8] sm:$0xff]
        %v9535 = vld [vmem:[%s9406 + $0x400] sm:$0xff]
        %v9536 = vld [vmem:[%s9406 + $0x408] sm:$0xff]
        %v9537 = vld [vmem:[%s9406 + $0x410] sm:$0xff]
        %v9538 = vld [vmem:[%s9406 + $0x418] sm:$0xff]
        %v9539 = vld [vmem:[%s9406 + $0x420] sm:$0xff]
        %v9540 = vld [vmem:[%s9406 + $0x428] sm:$0xff]
        %v9541 = vld [vmem:[%s9406 + $0x430] sm:$0xff]
        %v9542 = vld [vmem:[%s9406 + $0x438] sm:$0xff]
        %v9543 = vld [vmem:[%s9406 + $0x440] sm:$0xff]
        %v9544 = vld [vmem:[%s9406 + $0x448] sm:$0xff]
        %v9545 = vld [vmem:[%s9406 + $0x450] sm:$0xff]
        %v9546 = vld [vmem:[%s9406 + $0x458] sm:$0xff]
        %v9547 = vld [vmem:[%s9406 + $0x460] sm:$0xff]
        %v9548 = vld [vmem:[%s9406 + $0x468] sm:$0xff]
        %v9549 = vld [vmem:[%s9406 + $0x470] sm:$0xff]
        %v9550 = vld [vmem:[%s9406 + $0x478] sm:$0xff]
        %v9695 = vunpack.c.l.b16 %v9407
        %v9696 = vunpack.c.h.b16 %v9407
        %v9697 = vunpack.c.l.b16 %v9408
        %v9698 = vunpack.c.h.b16 %v9408
        %v9699 = vunpack.c.l.b16 %v9409
        %v9700 = vunpack.c.h.b16 %v9409
        %v9701 = vunpack.c.l.b16 %v9410
        %v9702 = vunpack.c.h.b16 %v9410
        %v9703 = vunpack.c.l.b16 %v9411
        %v9704 = vunpack.c.h.b16 %v9411
        %v9705 = vunpack.c.l.b16 %v9412
        %v9706 = vunpack.c.h.b16 %v9412
        %v9707 = vunpack.c.l.b16 %v9413
        %v9708 = vunpack.c.h.b16 %v9413
        %v9709 = vunpack.c.l.b16 %v9414
        %v9710 = vunpack.c.h.b16 %v9414
        %v9711 = vunpack.c.l.b16 %v9415
        %v9712 = vunpack.c.h.b16 %v9415
        %v9713 = vunpack.c.l.b16 %v9416
        %v9714 = vunpack.c.h.b16 %v9416
        %v9715 = vunpack.c.l.b16 %v9417
        %v9716 = vunpack.c.h.b16 %v9417
        %v9717 = vunpack.c.l.b16 %v9418
        %v9718 = vunpack.c.h.b16 %v9418
        %v9719 = vunpack.c.l.b16 %v9419
        %v9720 = vunpack.c.h.b16 %v9419
        %v9721 = vunpack.c.l.b16 %v9420
        %v9722 = vunpack.c.h.b16 %v9420
        %v9723 = vunpack.c.l.b16 %v9421
        %v9724 = vunpack.c.h.b16 %v9421
        %v9725 = vunpack.c.l.b16 %v9422
        %v9726 = vunpack.c.h.b16 %v9422
        %v9727 = vunpack.c.l.b16 %v9423
        %v9728 = vunpack.c.h.b16 %v9423
        %v9729 = vunpack.c.l.b16 %v9424
        %v9730 = vunpack.c.h.b16 %v9424
        %v9731 = vunpack.c.l.b16 %v9425
        %v9732 = vunpack.c.h.b16 %v9425
        %v9733 = vunpack.c.l.b16 %v9426
        %v9734 = vunpack.c.h.b16 %v9426
        %v9735 = vunpack.c.l.b16 %v9427
        %v9736 = vunpack.c.h.b16 %v9427
        %v9737 = vunpack.c.l.b16 %v9428
        %v9738 = vunpack.c.h.b16 %v9428
        %v9739 = vunpack.c.l.b16 %v9429
        %v9740 = vunpack.c.h.b16 %v9429
        %v9741 = vunpack.c.l.b16 %v9430
        %v9742 = vunpack.c.h.b16 %v9430
        %v9743 = vunpack.c.l.b16 %v9431
        %v9744 = vunpack.c.h.b16 %v9431
        %v9745 = vunpack.c.l.b16 %v9432
        %v9746 = vunpack.c.h.b16 %v9432
        %v9747 = vunpack.c.l.b16 %v9433
        %v9748 = vunpack.c.h.b16 %v9433
        %v9749 = vunpack.c.l.b16 %v9434
        %v9750 = vunpack.c.h.b16 %v9434
        %v9751 = vunpack.c.l.b16 %v9435
        %v9752 = vunpack.c.h.b16 %v9435
        %v9753 = vunpack.c.l.b16 %v9436
        %v9754 = vunpack.c.h.b16 %v9436
        %v9755 = vunpack.c.l.b16 %v9437
        %v9756 = vunpack.c.h.b16 %v9437
        %v9757 = vunpack.c.l.b16 %v9438
        %v9758 = vunpack.c.h.b16 %v9438
        %v9759 = vunpack.c.l.b16 %v9439
        %v9760 = vunpack.c.h.b16 %v9439
        %v9761 = vunpack.c.l.b16 %v9440
        %v9762 = vunpack.c.h.b16 %v9440
        %v9763 = vunpack.c.l.b16 %v9441
        %v9764 = vunpack.c.h.b16 %v9441
        %v9765 = vunpack.c.l.b16 %v9442
        %v9766 = vunpack.c.h.b16 %v9442
        %v9767 = vunpack.c.l.b16 %v9443
        %v9768 = vunpack.c.h.b16 %v9443
        %v9769 = vunpack.c.l.b16 %v9444
        %v9770 = vunpack.c.h.b16 %v9444
        %v9771 = vunpack.c.l.b16 %v9445
        %v9772 = vunpack.c.h.b16 %v9445
        %v9773 = vunpack.c.l.b16 %v9446
        %v9774 = vunpack.c.h.b16 %v9446
        %v9775 = vunpack.c.l.b16 %v9447
        %v9776 = vunpack.c.h.b16 %v9447
        %v9777 = vunpack.c.l.b16 %v9448
        %v9778 = vunpack.c.h.b16 %v9448
        %v9779 = vunpack.c.l.b16 %v9449
        %v9780 = vunpack.c.h.b16 %v9449
        %v9781 = vunpack.c.l.b16 %v9450
        %v9782 = vunpack.c.h.b16 %v9450
        %v9783 = vunpack.c.l.b16 %v9451
        %v9784 = vunpack.c.h.b16 %v9451
        %v9785 = vunpack.c.l.b16 %v9452
        %v9786 = vunpack.c.h.b16 %v9452
        %v9787 = vunpack.c.l.b16 %v9453
        %v9788 = vunpack.c.h.b16 %v9453
        %v9789 = vunpack.c.l.b16 %v9454
        %v9790 = vunpack.c.h.b16 %v9454
        %v9791 = vunpack.c.l.b16 %v9455
        %v9792 = vunpack.c.h.b16 %v9455
        %v9793 = vunpack.c.l.b16 %v9456
        %v9794 = vunpack.c.h.b16 %v9456
        %v9795 = vunpack.c.l.b16 %v9457
        %v9796 = vunpack.c.h.b16 %v9457
        %v9797 = vunpack.c.l.b16 %v9458
        %v9798 = vunpack.c.h.b16 %v9458
        %v9799 = vunpack.c.l.b16 %v9459
        %v9800 = vunpack.c.h.b16 %v9459
        %v9801 = vunpack.c.l.b16 %v9460
        %v9802 = vunpack.c.h.b16 %v9460
        %v9803 = vunpack.c.l.b16 %v9461
        %v9804 = vunpack.c.h.b16 %v9461
        %v9805 = vunpack.c.l.b16 %v9462
        %v9806 = vunpack.c.h.b16 %v9462
        %v9807 = vunpack.c.l.b16 %v9463
        %v9808 = vunpack.c.h.b16 %v9463
        %v9809 = vunpack.c.l.b16 %v9464
        %v9810 = vunpack.c.h.b16 %v9464
        %v9811 = vunpack.c.l.b16 %v9465
        %v9812 = vunpack.c.h.b16 %v9465
        %v9813 = vunpack.c.l.b16 %v9466
        %v9814 = vunpack.c.h.b16 %v9466
        %v9815 = vunpack.c.l.b16 %v9467
        %v9816 = vunpack.c.h.b16 %v9467
        %v9817 = vunpack.c.l.b16 %v9468
        %v9818 = vunpack.c.h.b16 %v9468
        %v9819 = vunpack.c.l.b16 %v9469
        %v9820 = vunpack.c.h.b16 %v9469
        %v9821 = vunpack.c.l.b16 %v9470
        %v9822 = vunpack.c.h.b16 %v9470
        %v9823 = vunpack.c.l.b16 %v9471
        %v9824 = vunpack.c.h.b16 %v9471
        %v9825 = vunpack.c.l.b16 %v9472
        %v9826 = vunpack.c.h.b16 %v9472
        %v9827 = vunpack.c.l.b16 %v9473
        %v9828 = vunpack.c.h.b16 %v9473
        %v9829 = vunpack.c.l.b16 %v9474
        %v9830 = vunpack.c.h.b16 %v9474
        %v9831 = vunpack.c.l.b16 %v9475
        %v9832 = vunpack.c.h.b16 %v9475
        %v9833 = vunpack.c.l.b16 %v9476
        %v9834 = vunpack.c.h.b16 %v9476
        %v9835 = vunpack.c.l.b16 %v9477
        %v9836 = vunpack.c.h.b16 %v9477
        %v9837 = vunpack.c.l.b16 %v9478
        %v9838 = vunpack.c.h.b16 %v9478
        %v9839 = vunpack.c.l.b16 %v9479
        %v9840 = vunpack.c.h.b16 %v9479
        %v9841 = vunpack.c.l.b16 %v9480
        %v9842 = vunpack.c.h.b16 %v9480
        %v9843 = vunpack.c.l.b16 %v9481
        %v9844 = vunpack.c.h.b16 %v9481
        %v9845 = vunpack.c.l.b16 %v9482
        %v9846 = vunpack.c.h.b16 %v9482
        %v9847 = vunpack.c.l.b16 %v9483
        %v9848 = vunpack.c.h.b16 %v9483
        %v9849 = vunpack.c.l.b16 %v9484
        %v9850 = vunpack.c.h.b16 %v9484
        %v9851 = vunpack.c.l.b16 %v9485
        %v9852 = vunpack.c.h.b16 %v9485
        %v9853 = vunpack.c.l.b16 %v9486
        %v9854 = vunpack.c.h.b16 %v9486
        %v9855 = vunpack.c.l.b16 %v9487
        %v9856 = vunpack.c.h.b16 %v9487
        %v9857 = vunpack.c.l.b16 %v9488
        %v9858 = vunpack.c.h.b16 %v9488
        %v9859 = vunpack.c.l.b16 %v9489
        %v9860 = vunpack.c.h.b16 %v9489
        %v9861 = vunpack.c.l.b16 %v9490
        %v9862 = vunpack.c.h.b16 %v9490
        %v9863 = vunpack.c.l.b16 %v9491
        %v9864 = vunpack.c.h.b16 %v9491
        %v9865 = vunpack.c.l.b16 %v9492
        %v9866 = vunpack.c.h.b16 %v9492
        %v9867 = vunpack.c.l.b16 %v9493
        %v9868 = vunpack.c.h.b16 %v9493
        %v9869 = vunpack.c.l.b16 %v9494
        %v9870 = vunpack.c.h.b16 %v9494
        %v9871 = vunpack.c.l.b16 %v9495
        %v9872 = vunpack.c.h.b16 %v9495
        %v9873 = vunpack.c.l.b16 %v9496
        %v9874 = vunpack.c.h.b16 %v9496
        %v9875 = vunpack.c.l.b16 %v9497
        %v9876 = vunpack.c.h.b16 %v9497
        %v9877 = vunpack.c.l.b16 %v9498
        %v9878 = vunpack.c.h.b16 %v9498
        %v9879 = vunpack.c.l.b16 %v9499
        %v9880 = vunpack.c.h.b16 %v9499
        %v9881 = vunpack.c.l.b16 %v9500
        %v9882 = vunpack.c.h.b16 %v9500
        %v9883 = vunpack.c.l.b16 %v9501
        %v9884 = vunpack.c.h.b16 %v9501
        %v9885 = vunpack.c.l.b16 %v9502
        %v9886 = vunpack.c.h.b16 %v9502
        %v9887 = vunpack.c.l.b16 %v9503
        %v9888 = vunpack.c.h.b16 %v9503
        %v9889 = vunpack.c.l.b16 %v9504
        %v9890 = vunpack.c.h.b16 %v9504
        %v9891 = vunpack.c.l.b16 %v9505
        %v9892 = vunpack.c.h.b16 %v9505
        %v9893 = vunpack.c.l.b16 %v9506
        %v9894 = vunpack.c.h.b16 %v9506
        %v9895 = vunpack.c.l.b16 %v9507
        %v9896 = vunpack.c.h.b16 %v9507
        %v9897 = vunpack.c.l.b16 %v9508
        %v9898 = vunpack.c.h.b16 %v9508
        %v9899 = vunpack.c.l.b16 %v9509
        %v9900 = vunpack.c.h.b16 %v9509
        %v9901 = vunpack.c.l.b16 %v9510
        %v9902 = vunpack.c.h.b16 %v9510
        %v9903 = vunpack.c.l.b16 %v9511
        %v9904 = vunpack.c.h.b16 %v9511
        %v9905 = vunpack.c.l.b16 %v9512
        %v9906 = vunpack.c.h.b16 %v9512
        %v9907 = vunpack.c.l.b16 %v9513
        %v9908 = vunpack.c.h.b16 %v9513
        %v9909 = vunpack.c.l.b16 %v9514
        %v9910 = vunpack.c.h.b16 %v9514
        %v9911 = vunpack.c.l.b16 %v9515
        %v9912 = vunpack.c.h.b16 %v9515
        %v9913 = vunpack.c.l.b16 %v9516
        %v9914 = vunpack.c.h.b16 %v9516
        %v9915 = vunpack.c.l.b16 %v9517
        %v9916 = vunpack.c.h.b16 %v9517
        %v9917 = vunpack.c.l.b16 %v9518
        %v9918 = vunpack.c.h.b16 %v9518
        %v9919 = vunpack.c.l.b16 %v9519
        %v9920 = vunpack.c.h.b16 %v9519
        %v9921 = vunpack.c.l.b16 %v9520
        %v9922 = vunpack.c.h.b16 %v9520
        %v9923 = vunpack.c.l.b16 %v9521
        %v9924 = vunpack.c.h.b16 %v9521
        %v9925 = vunpack.c.l.b16 %v9522
        %v9926 = vunpack.c.h.b16 %v9522
        %v9927 = vunpack.c.l.b16 %v9523
        %v9928 = vunpack.c.h.b16 %v9523
        %v9929 = vunpack.c.l.b16 %v9524
        %v9930 = vunpack.c.h.b16 %v9524
        %v9931 = vunpack.c.l.b16 %v9525
        %v9932 = vunpack.c.h.b16 %v9525
        %v9933 = vunpack.c.l.b16 %v9526
        %v9934 = vunpack.c.h.b16 %v9526
        %v9935 = vunpack.c.l.b16 %v9527
        %v9936 = vunpack.c.h.b16 %v9527
        %v9937 = vunpack.c.l.b16 %v9528
        %v9938 = vunpack.c.h.b16 %v9528
        %v9939 = vunpack.c.l.b16 %v9529
        %v9940 = vunpack.c.h.b16 %v9529
        %v9941 = vunpack.c.l.b16 %v9530
        %v9942 = vunpack.c.h.b16 %v9530
        %v9943 = vunpack.c.l.b16 %v9531
        %v9944 = vunpack.c.h.b16 %v9531
        %v9945 = vunpack.c.l.b16 %v9532
        %v9946 = vunpack.c.h.b16 %v9532
        %v9947 = vunpack.c.l.b16 %v9533
        %v9948 = vunpack.c.h.b16 %v9533
        %v9949 = vunpack.c.l.b16 %v9534
        %v9950 = vunpack.c.h.b16 %v9534
        %v9951 = vunpack.c.l.b16 %v9535
        %v9952 = vunpack.c.h.b16 %v9535
        %v9953 = vunpack.c.l.b16 %v9536
        %v9954 = vunpack.c.h.b16 %v9536
        %v9955 = vunpack.c.l.b16 %v9537
        %v9956 = vunpack.c.h.b16 %v9537
        %v9957 = vunpack.c.l.b16 %v9538
        %v9958 = vunpack.c.h.b16 %v9538
        %v9959 = vunpack.c.l.b16 %v9539
        %v9960 = vunpack.c.h.b16 %v9539
        %v9961 = vunpack.c.l.b16 %v9540
        %v9962 = vunpack.c.h.b16 %v9540
        %v9963 = vunpack.c.l.b16 %v9541
        %v9964 = vunpack.c.h.b16 %v9541
        %v9965 = vunpack.c.l.b16 %v9542
        %v9966 = vunpack.c.h.b16 %v9542
        %v9967 = vunpack.c.l.b16 %v9543
        %v9968 = vunpack.c.h.b16 %v9543
        %v9969 = vunpack.c.l.b16 %v9544
        %v9970 = vunpack.c.h.b16 %v9544
        %v9971 = vunpack.c.l.b16 %v9545
        %v9972 = vunpack.c.h.b16 %v9545
        %v9973 = vunpack.c.l.b16 %v9546
        %v9974 = vunpack.c.h.b16 %v9546
        %v9975 = vunpack.c.l.b16 %v9547
        %v9976 = vunpack.c.h.b16 %v9547
        %v9977 = vunpack.c.l.b16 %v9548
        %v9978 = vunpack.c.h.b16 %v9548
        %v9979 = vunpack.c.l.b16 %v9549
        %v9980 = vunpack.c.h.b16 %v9549
        %v9981 = vunpack.c.l.b16 %v9550
        %v9982 = vunpack.c.h.b16 %v9550
        %v9983 = vpack.c.b16 %v9701, %v9695
        %v9984 = vpack.c.b16 %v9702, %v9696
        %v9985 = vpack.c.b16 %v9703, %v9697
        %v9986 = vpack.c.b16 %v9704, %v9698
        %v9987 = vpack.c.b16 %v9705, %v9699
        %v9988 = vpack.c.b16 %v9706, %v9700
        %v9989 = vpack.c.b16 %v9713, %v9707
        %v9990 = vpack.c.b16 %v9714, %v9708
        %v9991 = vpack.c.b16 %v9715, %v9709
        %v9992 = vpack.c.b16 %v9716, %v9710
        %v9993 = vpack.c.b16 %v9717, %v9711
        %v9994 = vpack.c.b16 %v9718, %v9712
        %v9995 = vpack.c.b16 %v9725, %v9719
        %v9996 = vpack.c.b16 %v9726, %v9720
        %v9997 = vpack.c.b16 %v9727, %v9721
        %v9998 = vpack.c.b16 %v9728, %v9722
        %v9999 = vpack.c.b16 %v9729, %v9723
        %v10000 = vpack.c.b16 %v9730, %v9724
        %v10001 = vpack.c.b16 %v9737, %v9731
        %v10002 = vpack.c.b16 %v9738, %v9732
        %v10003 = vpack.c.b16 %v9739, %v9733
        %v10004 = vpack.c.b16 %v9740, %v9734
        %v10005 = vpack.c.b16 %v9741, %v9735
        %v10006 = vpack.c.b16 %v9742, %v9736
        %v10007 = vpack.c.b16 %v9749, %v9743
        %v10008 = vpack.c.b16 %v9750, %v9744
        %v10009 = vpack.c.b16 %v9751, %v9745
        %v10010 = vpack.c.b16 %v9752, %v9746
        %v10011 = vpack.c.b16 %v9753, %v9747
        %v10012 = vpack.c.b16 %v9754, %v9748
        %v10013 = vpack.c.b16 %v9761, %v9755
        %v10014 = vpack.c.b16 %v9762, %v9756
        %v10015 = vpack.c.b16 %v9763, %v9757
        %v10016 = vpack.c.b16 %v9764, %v9758
        %v10017 = vpack.c.b16 %v9765, %v9759
        %v10018 = vpack.c.b16 %v9766, %v9760
        %v10019 = vpack.c.b16 %v9773, %v9767
        %v10020 = vpack.c.b16 %v9774, %v9768
        %v10021 = vpack.c.b16 %v9775, %v9769
        %v10022 = vpack.c.b16 %v9776, %v9770
        %v10023 = vpack.c.b16 %v9777, %v9771
        %v10024 = vpack.c.b16 %v9778, %v9772
        %v10025 = vpack.c.b16 %v9785, %v9779
        %v10026 = vpack.c.b16 %v9786, %v9780
        %v10027 = vpack.c.b16 %v9787, %v9781
        %v10028 = vpack.c.b16 %v9788, %v9782
        %v10029 = vpack.c.b16 %v9789, %v9783
        %v10030 = vpack.c.b16 %v9790, %v9784
        %v10031 = vpack.c.b16 %v9797, %v9791
        %v10032 = vpack.c.b16 %v9798, %v9792
        %v10033 = vpack.c.b16 %v9799, %v9793
        %v10034 = vpack.c.b16 %v9800, %v9794
        %v10035 = vpack.c.b16 %v9801, %v9795
        %v10036 = vpack.c.b16 %v9802, %v9796
        %v10037 = vpack.c.b16 %v9809, %v9803
        %v10038 = vpack.c.b16 %v9810, %v9804
        %v10039 = vpack.c.b16 %v9811, %v9805
        %v10040 = vpack.c.b16 %v9812, %v9806
        %v10041 = vpack.c.b16 %v9813, %v9807
        %v10042 = vpack.c.b16 %v9814, %v9808
        %v10043 = vpack.c.b16 %v9821, %v9815
        %v10044 = vpack.c.b16 %v9822, %v9816
        %v10045 = vpack.c.b16 %v9823, %v9817
        %v10046 = vpack.c.b16 %v9824, %v9818
        %v10047 = vpack.c.b16 %v9825, %v9819
        %v10048 = vpack.c.b16 %v9826, %v9820
        %v10049 = vpack.c.b16 %v9833, %v9827
        %v10050 = vpack.c.b16 %v9834, %v9828
        %v10051 = vpack.c.b16 %v9835, %v9829
        %v10052 = vpack.c.b16 %v9836, %v9830
        %v10053 = vpack.c.b16 %v9837, %v9831
        %v10054 = vpack.c.b16 %v9838, %v9832
        %v10055 = vpack.c.b16 %v9845, %v9839
        %v10056 = vpack.c.b16 %v9846, %v9840
        %v10057 = vpack.c.b16 %v9847, %v9841
        %v10058 = vpack.c.b16 %v9848, %v9842
        %v10059 = vpack.c.b16 %v9849, %v9843
        %v10060 = vpack.c.b16 %v9850, %v9844
        %v10061 = vpack.c.b16 %v9857, %v9851
        %v10062 = vpack.c.b16 %v9858, %v9852
        %v10063 = vpack.c.b16 %v9859, %v9853
        %v10064 = vpack.c.b16 %v9860, %v9854
        %v10065 = vpack.c.b16 %v9861, %v9855
        %v10066 = vpack.c.b16 %v9862, %v9856
        %v10067 = vpack.c.b16 %v9869, %v9863
        %v10068 = vpack.c.b16 %v9870, %v9864
        %v10069 = vpack.c.b16 %v9871, %v9865
        %v10070 = vpack.c.b16 %v9872, %v9866
        %v10071 = vpack.c.b16 %v9873, %v9867
        %v10072 = vpack.c.b16 %v9874, %v9868
        %v10073 = vpack.c.b16 %v9881, %v9875
        %v10074 = vpack.c.b16 %v9882, %v9876
        %v10075 = vpack.c.b16 %v9883, %v9877
        %v10076 = vpack.c.b16 %v9884, %v9878
        %v10077 = vpack.c.b16 %v9885, %v9879
        %v10078 = vpack.c.b16 %v9886, %v9880
        %v10079 = vpack.c.b16 %v9893, %v9887
        %v10080 = vpack.c.b16 %v9894, %v9888
        %v10081 = vpack.c.b16 %v9895, %v9889
        %v10082 = vpack.c.b16 %v9896, %v9890
        %v10083 = vpack.c.b16 %v9897, %v9891
        %v10084 = vpack.c.b16 %v9898, %v9892
        %v10085 = vpack.c.b16 %v9905, %v9899
        %v10086 = vpack.c.b16 %v9906, %v9900
        %v10087 = vpack.c.b16 %v9907, %v9901
        %v10088 = vpack.c.b16 %v9908, %v9902
        %v10089 = vpack.c.b16 %v9909, %v9903
        %v10090 = vpack.c.b16 %v9910, %v9904
        %v10091 = vpack.c.b16 %v9917, %v9911
        %v10092 = vpack.c.b16 %v9918, %v9912
        %v10093 = vpack.c.b16 %v9919, %v9913
        %v10094 = vpack.c.b16 %v9920, %v9914
        %v10095 = vpack.c.b16 %v9921, %v9915
        %v10096 = vpack.c.b16 %v9922, %v9916
        %v10097 = vpack.c.b16 %v9929, %v9923
        %v10098 = vpack.c.b16 %v9930, %v9924
        %v10099 = vpack.c.b16 %v9931, %v9925
        %v10100 = vpack.c.b16 %v9932, %v9926
        %v10101 = vpack.c.b16 %v9933, %v9927
        %v10102 = vpack.c.b16 %v9934, %v9928
        %v10103 = vpack.c.b16 %v9941, %v9935
        %v10104 = vpack.c.b16 %v9942, %v9936
        %v10105 = vpack.c.b16 %v9943, %v9937
        %v10106 = vpack.c.b16 %v9944, %v9938
        %v10107 = vpack.c.b16 %v9945, %v9939
        %v10108 = vpack.c.b16 %v9946, %v9940
        %v10109 = vpack.c.b16 %v9953, %v9947
        %v10110 = vpack.c.b16 %v9954, %v9948
        %v10111 = vpack.c.b16 %v9955, %v9949
        %v10112 = vpack.c.b16 %v9956, %v9950
        %v10113 = vpack.c.b16 %v9957, %v9951
        %v10114 = vpack.c.b16 %v9958, %v9952
        %v10115 = vpack.c.b16 %v9965, %v9959
        %v10116 = vpack.c.b16 %v9966, %v9960
        %v10117 = vpack.c.b16 %v9967, %v9961
        %v10118 = vpack.c.b16 %v9968, %v9962
        %v10119 = vpack.c.b16 %v9969, %v9963
        %v10120 = vpack.c.b16 %v9970, %v9964
        %v10121 = vpack.c.b16 %v9977, %v9971
        %v10122 = vpack.c.b16 %v9978, %v9972
        %v10123 = vpack.c.b16 %v9979, %v9973
        %v10124 = vpack.c.b16 %v9980, %v9974
        %v10125 = vpack.c.b16 %v9981, %v9975
        %v10126 = vpack.c.b16 %v9982, %v9976
        %10271 = vmatprep.subr.bf16.mxu0 %v9984
        %10272 = vmatpush1.bf16.msra.mxu0 %v9983
        %10273 = vmatprep.subr.bf16.mxu0 %v9990
        %10274 = vmatpush1.bf16.msra.mxu0 %v9989
        %10275 = vmatprep.subr.bf16.mxu0 %v9996
        %10276 = vmatpush1.bf16.msra.mxu0 %v9995
        %10277 = vmatprep.subr.bf16.mxu0 %v10002
        %10278 = vmatpush1.bf16.msra.mxu0 %v10001
        %10279 = vmatprep.subr.bf16.mxu0 %v10008
        %10280 = vmatpush1.bf16.msra.mxu0 %v10007
        %10281 = vmatprep.subr.bf16.mxu0 %v10014
        %10282 = vmatpush1.bf16.msra.mxu0 %v10013
        %10283 = vmatprep.subr.bf16.mxu0 %v10020
        %10284 = vmatpush1.bf16.msra.mxu0 %v10019
        %10285 = vmatprep.subr.bf16.mxu0 %v10026
        %10286 = vmatpush1.bf16.msra.mxu0 %v10025
        %10287 = vmatprep.subr.bf16.mxu0 %v10032
        %10288 = vmatpush1.bf16.msra.mxu0 %v10031
        %10289 = vmatprep.subr.bf16.mxu0 %v10038
        %10290 = vmatpush1.bf16.msra.mxu0 %v10037
        %10291 = vmatprep.subr.bf16.mxu0 %v10044
        %10292 = vmatpush1.bf16.msra.mxu0 %v10043
        %10293 = vmatprep.subr.bf16.mxu0 %v10050
        %10294 = vmatpush1.bf16.msra.mxu0 %v10049
        %10295 = vmatprep.subr.bf16.mxu0 %v10056
        %10296 = vmatpush1.bf16.msra.mxu0 %v10055
        %10297 = vmatprep.subr.bf16.mxu0 %v10062
        %10298 = vmatpush1.bf16.msra.mxu0 %v10061
        %10299 = vmatprep.subr.bf16.mxu0 %v10068
        %10300 = vmatpush1.bf16.msra.mxu0 %v10067
        %10301 = vmatprep.subr.bf16.mxu0 %v10074
        %10302 = vmatpush1.bf16.msra.mxu0 %v10073
        %10303 = vmatprep.mubr.bf16.mxu0 %v9404
        %10304 = vmatmul.mubr.bf16.gmra.mrb[0].mxu0 %v9403
        %v10305 = vpop.f32.mrb[0].mxu0
        %v10306 = vadd.f32 0.0, %v10305
        %v10307 = vpop.f32.mrb[0].mxu0
        %v10308 = vadd.f32 0.0, %v10307
        %v10309 = vpop.f32.mrb[0].mxu0
        %v10310 = vpop.f32.mrb[0].mxu0
        %10311 = vdwg.mxu0
        %10312 = vmatprep.subr.bf16.mxu0 %v10080
        %10313 = vmatpush1.bf16.msra.mxu0 %v10079
        %10314 = vmatprep.subr.bf16.mxu0 %v10086
        %10315 = vmatpush1.bf16.msra.mxu0 %v10085
        %10316 = vmatprep.subr.bf16.mxu0 %v10092
        %10317 = vmatpush1.bf16.msra.mxu0 %v10091
        %10318 = vmatprep.subr.bf16.mxu0 %v10098
        %10319 = vmatpush1.bf16.msra.mxu0 %v10097
        %10320 = vmatprep.subr.bf16.mxu0 %v10104
        %10321 = vmatpush1.bf16.msra.mxu0 %v10103
        %10322 = vmatprep.subr.bf16.mxu0 %v10110
        %10323 = vmatpush1.bf16.msra.mxu0 %v10109
        %10324 = vmatprep.subr.bf16.mxu0 %v10116
        %10325 = vmatpush1.bf16.msra.mxu0 %v10115
        %10326 = vmatprep.subr.bf16.mxu0 %v10122
        %10327 = vmatpush1.bf16.msra.mxu0 %v10121
        %10328 = vmatprep.subr.bf16.mxu0 0
        %10329 = vmatpush1.bf16.msra.mxu0 0
        %10330 = vmatprep.subr.bf16.mxu0 0
        %10331 = vmatpush1.bf16.msra.mxu0 0
        %10332 = vmatprep.subr.bf16.mxu0 0
        %10333 = vmatpush1.bf16.msra.mxu0 0
        %10334 = vmatprep.subr.bf16.mxu0 0
        %10335 = vmatpush1.bf16.msra.mxu0 0
        %10336 = vmatprep.subr.bf16.mxu0 0
        %10337 = vmatpush1.bf16.msra.mxu0 0
        %10338 = vmatprep.subr.bf16.mxu0 0
        %10339 = vmatpush1.bf16.msra.mxu0 0
        %10340 = vmatprep.subr.bf16.mxu0 0
        %10341 = vmatpush1.bf16.msra.mxu0 0
        %10342 = vmatprep.subr.bf16.mxu0 0
        %10343 = vmatpush1.bf16.msra.mxu0 0
        %10344 = vmatprep.mubr.bf16.mxu0 0
        %10345 = vmatmul.mubr.bf16.gmra.mrb[0].mxu0 %v9405
        %v10346 = vpop.f32.mrb[0].mxu0
        %v10347 = vadd.f32 %v10306, %v10346
        %v10348 = vpop.f32.mrb[0].mxu0
        %v10349 = vadd.f32 %v10308, %v10348
        %v10350 = vpop.f32.mrb[0].mxu0
        %v10351 = vpop.f32.mrb[0].mxu0
        %10352 = vdwg.mxu0
        %10353 = vmatprep.subr.bf16.mxu0 %v9986
        %10354 = vmatpush1.bf16.msra.mxu0 %v9985
        %10355 = vmatprep.subr.bf16.mxu0 %v9992
        %10356 = vmatpush1.bf16.msra.mxu0 %v9991
        %10357 = vmatprep.subr.bf16.mxu0 %v9998
        %10358 = vmatpush1.bf16.msra.mxu0 %v9997
        %10359 = vmatprep.subr.bf16.mxu0 %v10004
        %10360 = vmatpush1.bf16.msra.mxu0 %v10003
        %10361 = vmatprep.subr.bf16.mxu0 %v10010
        %10362 = vmatpush1.bf16.msra.mxu0 %v10009
        %10363 = vmatprep.subr.bf16.mxu0 %v10016
        %10364 = vmatpush1.bf16.msra.mxu0 %v10015
        %10365 = vmatprep.subr.bf16.mxu0 %v10022
        %10366 = vmatpush1.bf16.msra.mxu0 %v10021
        %10367 = vmatprep.subr.bf16.mxu0 %v10028
        %10368 = vmatpush1.bf16.msra.mxu0 %v10027
        %10369 = vmatprep.subr.bf16.mxu0 %v10034
        %10370 = vmatpush1.bf16.msra.mxu0 %v10033
        %10371 = vmatprep.subr.bf16.mxu0 %v10040
        %10372 = vmatpush1.bf16.msra.mxu0 %v10039
        %10373 = vmatprep.subr.bf16.mxu0 %v10046
        %10374 = vmatpush1.bf16.msra.mxu0 %v10045
        %10375 = vmatprep.subr.bf16.mxu0 %v10052
        %10376 = vmatpush1.bf16.msra.mxu0 %v10051
        %10377 = vmatprep.subr.bf16.mxu0 %v10058
        %10378 = vmatpush1.bf16.msra.mxu0 %v10057
        %10379 = vmatprep.subr.bf16.mxu0 %v10064
        %10380 = vmatpush1.bf16.msra.mxu0 %v10063
        %10381 = vmatprep.subr.bf16.mxu0 %v10070
        %10382 = vmatpush1.bf16.msra.mxu0 %v10069
        %10383 = vmatprep.subr.bf16.mxu0 %v10076
        %10384 = vmatpush1.bf16.msra.mxu0 %v10075
        %10385 = vmatprep.mubr.bf16.mxu0 %v9404
        %10386 = vmatmul.mubr.bf16.gmra.mrb[0].mxu0 %v9403
        %v10387 = vpop.f32.mrb[0].mxu0
        %v10388 = vadd.f32 0.0, %v10387
        %v10389 = vpop.f32.mrb[0].mxu0
        %v10390 = vadd.f32 0.0, %v10389
        %v10391 = vpop.f32.mrb[0].mxu0
        %v10392 = vpop.f32.mrb[0].mxu0
        %10393 = vdwg.mxu0
        %10394 = vmatprep.subr.bf16.mxu0 %v10082
        %10395 = vmatpush1.bf16.msra.mxu0 %v10081
        %10396 = vmatprep.subr.bf16.mxu0 %v10088
        %10397 = vmatpush1.bf16.msra.mxu0 %v10087
        %10398 = vmatprep.subr.bf16.mxu0 %v10094
        %10399 = vmatpush1.bf16.msra.mxu0 %v10093
        %10400 = vmatprep.subr.bf16.mxu0 %v10100
        %10401 = vmatpush1.bf16.msra.mxu0 %v10099
        %10402 = vmatprep.subr.bf16.mxu0 %v10106
        %10403 = vmatpush1.bf16.msra.mxu0 %v10105
        %10404 = vmatprep.subr.bf16.mxu0 %v10112
        %10405 = vmatpush1.bf16.msra.mxu0 %v10111
        %10406 = vmatprep.subr.bf16.mxu0 %v10118
        %10407 = vmatpush1.bf16.msra.mxu0 %v10117
        %10408 = vmatprep.subr.bf16.mxu0 %v10124
        %10409 = vmatpush1.bf16.msra.mxu0 %v10123
        %10410 = vmatprep.subr.bf16.mxu0 0
        %10411 = vmatpush1.bf16.msra.mxu0 0
        %10412 = vmatprep.subr.bf16.mxu0 0
        %10413 = vmatpush1.bf16.msra.mxu0 0
        %10414 = vmatprep.subr.bf16.mxu0 0
        %10415 = vmatpush1.bf16.msra.mxu0 0
        %10416 = vmatprep.subr.bf16.mxu0 0
        %10417 = vmatpush1.bf16.msra.mxu0 0
        %10418 = vmatprep.subr.bf16.mxu0 0
        %10419 = vmatpush1.bf16.msra.mxu0 0
        %10420 = vmatprep.subr.bf16.mxu0 0
        %10421 = vmatpush1.bf16.msra.mxu0 0
        %10422 = vmatprep.subr.bf16.mxu0 0
        %10423 = vmatpush1.bf16.msra.mxu0 0
        %10424 = vmatprep.subr.bf16.mxu0 0
        %10425 = vmatpush1.bf16.msra.mxu0 0
        %10426 = vmatprep.mubr.bf16.mxu0 0
        %10427 = vmatmul.mubr.bf16.gmra.mrb[0].mxu0 %v9405
        %v10428 = vpop.f32.mrb[0].mxu0
        %v10429 = vadd.f32 %v10388, %v10428
        %v10430 = vpop.f32.mrb[0].mxu0
        %v10431 = vadd.f32 %v10390, %v10430
        %v10432 = vpop.f32.mrb[0].mxu0
        %v10433 = vpop.f32.mrb[0].mxu0
        %10434 = vdwg.mxu0
        %10435 = vmatprep.subr.bf16.mxu0 %v9988
        %10436 = vmatpush1.bf16.msra.mxu0 %v9987
        %10437 = vmatprep.subr.bf16.mxu0 %v9994
        %10438 = vmatpush1.bf16.msra.mxu0 %v9993
        %10439 = vmatprep.subr.bf16.mxu0 %v10000
        %10440 = vmatpush1.bf16.msra.mxu0 %v9999
        %10441 = vmatprep.subr.bf16.mxu0 %v10006
        %10442 = vmatpush1.bf16.msra.mxu0 %v10005
        %10443 = vmatprep.subr.bf16.mxu0 %v10012
        %10444 = vmatpush1.bf16.msra.mxu0 %v10011
        %10445 = vmatprep.subr.bf16.mxu0 %v10018
        %10446 = vmatpush1.bf16.msra.mxu0 %v10017
        %10447 = vmatprep.subr.bf16.mxu0 %v10024
        %10448 = vmatpush1.bf16.msra.mxu0 %v10023
        %10449 = vmatprep.subr.bf16.mxu0 %v10030
        %10450 = vmatpush1.bf16.msra.mxu0 %v10029
        %10451 = vmatprep.subr.bf16.mxu0 %v10036
        %10452 = vmatpush1.bf16.msra.mxu0 %v10035
        %10453 = vmatprep.subr.bf16.mxu0 %v10042
        %10454 = vmatpush1.bf16.msra.mxu0 %v10041
        %10455 = vmatprep.subr.bf16.mxu0 %v10048
        %10456 = vmatpush1.bf16.msra.mxu0 %v10047
        %10457 = vmatprep.subr.bf16.mxu0 %v10054
        %10458 = vmatpush1.bf16.msra.mxu0 %v10053
        %10459 = vmatprep.subr.bf16.mxu0 %v10060
        %10460 = vmatpush1.bf16.msra.mxu0 %v10059
        %10461 = vmatprep.subr.bf16.mxu0 %v10066
        %10462 = vmatpush1.bf16.msra.mxu0 %v10065
        %10463 = vmatprep.subr.bf16.mxu0 %v10072
        %10464 = vmatpush1.bf16.msra.mxu0 %v10071
        %10465 = vmatprep.subr.bf16.mxu0 %v10078
        %10466 = vmatpush1.bf16.msra.mxu0 %v10077
        %10467 = vmatprep.mubr.bf16.mxu0 %v9404
        %10468 = vmatmul.mubr.bf16.gmra.mrb[0].mxu0 %v9403
        %v10469 = vpop.f32.mrb[0].mxu0
        %v10470 = vadd.f32 0.0, %v10469
        %v10471 = vpop.f32.mrb[0].mxu0
        %v10472 = vadd.f32 0.0, %v10471
        %v10473 = vpop.f32.mrb[0].mxu0
        %v10474 = vpop.f32.mrb[0].mxu0
        %10475 = vdwg.mxu0
        %10476 = vmatprep.subr.bf16.mxu0 %v10084
        %10477 = vmatpush1.bf16.msra.mxu0 %v10083
        %10478 = vmatprep.subr.bf16.mxu0 %v10090
        %10479 = vmatpush1.bf16.msra.mxu0 %v10089
        %10480 = vmatprep.subr.bf16.mxu0 %v10096
        %10481 = vmatpush1.bf16.msra.mxu0 %v10095
        %10482 = vmatprep.subr.bf16.mxu0 %v10102
        %10483 = vmatpush1.bf16.msra.mxu0 %v10101
        %10484 = vmatprep.subr.bf16.mxu0 %v10108
        %10485 = vmatpush1.bf16.msra.mxu0 %v10107
        %10486 = vmatprep.subr.bf16.mxu0 %v10114
        %10487 = vmatpush1.bf16.msra.mxu0 %v10113
        %10488 = vmatprep.subr.bf16.mxu0 %v10120
        %10489 = vmatpush1.bf16.msra.mxu0 %v10119
        %10490 = vmatprep.subr.bf16.mxu0 %v10126
        %10491 = vmatpush1.bf16.msra.mxu0 %v10125
        %10492 = vmatprep.subr.bf16.mxu0 0
        %10493 = vmatpush1.bf16.msra.mxu0 0
        %10494 = vmatprep.subr.bf16.mxu0 0
        %10495 = vmatpush1.bf16.msra.mxu0 0
        %10496 = vmatprep.subr.bf16.mxu0 0
        %10497 = vmatpush1.bf16.msra.mxu0 0
        %10498 = vmatprep.subr.bf16.mxu0 0
        %10499 = vmatpush1.bf16.msra.mxu0 0
        %10500 = vmatprep.subr.bf16.mxu0 0
        %10501 = vmatpush1.bf16.msra.mxu0 0
        %10502 = vmatprep.subr.bf16.mxu0 0
        %10503 = vmatpush1.bf16.msra.mxu0 0
        %10504 = vmatprep.subr.bf16.mxu0 0
        %10505 = vmatpush1.bf16.msra.mxu0 0
        %10506 = vmatprep.subr.bf16.mxu0 0
        %10507 = vmatpush1.bf16.msra.mxu0 0
        %10508 = vmatprep.mubr.bf16.mxu0 0
        %10509 = vmatmul.mubr.bf16.gmra.mrb[0].mxu0 %v9405
        %v10510 = vpop.f32.mrb[0].mxu0
        %v10511 = vadd.f32 %v10470, %v10510
        %v10512 = vpop.f32.mrb[0].mxu0
        %v10513 = vadd.f32 %v10472, %v10512
        %v10514 = vpop.f32.mrb[0].mxu0
        %v10515 = vpop.f32.mrb[0].mxu0
        %10516 = vdwg.mxu0
        %v10517 = vadd.f32 %v9147, %v10347
        %v10518 = vadd.f32 %v9149, %v10349
        %v10519 = vadd.f32 %v9229, %v10429
        %v10520 = vadd.f32 %v9231, %v10431
        %v10521 = vadd.f32 %v9311, %v10511
        %v10522 = vadd.f32 %v9313, %v10513
        %s10523 = scalar_lea.vmem %s12, 6
        %v10524 = vld [vmem:[%s10523] sm:$0x3]
        %v10526 = vsel %vm3615, %v10524, 0
        %10528 = vmatprep.subr.bf16.mxu0 %v6908
        %10529 = vmatpush1.bf16.msra.mxu0 %v6907
        %10530 = vmatprep.subr.bf16.mxu0 %v6911
        %10531 = vmatpush1.bf16.msra.mxu0 %v6910
        %10532 = vmatprep.subr.bf16.mxu0 %v6914
        %10533 = vmatpush1.bf16.msra.mxu0 %v6913
        %10534 = vmatprep.subr.bf16.mxu0 %v6917
        %10535 = vmatpush1.bf16.msra.mxu0 %v6916
        %10536 = vmatprep.subr.bf16.mxu0 0
        %10537 = vmatpush1.bf16.msra.mxu0 0
        %10538 = vmatprep.subr.bf16.mxu0 0
        %10539 = vmatpush1.bf16.msra.mxu0 0
        %10540 = vmatprep.subr.bf16.mxu0 0
        %10541 = vmatpush1.bf16.msra.mxu0 0
        %10542 = vmatprep.subr.bf16.mxu0 0
        %10543 = vmatpush1.bf16.msra.mxu0 0
        %10544 = vmatprep.subr.bf16.mxu0 0
        %10545 = vmatpush1.bf16.msra.mxu0 0
        %10546 = vmatprep.subr.bf16.mxu0 0
        %10547 = vmatpush1.bf16.msra.mxu0 0
        %10548 = vmatprep.subr.bf16.mxu0 0
        %10549 = vmatpush1.bf16.msra.mxu0 0
        %10550 = vmatprep.subr.bf16.mxu0 0
        %10551 = vmatpush1.bf16.msra.mxu0 0
        %10552 = vmatprep.subr.bf16.mxu0 0
        %10553 = vmatpush1.bf16.msra.mxu0 0
        %10554 = vmatprep.subr.bf16.mxu0 0
        %10555 = vmatpush1.bf16.msra.mxu0 0
        %10556 = vmatprep.subr.bf16.mxu0 0
        %10557 = vmatpush1.bf16.msra.mxu0 0
        %10558 = vmatprep.subr.bf16.mxu0 0
        %10559 = vmatpush1.bf16.msra.mxu0 0
        %10560 = vmatprep.mubr.bf16.mxu0 0
        %10561 = vmatmul.mubr.bf16.gmra.mrb[0].mxu0 %v10526
        %v10562 = vpop.f32.mrb[0].mxu0
        %v10563 = vadd.f32 0.0, %v10562
        %v10564 = vpop.f32.mrb[0].mxu0
        %v10565 = vadd.f32 0.0, %v10564
        %v10566 = vpop.f32.mrb[0].mxu0
        %v10567 = vpop.f32.mrb[0].mxu0
        %10568 = vdwg.mxu0
        %10569 = vmatprep.subr.bf16.mxu0 0
        %10570 = vmatpush1.bf16.msra.mxu0 %v6909
        %10571 = vmatprep.subr.bf16.mxu0 0
        %10572 = vmatpush1.bf16.msra.mxu0 %v6912
        %10573 = vmatprep.subr.bf16.mxu0 0
        %10574 = vmatpush1.bf16.msra.mxu0 %v6915
        %10575 = vmatprep.subr.bf16.mxu0 0
        %10576 = vmatpush1.bf16.msra.mxu0 %v6918
        %10577 = vmatprep.subr.bf16.mxu0 0
        %10578 = vmatpush1.bf16.msra.mxu0 0
        %10579 = vmatprep.subr.bf16.mxu0 0
        %10580 = vmatpush1.bf16.msra.mxu0 0
        %10581 = vmatprep.subr.bf16.mxu0 0
        %10582 = vmatpush1.bf16.msra.mxu0 0
        %10583 = vmatprep.subr.bf16.mxu0 0
        %10584 = vmatpush1.bf16.msra.mxu0 0
        %10585 = vmatprep.subr.bf16.mxu0 0
        %10586 = vmatpush1.bf16.msra.mxu0 0
        %10587 = vmatprep.subr.bf16.mxu0 0
        %10588 = vmatpush1.bf16.msra.mxu0 0
        %10589 = vmatprep.subr.bf16.mxu0 0
        %10590 = vmatpush1.bf16.msra.mxu0 0
        %10591 = vmatprep.subr.bf16.mxu0 0
        %10592 = vmatpush1.bf16.msra.mxu0 0
        %10593 = vmatprep.subr.bf16.mxu0 0
        %10594 = vmatpush1.bf16.msra.mxu0 0
        %10595 = vmatprep.subr.bf16.mxu0 0
        %10596 = vmatpush1.bf16.msra.mxu0 0
        %10597 = vmatprep.subr.bf16.mxu0 0
        %10598 = vmatpush1.bf16.msra.mxu0 0
        %10599 = vmatprep.subr.bf16.mxu0 0
        %10600 = vmatpush1.bf16.msra.mxu0 0
        %10601 = vmatprep.mubr.bf16.mxu0 0
        %10602 = vmatmul.mubr.bf16.gmra.mrb[0].mxu0 %v10526
        %v10603 = vpop.f32.mrb[0].mxu0
        %v10604 = vadd.f32 0.0, %v10603
        %v10605 = vpop.f32.mrb[0].mxu0
        %v10606 = vpop.f32.mrb[0].mxu0
        %v10607 = vpop.f32.mrb[0].mxu0
        %10608 = vdwg.mxu0
        %v10609 = vpack.c.bf16 %v10563, %v10563
        %v10610 = vpack.c.bf16 %v10565, %v10565
        %v10611 = vpack.c.bf16 %v10604, %v10604
        %s10612 = scalar_lea.vmem [#allocation13], 3456
        %v10613 = vld [vmem:[%s10612] sm:$0xff]
        %v10614 = vld [vmem:[%s10612 + $0x8] sm:$0xff]
        %v10615 = vld [vmem:[%s10612 + $0x10] sm:$0xff]
        %v10616 = vld [vmem:[%s10612 + $0x18] sm:$0xff]
        %v10617 = vld [vmem:[%s10612 + $0x20] sm:$0xff]
        %v10618 = vld [vmem:[%s10612 + $0x28] sm:$0xff]
        %v10619 = vld [vmem:[%s10612 + $0x30] sm:$0xff]
        %v10620 = vld [vmem:[%s10612 + $0x38] sm:$0xff]
        %v10621 = vld [vmem:[%s10612 + $0x40] sm:$0xff]
        %v10622 = vld [vmem:[%s10612 + $0x48] sm:$0xff]
        %v10623 = vld [vmem:[%s10612 + $0x50] sm:$0xff]
        %v10624 = vld [vmem:[%s10612 + $0x58] sm:$0xff]
        %v10625 = vld [vmem:[%s10612 + $0x60] sm:$0xff]
        %v10626 = vld [vmem:[%s10612 + $0x68] sm:$0xff]
        %v10627 = vld [vmem:[%s10612 + $0x70] sm:$0xff]
        %v10628 = vld [vmem:[%s10612 + $0x78] sm:$0xff]
        %v10629 = vld [vmem:[%s10612 + $0x80] sm:$0xff]
        %v10630 = vld [vmem:[%s10612 + $0x88] sm:$0xff]
        %v10631 = vld [vmem:[%s10612 + $0x90] sm:$0xff]
        %v10632 = vld [vmem:[%s10612 + $0x98] sm:$0xff]
        %v10633 = vld [vmem:[%s10612 + $0xa0] sm:$0xff]
        %v10634 = vld [vmem:[%s10612 + $0xa8] sm:$0xff]
        %v10635 = vld [vmem:[%s10612 + $0xb0] sm:$0xff]
        %v10636 = vld [vmem:[%s10612 + $0xb8] sm:$0xff]
        %v10637 = vld [vmem:[%s10612 + $0xc0] sm:$0xff]
        %v10638 = vld [vmem:[%s10612 + $0xc8] sm:$0xff]
        %v10639 = vld [vmem:[%s10612 + $0xd0] sm:$0xff]
        %v10640 = vld [vmem:[%s10612 + $0xd8] sm:$0xff]
        %v10641 = vld [vmem:[%s10612 + $0xe0] sm:$0xff]
        %v10642 = vld [vmem:[%s10612 + $0xe8] sm:$0xff]
        %v10643 = vld [vmem:[%s10612 + $0xf0] sm:$0xff]
        %v10644 = vld [vmem:[%s10612 + $0xf8] sm:$0xff]
        %v10645 = vld [vmem:[%s10612 + $0x100] sm:$0xff]
        %v10646 = vld [vmem:[%s10612 + $0x108] sm:$0xff]
        %v10647 = vld [vmem:[%s10612 + $0x110] sm:$0xff]
        %v10648 = vld [vmem:[%s10612 + $0x118] sm:$0xff]
        %v10649 = vld [vmem:[%s10612 + $0x120] sm:$0xff]
        %v10650 = vld [vmem:[%s10612 + $0x128] sm:$0xff]
        %v10651 = vld [vmem:[%s10612 + $0x130] sm:$0xff]
        %v10652 = vld [vmem:[%s10612 + $0x138] sm:$0xff]
        %v10653 = vld [vmem:[%s10612 + $0x140] sm:$0xff]
        %v10654 = vld [vmem:[%s10612 + $0x148] sm:$0xff]
        %v10655 = vld [vmem:[%s10612 + $0x150] sm:$0xff]
        %v10656 = vld [vmem:[%s10612 + $0x158] sm:$0xff]
        %v10657 = vld [vmem:[%s10612 + $0x160] sm:$0xff]
        %v10658 = vld [vmem:[%s10612 + $0x168] sm:$0xff]
        %v10659 = vld [vmem:[%s10612 + $0x170] sm:$0xff]
        %v10660 = vld [vmem:[%s10612 + $0x178] sm:$0xff]
        %v10661 = vld [vmem:[%s10612 + $0x180] sm:$0xff]
        %v10662 = vld [vmem:[%s10612 + $0x188] sm:$0xff]
        %v10663 = vld [vmem:[%s10612 + $0x190] sm:$0xff]
        %v10664 = vld [vmem:[%s10612 + $0x198] sm:$0xff]
        %v10665 = vld [vmem:[%s10612 + $0x1a0] sm:$0xff]
        %v10666 = vld [vmem:[%s10612 + $0x1a8] sm:$0xff]
        %v10667 = vld [vmem:[%s10612 + $0x1b0] sm:$0xff]
        %v10668 = vld [vmem:[%s10612 + $0x1b8] sm:$0xff]
        %v10669 = vld [vmem:[%s10612 + $0x1c0] sm:$0xff]
        %v10670 = vld [vmem:[%s10612 + $0x1c8] sm:$0xff]
        %v10671 = vld [vmem:[%s10612 + $0x1d0] sm:$0xff]
        %v10672 = vld [vmem:[%s10612 + $0x1d8] sm:$0xff]
        %v10673 = vld [vmem:[%s10612 + $0x1e0] sm:$0xff]
        %v10674 = vld [vmem:[%s10612 + $0x1e8] sm:$0xff]
        %v10675 = vld [vmem:[%s10612 + $0x1f0] sm:$0xff]
        %v10676 = vld [vmem:[%s10612 + $0x1f8] sm:$0xff]
        %v10677 = vld [vmem:[%s10612 + $0x200] sm:$0xff]
        %v10678 = vld [vmem:[%s10612 + $0x208] sm:$0xff]
        %v10679 = vld [vmem:[%s10612 + $0x210] sm:$0xff]
        %v10680 = vld [vmem:[%s10612 + $0x218] sm:$0xff]
        %v10681 = vld [vmem:[%s10612 + $0x220] sm:$0xff]
        %v10682 = vld [vmem:[%s10612 + $0x228] sm:$0xff]
        %v10683 = vld [vmem:[%s10612 + $0x230] sm:$0xff]
        %v10684 = vld [vmem:[%s10612 + $0x238] sm:$0xff]
        %v10685 = vld [vmem:[%s10612 + $0x240] sm:$0xff]
        %v10686 = vld [vmem:[%s10612 + $0x248] sm:$0xff]
        %v10687 = vld [vmem:[%s10612 + $0x250] sm:$0xff]
        %v10688 = vld [vmem:[%s10612 + $0x258] sm:$0xff]
        %v10689 = vld [vmem:[%s10612 + $0x260] sm:$0xff]
        %v10690 = vld [vmem:[%s10612 + $0x268] sm:$0xff]
        %v10691 = vld [vmem:[%s10612 + $0x270] sm:$0xff]
        %v10692 = vld [vmem:[%s10612 + $0x278] sm:$0xff]
        %v10693 = vld [vmem:[%s10612 + $0x280] sm:$0xff]
        %v10694 = vld [vmem:[%s10612 + $0x288] sm:$0xff]
        %v10695 = vld [vmem:[%s10612 + $0x290] sm:$0xff]
        %v10696 = vld [vmem:[%s10612 + $0x298] sm:$0xff]
        %v10697 = vld [vmem:[%s10612 + $0x2a0] sm:$0xff]
        %v10698 = vld [vmem:[%s10612 + $0x2a8] sm:$0xff]
        %v10699 = vld [vmem:[%s10612 + $0x2b0] sm:$0xff]
        %v10700 = vld [vmem:[%s10612 + $0x2b8] sm:$0xff]
        %v10701 = vld [vmem:[%s10612 + $0x2c0] sm:$0xff]
        %v10702 = vld [vmem:[%s10612 + $0x2c8] sm:$0xff]
        %v10703 = vld [vmem:[%s10612 + $0x2d0] sm:$0xff]
        %v10704 = vld [vmem:[%s10612 + $0x2d8] sm:$0xff]
        %v10705 = vld [vmem:[%s10612 + $0x2e0] sm:$0xff]
        %v10706 = vld [vmem:[%s10612 + $0x2e8] sm:$0xff]
        %v10707 = vld [vmem:[%s10612 + $0x2f0] sm:$0xff]
        %v10708 = vld [vmem:[%s10612 + $0x2f8] sm:$0xff]
        %v10709 = vld [vmem:[%s10612 + $0x300] sm:$0xff]
        %v10710 = vld [vmem:[%s10612 + $0x308] sm:$0xff]
        %v10711 = vld [vmem:[%s10612 + $0x310] sm:$0xff]
        %v10712 = vld [vmem:[%s10612 + $0x318] sm:$0xff]
        %v10713 = vld [vmem:[%s10612 + $0x320] sm:$0xff]
        %v10714 = vld [vmem:[%s10612 + $0x328] sm:$0xff]
        %v10715 = vld [vmem:[%s10612 + $0x330] sm:$0xff]
        %v10716 = vld [vmem:[%s10612 + $0x338] sm:$0xff]
        %v10717 = vld [vmem:[%s10612 + $0x340] sm:$0xff]
        %v10718 = vld [vmem:[%s10612 + $0x348] sm:$0xff]
        %v10719 = vld [vmem:[%s10612 + $0x350] sm:$0xff]
        %v10720 = vld [vmem:[%s10612 + $0x358] sm:$0xff]
        %v10721 = vld [vmem:[%s10612 + $0x360] sm:$0xff]
        %v10722 = vld [vmem:[%s10612 + $0x368] sm:$0xff]
        %v10723 = vld [vmem:[%s10612 + $0x370] sm:$0xff]
        %v10724 = vld [vmem:[%s10612 + $0x378] sm:$0xff]
        %v10725 = vld [vmem:[%s10612 + $0x380] sm:$0xff]
        %v10726 = vld [vmem:[%s10612 + $0x388] sm:$0xff]
        %v10727 = vld [vmem:[%s10612 + $0x390] sm:$0xff]
        %v10728 = vld [vmem:[%s10612 + $0x398] sm:$0xff]
        %v10729 = vld [vmem:[%s10612 + $0x3a0] sm:$0xff]
        %v10730 = vld [vmem:[%s10612 + $0x3a8] sm:$0xff]
        %v10731 = vld [vmem:[%s10612 + $0x3b0] sm:$0xff]
        %v10732 = vld [vmem:[%s10612 + $0x3b8] sm:$0xff]
        %v10733 = vld [vmem:[%s10612 + $0x3c0] sm:$0xff]
        %v10734 = vld [vmem:[%s10612 + $0x3c8] sm:$0xff]
        %v10735 = vld [vmem:[%s10612 + $0x3d0] sm:$0xff]
        %v10736 = vld [vmem:[%s10612 + $0x3d8] sm:$0xff]
        %v10737 = vld [vmem:[%s10612 + $0x3e0] sm:$0xff]
        %v10738 = vld [vmem:[%s10612 + $0x3e8] sm:$0xff]
        %v10739 = vld [vmem:[%s10612 + $0x3f0] sm:$0xff]
        %v10740 = vld [vmem:[%s10612 + $0x3f8] sm:$0xff]
        %v10741 = vld [vmem:[%s10612 + $0x400] sm:$0xff]
        %v10742 = vld [vmem:[%s10612 + $0x408] sm:$0xff]
        %v10743 = vld [vmem:[%s10612 + $0x410] sm:$0xff]
        %v10744 = vld [vmem:[%s10612 + $0x418] sm:$0xff]
        %v10745 = vld [vmem:[%s10612 + $0x420] sm:$0xff]
        %v10746 = vld [vmem:[%s10612 + $0x428] sm:$0xff]
        %v10747 = vld [vmem:[%s10612 + $0x430] sm:$0xff]
        %v10748 = vld [vmem:[%s10612 + $0x438] sm:$0xff]
        %v10749 = vld [vmem:[%s10612 + $0x440] sm:$0xff]
        %v10750 = vld [vmem:[%s10612 + $0x448] sm:$0xff]
        %v10751 = vld [vmem:[%s10612 + $0x450] sm:$0xff]
        %v10752 = vld [vmem:[%s10612 + $0x458] sm:$0xff]
        %v10753 = vld [vmem:[%s10612 + $0x460] sm:$0xff]
        %v10754 = vld [vmem:[%s10612 + $0x468] sm:$0xff]
        %v10755 = vld [vmem:[%s10612 + $0x470] sm:$0xff]
        %v10756 = vld [vmem:[%s10612 + $0x478] sm:$0xff]
        %v10901 = vunpack.c.l.b16 %v10613
        %v10902 = vunpack.c.h.b16 %v10613
        %v10903 = vunpack.c.l.b16 %v10614
        %v10904 = vunpack.c.h.b16 %v10614
        %v10905 = vunpack.c.l.b16 %v10615
        %v10906 = vunpack.c.h.b16 %v10615
        %v10907 = vunpack.c.l.b16 %v10616
        %v10908 = vunpack.c.h.b16 %v10616
        %v10909 = vunpack.c.l.b16 %v10617
        %v10910 = vunpack.c.h.b16 %v10617
        %v10911 = vunpack.c.l.b16 %v10618
        %v10912 = vunpack.c.h.b16 %v10618
        %v10913 = vunpack.c.l.b16 %v10619
        %v10914 = vunpack.c.h.b16 %v10619
        %v10915 = vunpack.c.l.b16 %v10620
        %v10916 = vunpack.c.h.b16 %v10620
        %v10917 = vunpack.c.l.b16 %v10621
        %v10918 = vunpack.c.h.b16 %v10621
        %v10919 = vunpack.c.l.b16 %v10622
        %v10920 = vunpack.c.h.b16 %v10622
        %v10921 = vunpack.c.l.b16 %v10623
        %v10922 = vunpack.c.h.b16 %v10623
        %v10923 = vunpack.c.l.b16 %v10624
        %v10924 = vunpack.c.h.b16 %v10624
        %v10925 = vunpack.c.l.b16 %v10625
        %v10926 = vunpack.c.h.b16 %v10625
        %v10927 = vunpack.c.l.b16 %v10626
        %v10928 = vunpack.c.h.b16 %v10626
        %v10929 = vunpack.c.l.b16 %v10627
        %v10930 = vunpack.c.h.b16 %v10627
        %v10931 = vunpack.c.l.b16 %v10628
        %v10932 = vunpack.c.h.b16 %v10628
        %v10933 = vunpack.c.l.b16 %v10629
        %v10934 = vunpack.c.h.b16 %v10629
        %v10935 = vunpack.c.l.b16 %v10630
        %v10936 = vunpack.c.h.b16 %v10630
        %v10937 = vunpack.c.l.b16 %v10631
        %v10938 = vunpack.c.h.b16 %v10631
        %v10939 = vunpack.c.l.b16 %v10632
        %v10940 = vunpack.c.h.b16 %v10632
        %v10941 = vunpack.c.l.b16 %v10633
        %v10942 = vunpack.c.h.b16 %v10633
        %v10943 = vunpack.c.l.b16 %v10634
        %v10944 = vunpack.c.h.b16 %v10634
        %v10945 = vunpack.c.l.b16 %v10635
        %v10946 = vunpack.c.h.b16 %v10635
        %v10947 = vunpack.c.l.b16 %v10636
        %v10948 = vunpack.c.h.b16 %v10636
        %v10949 = vunpack.c.l.b16 %v10637
        %v10950 = vunpack.c.h.b16 %v10637
        %v10951 = vunpack.c.l.b16 %v10638
        %v10952 = vunpack.c.h.b16 %v10638
        %v10953 = vunpack.c.l.b16 %v10639
        %v10954 = vunpack.c.h.b16 %v10639
        %v10955 = vunpack.c.l.b16 %v10640
        %v10956 = vunpack.c.h.b16 %v10640
        %v10957 = vunpack.c.l.b16 %v10641
        %v10958 = vunpack.c.h.b16 %v10641
        %v10959 = vunpack.c.l.b16 %v10642
        %v10960 = vunpack.c.h.b16 %v10642
        %v10961 = vunpack.c.l.b16 %v10643
        %v10962 = vunpack.c.h.b16 %v10643
        %v10963 = vunpack.c.l.b16 %v10644
        %v10964 = vunpack.c.h.b16 %v10644
        %v10965 = vunpack.c.l.b16 %v10645
        %v10966 = vunpack.c.h.b16 %v10645
        %v10967 = vunpack.c.l.b16 %v10646
        %v10968 = vunpack.c.h.b16 %v10646
        %v10969 = vunpack.c.l.b16 %v10647
        %v10970 = vunpack.c.h.b16 %v10647
        %v10971 = vunpack.c.l.b16 %v10648
        %v10972 = vunpack.c.h.b16 %v10648
        %v10973 = vunpack.c.l.b16 %v10649
        %v10974 = vunpack.c.h.b16 %v10649
        %v10975 = vunpack.c.l.b16 %v10650
        %v10976 = vunpack.c.h.b16 %v10650
        %v10977 = vunpack.c.l.b16 %v10651
        %v10978 = vunpack.c.h.b16 %v10651
        %v10979 = vunpack.c.l.b16 %v10652
        %v10980 = vunpack.c.h.b16 %v10652
        %v10981 = vunpack.c.l.b16 %v10653
        %v10982 = vunpack.c.h.b16 %v10653
        %v10983 = vunpack.c.l.b16 %v10654
        %v10984 = vunpack.c.h.b16 %v10654
        %v10985 = vunpack.c.l.b16 %v10655
        %v10986 = vunpack.c.h.b16 %v10655
        %v10987 = vunpack.c.l.b16 %v10656
        %v10988 = vunpack.c.h.b16 %v10656
        %v10989 = vunpack.c.l.b16 %v10657
        %v10990 = vunpack.c.h.b16 %v10657
        %v10991 = vunpack.c.l.b16 %v10658
        %v10992 = vunpack.c.h.b16 %v10658
        %v10993 = vunpack.c.l.b16 %v10659
        %v10994 = vunpack.c.h.b16 %v10659
        %v10995 = vunpack.c.l.b16 %v10660
        %v10996 = vunpack.c.h.b16 %v10660
        %v10997 = vunpack.c.l.b16 %v10661
        %v10998 = vunpack.c.h.b16 %v10661
        %v10999 = vunpack.c.l.b16 %v10662
        %v11000 = vunpack.c.h.b16 %v10662
        %v11001 = vunpack.c.l.b16 %v10663
        %v11002 = vunpack.c.h.b16 %v10663
        %v11003 = vunpack.c.l.b16 %v10664
        %v11004 = vunpack.c.h.b16 %v10664
        %v11005 = vunpack.c.l.b16 %v10665
        %v11006 = vunpack.c.h.b16 %v10665
        %v11007 = vunpack.c.l.b16 %v10666
        %v11008 = vunpack.c.h.b16 %v10666
        %v11009 = vunpack.c.l.b16 %v10667
        %v11010 = vunpack.c.h.b16 %v10667
        %v11011 = vunpack.c.l.b16 %v10668
        %v11012 = vunpack.c.h.b16 %v10668
        %v11013 = vunpack.c.l.b16 %v10669
        %v11014 = vunpack.c.h.b16 %v10669
        %v11015 = vunpack.c.l.b16 %v10670
        %v11016 = vunpack.c.h.b16 %v10670
        %v11017 = vunpack.c.l.b16 %v10671
        %v11018 = vunpack.c.h.b16 %v10671
        %v11019 = vunpack.c.l.b16 %v10672
        %v11020 = vunpack.c.h.b16 %v10672
        %v11021 = vunpack.c.l.b16 %v10673
        %v11022 = vunpack.c.h.b16 %v10673
        %v11023 = vunpack.c.l.b16 %v10674
        %v11024 = vunpack.c.h.b16 %v10674
        %v11025 = vunpack.c.l.b16 %v10675
        %v11026 = vunpack.c.h.b16 %v10675
        %v11027 = vunpack.c.l.b16 %v10676
        %v11028 = vunpack.c.h.b16 %v10676
        %v11029 = vunpack.c.l.b16 %v10677
        %v11030 = vunpack.c.h.b16 %v10677
        %v11031 = vunpack.c.l.b16 %v10678
        %v11032 = vunpack.c.h.b16 %v10678
        %v11033 = vunpack.c.l.b16 %v10679
        %v11034 = vunpack.c.h.b16 %v10679
        %v11035 = vunpack.c.l.b16 %v10680
        %v11036 = vunpack.c.h.b16 %v10680
        %v11037 = vunpack.c.l.b16 %v10681
        %v11038 = vunpack.c.h.b16 %v10681
        %v11039 = vunpack.c.l.b16 %v10682
        %v11040 = vunpack.c.h.b16 %v10682
        %v11041 = vunpack.c.l.b16 %v10683
        %v11042 = vunpack.c.h.b16 %v10683
        %v11043 = vunpack.c.l.b16 %v10684
        %v11044 = vunpack.c.h.b16 %v10684
        %v11045 = vunpack.c.l.b16 %v10685
        %v11046 = vunpack.c.h.b16 %v10685
        %v11047 = vunpack.c.l.b16 %v10686
        %v11048 = vunpack.c.h.b16 %v10686
        %v11049 = vunpack.c.l.b16 %v10687
        %v11050 = vunpack.c.h.b16 %v10687
        %v11051 = vunpack.c.l.b16 %v10688
        %v11052 = vunpack.c.h.b16 %v10688
        %v11053 = vunpack.c.l.b16 %v10689
        %v11054 = vunpack.c.h.b16 %v10689
        %v11055 = vunpack.c.l.b16 %v10690
        %v11056 = vunpack.c.h.b16 %v10690
        %v11057 = vunpack.c.l.b16 %v10691
        %v11058 = vunpack.c.h.b16 %v10691
        %v11059 = vunpack.c.l.b16 %v10692
        %v11060 = vunpack.c.h.b16 %v10692
        %v11061 = vunpack.c.l.b16 %v10693
        %v11062 = vunpack.c.h.b16 %v10693
        %v11063 = vunpack.c.l.b16 %v10694
        %v11064 = vunpack.c.h.b16 %v10694
        %v11065 = vunpack.c.l.b16 %v10695
        %v11066 = vunpack.c.h.b16 %v10695
        %v11067 = vunpack.c.l.b16 %v10696
        %v11068 = vunpack.c.h.b16 %v10696
        %v11069 = vunpack.c.l.b16 %v10697
        %v11070 = vunpack.c.h.b16 %v10697
        %v11071 = vunpack.c.l.b16 %v10698
        %v11072 = vunpack.c.h.b16 %v10698
        %v11073 = vunpack.c.l.b16 %v10699
        %v11074 = vunpack.c.h.b16 %v10699
        %v11075 = vunpack.c.l.b16 %v10700
        %v11076 = vunpack.c.h.b16 %v10700
        %v11077 = vunpack.c.l.b16 %v10701
        %v11078 = vunpack.c.h.b16 %v10701
        %v11079 = vunpack.c.l.b16 %v10702
        %v11080 = vunpack.c.h.b16 %v10702
        %v11081 = vunpack.c.l.b16 %v10703
        %v11082 = vunpack.c.h.b16 %v10703
        %v11083 = vunpack.c.l.b16 %v10704
        %v11084 = vunpack.c.h.b16 %v10704
        %v11085 = vunpack.c.l.b16 %v10705
        %v11086 = vunpack.c.h.b16 %v10705
        %v11087 = vunpack.c.l.b16 %v10706
        %v11088 = vunpack.c.h.b16 %v10706
        %v11089 = vunpack.c.l.b16 %v10707
        %v11090 = vunpack.c.h.b16 %v10707
        %v11091 = vunpack.c.l.b16 %v10708
        %v11092 = vunpack.c.h.b16 %v10708
        %v11093 = vunpack.c.l.b16 %v10709
        %v11094 = vunpack.c.h.b16 %v10709
        %v11095 = vunpack.c.l.b16 %v10710
        %v11096 = vunpack.c.h.b16 %v10710
        %v11097 = vunpack.c.l.b16 %v10711
        %v11098 = vunpack.c.h.b16 %v10711
        %v11099 = vunpack.c.l.b16 %v10712
        %v11100 = vunpack.c.h.b16 %v10712
        %v11101 = vunpack.c.l.b16 %v10713
        %v11102 = vunpack.c.h.b16 %v10713
        %v11103 = vunpack.c.l.b16 %v10714
        %v11104 = vunpack.c.h.b16 %v10714
        %v11105 = vunpack.c.l.b16 %v10715
        %v11106 = vunpack.c.h.b16 %v10715
        %v11107 = vunpack.c.l.b16 %v10716
        %v11108 = vunpack.c.h.b16 %v10716
        %v11109 = vunpack.c.l.b16 %v10717
        %v11110 = vunpack.c.h.b16 %v10717
        %v11111 = vunpack.c.l.b16 %v10718
        %v11112 = vunpack.c.h.b16 %v10718
        %v11113 = vunpack.c.l.b16 %v10719
        %v11114 = vunpack.c.h.b16 %v10719
        %v11115 = vunpack.c.l.b16 %v10720
        %v11116 = vunpack.c.h.b16 %v10720
        %v11117 = vunpack.c.l.b16 %v10721
        %v11118 = vunpack.c.h.b16 %v10721
        %v11119 = vunpack.c.l.b16 %v10722
        %v11120 = vunpack.c.h.b16 %v10722
        %v11121 = vunpack.c.l.b16 %v10723
        %v11122 = vunpack.c.h.b16 %v10723
        %v11123 = vunpack.c.l.b16 %v10724
        %v11124 = vunpack.c.h.b16 %v10724
        %v11125 = vunpack.c.l.b16 %v10725
        %v11126 = vunpack.c.h.b16 %v10725
        %v11127 = vunpack.c.l.b16 %v10726
        %v11128 = vunpack.c.h.b16 %v10726
        %v11129 = vunpack.c.l.b16 %v10727
        %v11130 = vunpack.c.h.b16 %v10727
        %v11131 = vunpack.c.l.b16 %v10728
        %v11132 = vunpack.c.h.b16 %v10728
        %v11133 = vunpack.c.l.b16 %v10729
        %v11134 = vunpack.c.h.b16 %v10729
        %v11135 = vunpack.c.l.b16 %v10730
        %v11136 = vunpack.c.h.b16 %v10730
        %v11137 = vunpack.c.l.b16 %v10731
        %v11138 = vunpack.c.h.b16 %v10731
        %v11139 = vunpack.c.l.b16 %v10732
        %v11140 = vunpack.c.h.b16 %v10732
        %v11141 = vunpack.c.l.b16 %v10733
        %v11142 = vunpack.c.h.b16 %v10733
        %v11143 = vunpack.c.l.b16 %v10734
        %v11144 = vunpack.c.h.b16 %v10734
        %v11145 = vunpack.c.l.b16 %v10735
        %v11146 = vunpack.c.h.b16 %v10735
        %v11147 = vunpack.c.l.b16 %v10736
        %v11148 = vunpack.c.h.b16 %v10736
        %v11149 = vunpack.c.l.b16 %v10737
        %v11150 = vunpack.c.h.b16 %v10737
        %v11151 = vunpack.c.l.b16 %v10738
        %v11152 = vunpack.c.h.b16 %v10738
        %v11153 = vunpack.c.l.b16 %v10739
        %v11154 = vunpack.c.h.b16 %v10739
        %v11155 = vunpack.c.l.b16 %v10740
        %v11156 = vunpack.c.h.b16 %v10740
        %v11157 = vunpack.c.l.b16 %v10741
        %v11158 = vunpack.c.h.b16 %v10741
        %v11159 = vunpack.c.l.b16 %v10742
        %v11160 = vunpack.c.h.b16 %v10742
        %v11161 = vunpack.c.l.b16 %v10743
        %v11162 = vunpack.c.h.b16 %v10743
        %v11163 = vunpack.c.l.b16 %v10744
        %v11164 = vunpack.c.h.b16 %v10744
        %v11165 = vunpack.c.l.b16 %v10745
        %v11166 = vunpack.c.h.b16 %v10745
        %v11167 = vunpack.c.l.b16 %v10746
        %v11168 = vunpack.c.h.b16 %v10746
        %v11169 = vunpack.c.l.b16 %v10747
        %v11170 = vunpack.c.h.b16 %v10747
        %v11171 = vunpack.c.l.b16 %v10748
        %v11172 = vunpack.c.h.b16 %v10748
        %v11173 = vunpack.c.l.b16 %v10749
        %v11174 = vunpack.c.h.b16 %v10749
        %v11175 = vunpack.c.l.b16 %v10750
        %v11176 = vunpack.c.h.b16 %v10750
        %v11177 = vunpack.c.l.b16 %v10751
        %v11178 = vunpack.c.h.b16 %v10751
        %v11179 = vunpack.c.l.b16 %v10752
        %v11180 = vunpack.c.h.b16 %v10752
        %v11181 = vunpack.c.l.b16 %v10753
        %v11182 = vunpack.c.h.b16 %v10753
        %v11183 = vunpack.c.l.b16 %v10754
        %v11184 = vunpack.c.h.b16 %v10754
        %v11185 = vunpack.c.l.b16 %v10755
        %v11186 = vunpack.c.h.b16 %v10755
        %v11187 = vunpack.c.l.b16 %v10756
        %v11188 = vunpack.c.h.b16 %v10756
        %v11189 = vpack.c.b16 %v10907, %v10901
        %v11190 = vpack.c.b16 %v10908, %v10902
        %v11191 = vpack.c.b16 %v10909, %v10903
        %v11192 = vpack.c.b16 %v10910, %v10904
        %v11193 = vpack.c.b16 %v10911, %v10905
        %v11194 = vpack.c.b16 %v10912, %v10906
        %v11195 = vpack.c.b16 %v10919, %v10913
        %v11196 = vpack.c.b16 %v10920, %v10914
        %v11197 = vpack.c.b16 %v10921, %v10915
        %v11198 = vpack.c.b16 %v10922, %v10916
        %v11199 = vpack.c.b16 %v10923, %v10917
        %v11200 = vpack.c.b16 %v10924, %v10918
        %v11201 = vpack.c.b16 %v10931, %v10925
        %v11202 = vpack.c.b16 %v10932, %v10926
        %v11203 = vpack.c.b16 %v10933, %v10927
        %v11204 = vpack.c.b16 %v10934, %v10928
        %v11205 = vpack.c.b16 %v10935, %v10929
        %v11206 = vpack.c.b16 %v10936, %v10930
        %v11207 = vpack.c.b16 %v10943, %v10937
        %v11208 = vpack.c.b16 %v10944, %v10938
        %v11209 = vpack.c.b16 %v10945, %v10939
        %v11210 = vpack.c.b16 %v10946, %v10940
        %v11211 = vpack.c.b16 %v10947, %v10941
        %v11212 = vpack.c.b16 %v10948, %v10942
        %v11213 = vpack.c.b16 %v10955, %v10949
        %v11214 = vpack.c.b16 %v10956, %v10950
        %v11215 = vpack.c.b16 %v10957, %v10951
        %v11216 = vpack.c.b16 %v10958, %v10952
        %v11217 = vpack.c.b16 %v10959, %v10953
        %v11218 = vpack.c.b16 %v10960, %v10954
        %v11219 = vpack.c.b16 %v10967, %v10961
        %v11220 = vpack.c.b16 %v10968, %v10962
        %v11221 = vpack.c.b16 %v10969, %v10963
        %v11222 = vpack.c.b16 %v10970, %v10964
        %v11223 = vpack.c.b16 %v10971, %v10965
        %v11224 = vpack.c.b16 %v10972, %v10966
        %v11225 = vpack.c.b16 %v10979, %v10973
        %v11226 = vpack.c.b16 %v10980, %v10974
        %v11227 = vpack.c.b16 %v10981, %v10975
        %v11228 = vpack.c.b16 %v10982, %v10976
        %v11229 = vpack.c.b16 %v10983, %v10977
        %v11230 = vpack.c.b16 %v10984, %v10978
        %v11231 = vpack.c.b16 %v10991, %v10985
        %v11232 = vpack.c.b16 %v10992, %v10986
        %v11233 = vpack.c.b16 %v10993, %v10987
        %v11234 = vpack.c.b16 %v10994, %v10988
        %v11235 = vpack.c.b16 %v10995, %v10989
        %v11236 = vpack.c.b16 %v10996, %v10990
        %v11237 = vpack.c.b16 %v11003, %v10997
        %v11238 = vpack.c.b16 %v11004, %v10998
        %v11239 = vpack.c.b16 %v11005, %v10999
        %v11240 = vpack.c.b16 %v11006, %v11000
        %v11241 = vpack.c.b16 %v11007, %v11001
        %v11242 = vpack.c.b16 %v11008, %v11002
        %v11243 = vpack.c.b16 %v11015, %v11009
        %v11244 = vpack.c.b16 %v11016, %v11010
        %v11245 = vpack.c.b16 %v11017, %v11011
        %v11246 = vpack.c.b16 %v11018, %v11012
        %v11247 = vpack.c.b16 %v11019, %v11013
        %v11248 = vpack.c.b16 %v11020, %v11014
        %v11249 = vpack.c.b16 %v11027, %v11021
        %v11250 = vpack.c.b16 %v11028, %v11022
        %v11251 = vpack.c.b16 %v11029, %v11023
        %v11252 = vpack.c.b16 %v11030, %v11024
        %v11253 = vpack.c.b16 %v11031, %v11025
        %v11254 = vpack.c.b16 %v11032, %v11026
        %v11255 = vpack.c.b16 %v11039, %v11033
        %v11256 = vpack.c.b16 %v11040, %v11034
        %v11257 = vpack.c.b16 %v11041, %v11035
        %v11258 = vpack.c.b16 %v11042, %v11036
        %v11259 = vpack.c.b16 %v11043, %v11037
        %v11260 = vpack.c.b16 %v11044, %v11038
        %v11261 = vpack.c.b16 %v11051, %v11045
        %v11262 = vpack.c.b16 %v11052, %v11046
        %v11263 = vpack.c.b16 %v11053, %v11047
        %v11264 = vpack.c.b16 %v11054, %v11048
        %v11265 = vpack.c.b16 %v11055, %v11049
        %v11266 = vpack.c.b16 %v11056, %v11050
        %v11267 = vpack.c.b16 %v11063, %v11057
        %v11268 = vpack.c.b16 %v11064, %v11058
        %v11269 = vpack.c.b16 %v11065, %v11059
        %v11270 = vpack.c.b16 %v11066, %v11060
        %v11271 = vpack.c.b16 %v11067, %v11061
        %v11272 = vpack.c.b16 %v11068, %v11062
        %v11273 = vpack.c.b16 %v11075, %v11069
        %v11274 = vpack.c.b16 %v11076, %v11070
        %v11275 = vpack.c.b16 %v11077, %v11071
        %v11276 = vpack.c.b16 %v11078, %v11072
        %v11277 = vpack.c.b16 %v11079, %v11073
        %v11278 = vpack.c.b16 %v11080, %v11074
        %v11279 = vpack.c.b16 %v11087, %v11081
        %v11280 = vpack.c.b16 %v11088, %v11082
        %v11281 = vpack.c.b16 %v11089, %v11083
        %v11282 = vpack.c.b16 %v11090, %v11084
        %v11283 = vpack.c.b16 %v11091, %v11085
        %v11284 = vpack.c.b16 %v11092, %v11086
        %v11285 = vpack.c.b16 %v11099, %v11093
        %v11286 = vpack.c.b16 %v11100, %v11094
        %v11287 = vpack.c.b16 %v11101, %v11095
        %v11288 = vpack.c.b16 %v11102, %v11096
        %v11289 = vpack.c.b16 %v11103, %v11097
        %v11290 = vpack.c.b16 %v11104, %v11098
        %v11291 = vpack.c.b16 %v11111, %v11105
        %v11292 = vpack.c.b16 %v11112, %v11106
        %v11293 = vpack.c.b16 %v11113, %v11107
        %v11294 = vpack.c.b16 %v11114, %v11108
        %v11295 = vpack.c.b16 %v11115, %v11109
        %v11296 = vpack.c.b16 %v11116, %v11110
        %v11297 = vpack.c.b16 %v11123, %v11117
        %v11298 = vpack.c.b16 %v11124, %v11118
        %v11299 = vpack.c.b16 %v11125, %v11119
        %v11300 = vpack.c.b16 %v11126, %v11120
        %v11301 = vpack.c.b16 %v11127, %v11121
        %v11302 = vpack.c.b16 %v11128, %v11122
        %v11303 = vpack.c.b16 %v11135, %v11129
        %v11304 = vpack.c.b16 %v11136, %v11130
        %v11305 = vpack.c.b16 %v11137, %v11131
        %v11306 = vpack.c.b16 %v11138, %v11132
        %v11307 = vpack.c.b16 %v11139, %v11133
        %v11308 = vpack.c.b16 %v11140, %v11134
        %v11309 = vpack.c.b16 %v11147, %v11141
        %v11310 = vpack.c.b16 %v11148, %v11142
        %v11311 = vpack.c.b16 %v11149, %v11143
        %v11312 = vpack.c.b16 %v11150, %v11144
        %v11313 = vpack.c.b16 %v11151, %v11145
        %v11314 = vpack.c.b16 %v11152, %v11146
        %v11315 = vpack.c.b16 %v11159, %v11153
        %v11316 = vpack.c.b16 %v11160, %v11154
        %v11317 = vpack.c.b16 %v11161, %v11155
        %v11318 = vpack.c.b16 %v11162, %v11156
        %v11319 = vpack.c.b16 %v11163, %v11157
        %v11320 = vpack.c.b16 %v11164, %v11158
        %v11321 = vpack.c.b16 %v11171, %v11165
        %v11322 = vpack.c.b16 %v11172, %v11166
        %v11323 = vpack.c.b16 %v11173, %v11167
        %v11324 = vpack.c.b16 %v11174, %v11168
        %v11325 = vpack.c.b16 %v11175, %v11169
        %v11326 = vpack.c.b16 %v11176, %v11170
        %v11327 = vpack.c.b16 %v11183, %v11177
        %v11328 = vpack.c.b16 %v11184, %v11178
        %v11329 = vpack.c.b16 %v11185, %v11179
        %v11330 = vpack.c.b16 %v11186, %v11180
        %v11331 = vpack.c.b16 %v11187, %v11181
        %v11332 = vpack.c.b16 %v11188, %v11182
        %11477 = vmatprep.subr.bf16.mxu0 %v11190
        %11478 = vmatpush1.bf16.msra.mxu0 %v11189
        %11479 = vmatprep.subr.bf16.mxu0 %v11196
        %11480 = vmatpush1.bf16.msra.mxu0 %v11195
        %11481 = vmatprep.subr.bf16.mxu0 %v11202
        %11482 = vmatpush1.bf16.msra.mxu0 %v11201
        %11483 = vmatprep.subr.bf16.mxu0 %v11208
        %11484 = vmatpush1.bf16.msra.mxu0 %v11207
        %11485 = vmatprep.subr.bf16.mxu0 %v11214
        %11486 = vmatpush1.bf16.msra.mxu0 %v11213
        %11487 = vmatprep.subr.bf16.mxu0 %v11220
        %11488 = vmatpush1.bf16.msra.mxu0 %v11219
        %11489 = vmatprep.subr.bf16.mxu0 %v11226
        %11490 = vmatpush1.bf16.msra.mxu0 %v11225
        %11491 = vmatprep.subr.bf16.mxu0 %v11232
        %11492 = vmatpush1.bf16.msra.mxu0 %v11231
        %11493 = vmatprep.subr.bf16.mxu0 %v11238
        %11494 = vmatpush1.bf16.msra.mxu0 %v11237
        %11495 = vmatprep.subr.bf16.mxu0 %v11244
        %11496 = vmatpush1.bf16.msra.mxu0 %v11243
        %11497 = vmatprep.subr.bf16.mxu0 %v11250
        %11498 = vmatpush1.bf16.msra.mxu0 %v11249
        %11499 = vmatprep.subr.bf16.mxu0 %v11256
        %11500 = vmatpush1.bf16.msra.mxu0 %v11255
        %11501 = vmatprep.subr.bf16.mxu0 %v11262
        %11502 = vmatpush1.bf16.msra.mxu0 %v11261
        %11503 = vmatprep.subr.bf16.mxu0 %v11268
        %11504 = vmatpush1.bf16.msra.mxu0 %v11267
        %11505 = vmatprep.subr.bf16.mxu0 %v11274
        %11506 = vmatpush1.bf16.msra.mxu0 %v11273
        %11507 = vmatprep.subr.bf16.mxu0 %v11280
        %11508 = vmatpush1.bf16.msra.mxu0 %v11279
        %11509 = vmatprep.mubr.bf16.mxu0 %v10610
        %11510 = vmatmul.mubr.bf16.gmra.mrb[0].mxu0 %v10609
        %v11511 = vpop.f32.mrb[0].mxu0
        %v11512 = vadd.f32 0.0, %v11511
        %v11513 = vpop.f32.mrb[0].mxu0
        %v11514 = vadd.f32 0.0, %v11513
        %v11515 = vpop.f32.mrb[0].mxu0
        %v11516 = vpop.f32.mrb[0].mxu0
        %11517 = vdwg.mxu0
        %11518 = vmatprep.subr.bf16.mxu0 %v11286
        %11519 = vmatpush1.bf16.msra.mxu0 %v11285
        %11520 = vmatprep.subr.bf16.mxu0 %v11292
        %11521 = vmatpush1.bf16.msra.mxu0 %v11291
        %11522 = vmatprep.subr.bf16.mxu0 %v11298
        %11523 = vmatpush1.bf16.msra.mxu0 %v11297
        %11524 = vmatprep.subr.bf16.mxu0 %v11304
        %11525 = vmatpush1.bf16.msra.mxu0 %v11303
        %11526 = vmatprep.subr.bf16.mxu0 %v11310
        %11527 = vmatpush1.bf16.msra.mxu0 %v11309
        %11528 = vmatprep.subr.bf16.mxu0 %v11316
        %11529 = vmatpush1.bf16.msra.mxu0 %v11315
        %11530 = vmatprep.subr.bf16.mxu0 %v11322
        %11531 = vmatpush1.bf16.msra.mxu0 %v11321
        %11532 = vmatprep.subr.bf16.mxu0 %v11328
        %11533 = vmatpush1.bf16.msra.mxu0 %v11327
        %11534 = vmatprep.subr.bf16.mxu0 0
        %11535 = vmatpush1.bf16.msra.mxu0 0
        %11536 = vmatprep.subr.bf16.mxu0 0
        %11537 = vmatpush1.bf16.msra.mxu0 0
        %11538 = vmatprep.subr.bf16.mxu0 0
        %11539 = vmatpush1.bf16.msra.mxu0 0
        %11540 = vmatprep.subr.bf16.mxu0 0
        %11541 = vmatpush1.bf16.msra.mxu0 0
        %11542 = vmatprep.subr.bf16.mxu0 0
        %11543 = vmatpush1.bf16.msra.mxu0 0
        %11544 = vmatprep.subr.bf16.mxu0 0
        %11545 = vmatpush1.bf16.msra.mxu0 0
        %11546 = vmatprep.subr.bf16.mxu0 0
        %11547 = vmatpush1.bf16.msra.mxu0 0
        %11548 = vmatprep.subr.bf16.mxu0 0
        %11549 = vmatpush1.bf16.msra.mxu0 0
        %11550 = vmatprep.mubr.bf16.mxu0 0
        %11551 = vmatmul.mubr.bf16.gmra.mrb[0].mxu0 %v10611
        %v11552 = vpop.f32.mrb[0].mxu0
        %v11553 = vadd.f32 %v11512, %v11552
        %v11554 = vpop.f32.mrb[0].mxu0
        %v11555 = vadd.f32 %v11514, %v11554
        %v11556 = vpop.f32.mrb[0].mxu0
        %v11557 = vpop.f32.mrb[0].mxu0
        %11558 = vdwg.mxu0
        %11559 = vmatprep.subr.bf16.mxu0 %v11192
        %11560 = vmatpush1.bf16.msra.mxu0 %v11191
        %11561 = vmatprep.subr.bf16.mxu0 %v11198
        %11562 = vmatpush1.bf16.msra.mxu0 %v11197
        %11563 = vmatprep.subr.bf16.mxu0 %v11204
        %11564 = vmatpush1.bf16.msra.mxu0 %v11203
        %11565 = vmatprep.subr.bf16.mxu0 %v11210
        %11566 = vmatpush1.bf16.msra.mxu0 %v11209
        %11567 = vmatprep.subr.bf16.mxu0 %v11216
        %11568 = vmatpush1.bf16.msra.mxu0 %v11215
        %11569 = vmatprep.subr.bf16.mxu0 %v11222
        %11570 = vmatpush1.bf16.msra.mxu0 %v11221
        %11571 = vmatprep.subr.bf16.mxu0 %v11228
        %11572 = vmatpush1.bf16.msra.mxu0 %v11227
        %11573 = vmatprep.subr.bf16.mxu0 %v11234
        %11574 = vmatpush1.bf16.msra.mxu0 %v11233
        %11575 = vmatprep.subr.bf16.mxu0 %v11240
        %11576 = vmatpush1.bf16.msra.mxu0 %v11239
        %11577 = vmatprep.subr.bf16.mxu0 %v11246
        %11578 = vmatpush1.bf16.msra.mxu0 %v11245
        %11579 = vmatprep.subr.bf16.mxu0 %v11252
        %11580 = vmatpush1.bf16.msra.mxu0 %v11251
        %11581 = vmatprep.subr.bf16.mxu0 %v11258
        %11582 = vmatpush1.bf16.msra.mxu0 %v11257
        %11583 = vmatprep.subr.bf16.mxu0 %v11264
        %11584 = vmatpush1.bf16.msra.mxu0 %v11263
        %11585 = vmatprep.subr.bf16.mxu0 %v11270
        %11586 = vmatpush1.bf16.msra.mxu0 %v11269
        %11587 = vmatprep.subr.bf16.mxu0 %v11276
        %11588 = vmatpush1.bf16.msra.mxu0 %v11275
        %11589 = vmatprep.subr.bf16.mxu0 %v11282
        %11590 = vmatpush1.bf16.msra.mxu0 %v11281
        %11591 = vmatprep.mubr.bf16.mxu0 %v10610
        %11592 = vmatmul.mubr.bf16.gmra.mrb[0].mxu0 %v10609
        %v11593 = vpop.f32.mrb[0].mxu0
        %v11594 = vadd.f32 0.0, %v11593
        %v11595 = vpop.f32.mrb[0].mxu0
        %v11596 = vadd.f32 0.0, %v11595
        %v11597 = vpop.f32.mrb[0].mxu0
        %v11598 = vpop.f32.mrb[0].mxu0
        %11599 = vdwg.mxu0
        %11600 = vmatprep.subr.bf16.mxu0 %v11288
        %11601 = vmatpush1.bf16.msra.mxu0 %v11287
        %11602 = vmatprep.subr.bf16.mxu0 %v11294
        %11603 = vmatpush1.bf16.msra.mxu0 %v11293
        %11604 = vmatprep.subr.bf16.mxu0 %v11300
        %11605 = vmatpush1.bf16.msra.mxu0 %v11299
        %11606 = vmatprep.subr.bf16.mxu0 %v11306
        %11607 = vmatpush1.bf16.msra.mxu0 %v11305
        %11608 = vmatprep.subr.bf16.mxu0 %v11312
        %11609 = vmatpush1.bf16.msra.mxu0 %v11311
        %11610 = vmatprep.subr.bf16.mxu0 %v11318
        %11611 = vmatpush1.bf16.msra.mxu0 %v11317
        %11612 = vmatprep.subr.bf16.mxu0 %v11324
        %11613 = vmatpush1.bf16.msra.mxu0 %v11323
        %11614 = vmatprep.subr.bf16.mxu0 %v11330
        %11615 = vmatpush1.bf16.msra.mxu0 %v11329
        %11616 = vmatprep.subr.bf16.mxu0 0
        %11617 = vmatpush1.bf16.msra.mxu0 0
        %11618 = vmatprep.subr.bf16.mxu0 0
        %11619 = vmatpush1.bf16.msra.mxu0 0
        %11620 = vmatprep.subr.bf16.mxu0 0
        %11621 = vmatpush1.bf16.msra.mxu0 0
        %11622 = vmatprep.subr.bf16.mxu0 0
        %11623 = vmatpush1.bf16.msra.mxu0 0
        %11624 = vmatprep.subr.bf16.mxu0 0
        %11625 = vmatpush1.bf16.msra.mxu0 0
        %11626 = vmatprep.subr.bf16.mxu0 0
        %11627 = vmatpush1.bf16.msra.mxu0 0
        %11628 = vmatprep.subr.bf16.mxu0 0
        %11629 = vmatpush1.bf16.msra.mxu0 0
        %11630 = vmatprep.subr.bf16.mxu0 0
        %11631 = vmatpush1.bf16.msra.mxu0 0
        %11632 = vmatprep.mubr.bf16.mxu0 0
        %11633 = vmatmul.mubr.bf16.gmra.mrb[0].mxu0 %v10611
        %v11634 = vpop.f32.mrb[0].mxu0
        %v11635 = vadd.f32 %v11594, %v11634
        %v11636 = vpop.f32.mrb[0].mxu0
        %v11637 = vadd.f32 %v11596, %v11636
        %v11638 = vpop.f32.mrb[0].mxu0
        %v11639 = vpop.f32.mrb[0].mxu0
        %11640 = vdwg.mxu0
        %11641 = vmatprep.subr.bf16.mxu0 %v11194
        %11642 = vmatpush1.bf16.msra.mxu0 %v11193
        %11643 = vmatprep.subr.bf16.mxu0 %v11200
        %11644 = vmatpush1.bf16.msra.mxu0 %v11199
        %11645 = vmatprep.subr.bf16.mxu0 %v11206
        %11646 = vmatpush1.bf16.msra.mxu0 %v11205
        %11647 = vmatprep.subr.bf16.mxu0 %v11212
        %11648 = vmatpush1.bf16.msra.mxu0 %v11211
        %11649 = vmatprep.subr.bf16.mxu0 %v11218
        %11650 = vmatpush1.bf16.msra.mxu0 %v11217
        %11651 = vmatprep.subr.bf16.mxu0 %v11224
        %11652 = vmatpush1.bf16.msra.mxu0 %v11223
        %11653 = vmatprep.subr.bf16.mxu0 %v11230
        %11654 = vmatpush1.bf16.msra.mxu0 %v11229
        %11655 = vmatprep.subr.bf16.mxu0 %v11236
        %11656 = vmatpush1.bf16.msra.mxu0 %v11235
        %11657 = vmatprep.subr.bf16.mxu0 %v11242
        %11658 = vmatpush1.bf16.msra.mxu0 %v11241
        %11659 = vmatprep.subr.bf16.mxu0 %v11248
        %11660 = vmatpush1.bf16.msra.mxu0 %v11247
        %11661 = vmatprep.subr.bf16.mxu0 %v11254
        %11662 = vmatpush1.bf16.msra.mxu0 %v11253
        %11663 = vmatprep.subr.bf16.mxu0 %v11260
        %11664 = vmatpush1.bf16.msra.mxu0 %v11259
        %11665 = vmatprep.subr.bf16.mxu0 %v11266
        %11666 = vmatpush1.bf16.msra.mxu0 %v11265
        %11667 = vmatprep.subr.bf16.mxu0 %v11272
        %11668 = vmatpush1.bf16.msra.mxu0 %v11271
        %11669 = vmatprep.subr.bf16.mxu0 %v11278
        %11670 = vmatpush1.bf16.msra.mxu0 %v11277
        %11671 = vmatprep.subr.bf16.mxu0 %v11284
        %11672 = vmatpush1.bf16.msra.mxu0 %v11283
        %11673 = vmatprep.mubr.bf16.mxu0 %v10610
        %11674 = vmatmul.mubr.bf16.gmra.mrb[0].mxu0 %v10609
        %v11675 = vpop.f32.mrb[0].mxu0
        %v11676 = vadd.f32 0.0, %v11675
        %v11677 = vpop.f32.mrb[0].mxu0
        %v11678 = vadd.f32 0.0, %v11677
        %v11679 = vpop.f32.mrb[0].mxu0
        %v11680 = vpop.f32.mrb[0].mxu0
        %11681 = vdwg.mxu0
        %11682 = vmatprep.subr.bf16.mxu0 %v11290
        %11683 = vmatpush1.bf16.msra.mxu0 %v11289
        %11684 = vmatprep.subr.bf16.mxu0 %v11296
        %11685 = vmatpush1.bf16.msra.mxu0 %v11295
        %11686 = vmatprep.subr.bf16.mxu0 %v11302
        %11687 = vmatpush1.bf16.msra.mxu0 %v11301
        %11688 = vmatprep.subr.bf16.mxu0 %v11308
        %11689 = vmatpush1.bf16.msra.mxu0 %v11307
        %11690 = vmatprep.subr.bf16.mxu0 %v11314
        %11691 = vmatpush1.bf16.msra.mxu0 %v11313
        %11692 = vmatprep.subr.bf16.mxu0 %v11320
        %11693 = vmatpush1.bf16.msra.mxu0 %v11319
        %11694 = vmatprep.subr.bf16.mxu0 %v11326
        %11695 = vmatpush1.bf16.msra.mxu0 %v11325
        %11696 = vmatprep.subr.bf16.mxu0 %v11332
        %11697 = vmatpush1.bf16.msra.mxu0 %v11331
        %11698 = vmatprep.subr.bf16.mxu0 0
        %11699 = vmatpush1.bf16.msra.mxu0 0
        %11700 = vmatprep.subr.bf16.mxu0 0
        %11701 = vmatpush1.bf16.msra.mxu0 0
        %11702 = vmatprep.subr.bf16.mxu0 0
        %11703 = vmatpush1.bf16.msra.mxu0 0
        %11704 = vmatprep.subr.bf16.mxu0 0
        %11705 = vmatpush1.bf16.msra.mxu0 0
        %11706 = vmatprep.subr.bf16.mxu0 0
        %11707 = vmatpush1.bf16.msra.mxu0 0
        %11708 = vmatprep.subr.bf16.mxu0 0
        %11709 = vmatpush1.bf16.msra.mxu0 0
        %11710 = vmatprep.subr.bf16.mxu0 0
        %11711 = vmatpush1.bf16.msra.mxu0 0
        %11712 = vmatprep.subr.bf16.mxu0 0
        %11713 = vmatpush1.bf16.msra.mxu0 0
        %11714 = vmatprep.mubr.bf16.mxu0 0
        %11715 = vmatmul.mubr.bf16.gmra.mrb[0].mxu0 %v10611
        %v11716 = vpop.f32.mrb[0].mxu0
        %v11717 = vadd.f32 %v11676, %v11716
        %v11718 = vpop.f32.mrb[0].mxu0
        %v11719 = vadd.f32 %v11678, %v11718
        %v11720 = vpop.f32.mrb[0].mxu0
        %v11721 = vpop.f32.mrb[0].mxu0
        %11722 = vdwg.mxu0
        %v11723 = vadd.f32 %v10517, %v11553
        %v11724 = vadd.f32 %v10518, %v11555
        %v11725 = vadd.f32 %v10519, %v11635
        %v11726 = vadd.f32 %v10520, %v11637
        %v11727 = vadd.f32 %v10521, %v11717
        %v11728 = vadd.f32 %v10522, %v11719
        %v11729 = vld [vmem:[%s13] sm:$0x7]
        %11731 = vset.pattern.permute.xlu0 0
        %11732 = vperm.xlu0 %11731, %v11729
        %v11733 = vpop.permute.xlu0 %11732
        %v11735 = vadd.f32 %v11723, %v11733
        %v11736 = vadd.f32 %v11724, %v11733
        %v11737 = vadd.f32 %v11725, %v11733
        %v11738 = vadd.f32 %v11726, %v11733
        %v11739 = vadd.f32 %v11727, %v11733
        %v11740 = vadd.f32 %v11728, %v11733
        %v11741 = vtanh.pop %v11735
        %v11742 = vtanh.pop %v11736
        %v11743 = vtanh.pop %v11737
        %v11744 = vtanh.pop %v11738
        %v11745 = vtanh.pop %v11739
        %v11746 = vtanh.pop %v11740
        %v11753 = vcombine.low %v11741, %v11742
        %v11754 = vcombine.low %v11743, %v11744
        %v11755 = vcombine.low %v11745, %v11746
        %11759 = vst [vmem:[%s608] sm:$0x77] %v11753
        %11760 = vst [vmem:[%s608 + $0x8] sm:$0x77] %v11754
        %11761 = vst [vmem:[%s608 + $0x10] sm:$0x77] %v11755
        %p11762 = scmp.lt.s32.totalorder %s31, 1
        %s11763 = scalar_select %p11762, %s31, 1
        %s11764 = smul.addr %s11763, 6
        %s11765 = smul.addr %s11764, 4
        %s11766 = scalar_lea.vmem %s15, %s11765
        // Predicated region
        $region113: #{generator_forward.1} parent=79 // pred_check
          %p11767 = pneg %p369
        $region114: #{generator_forward.1} parent=79 // pred_check_branch
          %11769 = sbr.rel (%p11767) target = $region116
        $region115: #{generator_forward.1} parent=79 // pred_region
          _
        $region116: #{generator_forward.1} parent=79 // pred_fallthru
          _
      $region80: #{generator_forward.1} parent=5 // pred_fallthru
        _
      %p11770 = scmp.le.s32.totalorder 2, %s26
      // Predicated region
      $region117: #{generator_forward.1} parent=5 // pred_check
        %p11771 = pneg %p11770
      $region118: #{generator_forward.1} parent=5 // pred_check_branch
        %11773 = sbr.rel (%p11771) target = $region120
      $region119: #{generator_forward.1} parent=5 // pred_region
        %s11774 = ssub.s32 %s26, 2
        // Predicated region
        $region121: #{generator_forward.1} parent=119 // pred_check
          %p11775 = pneg %p375
        $region122: #{generator_forward.1} parent=119 // pred_check_branch
          %11777 = sbr.rel (%p11775) target = $region124
        $region123: #{generator_forward.1} parent=119 // pred_region
          %p11778 = scmp.lt.s32.totalorder %s32, 1
          %s11779 = scalar_select %p11778, %s32, 1
          %s11780 = smul.addr %s11779, 6
          %s11781 = smul.addr %s11780, 4
          %s11782 = scalar_lea.vmem %s15, %s11781
        $region124: #{generator_forward.1} parent=119 // pred_fallthru
          _
      $region120: #{generator_forward.1} parent=5 // pred_fallthru
        _
    $region6: #{generator_forward.1} parent=1 // loop_footer
      %s30 = sadd.s32 1, %s26
    $region7: #{generator_forward.1} parent=1 // loop_footer_branch
      %25 = sbr.rel target = $region3
    $region8: #{generator_forward.1} parent=1 // loop_exit
      _
    %11783 = vsyncpa [#allocation3], 1
    %s11784 = scalar_lea.sflag [#allocation3], 1
    %11785 = vsyncpa %s11784, 1
    %11786 = vsyncpa [#allocation5], 1
    %11787 = vsyncpa [#allocation8], 1
    %11788 = vsyncpa [#allocation11], 1
    %11789 = vsyncpa [#allocation14], 1

</llo_original>
